<compile_context>
chip_gen: v6e
topology: v6e:2x2x1
jax: 0.10.0
libtpu: 0.0.40
codegen_flags: <defaults>
</compile_context>

<pallas_src>
import functools

import jax
import jax.numpy as jnp
from jax.experimental import pallas as pl
from jax.experimental.pallas import tpu as pltpu


def _round_up(x, m):
    return ((x + m - 1) // m) * m


# ---------------------------------------------------------------------------
# Matmul kernels: K is small and taken as a single full block, so no
# accumulator scratch / epilogue gating.  bf16 MXU inputs, f32 accumulation,
# cast on store (optionally through a fused tanh).
# ---------------------------------------------------------------------------
def _matmul_kernel(a_ref, b_ref, o_ref):
    acc = jnp.dot(a_ref[...], b_ref[...], preferred_element_type=jnp.float32)
    o_ref[...] = acc.astype(o_ref.dtype)


def _matmul_tanh_kernel(a_ref, b_ref, o_ref):
    acc = jnp.dot(a_ref[...], b_ref[...], preferred_element_type=jnp.float32)
    o_ref[...] = jnp.tanh(acc).astype(o_ref.dtype)


def pallas_matmul(a, b, *, out_dtype=jnp.bfloat16, fuse_tanh=False):
    """(M, K) @ (K, N) -> (M, N).  Inputs cast to bf16 for the MXU."""
    M, K = a.shape
    K2, Nc = b.shape
    assert K == K2
    a = a.astype(jnp.bfloat16)
    b = b.astype(jnp.bfloat16)

    # Single row tile for small M (grid steps are ~0.35us of pure overhead on
    # the 1-TC chips); >=2 tiles for large M so v7x's two TensorCores both work.
    if M <= 512:
        tm = M
    else:
        tm = min(2048, _round_up(M // 2, 8))
    Mp = _round_up(M, tm)
    if Mp != M:
        a = jnp.pad(a, ((0, Mp - M), (0, 0)))

    kernel = _matmul_tanh_kernel if fuse_tanh else _matmul_kernel
    out = pl.pallas_call(
        kernel,
        out_shape=jax.ShapeDtypeStruct((Mp, Nc), out_dtype),
        grid_spec=pltpu.PrefetchScalarGridSpec(
            num_scalar_prefetch=0,
            grid=(Mp // tm,),
            in_specs=[pl.BlockSpec((tm, K), lambda i: (i, 0)),
                      pl.BlockSpec((K, Nc), lambda i: (0, 0))],  # B resident
            out_specs=pl.BlockSpec((tm, Nc), lambda i: (i, 0)),
        ),
        compiler_params=pltpu.CompilerParams(
            dimension_semantics=("parallel",)),
    )(a, b)
    return out if Mp == M else out[:M]


# ---------------------------------------------------------------------------
# Fused BatchNorm (batch statistics) + ReLU.
#   Input columns are `groups` repeats of the C channels (channel minor):
#   phase groups from the sub-pixel conv and/or lane-fold groups that make the
#   last dim >= 128.  Per-channel sums are formed with log2(groups) XLU rolls;
#   the rolled result is already tiled per column, so no unfold is needed.
#   gamma/beta arrive pre-tiled to the full lane width.
# ---------------------------------------------------------------------------
def _bn_relu_kernel(y_ref, g_ref, b_ref, o_ref, *, channels, groups,
                    inv_count, eps):
    y = y_ref[...].astype(jnp.float32)                  # (rows, L)
    s = jnp.sum(y, axis=0, keepdims=True)               # (1, L)
    q = jnp.sum(y * y, axis=0, keepdims=True)           # (1, L)
    if groups > 1:                                      # fold groups via rolls
        step = channels
        total = channels * groups
        while step < total:
            s = s + pltpu.roll(s, shift=step, axis=1)
            q = q + pltpu.roll(q, shift=step, axis=1)
            step *= 2
    mean = s * inv_count
    var = q * inv_count - mean * mean                   # biased variance
    scale = g_ref[...] * jax.lax.rsqrt(var + eps)
    bias = b_ref[...] - mean * scale
    yy = y_ref[...].astype(jnp.float32)                 # re-read from VMEM
    o_ref[...] = jnp.maximum(yy * scale + bias, 0.0).astype(o_ref.dtype)


def fused_bn_relu(y, gamma, beta, *, phases=1, eps=1e-5,
                  out_dtype=jnp.bfloat16):
    """y: (M, phases*C), channel index = column % C.  Batch-stat BN + ReLU."""
    M, P = y.shape
    C = P // phases
    # Lane-fold rows so stores are full-lane (>=128 wide) when possible.
    g = 1
    if P < 128 and 128 % P == 0:
        g = 128 // P
        while g > 1 and M % g != 0:
            g //= 2
    rows, L = M // g, P * g
    groups = phases * g
    assert groups & (groups - 1) == 0, "group count must be a power of two"

    y_f = y.reshape(rows, L)
    reps = L // C
    gamma_t = jnp.tile(gamma.astype(jnp.float32), reps).reshape(1, L)
    beta_t = jnp.tile(beta.astype(jnp.float32), reps).reshape(1, L)

    kernel = functools.partial(
        _bn_relu_kernel, channels=C, groups=groups,
        inv_count=1.0 / float(rows * groups), eps=eps)
    out = pl.pallas_call(
        kernel,
        out_shape=jax.ShapeDtypeStruct((rows, L), out_dtype),
    )(y_f, gamma_t, beta_t)
    return out.reshape(M, P)


# ---------------------------------------------------------------------------
# 4-phase (sub-pixel) decomposition of ConvTranspose2d(k=4, s=2, p=1).
#   out[n, 2j+py, 2i+px, co] = sum_{dy in D(py), dx in D(px)}
#       x[n, j+dy, i+dx, :] @ w[:, co, ky(py,dy), kx(px,dx)]
#   with D(0) = {0:ky=1, -1:ky=3}, D(1) = {0:ky=2, +1:ky=0}.
# A single matmul covers all phases via the 3x3-neighbourhood im2col and a
# phase weight matrix with zeros on the unused taps.
# ---------------------------------------------------------------------------
_PHASE_TAPS = {0: ((0, 1), (-1, 3)), 1: ((0, 2), (1, 0))}   # phase -> ((d, k),)


def phase_weight_matrix(w):
    """w: (Cin, Cout, 4, 4) torch ConvTranspose2d layout -> (9*Cin, 4*Cout)."""
    Cin, Cout, k, _ = w.shape
    assert k == 4
    W9 = jnp.zeros((3, 3, Cin, 2, 2, Cout), w.dtype)
    for py, ytaps in _PHASE_TAPS.items():
        for px, xtaps in _PHASE_TAPS.items():
            for dy, ky in ytaps:
                for dx, kx in xtaps:
                    W9 = W9.at[dy + 1, dx + 1, :, py, px, :].set(w[:, :, ky, kx])
    return W9.reshape(9 * Cin, 4 * Cout)


def conv_transpose_s2(x, w, *, out_dtype=jnp.bfloat16, fuse_tanh=False):
    """x: (N, H, W, Cin) NHWC; w: (Cin, Cout, 4, 4).  Stride 2, padding 1.

    Returns the phase-packed result (N*H*W, 4*Cout), columns = (py, px, co).
    """
    N, H, W, Cin = x.shape
    Cout = w.shape[1]
    xp = jnp.pad(x, ((0, 0), (1, 1), (1, 1), (0, 0)))
    cols = [xp[:, 1 + dy:1 + dy + H, 1 + dx:1 + dx + W, :]
            for dy in (-1, 0, 1) for dx in (-1, 0, 1)]
    a = jnp.concatenate(cols, axis=-1).reshape(N * H * W, 9 * Cin)
    b = phase_weight_matrix(w)
    return pallas_matmul(a, b, out_dtype=out_dtype, fuse_tanh=fuse_tanh)


def unphase(y, N, H, W, C):
    """(N*H*W, 4*C) phase-packed -> (N, 2H, 2W, C) NHWC."""
    t = y.reshape(N, H, W, 2, 2, C).transpose(0, 1, 3, 2, 4, 5)
    return t.reshape(N, 2 * H, 2 * W, C)


# ---------------------------------------------------------------------------
# Generator: parameter init + forward
# ---------------------------------------------------------------------------
def init_generator_params(key, latent=16, ngf=8, out_ch=3):
    chans = [latent, ngf * 8, ngf * 4, ngf * 2, ngf, ngf, out_ch]
    params = []
    for i in range(6):
        key, wk, gk, bk = jax.random.split(key, 4)
        cin, cout = chans[i], chans[i + 1]
        w = 0.05 * jax.random.normal(wk, (cin, cout, 4, 4), jnp.float32)
        if i < 5:
            gamma = 1.0 + 0.1 * jax.random.normal(gk, (cout,), jnp.float32)
            beta = 0.1 * jax.random.normal(bk, (cout,), jnp.float32)
        else:
            gamma, beta = None, None
        params.append((w, gamma, beta))
    return params


def generator_forward(params, z):
    # z: (N, latent, 1, 1) NCHW, mirroring the PyTorch DCGAN input.
    N = z.shape[0]

    # Layer 0: ConvT(k4, s1, p0) on a 1x1 input == a (N, latent)@(latent, 16*C)
    # matmul with M = N.  Plain XLA (a Pallas call here is pure overhead).
    w0, g0, b0 = params[0]
    c0 = w0.shape[1]
    zv = z.reshape(N, -1).astype(jnp.float32)
    y0 = jnp.einsum('nc,cokl->nklo', zv, w0)                 # (N, 4, 4, c0)
    x = fused_bn_relu(y0.reshape(N * 16, c0), g0, b0).reshape(N, 4, 4, c0)

    # Layers 1..4: phase-decomposed ConvT -> fused BN+ReLU (all bf16 traffic).
    for w, gamma, beta in params[1:-1]:
        n, H, W, _ = x.shape
        cout = w.shape[1]
        y = conv_transpose_s2(x, w)                          # (n*H*W, 4*cout)
        y = fused_bn_relu(y, gamma, beta, phases=4)          # bf16 out
        x = unphase(y, n, H, W, cout)                        # fuses into next im2col

    # Layer 5: phase-decomposed ConvT with tanh fused into the matmul epilogue.
    w5, _, _ = params[-1]
    n, H, W, _ = x.shape
    cout = w5.shape[1]
    y = conv_transpose_s2(x, w5, out_dtype=jnp.float32, fuse_tanh=True)
    out = unphase(y, n, H, W, cout)                          # (N, 2H, 2W, cout)
    return out.transpose(0, 3, 1, 2)                         # NCHW once, at the end


# ---------------------------------------------------------------------------
# Pure-f32 XLA reference (independent formulation: dilate + pad + flipped conv)
# ---------------------------------------------------------------------------
def _ref_conv_transpose(x_nchw, w, stride, pad):
    k = w.shape[2]
    w_t = jnp.flip(w, (2, 3)).transpose(1, 0, 2, 3)          # (Cout, Cin, k, k)
    return jax.lax.conv_general_dilated(
        x_nchw, w_t, window_strides=(1, 1),
        padding=[(k - 1 - pad, k - 1 - pad)] * 2,
        lhs_dilation=(stride, stride),
        dimension_numbers=('NCHW', 'OIHW', 'NCHW'))


def reference_forward(params, z):
    cfg = [(1, 0)] + [(2, 1)] * 5
    x = z
    for i, (w, gamma, beta) in enumerate(params):
        x = _ref_conv_transpose(x, w, *cfg[i])
        if gamma is not None:
            mean = jnp.mean(x, axis=(0, 2, 3), keepdims=True)
            var = jnp.mean((x - mean) ** 2, axis=(0, 2, 3), keepdims=True)
            x = (x - mean) * jax.lax.rsqrt(var + 1e-5)
            x = x * gamma.reshape(1, -1, 1, 1) + beta.reshape(1, -1, 1, 1)
            x = jnp.maximum(x, 0.0)
        else:
            x = jnp.tanh(x)
    return x


if __name__ == "__main__":
    key = jax.random.PRNGKey(0)
    pkey, zkey = jax.random.split(key)

    LATENT, NGF, OUT_CH, BATCH = 16, 8, 3, 2
    params = init_generator_params(pkey, latent=LATENT, ngf=NGF, out_ch=OUT_CH)
    z = jax.random.normal(zkey, (BATCH, LATENT, 1, 1), jnp.float32)

    fwd = jax.jit(generator_forward)
    out = jax.block_until_ready(fwd(params, z))

    assert out.shape == (BATCH, OUT_CH, 128, 128), out.shape
    assert bool(jnp.all(jnp.isfinite(out)))
    assert bool(jnp.all(jnp.abs(out) <= 1.0 + 1e-6))        # tanh range

    ref = jax.block_until_ready(jax.jit(reference_forward)(params, z))
    err = float(jnp.max(jnp.abs(out - ref)))
    assert err < 0.1, f"max abs err vs f32 reference: {err}"

    print("KERNEL_OK")
</pallas_src>

<mosaic_0001>
module attributes {stable_mosaic.version = 11 : i64} {
  func.func @_bn_relu_kernel(%arg0: memref<16x128xf32, #tpu.memory_space<vmem>>, %arg1: memref<1x128xf32, #tpu.memory_space<vmem>>, %arg2: memref<1x128xf32, #tpu.memory_space<vmem>>, %arg3: memref<16x128xbf16, #tpu.memory_space<vmem>>) attributes {dimension_semantics = [], scalar_prefetch = 0 : i64, scratch_operands = 0 : i64, tpu.core_type = #tpu.core_type<tc>} {
    %c0 = arith.constant 0 : index
    %c0_0 = arith.constant 0 : index
    %0 = vector.load %arg0[%c0, %c0_0] : memref<16x128xf32, #tpu.memory_space<vmem>>, vector<16x128xf32>
    %cst = arith.constant dense<0.000000e+00> : vector<128xf32>
    %1 = vector.multi_reduction <add>, %0, %cst [0] : vector<16x128xf32> to vector<128xf32>
    %2 = vector.shape_cast %1 : vector<128xf32> to vector<1x128xf32>
    %3 = arith.mulf %0, %0 : vector<16x128xf32>
    %cst_1 = arith.constant dense<0.000000e+00> : vector<128xf32>
    %4 = vector.multi_reduction <add>, %3, %cst_1 [0] : vector<16x128xf32> to vector<128xf32>
    %5 = vector.shape_cast %4 : vector<128xf32> to vector<1x128xf32>
    %c64_i32 = arith.constant 64 : i32
    %6 = tpu.dynamic_rotate %2 by %c64_i32 dim 1 : vector<1x128xf32>, i32 -> vector<1x128xf32>
    %7 = arith.addf %2, %6 : vector<1x128xf32>
    %c64_i32_2 = arith.constant 64 : i32
    %8 = tpu.dynamic_rotate %5 by %c64_i32_2 dim 1 : vector<1x128xf32>, i32 -> vector<1x128xf32>
    %9 = arith.addf %5, %8 : vector<1x128xf32>
    %cst_3 = arith.constant 3.125000e-02 : f32
    %10 = vector.broadcast %cst_3 : f32 to vector<1x128xf32>
    %11 = arith.mulf %7, %10 : vector<1x128xf32>
    %cst_4 = arith.constant 3.125000e-02 : f32
    %12 = vector.broadcast %cst_4 : f32 to vector<1x128xf32>
    %13 = arith.mulf %9, %12 : vector<1x128xf32>
    %14 = arith.mulf %11, %11 : vector<1x128xf32>
    %15 = arith.subf %13, %14 : vector<1x128xf32>
    %c0_5 = arith.constant 0 : index
    %c0_6 = arith.constant 0 : index
    %16 = vector.load %arg1[%c0_5, %c0_6] : memref<1x128xf32, #tpu.memory_space<vmem>>, vector<1x128xf32>
    %cst_7 = arith.constant 9.99999974E-6 : f32
    %17 = vector.broadcast %cst_7 : f32 to vector<1x128xf32>
    %18 = arith.addf %15, %17 : vector<1x128xf32>
    %19 = math.rsqrt %18 : vector<1x128xf32>
    %20 = arith.mulf %16, %19 : vector<1x128xf32>
    %c0_8 = arith.constant 0 : index
    %c0_9 = arith.constant 0 : index
    %21 = vector.load %arg2[%c0_8, %c0_9] : memref<1x128xf32, #tpu.memory_space<vmem>>, vector<1x128xf32>
    %22 = arith.mulf %11, %20 : vector<1x128xf32>
    %23 = arith.subf %21, %22 : vector<1x128xf32>
    %c0_10 = arith.constant 0 : index
    %c0_11 = arith.constant 0 : index
    %24 = vector.load %arg0[%c0_10, %c0_11] : memref<16x128xf32, #tpu.memory_space<vmem>>, vector<16x128xf32>
    %25 = vector.broadcast %20 : vector<1x128xf32> to vector<16x128xf32>
    %26 = arith.mulf %24, %25 : vector<16x128xf32>
    %27 = vector.broadcast %23 : vector<1x128xf32> to vector<16x128xf32>
    %28 = arith.addf %26, %27 : vector<16x128xf32>
    %cst_12 = arith.constant 0.000000e+00 : f32
    %29 = vector.broadcast %cst_12 : f32 to vector<16x128xf32>
    %30 = arith.maximumf %28, %29 : vector<16x128xf32>
    %31 = arith.truncf %30 : vector<16x128xf32> to vector<16x128xbf16>
    %c0_13 = arith.constant 0 : index
    %c0_14 = arith.constant 0 : index
    %32 = vector.load %arg3[%c0_13, %c0_14] : memref<16x128xbf16, #tpu.memory_space<vmem>>, vector<16x128xbf16>
    tpu.vector_store %arg3[%c0_13, %c0_14], %31 {strides = array<i32>} : memref<16x128xbf16, #tpu.memory_space<vmem>>, vector<16x128xbf16>,
    return
  }
}

module attributes {stable_mosaic.version = 11 : i64} {
  func.func @_matmul_kernel(%arg0: i32, %arg1: memref<32x576xbf16, #tpu.memory_space<vmem>>, %arg2: memref<576x128xbf16, #tpu.memory_space<vmem>>, %arg3: memref<32x128xbf16, #tpu.memory_space<vmem>>) attributes {dimension_semantics = [#tpu.dimension_semantics<parallel>], iteration_bounds = array<i64: 1>, scalar_prefetch = 0 : i64, scratch_operands = 0 : i64, tpu.core_type = #tpu.core_type<tc>, window_params = [{transform_indices = @transform_0, window_bounds = array<i64: 32, 576>}, {pipeline_mode = #tpu.pipeline_mode<synchronous>, transform_indices = @transform_1, window_bounds = array<i64: 576, 128>}, {transform_indices = @transform_2, window_bounds = array<i64: 32, 128>}]} {
    %c0 = arith.constant 0 : index
    %c0_0 = arith.constant 0 : index
    %0 = vector.load %arg1[%c0, %c0_0] : memref<32x576xbf16, #tpu.memory_space<vmem>>, vector<32x576xbf16>
    %c0_1 = arith.constant 0 : index
    %c0_2 = arith.constant 0 : index
    %1 = vector.load %arg2[%c0_1, %c0_2] : memref<576x128xbf16, #tpu.memory_space<vmem>>, vector<576x128xbf16>
    %cst = arith.constant dense<0.000000e+00> : vector<32x128xf32>
    %2 = tpu.matmul %0, %1, %cst {dimension_numbers = #tpu.dot_dimension_numbers<[1], [0], [0], [1], [0, 0, 1, 1], [], []>} : vector<32x576xbf16>, vector<576x128xbf16>, vector<32x128xf32> -> vector<32x128xf32>
    %3 = arith.truncf %2 : vector<32x128xf32> to vector<32x128xbf16>
    %c0_3 = arith.constant 0 : index
    %c0_4 = arith.constant 0 : index
    %4 = vector.load %arg3[%c0_3, %c0_4] : memref<32x128xbf16, #tpu.memory_space<vmem>>, vector<32x128xbf16>
    tpu.vector_store %arg3[%c0_3, %c0_4], %3 {strides = array<i32>} : memref<32x128xbf16, #tpu.memory_space<vmem>>, vector<32x128xbf16>,
    return
  }
  func.func @transform_0(%arg0: i32) -> (i32, i32) {
    %c0_i32 = arith.constant 0 : i32
    %c0_i32_0 = arith.constant 0 : i32
    return %arg0, %c0_i32 : i32, i32
  }
  func.func @transform_1(%arg0: i32) -> (i32, i32) {
    %c0_i32 = arith.constant 0 : i32
    %c0_i32_0 = arith.constant 0 : i32
    %c0_i32_1 = arith.constant 0 : i32
    return %c0_i32, %c0_i32_0 : i32, i32
  }
  func.func @transform_2(%arg0: i32) -> (i32, i32) {
    %c0_i32 = arith.constant 0 : i32
    %c0_i32_0 = arith.constant 0 : i32
    return %arg0, %c0_i32 : i32, i32
  }
}

module attributes {stable_mosaic.version = 11 : i64} {
  func.func @_bn_relu_kernel(%arg0: memref<32x128xbf16, #tpu.memory_space<vmem>>, %arg1: memref<1x128xf32, #tpu.memory_space<vmem>>, %arg2: memref<1x128xf32, #tpu.memory_space<vmem>>, %arg3: memref<32x128xbf16, #tpu.memory_space<vmem>>) attributes {dimension_semantics = [], scalar_prefetch = 0 : i64, scratch_operands = 0 : i64, tpu.core_type = #tpu.core_type<tc>} {
    %c0 = arith.constant 0 : index
    %c0_0 = arith.constant 0 : index
    %0 = vector.load %arg0[%c0, %c0_0] : memref<32x128xbf16, #tpu.memory_space<vmem>>, vector<32x128xbf16>
    %1 = arith.extf %0 : vector<32x128xbf16> to vector<32x128xf32>
    %cst = arith.constant dense<0.000000e+00> : vector<128xf32>
    %2 = vector.multi_reduction <add>, %1, %cst [0] : vector<32x128xf32> to vector<128xf32>
    %3 = vector.shape_cast %2 : vector<128xf32> to vector<1x128xf32>
    %4 = arith.mulf %1, %1 : vector<32x128xf32>
    %cst_1 = arith.constant dense<0.000000e+00> : vector<128xf32>
    %5 = vector.multi_reduction <add>, %4, %cst_1 [0] : vector<32x128xf32> to vector<128xf32>
    %6 = vector.shape_cast %5 : vector<128xf32> to vector<1x128xf32>
    %c32_i32 = arith.constant 32 : i32
    %7 = tpu.dynamic_rotate %3 by %c32_i32 dim 1 : vector<1x128xf32>, i32 -> vector<1x128xf32>
    %8 = arith.addf %3, %7 : vector<1x128xf32>
    %c32_i32_2 = arith.constant 32 : i32
    %9 = tpu.dynamic_rotate %6 by %c32_i32_2 dim 1 : vector<1x128xf32>, i32 -> vector<1x128xf32>
    %10 = arith.addf %6, %9 : vector<1x128xf32>
    %c64_i32 = arith.constant 64 : i32
    %11 = tpu.dynamic_rotate %8 by %c64_i32 dim 1 : vector<1x128xf32>, i32 -> vector<1x128xf32>
    %12 = arith.addf %8, %11 : vector<1x128xf32>
    %c64_i32_3 = arith.constant 64 : i32
    %13 = tpu.dynamic_rotate %10 by %c64_i32_3 dim 1 : vector<1x128xf32>, i32 -> vector<1x128xf32>
    %14 = arith.addf %10, %13 : vector<1x128xf32>
    %cst_4 = arith.constant 7.812500e-03 : f32
    %15 = vector.broadcast %cst_4 : f32 to vector<1x128xf32>
    %16 = arith.mulf %12, %15 : vector<1x128xf32>
    %cst_5 = arith.constant 7.812500e-03 : f32
    %17 = vector.broadcast %cst_5 : f32 to vector<1x128xf32>
    %18 = arith.mulf %14, %17 : vector<1x128xf32>
    %19 = arith.mulf %16, %16 : vector<1x128xf32>
    %20 = arith.subf %18, %19 : vector<1x128xf32>
    %c0_6 = arith.constant 0 : index
    %c0_7 = arith.constant 0 : index
    %21 = vector.load %arg1[%c0_6, %c0_7] : memref<1x128xf32, #tpu.memory_space<vmem>>, vector<1x128xf32>
    %cst_8 = arith.constant 9.99999974E-6 : f32
    %22 = vector.broadcast %cst_8 : f32 to vector<1x128xf32>
    %23 = arith.addf %20, %22 : vector<1x128xf32>
    %24 = math.rsqrt %23 : vector<1x128xf32>
    %25 = arith.mulf %21, %24 : vector<1x128xf32>
    %c0_9 = arith.constant 0 : index
    %c0_10 = arith.constant 0 : index
    %26 = vector.load %arg2[%c0_9, %c0_10] : memref<1x128xf32, #tpu.memory_space<vmem>>, vector<1x128xf32>
    %27 = arith.mulf %16, %25 : vector<1x128xf32>
    %28 = arith.subf %26, %27 : vector<1x128xf32>
    %c0_11 = arith.constant 0 : index
    %c0_12 = arith.constant 0 : index
    %29 = vector.load %arg0[%c0_11, %c0_12] : memref<32x128xbf16, #tpu.memory_space<vmem>>, vector<32x128xbf16>
    %30 = arith.extf %29 : vector<32x128xbf16> to vector<32x128xf32>
    %31 = vector.broadcast %25 : vector<1x128xf32> to vector<32x128xf32>
    %32 = arith.mulf %30, %31 : vector<32x128xf32>
    %33 = vector.broadcast %28 : vector<1x128xf32> to vector<32x128xf32>
    %34 = arith.addf %32, %33 : vector<32x128xf32>
    %cst_13 = arith.constant 0.000000e+00 : f32
    %35 = vector.broadcast %cst_13 : f32 to vector<32x128xf32>
    %36 = arith.maximumf %34, %35 : vector<32x128xf32>
    %37 = arith.truncf %36 : vector<32x128xf32> to vector<32x128xbf16>
    %c0_14 = arith.constant 0 : index
    %c0_15 = arith.constant 0 : index
    %38 = vector.load %arg3[%c0_14, %c0_15] : memref<32x128xbf16, #tpu.memory_space<vmem>>, vector<32x128xbf16>
    tpu.vector_store %arg3[%c0_14, %c0_15], %37 {strides = array<i32>} : memref<32x128xbf16, #tpu.memory_space<vmem>>, vector<32x128xbf16>,
    return
  }
}

module attributes {stable_mosaic.version = 11 : i64} {
  func.func @_bn_relu_kernel(%arg0: memref<64x128xbf16, #tpu.memory_space<vmem>>, %arg1: memref<1x128xf32, #tpu.memory_space<vmem>>, %arg2: memref<1x128xf32, #tpu.memory_space<vmem>>, %arg3: memref<64x128xbf16, #tpu.memory_space<vmem>>) attributes {dimension_semantics = [], scalar_prefetch = 0 : i64, scratch_operands = 0 : i64, tpu.core_type = #tpu.core_type<tc>} {
    %c0 = arith.constant 0 : index
    %c0_0 = arith.constant 0 : index
    %0 = vector.load %arg0[%c0, %c0_0] : memref<64x128xbf16, #tpu.memory_space<vmem>>, vector<64x128xbf16>
    %1 = arith.extf %0 : vector<64x128xbf16> to vector<64x128xf32>
    %cst = arith.constant dense<0.000000e+00> : vector<128xf32>
    %2 = vector.multi_reduction <add>, %1, %cst [0] : vector<64x128xf32> to vector<128xf32>
    %3 = vector.shape_cast %2 : vector<128xf32> to vector<1x128xf32>
    %4 = arith.mulf %1, %1 : vector<64x128xf32>
    %cst_1 = arith.constant dense<0.000000e+00> : vector<128xf32>
    %5 = vector.multi_reduction <add>, %4, %cst_1 [0] : vector<64x128xf32> to vector<128xf32>
    %6 = vector.shape_cast %5 : vector<128xf32> to vector<1x128xf32>
    %c16_i32 = arith.constant 16 : i32
    %7 = tpu.dynamic_rotate %3 by %c16_i32 dim 1 : vector<1x128xf32>, i32 -> vector<1x128xf32>
    %8 = arith.addf %3, %7 : vector<1x128xf32>
    %c16_i32_2 = arith.constant 16 : i32
    %9 = tpu.dynamic_rotate %6 by %c16_i32_2 dim 1 : vector<1x128xf32>, i32 -> vector<1x128xf32>
    %10 = arith.addf %6, %9 : vector<1x128xf32>
    %c32_i32 = arith.constant 32 : i32
    %11 = tpu.dynamic_rotate %8 by %c32_i32 dim 1 : vector<1x128xf32>, i32 -> vector<1x128xf32>
    %12 = arith.addf %8, %11 : vector<1x128xf32>
    %c32_i32_3 = arith.constant 32 : i32
    %13 = tpu.dynamic_rotate %10 by %c32_i32_3 dim 1 : vector<1x128xf32>, i32 -> vector<1x128xf32>
    %14 = arith.addf %10, %13 : vector<1x128xf32>
    %c64_i32 = arith.constant 64 : i32
    %15 = tpu.dynamic_rotate %12 by %c64_i32 dim 1 : vector<1x128xf32>, i32 -> vector<1x128xf32>
    %16 = arith.addf %12, %15 : vector<1x128xf32>
    %c64_i32_4 = arith.constant 64 : i32
    %17 = tpu.dynamic_rotate %14 by %c64_i32_4 dim 1 : vector<1x128xf32>, i32 -> vector<1x128xf32>
    %18 = arith.addf %14, %17 : vector<1x128xf32>
    %cst_5 = arith.constant 0.001953125 : f32
    %19 = vector.broadcast %cst_5 : f32 to vector<1x128xf32>
    %20 = arith.mulf %16, %19 : vector<1x128xf32>
    %cst_6 = arith.constant 0.001953125 : f32
    %21 = vector.broadcast %cst_6 : f32 to vector<1x128xf32>
    %22 = arith.mulf %18, %21 : vector<1x128xf32>
    %23 = arith.mulf %20, %20 : vector<1x128xf32>
    %24 = arith.subf %22, %23 : vector<1x128xf32>
    %c0_7 = arith.constant 0 : index
    %c0_8 = arith.constant 0 : index
    %25 = vector.load %arg1[%c0_7, %c0_8] : memref<1x128xf32, #tpu.memory_space<vmem>>, vector<1x128xf32>
    %cst_9 = arith.constant 9.99999974E-6 : f32
    %26 = vector.broadcast %cst_9 : f32 to vector<1x128xf32>
    %27 = arith.addf %24, %26 : vector<1x128xf32>
    %28 = math.rsqrt %27 : vector<1x128xf32>
    %29 = arith.mulf %25, %28 : vector<1x128xf32>
    %c0_10 = arith.constant 0 : index
    %c0_11 = arith.constant 0 : index
    %30 = vector.load %arg2[%c0_10, %c0_11] : memref<1x128xf32, #tpu.memory_space<vmem>>, vector<1x128xf32>
    %31 = arith.mulf %20, %29 : vector<1x128xf32>
    %32 = arith.subf %30, %31 : vector<1x128xf32>
    %c0_12 = arith.constant 0 : index
    %c0_13 = arith.constant 0 : index
    %33 = vector.load %arg0[%c0_12, %c0_13] : memref<64x128xbf16, #tpu.memory_space<vmem>>, vector<64x128xbf16>
    %34 = arith.extf %33 : vector<64x128xbf16> to vector<64x128xf32>
    %35 = vector.broadcast %29 : vector<1x128xf32> to vector<64x128xf32>
    %36 = arith.mulf %34, %35 : vector<64x128xf32>
    %37 = vector.broadcast %32 : vector<1x128xf32> to vector<64x128xf32>
    %38 = arith.addf %36, %37 : vector<64x128xf32>
    %cst_14 = arith.constant 0.000000e+00 : f32
    %39 = vector.broadcast %cst_14 : f32 to vector<64x128xf32>
    %40 = arith.maximumf %38, %39 : vector<64x128xf32>
    %41 = arith.truncf %40 : vector<64x128xf32> to vector<64x128xbf16>
    %c0_15 = arith.constant 0 : index
    %c0_16 = arith.constant 0 : index
    %42 = vector.load %arg3[%c0_15, %c0_16] : memref<64x128xbf16, #tpu.memory_space<vmem>>, vector<64x128xbf16>
    tpu.vector_store %arg3[%c0_15, %c0_16], %41 {strides = array<i32>} : memref<64x128xbf16, #tpu.memory_space<vmem>>, vector<64x128xbf16>,
    return
  }
}

module attributes {stable_mosaic.version = 11 : i64} {
  func.func @_matmul_kernel(%arg0: i32, %arg1: memref<128x288xbf16, #tpu.memory_space<vmem>>, %arg2: memref<288x64xbf16, #tpu.memory_space<vmem>>, %arg3: memref<128x64xbf16, #tpu.memory_space<vmem>>) attributes {dimension_semantics = [#tpu.dimension_semantics<parallel>], iteration_bounds = array<i64: 1>, scalar_prefetch = 0 : i64, scratch_operands = 0 : i64, tpu.core_type = #tpu.core_type<tc>, window_params = [{transform_indices = @transform_0, window_bounds = array<i64: 128, 288>}, {pipeline_mode = #tpu.pipeline_mode<synchronous>, transform_indices = @transform_1, window_bounds = array<i64: 288, 64>}, {transform_indices = @transform_2, window_bounds = array<i64: 128, 64>}]} {
    %c0 = arith.constant 0 : index
    %c0_0 = arith.constant 0 : index
    %0 = vector.load %arg1[%c0, %c0_0] : memref<128x288xbf16, #tpu.memory_space<vmem>>, vector<128x288xbf16>
    %c0_1 = arith.constant 0 : index
    %c0_2 = arith.constant 0 : index
    %1 = vector.load %arg2[%c0_1, %c0_2] : memref<288x64xbf16, #tpu.memory_space<vmem>>, vector<288x64xbf16>
    %cst = arith.constant dense<0.000000e+00> : vector<128x64xf32>
    %2 = tpu.matmul %0, %1, %cst {dimension_numbers = #tpu.dot_dimension_numbers<[1], [0], [0], [1], [0, 0, 1, 1], [], []>} : vector<128x288xbf16>, vector<288x64xbf16>, vector<128x64xf32> -> vector<128x64xf32>
    %3 = arith.truncf %2 : vector<128x64xf32> to vector<128x64xbf16>
    %c0_3 = arith.constant 0 : index
    %c0_4 = arith.constant 0 : index
    %4 = vector.load %arg3[%c0_3, %c0_4] : memref<128x64xbf16, #tpu.memory_space<vmem>>, vector<128x64xbf16>
    tpu.vector_store %arg3[%c0_3, %c0_4], %3 {strides = array<i32>} : memref<128x64xbf16, #tpu.memory_space<vmem>>, vector<128x64xbf16>,
    return
  }
  func.func @transform_0(%arg0: i32) -> (i32, i32) {
    %c0_i32 = arith.constant 0 : i32
    %c0_i32_0 = arith.constant 0 : i32
    return %arg0, %c0_i32 : i32, i32
  }
  func.func @transform_1(%arg0: i32) -> (i32, i32) {
    %c0_i32 = arith.constant 0 : i32
    %c0_i32_0 = arith.constant 0 : i32
    %c0_i32_1 = arith.constant 0 : i32
    return %c0_i32, %c0_i32_0 : i32, i32
  }
  func.func @transform_2(%arg0: i32) -> (i32, i32) {
    %c0_i32 = arith.constant 0 : i32
    %c0_i32_0 = arith.constant 0 : i32
    return %arg0, %c0_i32 : i32, i32
  }
}

module attributes {stable_mosaic.version = 11 : i64} {
  func.func @_matmul_kernel(%arg0: i32, %arg1: memref<512x144xbf16, #tpu.memory_space<vmem>>, %arg2: memref<144x32xbf16, #tpu.memory_space<vmem>>, %arg3: memref<512x32xbf16, #tpu.memory_space<vmem>>) attributes {dimension_semantics = [#tpu.dimension_semantics<parallel>], iteration_bounds = array<i64: 1>, scalar_prefetch = 0 : i64, scratch_operands = 0 : i64, tpu.core_type = #tpu.core_type<tc>, window_params = [{transform_indices = @transform_0, window_bounds = array<i64: 512, 144>}, {pipeline_mode = #tpu.pipeline_mode<synchronous>, transform_indices = @transform_1, window_bounds = array<i64: 144, 32>}, {transform_indices = @transform_2, window_bounds = array<i64: 512, 32>}]} {
    %c0 = arith.constant 0 : index
    %c0_0 = arith.constant 0 : index
    %0 = vector.load %arg1[%c0, %c0_0] : memref<512x144xbf16, #tpu.memory_space<vmem>>, vector<512x144xbf16>
    %c0_1 = arith.constant 0 : index
    %c0_2 = arith.constant 0 : index
    %1 = vector.load %arg2[%c0_1, %c0_2] : memref<144x32xbf16, #tpu.memory_space<vmem>>, vector<144x32xbf16>
    %cst = arith.constant dense<0.000000e+00> : vector<512x32xf32>
    %2 = tpu.matmul %0, %1, %cst {dimension_numbers = #tpu.dot_dimension_numbers<[1], [0], [0], [1], [0, 0, 1, 1], [], []>} : vector<512x144xbf16>, vector<144x32xbf16>, vector<512x32xf32> -> vector<512x32xf32>
    %3 = arith.truncf %2 : vector<512x32xf32> to vector<512x32xbf16>
    %c0_3 = arith.constant 0 : index
    %c0_4 = arith.constant 0 : index
    %4 = vector.load %arg3[%c0_3, %c0_4] : memref<512x32xbf16, #tpu.memory_space<vmem>>, vector<512x32xbf16>
    tpu.vector_store %arg3[%c0_3, %c0_4], %3 {strides = array<i32>} : memref<512x32xbf16, #tpu.memory_space<vmem>>, vector<512x32xbf16>,
    return
  }
  func.func @transform_0(%arg0: i32) -> (i32, i32) {
    %c0_i32 = arith.constant 0 : i32
    %c0_i32_0 = arith.constant 0 : i32
    return %arg0, %c0_i32 : i32, i32
  }
  func.func @transform_1(%arg0: i32) -> (i32, i32) {
    %c0_i32 = arith.constant 0 : i32
    %c0_i32_0 = arith.constant 0 : i32
    %c0_i32_1 = arith.constant 0 : i32
    return %c0_i32, %c0_i32_0 : i32, i32
  }
  func.func @transform_2(%arg0: i32) -> (i32, i32) {
    %c0_i32 = arith.constant 0 : i32
    %c0_i32_0 = arith.constant 0 : i32
    return %arg0, %c0_i32 : i32, i32
  }
}

module attributes {stable_mosaic.version = 11 : i64} {
  func.func @_bn_relu_kernel(%arg0: memref<128x128xbf16, #tpu.memory_space<vmem>>, %arg1: memref<1x128xf32, #tpu.memory_space<vmem>>, %arg2: memref<1x128xf32, #tpu.memory_space<vmem>>, %arg3: memref<128x128xbf16, #tpu.memory_space<vmem>>) attributes {dimension_semantics = [], scalar_prefetch = 0 : i64, scratch_operands = 0 : i64, tpu.core_type = #tpu.core_type<tc>} {
    %c0 = arith.constant 0 : index
    %c0_0 = arith.constant 0 : index
    %0 = vector.load %arg0[%c0, %c0_0] : memref<128x128xbf16, #tpu.memory_space<vmem>>, vector<128x128xbf16>
    %1 = arith.extf %0 : vector<128x128xbf16> to vector<128x128xf32>
    %cst = arith.constant dense<0.000000e+00> : vector<128xf32>
    %2 = vector.multi_reduction <add>, %1, %cst [0] : vector<128x128xf32> to vector<128xf32>
    %3 = vector.shape_cast %2 : vector<128xf32> to vector<1x128xf32>
    %4 = arith.mulf %1, %1 : vector<128x128xf32>
    %cst_1 = arith.constant dense<0.000000e+00> : vector<128xf32>
    %5 = vector.multi_reduction <add>, %4, %cst_1 [0] : vector<128x128xf32> to vector<128xf32>
    %6 = vector.shape_cast %5 : vector<128xf32> to vector<1x128xf32>
    %c8_i32 = arith.constant 8 : i32
    %7 = tpu.dynamic_rotate %3 by %c8_i32 dim 1 : vector<1x128xf32>, i32 -> vector<1x128xf32>
    %8 = arith.addf %3, %7 : vector<1x128xf32>
    %c8_i32_2 = arith.constant 8 : i32
    %9 = tpu.dynamic_rotate %6 by %c8_i32_2 dim 1 : vector<1x128xf32>, i32 -> vector<1x128xf32>
    %10 = arith.addf %6, %9 : vector<1x128xf32>
    %c16_i32 = arith.constant 16 : i32
    %11 = tpu.dynamic_rotate %8 by %c16_i32 dim 1 : vector<1x128xf32>, i32 -> vector<1x128xf32>
    %12 = arith.addf %8, %11 : vector<1x128xf32>
    %c16_i32_3 = arith.constant 16 : i32
    %13 = tpu.dynamic_rotate %10 by %c16_i32_3 dim 1 : vector<1x128xf32>, i32 -> vector<1x128xf32>
    %14 = arith.addf %10, %13 : vector<1x128xf32>
    %c32_i32 = arith.constant 32 : i32
    %15 = tpu.dynamic_rotate %12 by %c32_i32 dim 1 : vector<1x128xf32>, i32 -> vector<1x128xf32>
    %16 = arith.addf %12, %15 : vector<1x128xf32>
    %c32_i32_4 = arith.constant 32 : i32
    %17 = tpu.dynamic_rotate %14 by %c32_i32_4 dim 1 : vector<1x128xf32>, i32 -> vector<1x128xf32>
    %18 = arith.addf %14, %17 : vector<1x128xf32>
    %c64_i32 = arith.constant 64 : i32
    %19 = tpu.dynamic_rotate %16 by %c64_i32 dim 1 : vector<1x128xf32>, i32 -> vector<1x128xf32>
    %20 = arith.addf %16, %19 : vector<1x128xf32>
    %c64_i32_5 = arith.constant 64 : i32
    %21 = tpu.dynamic_rotate %18 by %c64_i32_5 dim 1 : vector<1x128xf32>, i32 -> vector<1x128xf32>
    %22 = arith.addf %18, %21 : vector<1x128xf32>
    %cst_6 = arith.constant 4.8828125E-4 : f32
    %23 = vector.broadcast %cst_6 : f32 to vector<1x128xf32>
    %24 = arith.mulf %20, %23 : vector<1x128xf32>
    %cst_7 = arith.constant 4.8828125E-4 : f32
    %25 = vector.broadcast %cst_7 : f32 to vector<1x128xf32>
    %26 = arith.mulf %22, %25 : vector<1x128xf32>
    %27 = arith.mulf %24, %24 : vector<1x128xf32>
    %28 = arith.subf %26, %27 : vector<1x128xf32>
    %c0_8 = arith.constant 0 : index
    %c0_9 = arith.constant 0 : index
    %29 = vector.load %arg1[%c0_8, %c0_9] : memref<1x128xf32, #tpu.memory_space<vmem>>, vector<1x128xf32>
    %cst_10 = arith.constant 9.99999974E-6 : f32
    %30 = vector.broadcast %cst_10 : f32 to vector<1x128xf32>
    %31 = arith.addf %28, %30 : vector<1x128xf32>
    %32 = math.rsqrt %31 : vector<1x128xf32>
    %33 = arith.mulf %29, %32 : vector<1x128xf32>
    %c0_11 = arith.constant 0 : index
    %c0_12 = arith.constant 0 : index
    %34 = vector.load %arg2[%c0_11, %c0_12] : memref<1x128xf32, #tpu.memory_space<vmem>>, vector<1x128xf32>
    %35 = arith.mulf %24, %33 : vector<1x128xf32>
    %36 = arith.subf %34, %35 : vector<1x128xf32>
    %c0_13 = arith.constant 0 : index
    %c0_14 = arith.constant 0 : index
    %37 = vector.load %arg0[%c0_13, %c0_14] : memref<128x128xbf16, #tpu.memory_space<vmem>>, vector<128x128xbf16>
    %38 = arith.extf %37 : vector<128x128xbf16> to vector<128x128xf32>
    %39 = vector.broadcast %33 : vector<1x128xf32> to vector<128x128xf32>
    %40 = arith.mulf %38, %39 : vector<128x128xf32>
    %41 = vector.broadcast %36 : vector<1x128xf32> to vector<128x128xf32>
    %42 = arith.addf %40, %41 : vector<128x128xf32>
    %cst_15 = arith.constant 0.000000e+00 : f32
    %43 = vector.broadcast %cst_15 : f32 to vector<128x128xf32>
    %44 = arith.maximumf %42, %43 : vector<128x128xf32>
    %45 = arith.truncf %44 : vector<128x128xf32> to vector<128x128xbf16>
    %c0_16 = arith.constant 0 : index
    %c0_17 = arith.constant 0 : index
    %46 = vector.load %arg3[%c0_16, %c0_17] : memref<128x128xbf16, #tpu.memory_space<vmem>>, vector<128x128xbf16>
    tpu.vector_store %arg3[%c0_16, %c0_17], %45 {strides = array<i32>} : memref<128x128xbf16, #tpu.memory_space<vmem>>, vector<128x128xbf16>,
    return
  }
}

module attributes {stable_mosaic.version = 11 : i64} {
  func.func @_matmul_kernel(%arg0: i32, %arg1: memref<1024x72xbf16, #tpu.memory_space<vmem>>, %arg2: memref<72x32xbf16, #tpu.memory_space<vmem>>, %arg3: memref<1024x32xbf16, #tpu.memory_space<vmem>>) attributes {dimension_semantics = [#tpu.dimension_semantics<parallel>], iteration_bounds = array<i64: 2>, scalar_prefetch = 0 : i64, scratch_operands = 0 : i64, tpu.core_type = #tpu.core_type<tc>, window_params = [{transform_indices = @transform_0, window_bounds = array<i64: 1024, 72>}, {pipeline_mode = #tpu.pipeline_mode<synchronous>, transform_indices = @transform_1, window_bounds = array<i64: 72, 32>}, {transform_indices = @transform_2, window_bounds = array<i64: 1024, 32>}]} {
    %c0 = arith.constant 0 : index
    %c0_0 = arith.constant 0 : index
    %0 = vector.load %arg1[%c0, %c0_0] : memref<1024x72xbf16, #tpu.memory_space<vmem>>, vector<1024x72xbf16>
    %c0_1 = arith.constant 0 : index
    %c0_2 = arith.constant 0 : index
    %1 = vector.load %arg2[%c0_1, %c0_2] : memref<72x32xbf16, #tpu.memory_space<vmem>>, vector<72x32xbf16>
    %cst = arith.constant dense<0.000000e+00> : vector<1024x32xf32>
    %2 = tpu.matmul %0, %1, %cst {dimension_numbers = #tpu.dot_dimension_numbers<[1], [0], [0], [1], [0, 0, 1, 1], [], []>} : vector<1024x72xbf16>, vector<72x32xbf16>, vector<1024x32xf32> -> vector<1024x32xf32>
    %3 = arith.truncf %2 : vector<1024x32xf32> to vector<1024x32xbf16>
    %c0_3 = arith.constant 0 : index
    %c0_4 = arith.constant 0 : index
    %4 = vector.load %arg3[%c0_3, %c0_4] : memref<1024x32xbf16, #tpu.memory_space<vmem>>, vector<1024x32xbf16>
    tpu.vector_store %arg3[%c0_3, %c0_4], %3 {strides = array<i32>} : memref<1024x32xbf16, #tpu.memory_space<vmem>>, vector<1024x32xbf16>,
    return
  }
  func.func @transform_0(%arg0: i32) -> (i32, i32) {
    %c0_i32 = arith.constant 0 : i32
    %c0_i32_0 = arith.constant 0 : i32
    return %arg0, %c0_i32 : i32, i32
  }
  func.func @transform_1(%arg0: i32) -> (i32, i32) {
    %c0_i32 = arith.constant 0 : i32
    %c0_i32_0 = arith.constant 0 : i32
    %c0_i32_1 = arith.constant 0 : i32
    return %c0_i32, %c0_i32_0 : i32, i32
  }
  func.func @transform_2(%arg0: i32) -> (i32, i32) {
    %c0_i32 = arith.constant 0 : i32
    %c0_i32_0 = arith.constant 0 : i32
    return %arg0, %c0_i32 : i32, i32
  }
}

module attributes {stable_mosaic.version = 11 : i64} {
  func.func @_bn_relu_kernel(%arg0: memref<512x128xbf16, #tpu.memory_space<vmem>>, %arg1: memref<1x128xf32, #tpu.memory_space<vmem>>, %arg2: memref<1x128xf32, #tpu.memory_space<vmem>>, %arg3: memref<512x128xbf16, #tpu.memory_space<vmem>>) attributes {dimension_semantics = [], scalar_prefetch = 0 : i64, scratch_operands = 0 : i64, tpu.core_type = #tpu.core_type<tc>} {
    %c0 = arith.constant 0 : index
    %c0_0 = arith.constant 0 : index
    %0 = vector.load %arg0[%c0, %c0_0] : memref<512x128xbf16, #tpu.memory_space<vmem>>, vector<512x128xbf16>
    %1 = arith.extf %0 : vector<512x128xbf16> to vector<512x128xf32>
    %cst = arith.constant dense<0.000000e+00> : vector<128xf32>
    %2 = vector.multi_reduction <add>, %1, %cst [0] : vector<512x128xf32> to vector<128xf32>
    %3 = vector.shape_cast %2 : vector<128xf32> to vector<1x128xf32>
    %4 = arith.mulf %1, %1 : vector<512x128xf32>
    %cst_1 = arith.constant dense<0.000000e+00> : vector<128xf32>
    %5 = vector.multi_reduction <add>, %4, %cst_1 [0] : vector<512x128xf32> to vector<128xf32>
    %6 = vector.shape_cast %5 : vector<128xf32> to vector<1x128xf32>
    %c8_i32 = arith.constant 8 : i32
    %7 = tpu.dynamic_rotate %3 by %c8_i32 dim 1 : vector<1x128xf32>, i32 -> vector<1x128xf32>
    %8 = arith.addf %3, %7 : vector<1x128xf32>
    %c8_i32_2 = arith.constant 8 : i32
    %9 = tpu.dynamic_rotate %6 by %c8_i32_2 dim 1 : vector<1x128xf32>, i32 -> vector<1x128xf32>
    %10 = arith.addf %6, %9 : vector<1x128xf32>
    %c16_i32 = arith.constant 16 : i32
    %11 = tpu.dynamic_rotate %8 by %c16_i32 dim 1 : vector<1x128xf32>, i32 -> vector<1x128xf32>
    %12 = arith.addf %8, %11 : vector<1x128xf32>
    %c16_i32_3 = arith.constant 16 : i32
    %13 = tpu.dynamic_rotate %10 by %c16_i32_3 dim 1 : vector<1x128xf32>, i32 -> vector<1x128xf32>
    %14 = arith.addf %10, %13 : vector<1x128xf32>
    %c32_i32 = arith.constant 32 : i32
    %15 = tpu.dynamic_rotate %12 by %c32_i32 dim 1 : vector<1x128xf32>, i32 -> vector<1x128xf32>
    %16 = arith.addf %12, %15 : vector<1x128xf32>
    %c32_i32_4 = arith.constant 32 : i32
    %17 = tpu.dynamic_rotate %14 by %c32_i32_4 dim 1 : vector<1x128xf32>, i32 -> vector<1x128xf32>
    %18 = arith.addf %14, %17 : vector<1x128xf32>
    %c64_i32 = arith.constant 64 : i32
    %19 = tpu.dynamic_rotate %16 by %c64_i32 dim 1 : vector<1x128xf32>, i32 -> vector<1x128xf32>
    %20 = arith.addf %16, %19 : vector<1x128xf32>
    %c64_i32_5 = arith.constant 64 : i32
    %21 = tpu.dynamic_rotate %18 by %c64_i32_5 dim 1 : vector<1x128xf32>, i32 -> vector<1x128xf32>
    %22 = arith.addf %18, %21 : vector<1x128xf32>
    %cst_6 = arith.constant 1.22070313E-4 : f32
    %23 = vector.broadcast %cst_6 : f32 to vector<1x128xf32>
    %24 = arith.mulf %20, %23 : vector<1x128xf32>
    %cst_7 = arith.constant 1.22070313E-4 : f32
    %25 = vector.broadcast %cst_7 : f32 to vector<1x128xf32>
    %26 = arith.mulf %22, %25 : vector<1x128xf32>
    %27 = arith.mulf %24, %24 : vector<1x128xf32>
    %28 = arith.subf %26, %27 : vector<1x128xf32>
    %c0_8 = arith.constant 0 : index
    %c0_9 = arith.constant 0 : index
    %29 = vector.load %arg1[%c0_8, %c0_9] : memref<1x128xf32, #tpu.memory_space<vmem>>, vector<1x128xf32>
    %cst_10 = arith.constant 9.99999974E-6 : f32
    %30 = vector.broadcast %cst_10 : f32 to vector<1x128xf32>
    %31 = arith.addf %28, %30 : vector<1x128xf32>
    %32 = math.rsqrt %31 : vector<1x128xf32>
    %33 = arith.mulf %29, %32 : vector<1x128xf32>
    %c0_11 = arith.constant 0 : index
    %c0_12 = arith.constant 0 : index
    %34 = vector.load %arg2[%c0_11, %c0_12] : memref<1x128xf32, #tpu.memory_space<vmem>>, vector<1x128xf32>
    %35 = arith.mulf %24, %33 : vector<1x128xf32>
    %36 = arith.subf %34, %35 : vector<1x128xf32>
    %c0_13 = arith.constant 0 : index
    %c0_14 = arith.constant 0 : index
    %37 = vector.load %arg0[%c0_13, %c0_14] : memref<512x128xbf16, #tpu.memory_space<vmem>>, vector<512x128xbf16>
    %38 = arith.extf %37 : vector<512x128xbf16> to vector<512x128xf32>
    %39 = vector.broadcast %33 : vector<1x128xf32> to vector<512x128xf32>
    %40 = arith.mulf %38, %39 : vector<512x128xf32>
    %41 = vector.broadcast %36 : vector<1x128xf32> to vector<512x128xf32>
    %42 = arith.addf %40, %41 : vector<512x128xf32>
    %cst_15 = arith.constant 0.000000e+00 : f32
    %43 = vector.broadcast %cst_15 : f32 to vector<512x128xf32>
    %44 = arith.maximumf %42, %43 : vector<512x128xf32>
    %45 = arith.truncf %44 : vector<512x128xf32> to vector<512x128xbf16>
    %c0_16 = arith.constant 0 : index
    %c0_17 = arith.constant 0 : index
    %46 = vector.load %arg3[%c0_16, %c0_17] : memref<512x128xbf16, #tpu.memory_space<vmem>>, vector<512x128xbf16>
    tpu.vector_store %arg3[%c0_16, %c0_17], %45 {strides = array<i32>} : memref<512x128xbf16, #tpu.memory_space<vmem>>, vector<512x128xbf16>,
    return
  }
}

module attributes {stable_mosaic.version = 11 : i64} {
  func.func @_matmul_tanh_kernel(%arg0: i32, %arg1: memref<2048x72xbf16, #tpu.memory_space<vmem>>, %arg2: memref<72x12xbf16, #tpu.memory_space<vmem>>, %arg3: memref<2048x12xf32, #tpu.memory_space<vmem>>) attributes {dimension_semantics = [#tpu.dimension_semantics<parallel>], iteration_bounds = array<i64: 4>, scalar_prefetch = 0 : i64, scratch_operands = 0 : i64, tpu.core_type = #tpu.core_type<tc>, window_params = [{transform_indices = @transform_0, window_bounds = array<i64: 2048, 72>}, {pipeline_mode = #tpu.pipeline_mode<synchronous>, transform_indices = @transform_1, window_bounds = array<i64: 72, 12>}, {transform_indices = @transform_2, window_bounds = array<i64: 2048, 12>}]} {
    %c0 = arith.constant 0 : index
    %c0_0 = arith.constant 0 : index
    %0 = vector.load %arg1[%c0, %c0_0] : memref<2048x72xbf16, #tpu.memory_space<vmem>>, vector<2048x72xbf16>
    %c0_1 = arith.constant 0 : index
    %c0_2 = arith.constant 0 : index
    %1 = vector.load %arg2[%c0_1, %c0_2] : memref<72x12xbf16, #tpu.memory_space<vmem>>, vector<72x12xbf16>
    %cst = arith.constant dense<0.000000e+00> : vector<2048x12xf32>
    %2 = tpu.matmul %0, %1, %cst {dimension_numbers = #tpu.dot_dimension_numbers<[1], [0], [0], [1], [0, 0, 1, 1], [], []>} : vector<2048x72xbf16>, vector<72x12xbf16>, vector<2048x12xf32> -> vector<2048x12xf32>
    %3 = math.tanh %2 : vector<2048x12xf32>
    %c0_3 = arith.constant 0 : index
    %c0_4 = arith.constant 0 : index
    %4 = vector.load %arg3[%c0_3, %c0_4] : memref<2048x12xf32, #tpu.memory_space<vmem>>, vector<2048x12xf32>
    tpu.vector_store %arg3[%c0_3, %c0_4], %3 {strides = array<i32>} : memref<2048x12xf32, #tpu.memory_space<vmem>>, vector<2048x12xf32>,
    return
  }
  func.func @transform_0(%arg0: i32) -> (i32, i32) {
    %c0_i32 = arith.constant 0 : i32
    %c0_i32_0 = arith.constant 0 : i32
    return %arg0, %c0_i32 : i32, i32
  }
  func.func @transform_1(%arg0: i32) -> (i32, i32) {
    %c0_i32 = arith.constant 0 : i32
    %c0_i32_0 = arith.constant 0 : i32
    %c0_i32_1 = arith.constant 0 : i32
    return %c0_i32, %c0_i32_0 : i32, i32
  }
  func.func @transform_2(%arg0: i32) -> (i32, i32) {
    %c0_i32 = arith.constant 0 : i32
    %c0_i32_0 = arith.constant 0 : i32
    return %arg0, %c0_i32 : i32, i32
  }
}

</mosaic_0001>

<llo_original>
// kernel: tile.64
$region0: #{tile.64}
  %s0 = inlined_call_operand.vmem [shape: f32[4,32], index: 0, kind: input, shape index: {}]
  %s1 = inlined_call_operand.vmem [shape: f32[1,128], index: 1, kind: output, shape index: {}]
  $region1: #{tile.64} parent=0
    #allocation0 [shape = 'u8[4096]{0}', space=vmem, size = 0x1000, scoped, tag = 'scoped mem for output reshape']
    #allocation1 [shape = 'u8[4096]{0}', space=vmem, size = 0x1000, scoped, tag = 'scoped mem for input reshape']
    %s3 = sshll.u32 1, 4
    %s4 = ssub.s32 %s3, 1
    %v5 = vld [vmem:[%s0] sm:%s4]
    %6 = vst [vmem:[#allocation1] sm:%s4] %v5
    %v7 = vld [vmem:[#allocation1] sm:$0x1]
    %vm8 = vcmask 261120
    %9 = vst.msk [vmem:[#allocation0] sm:$0x1] %vm8, %v7
    %s10 = scalar_lea.vmem [#allocation1], 3
    %v11 = vld [vmem:[%s10] sm:$0x1]
    %12 = vrot.lane.b32.xlu0 %v11, 96
    %v13 = vpop.permute.xlu0 %12
    %vm14 = vcmask 1048320
    %15 = vst.msk [vmem:[#allocation0] sm:$0x1] %vm14, %v13
    %s16 = scalar_lea.vmem [#allocation1], 2
    %v17 = vld [vmem:[%s16] sm:$0x1]
    %18 = vrot.lane.b32.xlu0 %v17, 64
    %v19 = vpop.permute.xlu0 %18
    %vm20 = vcmask 785920
    %21 = vst.msk [vmem:[#allocation0] sm:$0x1] %vm20, %v19
    %s22 = scalar_lea.vmem [#allocation1], 1
    %v23 = vld [vmem:[%s22] sm:$0x1]
    %24 = vrot.lane.b32.xlu0 %v23, 32
    %v25 = vpop.permute.xlu0 %24
    %vm26 = vcmask 523520
    %27 = vst.msk [vmem:[#allocation0] sm:$0x1] %vm26, %v25
    %s29 = sshll.u32 1, 1
    %s30 = ssub.s32 %s29, 1
    %v32 = vld [vmem:[#allocation0] sm:%s30]
    %s33 = sshll.u32 1, 1
    %s34 = ssub.s32 %s33, 1
    %35 = vst [vmem:[%s1] sm:%s34] %v32

// kernel: tile.54
$region0: #{tile.54}
  %s0 = inlined_call_operand.vmem [shape: f32[2,64], index: 0, kind: input, shape index: {}]
  %s1 = inlined_call_operand.vmem [shape: f32[1,128], index: 1, kind: output, shape index: {}]
  $region1: #{tile.54} parent=0
    #allocation0 [shape = 'u8[4096]{0}', space=vmem, size = 0x1000, scoped, tag = 'scoped mem for output reshape']
    #allocation1 [shape = 'u8[4096]{0}', space=vmem, size = 0x1000, scoped, tag = 'scoped mem for input reshape']
    %s3 = sshll.u32 1, 2
    %s4 = ssub.s32 %s3, 1
    %v5 = vld [vmem:[%s0] sm:%s4]
    %6 = vst [vmem:[#allocation1] sm:%s4] %v5
    %v7 = vld [vmem:[#allocation1] sm:$0x1]
    %vm8 = vcmask 523264
    %9 = vst.msk [vmem:[#allocation0] sm:$0x1] %vm8, %v7
    %s10 = scalar_lea.vmem [#allocation1], 1
    %v11 = vld [vmem:[%s10] sm:$0x1]
    %12 = vrot.lane.b32.xlu0 %v11, 64
    %v13 = vpop.permute.xlu0 %12
    %vm14 = vcmask 1048064
    %15 = vst.msk [vmem:[#allocation0] sm:$0x1] %vm14, %v13
    %s17 = sshll.u32 1, 1
    %s18 = ssub.s32 %s17, 1
    %v20 = vld [vmem:[#allocation0] sm:%s18]
    %s21 = sshll.u32 1, 1
    %s22 = ssub.s32 %s21, 1
    %23 = vst [vmem:[%s1] sm:%s22] %v20

// kernel: tile.53
$region0: #{tile.53}
  #allocation2 [shape = 's32[1]{0}', space=sflag, size = 0x4, scoped, tag = 'scoped memory for tile.53']
  %s0 = inlined_call_operand.hbm [shape: f32[64], index: 0, kind: input, shape index: {}]
  %s1 = inlined_call_operand.vmem [shape: f32[2,64], index: 1, kind: output, shape index: {}]
  $region1: #{tile.53} parent=0
    #allocation0 [shape = 'u8[512]{0}', space=vmem, size = 0x400, scoped, tag = 'operand span for operand 0']
    #allocation1 [shape = 's32[1]{0}', space=sflag, size = 0x4, scoped, tag = 'scoped memory for tile.53']
    %2 = vsyncpa [#allocation1], 0
    // Predicated region
    $region2: #{tile.53} parent=1 // pred_check
      _
    $region3: #{tile.53} parent=1 // pred_check_branch
      %4 = sbr.rel (0) target = $region5
    $region4: #{tile.53} parent=1 // pred_region
      %s6 = ssub.s32 16, 16
      %7 = vsyncadd [#allocation1], %s6
      %s9 = sshll.u32 [#allocation0], 4
      %s10 = int_to_ptr.vmem [resolvable:$true] %s9
      %12 = dma.hbm_to_vmem [thread:$0]  %s0, 16, %s10, [#allocation1]
    $region5: #{tile.53} parent=1 // pred_fallthru
      _
    // Predicated region
    $region6: #{tile.53} parent=1 // pred_check
      _
    $region7: #{tile.53} parent=1 // pred_check_branch
      %14 = sbr.rel (0) target = $region9
    $region8: #{tile.53} parent=1 // pred_region
      %15 = dma.done [#allocation1], 16
    $region9: #{tile.53} parent=1 // pred_fallthru
      _
    %v16 = vld [vmem:[#allocation0] ss:$0 sm:$0xff]
    %17 = vst [vmem:[%s1] sm:$0x3] %v16
    %18 = vsyncpa [#allocation1], 1

// kernel: tile.63
$region0: #{tile.63}
  #allocation2 [shape = 's32[1]{0}', space=sflag, size = 0x4, scoped, tag = 'scoped memory for tile.63']
  %s0 = inlined_call_operand.hbm [shape: f32[32], index: 0, kind: input, shape index: {}]
  %s1 = inlined_call_operand.vmem [shape: f32[4,32], index: 1, kind: output, shape index: {}]
  $region1: #{tile.63} parent=0
    #allocation0 [shape = 'u8[512]{0}', space=vmem, size = 0x400, scoped, tag = 'operand span for operand 0']
    #allocation1 [shape = 's32[1]{0}', space=sflag, size = 0x4, scoped, tag = 'scoped memory for tile.63']
    %2 = vsyncpa [#allocation1], 0
    // Predicated region
    $region2: #{tile.63} parent=1 // pred_check
      _
    $region3: #{tile.63} parent=1 // pred_check_branch
      %4 = sbr.rel (0) target = $region5
    $region4: #{tile.63} parent=1 // pred_region
      %s6 = ssub.s32 16, 16
      %7 = vsyncadd [#allocation1], %s6
      %s9 = sshll.u32 [#allocation0], 4
      %s10 = int_to_ptr.vmem [resolvable:$true] %s9
      %12 = dma.hbm_to_vmem [thread:$0]  %s0, 16, %s10, [#allocation1]
    $region5: #{tile.63} parent=1 // pred_fallthru
      _
    // Predicated region
    $region6: #{tile.63} parent=1 // pred_check
      _
    $region7: #{tile.63} parent=1 // pred_check_branch
      %14 = sbr.rel (0) target = $region9
    $region8: #{tile.63} parent=1 // pred_region
      %15 = dma.done [#allocation1], 16
    $region9: #{tile.63} parent=1 // pred_fallthru
      _
    %v16 = vld [vmem:[#allocation0] ss:$0 sm:$0xff]
    %17 = vst [vmem:[%s1] sm:$0xf] %v16
    %18 = vsyncpa [#allocation1], 1

// kernel: tile.73
$region0: #{tile.73}
  #allocation2 [shape = 's32[1]{0}', space=sflag, size = 0x4, scoped, tag = 'scoped memory for tile.73']
  %s0 = inlined_call_operand.hbm [shape: f32[16], index: 0, kind: input, shape index: {}]
  %s1 = inlined_call_operand.vmem [shape: f32[8,16], index: 1, kind: output, shape index: {}]
  $region1: #{tile.73} parent=0
    #allocation0 [shape = 'u8[512]{0}', space=vmem, size = 0x400, scoped, tag = 'operand span for operand 0']
    #allocation1 [shape = 's32[1]{0}', space=sflag, size = 0x4, scoped, tag = 'scoped memory for tile.73']
    %2 = vsyncpa [#allocation1], 0
    // Predicated region
    $region2: #{tile.73} parent=1 // pred_check
      _
    $region3: #{tile.73} parent=1 // pred_check_branch
      %4 = sbr.rel (0) target = $region5
    $region4: #{tile.73} parent=1 // pred_region
      %s6 = ssub.s32 16, 16
      %7 = vsyncadd [#allocation1], %s6
      %s9 = sshll.u32 [#allocation0], 4
      %s10 = int_to_ptr.vmem [resolvable:$true] %s9
      %12 = dma.hbm_to_vmem [thread:$0]  %s0, 16, %s10, [#allocation1]
    $region5: #{tile.73} parent=1 // pred_fallthru
      _
    // Predicated region
    $region6: #{tile.73} parent=1 // pred_check
      _
    $region7: #{tile.73} parent=1 // pred_check_branch
      %14 = sbr.rel (0) target = $region9
    $region8: #{tile.73} parent=1 // pred_region
      %15 = dma.done [#allocation1], 16
    $region9: #{tile.73} parent=1 // pred_fallthru
      _
    %v16 = vld [vmem:[#allocation0] ss:$0 sm:$0xff]
    %17 = vst [vmem:[%s1] sm:$0xff] %v16
    %18 = vsyncpa [#allocation1], 1

// kernel: tile.74
$region0: #{tile.74}
  %s0 = inlined_call_operand.vmem [shape: f32[8,16], index: 0, kind: input, shape index: {}]
  %s1 = inlined_call_operand.vmem [shape: f32[1,128], index: 1, kind: output, shape index: {}]
  $region1: #{tile.74} parent=0
    #allocation0 [shape = 'u8[4096]{0}', space=vmem, size = 0x1000, scoped, tag = 'scoped mem for output reshape']
    %v2 = vld [vmem:[%s0] sm:$0x1]
    %vm3 = vcmask 130048
    %4 = vst.msk [vmem:[#allocation0] sm:$0x1] %vm3, %v2
    %s5 = scalar_lea.vmem %s0, 7
    %v6 = vld [vmem:[%s5] sm:$0x1]
    %7 = vrot.lane.b32.xlu0 %v6, 112
    %v8 = vpop.permute.xlu0 %7
    %vm9 = vcmask 1048448
    %10 = vst.msk [vmem:[#allocation0] sm:$0x1] %vm9, %v8
    %s11 = scalar_lea.vmem %s0, 6
    %v12 = vld [vmem:[%s11] sm:$0x1]
    %13 = vrot.lane.b32.xlu0 %v12, 96
    %v14 = vpop.permute.xlu0 %13
    %vm15 = vcmask 917248
    %16 = vst.msk [vmem:[#allocation0] sm:$0x1] %vm15, %v14
    %s17 = scalar_lea.vmem %s0, 5
    %v18 = vld [vmem:[%s17] sm:$0x1]
    %19 = vrot.lane.b32.xlu0 %v18, 80
    %v20 = vpop.permute.xlu0 %19
    %vm21 = vcmask 786048
    %22 = vst.msk [vmem:[#allocation0] sm:$0x1] %vm21, %v20
    %s23 = scalar_lea.vmem %s0, 4
    %v24 = vld [vmem:[%s23] sm:$0x1]
    %25 = vrot.lane.b32.xlu0 %v24, 64
    %v26 = vpop.permute.xlu0 %25
    %vm27 = vcmask 654848
    %28 = vst.msk [vmem:[#allocation0] sm:$0x1] %vm27, %v26
    %s29 = scalar_lea.vmem %s0, 3
    %v30 = vld [vmem:[%s29] sm:$0x1]
    %31 = vrot.lane.b32.xlu0 %v30, 48
    %v32 = vpop.permute.xlu0 %31
    %vm33 = vcmask 523648
    %34 = vst.msk [vmem:[#allocation0] sm:$0x1] %vm33, %v32
    %s35 = scalar_lea.vmem %s0, 2
    %v36 = vld [vmem:[%s35] sm:$0x1]
    %37 = vrot.lane.b32.xlu0 %v36, 32
    %v38 = vpop.permute.xlu0 %37
    %vm39 = vcmask 392448
    %40 = vst.msk [vmem:[#allocation0] sm:$0x1] %vm39, %v38
    %s41 = scalar_lea.vmem %s0, 1
    %v42 = vld [vmem:[%s41] sm:$0x1]
    %43 = vrot.lane.b32.xlu0 %v42, 16
    %v44 = vpop.permute.xlu0 %43
    %vm45 = vcmask 261248
    %46 = vst.msk [vmem:[#allocation0] sm:$0x1] %vm45, %v44
    %s48 = sshll.u32 1, 1
    %s49 = ssub.s32 %s48, 1
    %v51 = vld [vmem:[#allocation0] sm:%s49]
    %s52 = sshll.u32 1, 1
    %s53 = ssub.s32 %s52, 1
    %54 = vst [vmem:[%s1] sm:%s53] %v51

// kernel: tile.83
$region0: #{tile.83}
  #allocation2 [shape = 's32[1]{0}', space=sflag, size = 0x4, scoped, tag = 'scoped memory for tile.83']
  %s0 = inlined_call_operand.hbm [shape: f32[8], index: 0, kind: input, shape index: {}]
  %s1 = inlined_call_operand.vmem [shape: f32[16,8], index: 1, kind: output, shape index: {}]
  $region1: #{tile.83} parent=0
    #allocation0 [shape = 'u8[512]{0}', space=vmem, size = 0x400, scoped, tag = 'operand span for operand 0']
    #allocation1 [shape = 's32[1]{0}', space=sflag, size = 0x4, scoped, tag = 'scoped memory for tile.83']
    %2 = vsyncpa [#allocation1], 0
    // Predicated region
    $region2: #{tile.83} parent=1 // pred_check
      _
    $region3: #{tile.83} parent=1 // pred_check_branch
      %4 = sbr.rel (0) target = $region5
    $region4: #{tile.83} parent=1 // pred_region
      %s6 = ssub.s32 16, 16
      %7 = vsyncadd [#allocation1], %s6
      %s9 = sshll.u32 [#allocation0], 4
      %s10 = int_to_ptr.vmem [resolvable:$true] %s9
      %12 = dma.hbm_to_vmem [thread:$0]  %s0, 16, %s10, [#allocation1]
    $region5: #{tile.83} parent=1 // pred_fallthru
      _
    // Predicated region
    $region6: #{tile.83} parent=1 // pred_check
      _
    $region7: #{tile.83} parent=1 // pred_check_branch
      %14 = sbr.rel (0) target = $region9
    $region8: #{tile.83} parent=1 // pred_region
      %15 = dma.done [#allocation1], 16
    $region9: #{tile.83} parent=1 // pred_fallthru
      _
    %v16 = vld [vmem:[#allocation0] ss:$0 sm:$0xff]
    %17 = vst [vmem:[%s1] sm:$0xff] %v16
    %s18 = scalar_lea.vmem %s1, 8
    %19 = vst [vmem:[%s18] sm:$0xff] %v16
    %20 = vsyncpa [#allocation1], 1

// kernel: tile.84
$region0: #{tile.84}
  %s0 = inlined_call_operand.vmem [shape: f32[16,8], index: 0, kind: input, shape index: {}]
  %s1 = inlined_call_operand.vmem [shape: f32[1,128], index: 1, kind: output, shape index: {}]
  $region1: #{tile.84} parent=0
    #allocation0 [shape = 'u8[4096]{0}', space=vmem, size = 0x1000, scoped, tag = 'scoped mem for output reshape']
    %v2 = vld [vmem:[%s0] sm:$0x1]
    %vm3 = vcmask 64512
    %4 = vst.msk [vmem:[#allocation0] sm:$0x1] %vm3, %v2
    %s5 = scalar_lea.vmem %s0, 15
    %v6 = vld [vmem:[%s5] sm:$0x1]
    %7 = vrot.lane.b32.xlu0 %v6, 120
    %v8 = vpop.permute.xlu0 %7
    %vm9 = vcmask 1048512
    %10 = vst.msk [vmem:[#allocation0] sm:$0x1] %vm9, %v8
    %s11 = scalar_lea.vmem %s0, 14
    %v12 = vld [vmem:[%s11] sm:$0x1]
    %13 = vrot.lane.b32.xlu0 %v12, 112
    %v14 = vpop.permute.xlu0 %13
    %vm15 = vcmask 982912
    %16 = vst.msk [vmem:[#allocation0] sm:$0x1] %vm15, %v14
    %s17 = scalar_lea.vmem %s0, 13
    %v18 = vld [vmem:[%s17] sm:$0x1]
    %19 = vrot.lane.b32.xlu0 %v18, 104
    %v20 = vpop.permute.xlu0 %19
    %vm21 = vcmask 917312
    %22 = vst.msk [vmem:[#allocation0] sm:$0x1] %vm21, %v20
    %s23 = scalar_lea.vmem %s0, 12
    %v24 = vld [vmem:[%s23] sm:$0x1]
    %25 = vrot.lane.b32.xlu0 %v24, 96
    %v26 = vpop.permute.xlu0 %25
    %vm27 = vcmask 851712
    %28 = vst.msk [vmem:[#allocation0] sm:$0x1] %vm27, %v26
    %s29 = scalar_lea.vmem %s0, 11
    %v30 = vld [vmem:[%s29] sm:$0x1]
    %31 = vrot.lane.b32.xlu0 %v30, 88
    %v32 = vpop.permute.xlu0 %31
    %vm33 = vcmask 786112
    %34 = vst.msk [vmem:[#allocation0] sm:$0x1] %vm33, %v32
    %s35 = scalar_lea.vmem %s0, 10
    %v36 = vld [vmem:[%s35] sm:$0x1]
    %37 = vrot.lane.b32.xlu0 %v36, 80
    %v38 = vpop.permute.xlu0 %37
    %vm39 = vcmask 720512
    %40 = vst.msk [vmem:[#allocation0] sm:$0x1] %vm39, %v38
    %s41 = scalar_lea.vmem %s0, 9
    %v42 = vld [vmem:[%s41] sm:$0x1]
    %43 = vrot.lane.b32.xlu0 %v42, 72
    %v44 = vpop.permute.xlu0 %43
    %vm45 = vcmask 654912
    %46 = vst.msk [vmem:[#allocation0] sm:$0x1] %vm45, %v44
    %s47 = scalar_lea.vmem %s0, 8
    %v48 = vld [vmem:[%s47] sm:$0x1]
    %49 = vrot.lane.b32.xlu0 %v48, 64
    %v50 = vpop.permute.xlu0 %49
    %vm51 = vcmask 589312
    %52 = vst.msk [vmem:[#allocation0] sm:$0x1] %vm51, %v50
    %s53 = scalar_lea.vmem %s0, 7
    %v54 = vld [vmem:[%s53] sm:$0x1]
    %55 = vrot.lane.b32.xlu0 %v54, 56
    %v56 = vpop.permute.xlu0 %55
    %vm57 = vcmask 523712
    %58 = vst.msk [vmem:[#allocation0] sm:$0x1] %vm57, %v56
    %s59 = scalar_lea.vmem %s0, 6
    %v60 = vld [vmem:[%s59] sm:$0x1]
    %61 = vrot.lane.b32.xlu0 %v60, 48
    %v62 = vpop.permute.xlu0 %61
    %vm63 = vcmask 458112
    %64 = vst.msk [vmem:[#allocation0] sm:$0x1] %vm63, %v62
    %s65 = scalar_lea.vmem %s0, 5
    %v66 = vld [vmem:[%s65] sm:$0x1]
    %67 = vrot.lane.b32.xlu0 %v66, 40
    %v68 = vpop.permute.xlu0 %67
    %vm69 = vcmask 392512
    %70 = vst.msk [vmem:[#allocation0] sm:$0x1] %vm69, %v68
    %s71 = scalar_lea.vmem %s0, 4
    %v72 = vld [vmem:[%s71] sm:$0x1]
    %73 = vrot.lane.b32.xlu0 %v72, 32
    %v74 = vpop.permute.xlu0 %73
    %vm75 = vcmask 326912
    %76 = vst.msk [vmem:[#allocation0] sm:$0x1] %vm75, %v74
    %s77 = scalar_lea.vmem %s0, 3
    %v78 = vld [vmem:[%s77] sm:$0x1]
    %79 = vrot.lane.b32.xlu0 %v78, 24
    %v80 = vpop.permute.xlu0 %79
    %vm81 = vcmask 261312
    %82 = vst.msk [vmem:[#allocation0] sm:$0x1] %vm81, %v80
    %s83 = scalar_lea.vmem %s0, 2
    %v84 = vld [vmem:[%s83] sm:$0x1]
    %85 = vrot.lane.b32.xlu0 %v84, 16
    %v86 = vpop.permute.xlu0 %85
    %vm87 = vcmask 195712
    %88 = vst.msk [vmem:[#allocation0] sm:$0x1] %vm87, %v86
    %s89 = scalar_lea.vmem %s0, 1
    %v90 = vld [vmem:[%s89] sm:$0x1]
    %91 = vrot.lane.b32.xlu0 %v90, 8
    %v92 = vpop.permute.xlu0 %91
    %vm93 = vcmask 130112
    %94 = vst.msk [vmem:[#allocation0] sm:$0x1] %vm93, %v92
    %s96 = sshll.u32 1, 1
    %s97 = ssub.s32 %s96, 1
    %v99 = vld [vmem:[#allocation0] sm:%s97]
    %s100 = sshll.u32 1, 1
    %s101 = ssub.s32 %s100, 1
    %102 = vst [vmem:[%s1] sm:%s101] %v99

// kernel: generator_forward.10
$region0: #{generator_forward.10}
  #allocation0 [shape = 'u32[]', space=smem, size = 0x4, offset = 0x4, fixed_abs, tag = 'smem constant byte address 0x4 - core index']
  #allocation1 [shape = 'u32[144,128]{1,0:T(1,128)}', space=vmem, size = 0x12000, scoped, tag = 'internal scratch']
  %s0 = inlined_call_operand.vmem [shape: f32[16,128], index: 0, kind: input, shape index: {}]
  %s1 = inlined_call_operand.vmem [shape: f32[1,128], index: 1, kind: input, shape index: {}]
  %s2 = inlined_call_operand.vmem [shape: f32[1,128], index: 2, kind: input, shape index: {}]
  %s3 = inlined_call_operand.vmem [shape: bf16[16,128], index: 3, kind: output, shape index: {}]
  %s4 = sld [smem:[#allocation0]]
  $region22: #{generator_forward.10} parent=0
    _
  %s6 = ssub.s32 1, %s4
  %s7 = scalar_select 0, %s6, %s4
  // Predicated region
  $region2: #{generator_forward.10} parent=0 // pred_check
    _
  $region3: #{generator_forward.10} parent=0 // pred_check_branch
    %9 = sbr.rel (0) target = $region5
  $region4: #{generator_forward.10} parent=0 // pred_region
    _
  $region5: #{generator_forward.10} parent=0 // pred_fallthru
    _
  // Predicated region
  $region6: #{generator_forward.10} parent=0 // pred_check
    _
  $region7: #{generator_forward.10} parent=0 // pred_check_branch
    %11 = sbr.rel (0) target = $region9
  $region8: #{generator_forward.10} parent=0 // pred_region
    _
  $region9: #{generator_forward.10} parent=0 // pred_fallthru
    _
  // Predicated region
  $region10: #{generator_forward.10} parent=0 // pred_check
    _
  $region11: #{generator_forward.10} parent=0 // pred_check_branch
    %13 = sbr.rel (0) target = $region13
  $region12: #{generator_forward.10} parent=0 // pred_region
    _
  $region13: #{generator_forward.10} parent=0 // pred_fallthru
    _
  %v14 = vld [vmem:[%s0] sm:$0xff]
  %v15 = vld [vmem:[%s0 + $0x8] sm:$0xff]
  %v16 = vadd.f32 %v14, %v15
  %v17 = vrot.slane %v16, 4
  %v18 = vadd.f32 %v16, %v17
  %v19 = vrot.slane %v18, 2
  %v20 = vadd.f32 %v18, %v19
  %v21 = vrot.slane %v20, 1
  %v22 = vadd.f32 %v20, %v21
  %v23 = vmul.f32 %v14, %v14
  %v24 = vmul.f32 %v15, %v15
  %v25 = vadd.f32 %v23, %v24
  %v26 = vrot.slane %v25, 4
  %v27 = vadd.f32 %v25, %v26
  %v28 = vrot.slane %v27, 2
  %v29 = vadd.f32 %v27, %v28
  %v30 = vrot.slane %v29, 1
  %v31 = vadd.f32 %v29, %v30
  %32 = vrot.lane.b32.xlu0 %v22, 64
  %v33 = vpop.permute.xlu0 %32
  %v34 = vadd.f32 %v22, %v33
  %35 = vrot.lane.b32.xlu0 %v31, 64
  %v36 = vpop.permute.xlu0 %35
  %v37 = vadd.f32 %v31, %v36
  %v38 = vmul.f32 %v34, 0.03125
  %v39 = vmul.f32 %v37, 0.03125
  %v40 = vmul.f32 %v38, %v38
  %v41 = vsub.f32 %v39, %v40
  %v42 = vld [vmem:[%s1] sm:$0x1]
  %v43 = vadd.f32 %v41, 1e-05
  %v44 = vrsqrt.pop %v43
  %v45 = vmul.f32 %v42, %v44
  %v46 = vld [vmem:[%s2] sm:$0x1]
  %v47 = vmul.f32 %v38, %v45
  %v48 = vsub.f32 %v46, %v47
  %v50 = vlaneseq
  %v51 = vshrl.u32 %v50, 7
  %v52 = vsub.s32 0, %v51
  %v53 = vrot.slane %v45, %v52
  %v55 = vmul.f32 %v14, %v53
  %v56 = vmul.f32 %v15, %v53
  %v58 = vlaneseq
  %v59 = vshrl.u32 %v58, 7
  %v60 = vsub.s32 0, %v59
  %v61 = vrot.slane %v48, %v60
  %v63 = vadd.f32 %v55, %v61
  %v64 = vadd.f32 %v56, %v61
  %v65 = vmax.f32 %v63, 0.0
  %v66 = vmax.f32 %v64, 0.0
  %v67 = vpack.c.bf16 %v66, %v65
  %v69 = vunpack.c.l.b16 %v67
  %v70 = vunpack.c.h.b16 %v67
  %v71 = vpack.c.b16 %v69, %v69
  %v72 = vpack.c.b16 %v70, %v70
  %75 = vst [vmem:[%s3] sm:$0xf] %v71
  %76 = vst [vmem:[%s3 + $0x4] sm:$0xf] %v72
  // Predicated region
  $region14: #{generator_forward.10} parent=0 // pred_check
    _
  $region15: #{generator_forward.10} parent=0 // pred_check_branch
    %78 = sbr.rel (0) target = $region17
  $region16: #{generator_forward.10} parent=0 // pred_region
    _
  $region17: #{generator_forward.10} parent=0 // pred_fallthru
    _
  // Predicated region
  $region18: #{generator_forward.10} parent=0 // pred_check
    _
  $region19: #{generator_forward.10} parent=0 // pred_check_branch
    %80 = sbr.rel (0) target = $region21
  $region20: #{generator_forward.10} parent=0 // pred_region
    _
  $region21: #{generator_forward.10} parent=0 // pred_fallthru
    _

// kernel: generator_forward.11
$region0: #{generator_forward.11}
  #allocation0 [shape = 'u32[]', space=smem, size = 0x4, offset = 0x4, fixed_abs, tag = 'smem constant byte address 0x4 - core index']
  #allocation1 [shape = 'u32[144,128]{1,0:T(1,128)}', space=vmem, size = 0x12000, scoped, tag = 'internal scratch']
  %s0 = inlined_call_operand.vmem [shape: bf16[32,576], index: 0, kind: input, shape index: {}]
  %s1 = inlined_call_operand.vmem [shape: bf16[576,128], index: 1, kind: input, shape index: {}]
  %s2 = inlined_call_operand.vmem [shape: bf16[32,128], index: 2, kind: output, shape index: {}]
  %s3 = sld [smem:[#allocation0]]
  $region18: #{generator_forward.11} parent=0
    _
  %s5 = ssub.s32 1, %s3
  %s6 = scalar_select 0, %s5, %s3
  // Predicated region
  $region2: #{generator_forward.11} parent=0 // pred_check
    _
  $region3: #{generator_forward.11} parent=0 // pred_check_branch
    %8 = sbr.rel (0) target = $region5
  $region4: #{generator_forward.11} parent=0 // pred_region
    _
  $region5: #{generator_forward.11} parent=0 // pred_fallthru
    _
  // Predicated region
  $region6: #{generator_forward.11} parent=0 // pred_check
    _
  $region7: #{generator_forward.11} parent=0 // pred_check_branch
    %10 = sbr.rel (0) target = $region9
  $region8: #{generator_forward.11} parent=0 // pred_region
    _
  $region9: #{generator_forward.11} parent=0 // pred_fallthru
    _
  %v12 = vld [vmem:[%s0] sm:$0xff]
  %v13 = vld [vmem:[%s0 + $0x8] sm:$0xff]
  %v14 = vld [vmem:[%s0 + $0x10] sm:$0xf]
  %v15 = vld [vmem:[%s0 + $0x14] sm:$0xff]
  %v16 = vld [vmem:[%s0 + $0x1c] sm:$0xff]
  %v17 = vld [vmem:[%s0 + $0x24] sm:$0xf]
  %v18 = vld [vmem:[%s0 + $0x28] sm:$0xff]
  %v19 = vld [vmem:[%s0 + $0x30] sm:$0xff]
  %v20 = vld [vmem:[%s0 + $0x38] sm:$0xf]
  %v21 = vld [vmem:[%s0 + $0x3c] sm:$0xff]
  %v22 = vld [vmem:[%s0 + $0x44] sm:$0xff]
  %v23 = vld [vmem:[%s0 + $0x4c] sm:$0xf]
  %v24 = vld [vmem:[%s1] sm:$0xf]
  %v25 = vld [vmem:[%s1 + $0x4] sm:$0xf]
  %v26 = vld [vmem:[%s1 + $0x8] sm:$0xf]
  %v27 = vld [vmem:[%s1 + $0xc] sm:$0xf]
  %v28 = vld [vmem:[%s1 + $0x10] sm:$0xf]
  %v29 = vld [vmem:[%s1 + $0x14] sm:$0xf]
  %v30 = vld [vmem:[%s1 + $0x18] sm:$0xf]
  %v31 = vld [vmem:[%s1 + $0x1c] sm:$0xf]
  %v32 = vld [vmem:[%s1 + $0x20] sm:$0xf]
  %v33 = vld [vmem:[%s1 + $0x24] sm:$0xf]
  %v34 = vld [vmem:[%s1 + $0x28] sm:$0xf]
  %v35 = vld [vmem:[%s1 + $0x2c] sm:$0xf]
  %v36 = vld [vmem:[%s1 + $0x30] sm:$0xf]
  %v37 = vld [vmem:[%s1 + $0x34] sm:$0xf]
  %v38 = vld [vmem:[%s1 + $0x38] sm:$0xf]
  %v39 = vld [vmem:[%s1 + $0x3c] sm:$0xf]
  %v40 = vld [vmem:[%s1 + $0x40] sm:$0xf]
  %v41 = vld [vmem:[%s1 + $0x44] sm:$0xf]
  %v42 = vld [vmem:[%s1 + $0x48] sm:$0xf]
  %v43 = vld [vmem:[%s1 + $0x4c] sm:$0xf]
  %v44 = vld [vmem:[%s1 + $0x50] sm:$0xf]
  %v45 = vld [vmem:[%s1 + $0x54] sm:$0xf]
  %v46 = vld [vmem:[%s1 + $0x58] sm:$0xf]
  %v47 = vld [vmem:[%s1 + $0x5c] sm:$0xf]
  %v48 = vld [vmem:[%s1 + $0x60] sm:$0xf]
  %v49 = vld [vmem:[%s1 + $0x64] sm:$0xf]
  %v50 = vld [vmem:[%s1 + $0x68] sm:$0xf]
  %v51 = vld [vmem:[%s1 + $0x6c] sm:$0xf]
  %v52 = vld [vmem:[%s1 + $0x70] sm:$0xf]
  %v53 = vld [vmem:[%s1 + $0x74] sm:$0xf]
  %v54 = vld [vmem:[%s1 + $0x78] sm:$0xf]
  %v55 = vld [vmem:[%s1 + $0x7c] sm:$0xf]
  %v56 = vld [vmem:[%s1 + $0x80] sm:$0xf]
  %v57 = vld [vmem:[%s1 + $0x84] sm:$0xf]
  %v58 = vld [vmem:[%s1 + $0x88] sm:$0xf]
  %v59 = vld [vmem:[%s1 + $0x8c] sm:$0xf]
  %v60 = vld [vmem:[%s1 + $0x90] sm:$0xf]
  %v61 = vld [vmem:[%s1 + $0x94] sm:$0xf]
  %v62 = vld [vmem:[%s1 + $0x98] sm:$0xf]
  %v63 = vld [vmem:[%s1 + $0x9c] sm:$0xf]
  %v64 = vld [vmem:[%s1 + $0xa0] sm:$0xf]
  %v65 = vld [vmem:[%s1 + $0xa4] sm:$0xf]
  %v66 = vld [vmem:[%s1 + $0xa8] sm:$0xf]
  %v67 = vld [vmem:[%s1 + $0xac] sm:$0xf]
  %v68 = vld [vmem:[%s1 + $0xb0] sm:$0xf]
  %v69 = vld [vmem:[%s1 + $0xb4] sm:$0xf]
  %v70 = vld [vmem:[%s1 + $0xb8] sm:$0xf]
  %v71 = vld [vmem:[%s1 + $0xbc] sm:$0xf]
  %v72 = vld [vmem:[%s1 + $0xc0] sm:$0xf]
  %v73 = vld [vmem:[%s1 + $0xc4] sm:$0xf]
  %v74 = vld [vmem:[%s1 + $0xc8] sm:$0xf]
  %v75 = vld [vmem:[%s1 + $0xcc] sm:$0xf]
  %v76 = vld [vmem:[%s1 + $0xd0] sm:$0xf]
  %v77 = vld [vmem:[%s1 + $0xd4] sm:$0xf]
  %v78 = vld [vmem:[%s1 + $0xd8] sm:$0xf]
  %v79 = vld [vmem:[%s1 + $0xdc] sm:$0xf]
  %v80 = vld [vmem:[%s1 + $0xe0] sm:$0xf]
  %v81 = vld [vmem:[%s1 + $0xe4] sm:$0xf]
  %v82 = vld [vmem:[%s1 + $0xe8] sm:$0xf]
  %v83 = vld [vmem:[%s1 + $0xec] sm:$0xf]
  %v84 = vld [vmem:[%s1 + $0xf0] sm:$0xf]
  %v85 = vld [vmem:[%s1 + $0xf4] sm:$0xf]
  %v86 = vld [vmem:[%s1 + $0xf8] sm:$0xf]
  %v87 = vld [vmem:[%s1 + $0xfc] sm:$0xf]
  %v88 = vld [vmem:[%s1 + $0x100] sm:$0xf]
  %v89 = vld [vmem:[%s1 + $0x104] sm:$0xf]
  %v90 = vld [vmem:[%s1 + $0x108] sm:$0xf]
  %v91 = vld [vmem:[%s1 + $0x10c] sm:$0xf]
  %v92 = vld [vmem:[%s1 + $0x110] sm:$0xf]
  %v93 = vld [vmem:[%s1 + $0x114] sm:$0xf]
  %v94 = vld [vmem:[%s1 + $0x118] sm:$0xf]
  %v95 = vld [vmem:[%s1 + $0x11c] sm:$0xf]
  %v108 = vunpack.c.l.b16 %v12
  %v109 = vunpack.c.h.b16 %v12
  %v110 = vunpack.c.l.b16 %v13
  %v111 = vunpack.c.h.b16 %v13
  %v112 = vunpack.c.l.b16 %v14
  %v113 = vunpack.c.l.b16 %v15
  %v114 = vunpack.c.h.b16 %v15
  %v115 = vunpack.c.l.b16 %v16
  %v116 = vunpack.c.h.b16 %v16
  %v117 = vunpack.c.l.b16 %v17
  %v118 = vunpack.c.l.b16 %v18
  %v119 = vunpack.c.h.b16 %v18
  %v120 = vunpack.c.l.b16 %v19
  %v121 = vunpack.c.h.b16 %v19
  %v122 = vunpack.c.l.b16 %v20
  %v123 = vunpack.c.l.b16 %v21
  %v124 = vunpack.c.h.b16 %v21
  %v125 = vunpack.c.l.b16 %v22
  %v126 = vunpack.c.h.b16 %v22
  %v127 = vunpack.c.l.b16 %v23
  %v128 = vpack.c.b16 %v113, %v108
  %v129 = vpack.c.b16 %v114, %v109
  %v130 = vpack.c.b16 %v115, %v110
  %v131 = vpack.c.b16 %v116, %v111
  %v132 = vpack.c.b16 %v117, %v112
  %v133 = vpack.c.b16 %v123, %v118
  %v134 = vpack.c.b16 %v124, %v119
  %v135 = vpack.c.b16 %v125, %v120
  %v136 = vpack.c.b16 %v126, %v121
  %v137 = vpack.c.b16 %v127, %v122
  %v218 = vunpack.c.l.b16 %v24
  %v219 = vunpack.c.l.b16 %v25
  %v220 = vunpack.c.l.b16 %v26
  %v221 = vunpack.c.l.b16 %v27
  %v222 = vunpack.c.l.b16 %v28
  %v223 = vunpack.c.l.b16 %v29
  %v224 = vunpack.c.l.b16 %v30
  %v225 = vunpack.c.l.b16 %v31
  %v226 = vunpack.c.l.b16 %v32
  %v227 = vunpack.c.l.b16 %v33
  %v228 = vunpack.c.l.b16 %v34
  %v229 = vunpack.c.l.b16 %v35
  %v230 = vunpack.c.l.b16 %v36
  %v231 = vunpack.c.l.b16 %v37
  %v232 = vunpack.c.l.b16 %v38
  %v233 = vunpack.c.l.b16 %v39
  %v234 = vunpack.c.l.b16 %v40
  %v235 = vunpack.c.l.b16 %v41
  %v236 = vunpack.c.l.b16 %v42
  %v237 = vunpack.c.l.b16 %v43
  %v238 = vunpack.c.l.b16 %v44
  %v239 = vunpack.c.l.b16 %v45
  %v240 = vunpack.c.l.b16 %v46
  %v241 = vunpack.c.l.b16 %v47
  %v242 = vunpack.c.l.b16 %v48
  %v243 = vunpack.c.l.b16 %v49
  %v244 = vunpack.c.l.b16 %v50
  %v245 = vunpack.c.l.b16 %v51
  %v246 = vunpack.c.l.b16 %v52
  %v247 = vunpack.c.l.b16 %v53
  %v248 = vunpack.c.l.b16 %v54
  %v249 = vunpack.c.l.b16 %v55
  %v250 = vunpack.c.l.b16 %v56
  %v251 = vunpack.c.l.b16 %v57
  %v252 = vunpack.c.l.b16 %v58
  %v253 = vunpack.c.l.b16 %v59
  %v254 = vunpack.c.l.b16 %v60
  %v255 = vunpack.c.l.b16 %v61
  %v256 = vunpack.c.l.b16 %v62
  %v257 = vunpack.c.l.b16 %v63
  %v258 = vunpack.c.l.b16 %v64
  %v259 = vunpack.c.l.b16 %v65
  %v260 = vunpack.c.l.b16 %v66
  %v261 = vunpack.c.l.b16 %v67
  %v262 = vunpack.c.l.b16 %v68
  %v263 = vunpack.c.l.b16 %v69
  %v264 = vunpack.c.l.b16 %v70
  %v265 = vunpack.c.l.b16 %v71
  %v266 = vunpack.c.l.b16 %v72
  %v267 = vunpack.c.l.b16 %v73
  %v268 = vunpack.c.l.b16 %v74
  %v269 = vunpack.c.l.b16 %v75
  %v270 = vunpack.c.l.b16 %v76
  %v271 = vunpack.c.l.b16 %v77
  %v272 = vunpack.c.l.b16 %v78
  %v273 = vunpack.c.l.b16 %v79
  %v274 = vunpack.c.l.b16 %v80
  %v275 = vunpack.c.l.b16 %v81
  %v276 = vunpack.c.l.b16 %v82
  %v277 = vunpack.c.l.b16 %v83
  %v278 = vunpack.c.l.b16 %v84
  %v279 = vunpack.c.l.b16 %v85
  %v280 = vunpack.c.l.b16 %v86
  %v281 = vunpack.c.l.b16 %v87
  %v282 = vunpack.c.l.b16 %v88
  %v283 = vunpack.c.l.b16 %v89
  %v284 = vunpack.c.l.b16 %v90
  %v285 = vunpack.c.l.b16 %v91
  %v286 = vunpack.c.l.b16 %v92
  %v287 = vunpack.c.l.b16 %v93
  %v288 = vunpack.c.l.b16 %v94
  %v289 = vunpack.c.l.b16 %v95
  %v290 = vpack.c.b16 %v219, %v218
  %v291 = vpack.c.b16 %v221, %v220
  %v292 = vpack.c.b16 %v223, %v222
  %v293 = vpack.c.b16 %v225, %v224
  %v294 = vpack.c.b16 %v227, %v226
  %v295 = vpack.c.b16 %v229, %v228
  %v296 = vpack.c.b16 %v231, %v230
  %v297 = vpack.c.b16 %v233, %v232
  %v298 = vpack.c.b16 %v235, %v234
  %v299 = vpack.c.b16 %v237, %v236
  %v300 = vpack.c.b16 %v239, %v238
  %v301 = vpack.c.b16 %v241, %v240
  %v302 = vpack.c.b16 %v243, %v242
  %v303 = vpack.c.b16 %v245, %v244
  %v304 = vpack.c.b16 %v247, %v246
  %v305 = vpack.c.b16 %v249, %v248
  %v306 = vpack.c.b16 %v251, %v250
  %v307 = vpack.c.b16 %v253, %v252
  %v308 = vpack.c.b16 %v255, %v254
  %v309 = vpack.c.b16 %v257, %v256
  %v310 = vpack.c.b16 %v259, %v258
  %v311 = vpack.c.b16 %v261, %v260
  %v312 = vpack.c.b16 %v263, %v262
  %v313 = vpack.c.b16 %v265, %v264
  %v314 = vpack.c.b16 %v267, %v266
  %v315 = vpack.c.b16 %v269, %v268
  %v316 = vpack.c.b16 %v271, %v270
  %v317 = vpack.c.b16 %v273, %v272
  %v318 = vpack.c.b16 %v275, %v274
  %v319 = vpack.c.b16 %v277, %v276
  %v320 = vpack.c.b16 %v279, %v278
  %v321 = vpack.c.b16 %v281, %v280
  %v322 = vpack.c.b16 %v283, %v282
  %v323 = vpack.c.b16 %v285, %v284
  %v324 = vpack.c.b16 %v287, %v286
  %v325 = vpack.c.b16 %v289, %v288
  %vm362 = vcmask 523264
  %v364 = vsel %vm362, %v132, 0
  %v367 = vsel %vm362, %v137, 0
  %369 = vmatprep.subr.bf16.mxu0 0
  %370 = vmatpush1.bf16.msra.mxu0 %v297
  %371 = vmatprep.subr.bf16.mxu0 0
  %372 = vmatpush1.bf16.msra.mxu0 %v296
  %373 = vmatprep.subr.bf16.mxu0 0
  %374 = vmatpush1.bf16.msra.mxu0 %v295
  %375 = vmatprep.subr.bf16.mxu0 0
  %376 = vmatpush1.bf16.msra.mxu0 %v294
  %377 = vmatprep.subr.bf16.mxu0 0
  %378 = vmatpush1.bf16.msra.mxu0 %v293
  %379 = vmatprep.subr.bf16.mxu0 0
  %380 = vmatpush1.bf16.msra.mxu0 %v292
  %381 = vmatprep.subr.bf16.mxu0 0
  %382 = vmatpush1.bf16.msra.mxu0 %v291
  %383 = vmatprep.subr.bf16.mxu0 0
  %384 = vmatpush1.bf16.msra.mxu0 %v290
  %385 = vmatprep.subr.bf16.mxu0 0
  %386 = vmatpush2.bf16.msra.mxu0 %v305
  %387 = vmatprep.subr.bf16.mxu0 0
  %388 = vmatpush2.bf16.msra.mxu0 %v304
  %389 = vmatprep.subr.bf16.mxu0 0
  %390 = vmatpush2.bf16.msra.mxu0 %v303
  %391 = vmatprep.subr.bf16.mxu0 0
  %392 = vmatpush2.bf16.msra.mxu0 %v302
  %393 = vmatprep.subr.bf16.mxu0 0
  %394 = vmatpush2.bf16.msra.mxu0 %v301
  %395 = vmatprep.subr.bf16.mxu0 0
  %396 = vmatpush2.bf16.msra.mxu0 %v300
  %397 = vmatprep.subr.bf16.mxu0 0
  %398 = vmatpush2.bf16.msra.mxu0 %v299
  %399 = vmatprep.subr.bf16.mxu0 0
  %400 = vmatpush2.bf16.msra.mxu0 %v298
  %401 = vmatprep.mubr.bf16.mxu0 %v129
  %402 = vmatmul.mubr.bf16.gmra.mxu0 %v128
  %v403 = vpop.f32.mrf.mxu0
  %v404 = vadd.f32 0.0, %v403
  %v405 = vpop.f32.mrf.mxu0
  %v406 = vpop.f32.mrf.mxu0
  %v407 = vadd.f32 0.0, %v406
  %v408 = vpop.f32.mrf.mxu0
  %409 = vmatprep.mubr.bf16.mxu0 %v134
  %410 = vmatmul.mubr.bf16.gmra.mxu0 %v133
  %v411 = vpop.f32.mrf.mxu0
  %v412 = vadd.f32 0.0, %v411
  %v413 = vpop.f32.mrf.mxu0
  %v414 = vpop.f32.mrf.mxu0
  %v415 = vadd.f32 0.0, %v414
  %v416 = vpop.f32.mrf.mxu0
  %417 = vdwg.mxu0
  %418 = vmatprep.subr.bf16.mxu0 0
  %419 = vmatpush1.bf16.msra.mxu0 %v313
  %420 = vmatprep.subr.bf16.mxu0 0
  %421 = vmatpush1.bf16.msra.mxu0 %v312
  %422 = vmatprep.subr.bf16.mxu0 0
  %423 = vmatpush1.bf16.msra.mxu0 %v311
  %424 = vmatprep.subr.bf16.mxu0 0
  %425 = vmatpush1.bf16.msra.mxu0 %v310
  %426 = vmatprep.subr.bf16.mxu0 0
  %427 = vmatpush1.bf16.msra.mxu0 %v309
  %428 = vmatprep.subr.bf16.mxu0 0
  %429 = vmatpush1.bf16.msra.mxu0 %v308
  %430 = vmatprep.subr.bf16.mxu0 0
  %431 = vmatpush1.bf16.msra.mxu0 %v307
  %432 = vmatprep.subr.bf16.mxu0 0
  %433 = vmatpush1.bf16.msra.mxu0 %v306
  %434 = vmatprep.subr.bf16.mxu0 0
  %435 = vmatpush2.bf16.msra.mxu0 %v321
  %436 = vmatprep.subr.bf16.mxu0 0
  %437 = vmatpush2.bf16.msra.mxu0 %v320
  %438 = vmatprep.subr.bf16.mxu0 0
  %439 = vmatpush2.bf16.msra.mxu0 %v319
  %440 = vmatprep.subr.bf16.mxu0 0
  %441 = vmatpush2.bf16.msra.mxu0 %v318
  %442 = vmatprep.subr.bf16.mxu0 0
  %443 = vmatpush2.bf16.msra.mxu0 %v317
  %444 = vmatprep.subr.bf16.mxu0 0
  %445 = vmatpush2.bf16.msra.mxu0 %v316
  %446 = vmatprep.subr.bf16.mxu0 0
  %447 = vmatpush2.bf16.msra.mxu0 %v315
  %448 = vmatprep.subr.bf16.mxu0 0
  %449 = vmatpush2.bf16.msra.mxu0 %v314
  %450 = vmatprep.mubr.bf16.mxu0 %v131
  %451 = vmatmul.mubr.bf16.gmra.mxu0 %v130
  %v452 = vpop.f32.mrf.mxu0
  %v453 = vadd.f32 %v404, %v452
  %v454 = vpop.f32.mrf.mxu0
  %v455 = vpop.f32.mrf.mxu0
  %v456 = vadd.f32 %v407, %v455
  %v457 = vpop.f32.mrf.mxu0
  %458 = vmatprep.mubr.bf16.mxu0 %v136
  %459 = vmatmul.mubr.bf16.gmra.mxu0 %v135
  %v460 = vpop.f32.mrf.mxu0
  %v461 = vadd.f32 %v412, %v460
  %v462 = vpop.f32.mrf.mxu0
  %v463 = vpop.f32.mrf.mxu0
  %v464 = vadd.f32 %v415, %v463
  %v465 = vpop.f32.mrf.mxu0
  %466 = vdwg.mxu0
  %467 = vmatprep.subr.bf16.mxu0 0
  %468 = vmatpush1.bf16.msra.mxu0 0
  %469 = vmatprep.subr.bf16.mxu0 0
  %470 = vmatpush1.bf16.msra.mxu0 0
  %471 = vmatprep.subr.bf16.mxu0 0
  %472 = vmatpush1.bf16.msra.mxu0 0
  %473 = vmatprep.subr.bf16.mxu0 0
  %474 = vmatpush1.bf16.msra.mxu0 0
  %475 = vmatprep.subr.bf16.mxu0 0
  %476 = vmatpush1.bf16.msra.mxu0 %v325
  %477 = vmatprep.subr.bf16.mxu0 0
  %478 = vmatpush1.bf16.msra.mxu0 %v324
  %479 = vmatprep.subr.bf16.mxu0 0
  %480 = vmatpush1.bf16.msra.mxu0 %v323
  %481 = vmatprep.subr.bf16.mxu0 0
  %482 = vmatpush1.bf16.msra.mxu0 %v322
  %483 = vmatprep.subr.bf16.mxu0 0
  %484 = vmatpush2.bf16.msra.mxu0 0
  %485 = vmatprep.subr.bf16.mxu0 0
  %486 = vmatpush2.bf16.msra.mxu0 0
  %487 = vmatprep.subr.bf16.mxu0 0
  %488 = vmatpush2.bf16.msra.mxu0 0
  %489 = vmatprep.subr.bf16.mxu0 0
  %490 = vmatpush2.bf16.msra.mxu0 0
  %491 = vmatprep.subr.bf16.mxu0 0
  %492 = vmatpush2.bf16.msra.mxu0 0
  %493 = vmatprep.subr.bf16.mxu0 0
  %494 = vmatpush2.bf16.msra.mxu0 0
  %495 = vmatprep.subr.bf16.mxu0 0
  %496 = vmatpush2.bf16.msra.mxu0 0
  %497 = vmatprep.subr.bf16.mxu0 0
  %498 = vmatpush2.bf16.msra.mxu0 0
  %499 = vmatprep.mubr.bf16.mxu0 0
  %500 = vmatmul.mubr.bf16.gmra.mxu0 %v364
  %v501 = vpop.f32.mrf.mxu0
  %v502 = vadd.f32 %v453, %v501
  %v503 = vpop.f32.mrf.mxu0
  %v504 = vpop.f32.mrf.mxu0
  %v505 = vadd.f32 %v456, %v504
  %v506 = vpop.f32.mrf.mxu0
  %507 = vmatprep.mubr.bf16.mxu0 0
  %508 = vmatmul.mubr.bf16.gmra.mxu0 %v367
  %v509 = vpop.f32.mrf.mxu0
  %v510 = vadd.f32 %v461, %v509
  %v511 = vpop.f32.mrf.mxu0
  %v512 = vpop.f32.mrf.mxu0
  %v513 = vadd.f32 %v464, %v512
  %v514 = vpop.f32.mrf.mxu0
  %515 = vdwg.mxu0
  %v516 = vpack.c.bf16 %v505, %v502
  %v517 = vpack.c.bf16 %v513, %v510
  %v520 = vunpack.c.l.b16 %v516
  %v521 = vunpack.c.h.b16 %v516
  %v522 = vunpack.c.l.b16 %v517
  %v523 = vunpack.c.h.b16 %v517
  %v524 = vpack.c.b16 %v520, %v520
  %v525 = vpack.c.b16 %v521, %v521
  %v526 = vpack.c.b16 %v522, %v522
  %v527 = vpack.c.b16 %v523, %v523
  %532 = vst [vmem:[%s2] sm:$0xf] %v524
  %533 = vst [vmem:[%s2 + $0x4] sm:$0xf] %v525
  %534 = vst [vmem:[%s2 + $0x8] sm:$0xf] %v526
  %535 = vst [vmem:[%s2 + $0xc] sm:$0xf] %v527
  // Predicated region
  $region10: #{generator_forward.11} parent=0 // pred_check
    _
  $region11: #{generator_forward.11} parent=0 // pred_check_branch
    %537 = sbr.rel (0) target = $region13
  $region12: #{generator_forward.11} parent=0 // pred_region
    _
  $region13: #{generator_forward.11} parent=0 // pred_fallthru
    _
  // Predicated region
  $region14: #{generator_forward.11} parent=0 // pred_check
    _
  $region15: #{generator_forward.11} parent=0 // pred_check_branch
    %539 = sbr.rel (0) target = $region17
  $region16: #{generator_forward.11} parent=0 // pred_region
    _
  $region17: #{generator_forward.11} parent=0 // pred_fallthru
    _

// kernel: generator_forward.12
$region0: #{generator_forward.12}
  #allocation0 [shape = 'u32[]', space=smem, size = 0x4, offset = 0x4, fixed_abs, tag = 'smem constant byte address 0x4 - core index']
  #allocation1 [shape = 'u32[144,128]{1,0:T(1,128)}', space=vmem, size = 0x12000, scoped, tag = 'internal scratch']
  %s0 = inlined_call_operand.vmem [shape: bf16[32,128], index: 0, kind: input, shape index: {}]
  %s1 = inlined_call_operand.vmem [shape: f32[1,128], index: 1, kind: input, shape index: {}]
  %s2 = inlined_call_operand.vmem [shape: f32[1,128], index: 2, kind: input, shape index: {}]
  %s3 = inlined_call_operand.vmem [shape: bf16[32,128], index: 3, kind: output, shape index: {}]
  %s4 = sld [smem:[#allocation0]]
  $region22: #{generator_forward.12} parent=0
    _
  %s6 = ssub.s32 1, %s4
  %s7 = scalar_select 0, %s6, %s4
  // Predicated region
  $region2: #{generator_forward.12} parent=0 // pred_check
    _
  $region3: #{generator_forward.12} parent=0 // pred_check_branch
    %9 = sbr.rel (0) target = $region5
  $region4: #{generator_forward.12} parent=0 // pred_region
    _
  $region5: #{generator_forward.12} parent=0 // pred_fallthru
    _
  // Predicated region
  $region6: #{generator_forward.12} parent=0 // pred_check
    _
  $region7: #{generator_forward.12} parent=0 // pred_check_branch
    %11 = sbr.rel (0) target = $region9
  $region8: #{generator_forward.12} parent=0 // pred_region
    _
  $region9: #{generator_forward.12} parent=0 // pred_fallthru
    _
  // Predicated region
  $region10: #{generator_forward.12} parent=0 // pred_check
    _
  $region11: #{generator_forward.12} parent=0 // pred_check_branch
    %13 = sbr.rel (0) target = $region13
  $region12: #{generator_forward.12} parent=0 // pred_region
    _
  $region13: #{generator_forward.12} parent=0 // pred_fallthru
    _
  %v14 = vld [vmem:[%s0] sm:$0xf]
  %v15 = vld [vmem:[%s0 + $0x4] sm:$0xf]
  %v16 = vld [vmem:[%s0 + $0x8] sm:$0xf]
  %v17 = vld [vmem:[%s0 + $0xc] sm:$0xf]
  %v18 = vunpack.c.l.bf16 %v14
  %v19 = vunpack.c.l.bf16 %v15
  %v20 = vunpack.c.l.bf16 %v16
  %v21 = vunpack.c.l.bf16 %v17
  %v22 = vadd.f32 %v18, %v19
  %v23 = vadd.f32 %v22, %v20
  %v24 = vadd.f32 %v23, %v21
  %v25 = vrot.slane %v24, 4
  %v26 = vadd.f32 %v24, %v25
  %v27 = vrot.slane %v26, 2
  %v28 = vadd.f32 %v26, %v27
  %v29 = vrot.slane %v28, 1
  %v30 = vadd.f32 %v28, %v29
  %v31 = vmul.f32 %v18, %v18
  %v32 = vmul.f32 %v19, %v19
  %v33 = vmul.f32 %v20, %v20
  %v34 = vmul.f32 %v21, %v21
  %v35 = vadd.f32 %v31, %v32
  %v36 = vadd.f32 %v35, %v33
  %v37 = vadd.f32 %v36, %v34
  %v38 = vrot.slane %v37, 4
  %v39 = vadd.f32 %v37, %v38
  %v40 = vrot.slane %v39, 2
  %v41 = vadd.f32 %v39, %v40
  %v42 = vrot.slane %v41, 1
  %v43 = vadd.f32 %v41, %v42
  %44 = vrot.lane.b32.xlu0 %v30, 32
  %v45 = vpop.permute.xlu0 %44
  %v46 = vadd.f32 %v30, %v45
  %47 = vrot.lane.b32.xlu0 %v43, 32
  %v48 = vpop.permute.xlu0 %47
  %v49 = vadd.f32 %v43, %v48
  %50 = vrot.lane.b32.xlu0 %v46, 64
  %v51 = vpop.permute.xlu0 %50
  %v52 = vadd.f32 %v46, %v51
  %53 = vrot.lane.b32.xlu0 %v49, 64
  %v54 = vpop.permute.xlu0 %53
  %v55 = vadd.f32 %v49, %v54
  %v56 = vmul.f32 %v52, 0.0078125
  %v57 = vmul.f32 %v55, 0.0078125
  %v58 = vmul.f32 %v56, %v56
  %v59 = vsub.f32 %v57, %v58
  %v60 = vld [vmem:[%s1] sm:$0x1]
  %v61 = vadd.f32 %v59, 1e-05
  %v62 = vrsqrt.pop %v61
  %v63 = vmul.f32 %v60, %v62
  %v64 = vld [vmem:[%s2] sm:$0x1]
  %v65 = vmul.f32 %v56, %v63
  %v66 = vsub.f32 %v64, %v65
  %v68 = vlaneseq
  %v69 = vshrl.u32 %v68, 7
  %v70 = vsub.s32 0, %v69
  %v71 = vrot.slane %v63, %v70
  %v73 = vmul.f32 %v18, %v71
  %v74 = vmul.f32 %v19, %v71
  %v75 = vmul.f32 %v20, %v71
  %v76 = vmul.f32 %v21, %v71
  %v78 = vlaneseq
  %v79 = vshrl.u32 %v78, 7
  %v80 = vsub.s32 0, %v79
  %v81 = vrot.slane %v66, %v80
  %v83 = vadd.f32 %v73, %v81
  %v84 = vadd.f32 %v74, %v81
  %v85 = vadd.f32 %v75, %v81
  %v86 = vadd.f32 %v76, %v81
  %v87 = vmax.f32 %v83, 0.0
  %v88 = vmax.f32 %v84, 0.0
  %v89 = vmax.f32 %v85, 0.0
  %v90 = vmax.f32 %v86, 0.0
  %v91 = vpack.c.bf16 %v88, %v87
  %v92 = vpack.c.bf16 %v90, %v89
  %v95 = vunpack.c.l.b16 %v91
  %v96 = vunpack.c.h.b16 %v91
  %v97 = vunpack.c.l.b16 %v92
  %v98 = vunpack.c.h.b16 %v92
  %v99 = vpack.c.b16 %v95, %v95
  %v100 = vpack.c.b16 %v96, %v96
  %v101 = vpack.c.b16 %v97, %v97
  %v102 = vpack.c.b16 %v98, %v98
  %107 = vst [vmem:[%s3] sm:$0xf] %v99
  %108 = vst [vmem:[%s3 + $0x4] sm:$0xf] %v100
  %109 = vst [vmem:[%s3 + $0x8] sm:$0xf] %v101
  %110 = vst [vmem:[%s3 + $0xc] sm:$0xf] %v102
  // Predicated region
  $region14: #{generator_forward.12} parent=0 // pred_check
    _
  $region15: #{generator_forward.12} parent=0 // pred_check_branch
    %112 = sbr.rel (0) target = $region17
  $region16: #{generator_forward.12} parent=0 // pred_region
    _
  $region17: #{generator_forward.12} parent=0 // pred_fallthru
    _
  // Predicated region
  $region18: #{generator_forward.12} parent=0 // pred_check
    _
  $region19: #{generator_forward.12} parent=0 // pred_check_branch
    %114 = sbr.rel (0) target = $region21
  $region20: #{generator_forward.12} parent=0 // pred_region
    _
  $region21: #{generator_forward.12} parent=0 // pred_fallthru
    _

// kernel: generator_forward.14
$region0: #{generator_forward.14}
  #allocation0 [shape = 'u32[]', space=smem, size = 0x4, offset = 0x4, fixed_abs, tag = 'smem constant byte address 0x4 - core index']
  #allocation1 [shape = 'u32[144,128]{1,0:T(1,128)}', space=vmem, size = 0x12000, scoped, tag = 'internal scratch']
  %s0 = inlined_call_operand.vmem [shape: bf16[64,128], index: 0, kind: input, shape index: {}]
  %s1 = inlined_call_operand.vmem [shape: f32[1,128], index: 1, kind: input, shape index: {}]
  %s2 = inlined_call_operand.vmem [shape: f32[1,128], index: 2, kind: input, shape index: {}]
  %s3 = inlined_call_operand.vmem [shape: bf16[64,128], index: 3, kind: output, shape index: {}]
  %s4 = sld [smem:[#allocation0]]
  $region22: #{generator_forward.14} parent=0
    _
  %s6 = ssub.s32 1, %s4
  %s7 = scalar_select 0, %s6, %s4
  // Predicated region
  $region2: #{generator_forward.14} parent=0 // pred_check
    _
  $region3: #{generator_forward.14} parent=0 // pred_check_branch
    %9 = sbr.rel (0) target = $region5
  $region4: #{generator_forward.14} parent=0 // pred_region
    _
  $region5: #{generator_forward.14} parent=0 // pred_fallthru
    _
  // Predicated region
  $region6: #{generator_forward.14} parent=0 // pred_check
    _
  $region7: #{generator_forward.14} parent=0 // pred_check_branch
    %11 = sbr.rel (0) target = $region9
  $region8: #{generator_forward.14} parent=0 // pred_region
    _
  $region9: #{generator_forward.14} parent=0 // pred_fallthru
    _
  // Predicated region
  $region10: #{generator_forward.14} parent=0 // pred_check
    _
  $region11: #{generator_forward.14} parent=0 // pred_check_branch
    %13 = sbr.rel (0) target = $region13
  $region12: #{generator_forward.14} parent=0 // pred_region
    _
  $region13: #{generator_forward.14} parent=0 // pred_fallthru
    _
  %v14 = vld [vmem:[%s0] sm:$0xf]
  %v15 = vld [vmem:[%s0 + $0x4] sm:$0xf]
  %v16 = vld [vmem:[%s0 + $0x8] sm:$0xf]
  %v17 = vld [vmem:[%s0 + $0xc] sm:$0xf]
  %v18 = vld [vmem:[%s0 + $0x10] sm:$0xf]
  %v19 = vld [vmem:[%s0 + $0x14] sm:$0xf]
  %v20 = vld [vmem:[%s0 + $0x18] sm:$0xf]
  %v21 = vld [vmem:[%s0 + $0x1c] sm:$0xf]
  %v22 = vunpack.c.l.bf16 %v14
  %v23 = vunpack.c.l.bf16 %v15
  %v24 = vunpack.c.l.bf16 %v16
  %v25 = vunpack.c.l.bf16 %v17
  %v26 = vunpack.c.l.bf16 %v18
  %v27 = vunpack.c.l.bf16 %v19
  %v28 = vunpack.c.l.bf16 %v20
  %v29 = vunpack.c.l.bf16 %v21
  %v30 = vadd.f32 %v22, %v23
  %v31 = vadd.f32 %v30, %v24
  %v32 = vadd.f32 %v31, %v25
  %v33 = vadd.f32 %v32, %v26
  %v34 = vadd.f32 %v33, %v27
  %v35 = vadd.f32 %v34, %v28
  %v36 = vadd.f32 %v35, %v29
  %v37 = vrot.slane %v36, 4
  %v38 = vadd.f32 %v36, %v37
  %v39 = vrot.slane %v38, 2
  %v40 = vadd.f32 %v38, %v39
  %v41 = vrot.slane %v40, 1
  %v42 = vadd.f32 %v40, %v41
  %v43 = vmul.f32 %v22, %v22
  %v44 = vmul.f32 %v23, %v23
  %v45 = vmul.f32 %v24, %v24
  %v46 = vmul.f32 %v25, %v25
  %v47 = vmul.f32 %v26, %v26
  %v48 = vmul.f32 %v27, %v27
  %v49 = vmul.f32 %v28, %v28
  %v50 = vmul.f32 %v29, %v29
  %v51 = vadd.f32 %v43, %v44
  %v52 = vadd.f32 %v51, %v45
  %v53 = vadd.f32 %v52, %v46
  %v54 = vadd.f32 %v53, %v47
  %v55 = vadd.f32 %v54, %v48
  %v56 = vadd.f32 %v55, %v49
  %v57 = vadd.f32 %v56, %v50
  %v58 = vrot.slane %v57, 4
  %v59 = vadd.f32 %v57, %v58
  %v60 = vrot.slane %v59, 2
  %v61 = vadd.f32 %v59, %v60
  %v62 = vrot.slane %v61, 1
  %v63 = vadd.f32 %v61, %v62
  %64 = vrot.lane.b32.xlu0 %v42, 16
  %v65 = vpop.permute.xlu0 %64
  %v66 = vadd.f32 %v42, %v65
  %67 = vrot.lane.b32.xlu0 %v63, 16
  %v68 = vpop.permute.xlu0 %67
  %v69 = vadd.f32 %v63, %v68
  %70 = vrot.lane.b32.xlu0 %v66, 32
  %v71 = vpop.permute.xlu0 %70
  %v72 = vadd.f32 %v66, %v71
  %73 = vrot.lane.b32.xlu0 %v69, 32
  %v74 = vpop.permute.xlu0 %73
  %v75 = vadd.f32 %v69, %v74
  %76 = vrot.lane.b32.xlu0 %v72, 64
  %v77 = vpop.permute.xlu0 %76
  %v78 = vadd.f32 %v72, %v77
  %79 = vrot.lane.b32.xlu0 %v75, 64
  %v80 = vpop.permute.xlu0 %79
  %v81 = vadd.f32 %v75, %v80
  %v82 = vmul.f32 %v78, 0.001953125
  %v83 = vmul.f32 %v81, 0.001953125
  %v84 = vmul.f32 %v82, %v82
  %v85 = vsub.f32 %v83, %v84
  %v86 = vld [vmem:[%s1] sm:$0x1]
  %v87 = vadd.f32 %v85, 1e-05
  %v88 = vrsqrt.pop %v87
  %v89 = vmul.f32 %v86, %v88
  %v90 = vld [vmem:[%s2] sm:$0x1]
  %v91 = vmul.f32 %v82, %v89
  %v92 = vsub.f32 %v90, %v91
  %v94 = vlaneseq
  %v95 = vshrl.u32 %v94, 7
  %v96 = vsub.s32 0, %v95
  %v97 = vrot.slane %v89, %v96
  %v99 = vmul.f32 %v22, %v97
  %v100 = vmul.f32 %v23, %v97
  %v101 = vmul.f32 %v24, %v97
  %v102 = vmul.f32 %v25, %v97
  %v103 = vmul.f32 %v26, %v97
  %v104 = vmul.f32 %v27, %v97
  %v105 = vmul.f32 %v28, %v97
  %v106 = vmul.f32 %v29, %v97
  %v108 = vlaneseq
  %v109 = vshrl.u32 %v108, 7
  %v110 = vsub.s32 0, %v109
  %v111 = vrot.slane %v92, %v110
  %v113 = vadd.f32 %v99, %v111
  %v114 = vadd.f32 %v100, %v111
  %v115 = vadd.f32 %v101, %v111
  %v116 = vadd.f32 %v102, %v111
  %v117 = vadd.f32 %v103, %v111
  %v118 = vadd.f32 %v104, %v111
  %v119 = vadd.f32 %v105, %v111
  %v120 = vadd.f32 %v106, %v111
  %v121 = vmax.f32 %v113, 0.0
  %v122 = vmax.f32 %v114, 0.0
  %v123 = vmax.f32 %v115, 0.0
  %v124 = vmax.f32 %v116, 0.0
  %v125 = vmax.f32 %v117, 0.0
  %v126 = vmax.f32 %v118, 0.0
  %v127 = vmax.f32 %v119, 0.0
  %v128 = vmax.f32 %v120, 0.0
  %v129 = vpack.c.bf16 %v122, %v121
  %v130 = vpack.c.bf16 %v124, %v123
  %v131 = vpack.c.bf16 %v126, %v125
  %v132 = vpack.c.bf16 %v128, %v127
  %v137 = vunpack.c.l.b16 %v129
  %v138 = vunpack.c.h.b16 %v129
  %v139 = vunpack.c.l.b16 %v130
  %v140 = vunpack.c.h.b16 %v130
  %v141 = vunpack.c.l.b16 %v131
  %v142 = vunpack.c.h.b16 %v131
  %v143 = vunpack.c.l.b16 %v132
  %v144 = vunpack.c.h.b16 %v132
  %v145 = vpack.c.b16 %v137, %v137
  %v146 = vpack.c.b16 %v138, %v138
  %v147 = vpack.c.b16 %v139, %v139
  %v148 = vpack.c.b16 %v140, %v140
  %v149 = vpack.c.b16 %v141, %v141
  %v150 = vpack.c.b16 %v142, %v142
  %v151 = vpack.c.b16 %v143, %v143
  %v152 = vpack.c.b16 %v144, %v144
  %161 = vst [vmem:[%s3] sm:$0xf] %v145
  %162 = vst [vmem:[%s3 + $0x4] sm:$0xf] %v146
  %163 = vst [vmem:[%s3 + $0x8] sm:$0xf] %v147
  %164 = vst [vmem:[%s3 + $0xc] sm:$0xf] %v148
  %165 = vst [vmem:[%s3 + $0x10] sm:$0xf] %v149
  %166 = vst [vmem:[%s3 + $0x14] sm:$0xf] %v150
  %167 = vst [vmem:[%s3 + $0x18] sm:$0xf] %v151
  %168 = vst [vmem:[%s3 + $0x1c] sm:$0xf] %v152
  // Predicated region
  $region14: #{generator_forward.14} parent=0 // pred_check
    _
  $region15: #{generator_forward.14} parent=0 // pred_check_branch
    %170 = sbr.rel (0) target = $region17
  $region16: #{generator_forward.14} parent=0 // pred_region
    _
  $region17: #{generator_forward.14} parent=0 // pred_fallthru
    _
  // Predicated region
  $region18: #{generator_forward.14} parent=0 // pred_check
    _
  $region19: #{generator_forward.14} parent=0 // pred_check_branch
    %172 = sbr.rel (0) target = $region21
  $region20: #{generator_forward.14} parent=0 // pred_region
    _
  $region21: #{generator_forward.14} parent=0 // pred_fallthru
    _

// kernel: generator_forward.13
$region0: #{generator_forward.13}
  #allocation0 [shape = 'u32[]', space=smem, size = 0x4, offset = 0x4, fixed_abs, tag = 'smem constant byte address 0x4 - core index']
  #allocation1 [shape = 'u32[144,128]{1,0:T(1,128)}', space=vmem, size = 0x12000, scoped, tag = 'internal scratch']
  %s0 = inlined_call_operand.vmem [shape: bf16[128,288], index: 0, kind: input, shape index: {}]
  %s1 = inlined_call_operand.vmem [shape: bf16[288,64], index: 1, kind: input, shape index: {}]
  %s2 = inlined_call_operand.vmem [shape: bf16[128,64], index: 2, kind: output, shape index: {}]
  %s3 = sld [smem:[#allocation0]]
  $region18: #{generator_forward.13} parent=0
    _
  %s5 = ssub.s32 1, %s3
  %s6 = scalar_select 0, %s5, %s3
  // Predicated region
  $region2: #{generator_forward.13} parent=0 // pred_check
    _
  $region3: #{generator_forward.13} parent=0 // pred_check_branch
    %8 = sbr.rel (0) target = $region5
  $region4: #{generator_forward.13} parent=0 // pred_region
    _
  $region5: #{generator_forward.13} parent=0 // pred_fallthru
    _
  // Predicated region
  $region6: #{generator_forward.13} parent=0 // pred_check
    _
  $region7: #{generator_forward.13} parent=0 // pred_check_branch
    %10 = sbr.rel (0) target = $region9
  $region8: #{generator_forward.13} parent=0 // pred_region
    _
  $region9: #{generator_forward.13} parent=0 // pred_fallthru
    _
  %v12 = vld [vmem:[%s0] sm:$0xff]
  %v13 = vld [vmem:[%s0 + $0x8] sm:$0xf]
  %v14 = vld [vmem:[%s0 + $0xc] sm:$0xff]
  %v15 = vld [vmem:[%s0 + $0x14] sm:$0xf]
  %v16 = vld [vmem:[%s0 + $0x18] sm:$0xff]
  %v17 = vld [vmem:[%s0 + $0x20] sm:$0xf]
  %v18 = vld [vmem:[%s0 + $0x24] sm:$0xff]
  %v19 = vld [vmem:[%s0 + $0x2c] sm:$0xf]
  %v20 = vld [vmem:[%s0 + $0x30] sm:$0xff]
  %v21 = vld [vmem:[%s0 + $0x38] sm:$0xf]
  %v22 = vld [vmem:[%s0 + $0x3c] sm:$0xff]
  %v23 = vld [vmem:[%s0 + $0x44] sm:$0xf]
  %v24 = vld [vmem:[%s0 + $0x48] sm:$0xff]
  %v25 = vld [vmem:[%s0 + $0x50] sm:$0xf]
  %v26 = vld [vmem:[%s0 + $0x54] sm:$0xff]
  %v27 = vld [vmem:[%s0 + $0x5c] sm:$0xf]
  %v28 = vld [vmem:[%s0 + $0x60] sm:$0xff]
  %v29 = vld [vmem:[%s0 + $0x68] sm:$0xf]
  %v30 = vld [vmem:[%s0 + $0x6c] sm:$0xff]
  %v31 = vld [vmem:[%s0 + $0x74] sm:$0xf]
  %v32 = vld [vmem:[%s0 + $0x78] sm:$0xff]
  %v33 = vld [vmem:[%s0 + $0x80] sm:$0xf]
  %v34 = vld [vmem:[%s0 + $0x84] sm:$0xff]
  %v35 = vld [vmem:[%s0 + $0x8c] sm:$0xf]
  %v36 = vld [vmem:[%s0 + $0x90] sm:$0xff]
  %v37 = vld [vmem:[%s0 + $0x98] sm:$0xf]
  %v38 = vld [vmem:[%s0 + $0x9c] sm:$0xff]
  %v39 = vld [vmem:[%s0 + $0xa4] sm:$0xf]
  %v40 = vld [vmem:[%s0 + $0xa8] sm:$0xff]
  %v41 = vld [vmem:[%s0 + $0xb0] sm:$0xf]
  %v42 = vld [vmem:[%s0 + $0xb4] sm:$0xff]
  %v43 = vld [vmem:[%s0 + $0xbc] sm:$0xf]
  %v44 = vld [vmem:[%s1] sm:$0xf]
  %v45 = vld [vmem:[%s1 + $0x4] sm:$0xf]
  %v46 = vld [vmem:[%s1 + $0x8] sm:$0xf]
  %v47 = vld [vmem:[%s1 + $0xc] sm:$0xf]
  %v48 = vld [vmem:[%s1 + $0x10] sm:$0xf]
  %v49 = vld [vmem:[%s1 + $0x14] sm:$0xf]
  %v50 = vld [vmem:[%s1 + $0x18] sm:$0xf]
  %v51 = vld [vmem:[%s1 + $0x1c] sm:$0xf]
  %v52 = vld [vmem:[%s1 + $0x20] sm:$0xf]
  %v53 = vld [vmem:[%s1 + $0x24] sm:$0xf]
  %v54 = vld [vmem:[%s1 + $0x28] sm:$0xf]
  %v55 = vld [vmem:[%s1 + $0x2c] sm:$0xf]
  %v56 = vld [vmem:[%s1 + $0x30] sm:$0xf]
  %v57 = vld [vmem:[%s1 + $0x34] sm:$0xf]
  %v58 = vld [vmem:[%s1 + $0x38] sm:$0xf]
  %v59 = vld [vmem:[%s1 + $0x3c] sm:$0xf]
  %v60 = vld [vmem:[%s1 + $0x40] sm:$0xf]
  %v61 = vld [vmem:[%s1 + $0x44] sm:$0xf]
  %v62 = vld [vmem:[%s1 + $0x48] sm:$0xf]
  %v63 = vld [vmem:[%s1 + $0x4c] sm:$0xf]
  %v64 = vld [vmem:[%s1 + $0x50] sm:$0xf]
  %v65 = vld [vmem:[%s1 + $0x54] sm:$0xf]
  %v66 = vld [vmem:[%s1 + $0x58] sm:$0xf]
  %v67 = vld [vmem:[%s1 + $0x5c] sm:$0xf]
  %v68 = vld [vmem:[%s1 + $0x60] sm:$0xf]
  %v69 = vld [vmem:[%s1 + $0x64] sm:$0xf]
  %v70 = vld [vmem:[%s1 + $0x68] sm:$0xf]
  %v71 = vld [vmem:[%s1 + $0x6c] sm:$0xf]
  %v72 = vld [vmem:[%s1 + $0x70] sm:$0xf]
  %v73 = vld [vmem:[%s1 + $0x74] sm:$0xf]
  %v74 = vld [vmem:[%s1 + $0x78] sm:$0xf]
  %v75 = vld [vmem:[%s1 + $0x7c] sm:$0xf]
  %v76 = vld [vmem:[%s1 + $0x80] sm:$0xf]
  %v77 = vld [vmem:[%s1 + $0x84] sm:$0xf]
  %v78 = vld [vmem:[%s1 + $0x88] sm:$0xf]
  %v79 = vld [vmem:[%s1 + $0x8c] sm:$0xf]
  %v112 = vunpack.c.l.b16 %v12
  %v113 = vunpack.c.h.b16 %v12
  %v114 = vunpack.c.l.b16 %v13
  %v115 = vunpack.c.l.b16 %v14
  %v116 = vunpack.c.h.b16 %v14
  %v117 = vunpack.c.l.b16 %v15
  %v118 = vunpack.c.l.b16 %v16
  %v119 = vunpack.c.h.b16 %v16
  %v120 = vunpack.c.l.b16 %v17
  %v121 = vunpack.c.l.b16 %v18
  %v122 = vunpack.c.h.b16 %v18
  %v123 = vunpack.c.l.b16 %v19
  %v124 = vunpack.c.l.b16 %v20
  %v125 = vunpack.c.h.b16 %v20
  %v126 = vunpack.c.l.b16 %v21
  %v127 = vunpack.c.l.b16 %v22
  %v128 = vunpack.c.h.b16 %v22
  %v129 = vunpack.c.l.b16 %v23
  %v130 = vunpack.c.l.b16 %v24
  %v131 = vunpack.c.h.b16 %v24
  %v132 = vunpack.c.l.b16 %v25
  %v133 = vunpack.c.l.b16 %v26
  %v134 = vunpack.c.h.b16 %v26
  %v135 = vunpack.c.l.b16 %v27
  %v136 = vunpack.c.l.b16 %v28
  %v137 = vunpack.c.h.b16 %v28
  %v138 = vunpack.c.l.b16 %v29
  %v139 = vunpack.c.l.b16 %v30
  %v140 = vunpack.c.h.b16 %v30
  %v141 = vunpack.c.l.b16 %v31
  %v142 = vunpack.c.l.b16 %v32
  %v143 = vunpack.c.h.b16 %v32
  %v144 = vunpack.c.l.b16 %v33
  %v145 = vunpack.c.l.b16 %v34
  %v146 = vunpack.c.h.b16 %v34
  %v147 = vunpack.c.l.b16 %v35
  %v148 = vunpack.c.l.b16 %v36
  %v149 = vunpack.c.h.b16 %v36
  %v150 = vunpack.c.l.b16 %v37
  %v151 = vunpack.c.l.b16 %v38
  %v152 = vunpack.c.h.b16 %v38
  %v153 = vunpack.c.l.b16 %v39
  %v154 = vunpack.c.l.b16 %v40
  %v155 = vunpack.c.h.b16 %v40
  %v156 = vunpack.c.l.b16 %v41
  %v157 = vunpack.c.l.b16 %v42
  %v158 = vunpack.c.h.b16 %v42
  %v159 = vunpack.c.l.b16 %v43
  %v160 = vpack.c.b16 %v115, %v112
  %v161 = vpack.c.b16 %v116, %v113
  %v162 = vpack.c.b16 %v117, %v114
  %v163 = vpack.c.b16 %v121, %v118
  %v164 = vpack.c.b16 %v122, %v119
  %v165 = vpack.c.b16 %v123, %v120
  %v166 = vpack.c.b16 %v127, %v124
  %v167 = vpack.c.b16 %v128, %v125
  %v168 = vpack.c.b16 %v129, %v126
  %v169 = vpack.c.b16 %v133, %v130
  %v170 = vpack.c.b16 %v134, %v131
  %v171 = vpack.c.b16 %v135, %v132
  %v172 = vpack.c.b16 %v139, %v136
  %v173 = vpack.c.b16 %v140, %v137
  %v174 = vpack.c.b16 %v141, %v138
  %v175 = vpack.c.b16 %v145, %v142
  %v176 = vpack.c.b16 %v146, %v143
  %v177 = vpack.c.b16 %v147, %v144
  %v178 = vpack.c.b16 %v151, %v148
  %v179 = vpack.c.b16 %v152, %v149
  %v180 = vpack.c.b16 %v153, %v150
  %v181 = vpack.c.b16 %v157, %v154
  %v182 = vpack.c.b16 %v158, %v155
  %v183 = vpack.c.b16 %v159, %v156
  %v236 = vunpack.c.l.b16 %v44
  %v237 = vunpack.c.l.b16 %v45
  %v238 = vunpack.c.l.b16 %v46
  %v239 = vunpack.c.l.b16 %v47
  %v240 = vunpack.c.l.b16 %v48
  %v241 = vunpack.c.l.b16 %v49
  %v242 = vunpack.c.l.b16 %v50
  %v243 = vunpack.c.l.b16 %v51
  %v244 = vunpack.c.l.b16 %v52
  %v245 = vunpack.c.l.b16 %v53
  %v246 = vunpack.c.l.b16 %v54
  %v247 = vunpack.c.l.b16 %v55
  %v248 = vunpack.c.l.b16 %v56
  %v249 = vunpack.c.l.b16 %v57
  %v250 = vunpack.c.l.b16 %v58
  %v251 = vunpack.c.l.b16 %v59
  %v252 = vunpack.c.l.b16 %v60
  %v253 = vunpack.c.l.b16 %v61
  %v254 = vunpack.c.l.b16 %v62
  %v255 = vunpack.c.l.b16 %v63
  %v256 = vunpack.c.l.b16 %v64
  %v257 = vunpack.c.l.b16 %v65
  %v258 = vunpack.c.l.b16 %v66
  %v259 = vunpack.c.l.b16 %v67
  %v260 = vunpack.c.l.b16 %v68
  %v261 = vunpack.c.l.b16 %v69
  %v262 = vunpack.c.l.b16 %v70
  %v263 = vunpack.c.l.b16 %v71
  %v264 = vunpack.c.l.b16 %v72
  %v265 = vunpack.c.l.b16 %v73
  %v266 = vunpack.c.l.b16 %v74
  %v267 = vunpack.c.l.b16 %v75
  %v268 = vunpack.c.l.b16 %v76
  %v269 = vunpack.c.l.b16 %v77
  %v270 = vunpack.c.l.b16 %v78
  %v271 = vunpack.c.l.b16 %v79
  %v272 = vpack.c.b16 %v237, %v236
  %v273 = vpack.c.b16 %v239, %v238
  %v274 = vpack.c.b16 %v241, %v240
  %v275 = vpack.c.b16 %v243, %v242
  %v276 = vpack.c.b16 %v245, %v244
  %v277 = vpack.c.b16 %v247, %v246
  %v278 = vpack.c.b16 %v249, %v248
  %v279 = vpack.c.b16 %v251, %v250
  %v280 = vpack.c.b16 %v253, %v252
  %v281 = vpack.c.b16 %v255, %v254
  %v282 = vpack.c.b16 %v257, %v256
  %v283 = vpack.c.b16 %v259, %v258
  %v284 = vpack.c.b16 %v261, %v260
  %v285 = vpack.c.b16 %v263, %v262
  %v286 = vpack.c.b16 %v265, %v264
  %v287 = vpack.c.b16 %v267, %v266
  %v288 = vpack.c.b16 %v269, %v268
  %v289 = vpack.c.b16 %v271, %v270
  %vm308 = vcmask 261120
  %v310 = vsel %vm308, %v162, 0
  %v313 = vsel %vm308, %v165, 0
  %v316 = vsel %vm308, %v168, 0
  %v319 = vsel %vm308, %v171, 0
  %v322 = vsel %vm308, %v174, 0
  %v325 = vsel %vm308, %v177, 0
  %v328 = vsel %vm308, %v180, 0
  %v331 = vsel %vm308, %v183, 0
  %333 = vmatprep.subr.bf16.mxu0 0
  %334 = vmatpush1.bf16.msra.mxu0 %v279
  %335 = vmatprep.subr.bf16.mxu0 0
  %336 = vmatpush1.bf16.msra.mxu0 %v278
  %337 = vmatprep.subr.bf16.mxu0 0
  %338 = vmatpush1.bf16.msra.mxu0 %v277
  %339 = vmatprep.subr.bf16.mxu0 0
  %340 = vmatpush1.bf16.msra.mxu0 %v276
  %341 = vmatprep.subr.bf16.mxu0 0
  %342 = vmatpush1.bf16.msra.mxu0 %v275
  %343 = vmatprep.subr.bf16.mxu0 0
  %344 = vmatpush1.bf16.msra.mxu0 %v274
  %345 = vmatprep.subr.bf16.mxu0 0
  %346 = vmatpush1.bf16.msra.mxu0 %v273
  %347 = vmatprep.subr.bf16.mxu0 0
  %348 = vmatpush1.bf16.msra.mxu0 %v272
  %349 = vmatprep.subr.bf16.mxu0 0
  %350 = vmatpush2.bf16.msra.mxu0 %v287
  %351 = vmatprep.subr.bf16.mxu0 0
  %352 = vmatpush2.bf16.msra.mxu0 %v286
  %353 = vmatprep.subr.bf16.mxu0 0
  %354 = vmatpush2.bf16.msra.mxu0 %v285
  %355 = vmatprep.subr.bf16.mxu0 0
  %356 = vmatpush2.bf16.msra.mxu0 %v284
  %357 = vmatprep.subr.bf16.mxu0 0
  %358 = vmatpush2.bf16.msra.mxu0 %v283
  %359 = vmatprep.subr.bf16.mxu0 0
  %360 = vmatpush2.bf16.msra.mxu0 %v282
  %361 = vmatprep.subr.bf16.mxu0 0
  %362 = vmatpush2.bf16.msra.mxu0 %v281
  %363 = vmatprep.subr.bf16.mxu0 0
  %364 = vmatpush2.bf16.msra.mxu0 %v280
  %365 = vmatprep.mubr.bf16.mxu0 %v161
  %366 = vmatmul.mubr.bf16.gmra.mxu0 %v160
  %v367 = vpop.f32.mrf.mxu0
  %v368 = vadd.f32 0.0, %v367
  %v369 = vpop.f32.mrf.mxu0
  %v370 = vpop.f32.mrf.mxu0
  %v371 = vadd.f32 0.0, %v370
  %v372 = vpop.f32.mrf.mxu0
  %373 = vmatprep.mubr.bf16.mxu0 %v164
  %374 = vmatmul.mubr.bf16.gmra.mxu0 %v163
  %v375 = vpop.f32.mrf.mxu0
  %v376 = vadd.f32 0.0, %v375
  %v377 = vpop.f32.mrf.mxu0
  %v378 = vpop.f32.mrf.mxu0
  %v379 = vadd.f32 0.0, %v378
  %v380 = vpop.f32.mrf.mxu0
  %381 = vmatprep.mubr.bf16.mxu0 %v167
  %382 = vmatmul.mubr.bf16.gmra.mxu0 %v166
  %v383 = vpop.f32.mrf.mxu0
  %v384 = vadd.f32 0.0, %v383
  %v385 = vpop.f32.mrf.mxu0
  %v386 = vpop.f32.mrf.mxu0
  %v387 = vadd.f32 0.0, %v386
  %v388 = vpop.f32.mrf.mxu0
  %389 = vmatprep.mubr.bf16.mxu0 %v170
  %390 = vmatmul.mubr.bf16.gmra.mxu0 %v169
  %v391 = vpop.f32.mrf.mxu0
  %v392 = vadd.f32 0.0, %v391
  %v393 = vpop.f32.mrf.mxu0
  %v394 = vpop.f32.mrf.mxu0
  %v395 = vadd.f32 0.0, %v394
  %v396 = vpop.f32.mrf.mxu0
  %397 = vmatprep.mubr.bf16.mxu0 %v173
  %398 = vmatmul.mubr.bf16.gmra.mxu0 %v172
  %v399 = vpop.f32.mrf.mxu0
  %v400 = vadd.f32 0.0, %v399
  %v401 = vpop.f32.mrf.mxu0
  %v402 = vpop.f32.mrf.mxu0
  %v403 = vadd.f32 0.0, %v402
  %v404 = vpop.f32.mrf.mxu0
  %405 = vmatprep.mubr.bf16.mxu0 %v176
  %406 = vmatmul.mubr.bf16.gmra.mxu0 %v175
  %v407 = vpop.f32.mrf.mxu0
  %v408 = vadd.f32 0.0, %v407
  %v409 = vpop.f32.mrf.mxu0
  %v410 = vpop.f32.mrf.mxu0
  %v411 = vadd.f32 0.0, %v410
  %v412 = vpop.f32.mrf.mxu0
  %413 = vmatprep.mubr.bf16.mxu0 %v179
  %414 = vmatmul.mubr.bf16.gmra.mxu0 %v178
  %v415 = vpop.f32.mrf.mxu0
  %v416 = vadd.f32 0.0, %v415
  %v417 = vpop.f32.mrf.mxu0
  %v418 = vpop.f32.mrf.mxu0
  %v419 = vadd.f32 0.0, %v418
  %v420 = vpop.f32.mrf.mxu0
  %421 = vmatprep.mubr.bf16.mxu0 %v182
  %422 = vmatmul.mubr.bf16.gmra.mxu0 %v181
  %v423 = vpop.f32.mrf.mxu0
  %v424 = vadd.f32 0.0, %v423
  %v425 = vpop.f32.mrf.mxu0
  %v426 = vpop.f32.mrf.mxu0
  %v427 = vadd.f32 0.0, %v426
  %v428 = vpop.f32.mrf.mxu0
  %429 = vdwg.mxu0
  %430 = vmatprep.subr.bf16.mxu0 0
  %431 = vmatpush1.bf16.msra.mxu0 0
  %432 = vmatprep.subr.bf16.mxu0 0
  %433 = vmatpush1.bf16.msra.mxu0 0
  %434 = vmatprep.subr.bf16.mxu0 0
  %435 = vmatpush1.bf16.msra.mxu0 0
  %436 = vmatprep.subr.bf16.mxu0 0
  %437 = vmatpush1.bf16.msra.mxu0 0
  %438 = vmatprep.subr.bf16.mxu0 0
  %439 = vmatpush1.bf16.msra.mxu0 0
  %440 = vmatprep.subr.bf16.mxu0 0
  %441 = vmatpush1.bf16.msra.mxu0 0
  %442 = vmatprep.subr.bf16.mxu0 0
  %443 = vmatpush1.bf16.msra.mxu0 %v289
  %444 = vmatprep.subr.bf16.mxu0 0
  %445 = vmatpush1.bf16.msra.mxu0 %v288
  %446 = vmatprep.subr.bf16.mxu0 0
  %447 = vmatpush2.bf16.msra.mxu0 0
  %448 = vmatprep.subr.bf16.mxu0 0
  %449 = vmatpush2.bf16.msra.mxu0 0
  %450 = vmatprep.subr.bf16.mxu0 0
  %451 = vmatpush2.bf16.msra.mxu0 0
  %452 = vmatprep.subr.bf16.mxu0 0
  %453 = vmatpush2.bf16.msra.mxu0 0
  %454 = vmatprep.subr.bf16.mxu0 0
  %455 = vmatpush2.bf16.msra.mxu0 0
  %456 = vmatprep.subr.bf16.mxu0 0
  %457 = vmatpush2.bf16.msra.mxu0 0
  %458 = vmatprep.subr.bf16.mxu0 0
  %459 = vmatpush2.bf16.msra.mxu0 0
  %460 = vmatprep.subr.bf16.mxu0 0
  %461 = vmatpush2.bf16.msra.mxu0 0
  %462 = vmatprep.mubr.bf16.mxu0 0
  %463 = vmatmul.mubr.bf16.gmra.mxu0 %v310
  %v464 = vpop.f32.mrf.mxu0
  %v465 = vadd.f32 %v368, %v464
  %v466 = vpop.f32.mrf.mxu0
  %v467 = vpop.f32.mrf.mxu0
  %v468 = vadd.f32 %v371, %v467
  %v469 = vpop.f32.mrf.mxu0
  %470 = vmatprep.mubr.bf16.mxu0 0
  %471 = vmatmul.mubr.bf16.gmra.mxu0 %v313
  %v472 = vpop.f32.mrf.mxu0
  %v473 = vadd.f32 %v376, %v472
  %v474 = vpop.f32.mrf.mxu0
  %v475 = vpop.f32.mrf.mxu0
  %v476 = vadd.f32 %v379, %v475
  %v477 = vpop.f32.mrf.mxu0
  %478 = vmatprep.mubr.bf16.mxu0 0
  %479 = vmatmul.mubr.bf16.gmra.mxu0 %v316
  %v480 = vpop.f32.mrf.mxu0
  %v481 = vadd.f32 %v384, %v480
  %v482 = vpop.f32.mrf.mxu0
  %v483 = vpop.f32.mrf.mxu0
  %v484 = vadd.f32 %v387, %v483
  %v485 = vpop.f32.mrf.mxu0
  %486 = vmatprep.mubr.bf16.mxu0 0
  %487 = vmatmul.mubr.bf16.gmra.mxu0 %v319
  %v488 = vpop.f32.mrf.mxu0
  %v489 = vadd.f32 %v392, %v488
  %v490 = vpop.f32.mrf.mxu0
  %v491 = vpop.f32.mrf.mxu0
  %v492 = vadd.f32 %v395, %v491
  %v493 = vpop.f32.mrf.mxu0
  %494 = vmatprep.mubr.bf16.mxu0 0
  %495 = vmatmul.mubr.bf16.gmra.mxu0 %v322
  %v496 = vpop.f32.mrf.mxu0
  %v497 = vadd.f32 %v400, %v496
  %v498 = vpop.f32.mrf.mxu0
  %v499 = vpop.f32.mrf.mxu0
  %v500 = vadd.f32 %v403, %v499
  %v501 = vpop.f32.mrf.mxu0
  %502 = vmatprep.mubr.bf16.mxu0 0
  %503 = vmatmul.mubr.bf16.gmra.mxu0 %v325
  %v504 = vpop.f32.mrf.mxu0
  %v505 = vadd.f32 %v408, %v504
  %v506 = vpop.f32.mrf.mxu0
  %v507 = vpop.f32.mrf.mxu0
  %v508 = vadd.f32 %v411, %v507
  %v509 = vpop.f32.mrf.mxu0
  %510 = vmatprep.mubr.bf16.mxu0 0
  %511 = vmatmul.mubr.bf16.gmra.mxu0 %v328
  %v512 = vpop.f32.mrf.mxu0
  %v513 = vadd.f32 %v416, %v512
  %v514 = vpop.f32.mrf.mxu0
  %v515 = vpop.f32.mrf.mxu0
  %v516 = vadd.f32 %v419, %v515
  %v517 = vpop.f32.mrf.mxu0
  %518 = vmatprep.mubr.bf16.mxu0 0
  %519 = vmatmul.mubr.bf16.gmra.mxu0 %v331
  %v520 = vpop.f32.mrf.mxu0
  %v521 = vadd.f32 %v424, %v520
  %v522 = vpop.f32.mrf.mxu0
  %v523 = vpop.f32.mrf.mxu0
  %v524 = vadd.f32 %v427, %v523
  %v525 = vpop.f32.mrf.mxu0
  %526 = vdwg.mxu0
  %v527 = vpack.c.bf16 %v468, %v465
  %v528 = vpack.c.bf16 %v476, %v473
  %v529 = vpack.c.bf16 %v484, %v481
  %v530 = vpack.c.bf16 %v492, %v489
  %v531 = vpack.c.bf16 %v500, %v497
  %v532 = vpack.c.bf16 %v508, %v505
  %v533 = vpack.c.bf16 %v516, %v513
  %v534 = vpack.c.bf16 %v524, %v521
  %v543 = vunpack.c.l.b16 %v527
  %v544 = vunpack.c.h.b16 %v527
  %v545 = vunpack.c.l.b16 %v528
  %v546 = vunpack.c.h.b16 %v528
  %v547 = vunpack.c.l.b16 %v529
  %v548 = vunpack.c.h.b16 %v529
  %v549 = vunpack.c.l.b16 %v530
  %v550 = vunpack.c.h.b16 %v530
  %v551 = vunpack.c.l.b16 %v531
  %v552 = vunpack.c.h.b16 %v531
  %v553 = vunpack.c.l.b16 %v532
  %v554 = vunpack.c.h.b16 %v532
  %v555 = vunpack.c.l.b16 %v533
  %v556 = vunpack.c.h.b16 %v533
  %v557 = vunpack.c.l.b16 %v534
  %v558 = vunpack.c.h.b16 %v534
  %v559 = vpack.c.b16 %v543, %v543
  %v560 = vpack.c.b16 %v544, %v544
  %v561 = vpack.c.b16 %v545, %v545
  %v562 = vpack.c.b16 %v546, %v546
  %v563 = vpack.c.b16 %v547, %v547
  %v564 = vpack.c.b16 %v548, %v548
  %v565 = vpack.c.b16 %v549, %v549
  %v566 = vpack.c.b16 %v550, %v550
  %v567 = vpack.c.b16 %v551, %v551
  %v568 = vpack.c.b16 %v552, %v552
  %v569 = vpack.c.b16 %v553, %v553
  %v570 = vpack.c.b16 %v554, %v554
  %v571 = vpack.c.b16 %v555, %v555
  %v572 = vpack.c.b16 %v556, %v556
  %v573 = vpack.c.b16 %v557, %v557
  %v574 = vpack.c.b16 %v558, %v558
  %vm591 = vcmask 519168
  %592 = vst.msk [vmem:[%s2] sm:$0xf] %vm591, %v559
  %593 = vst.msk [vmem:[%s2 + $0x4] sm:$0xf] %vm591, %v560
  %594 = vst.msk [vmem:[%s2 + $0x8] sm:$0xf] %vm591, %v561
  %595 = vst.msk [vmem:[%s2 + $0xc] sm:$0xf] %vm591, %v562
  %596 = vst.msk [vmem:[%s2 + $0x10] sm:$0xf] %vm591, %v563
  %597 = vst.msk [vmem:[%s2 + $0x14] sm:$0xf] %vm591, %v564
  %598 = vst.msk [vmem:[%s2 + $0x18] sm:$0xf] %vm591, %v565
  %599 = vst.msk [vmem:[%s2 + $0x1c] sm:$0xf] %vm591, %v566
  %600 = vst.msk [vmem:[%s2 + $0x20] sm:$0xf] %vm591, %v567
  %601 = vst.msk [vmem:[%s2 + $0x24] sm:$0xf] %vm591, %v568
  %602 = vst.msk [vmem:[%s2 + $0x28] sm:$0xf] %vm591, %v569
  %603 = vst.msk [vmem:[%s2 + $0x2c] sm:$0xf] %vm591, %v570
  %604 = vst.msk [vmem:[%s2 + $0x30] sm:$0xf] %vm591, %v571
  %605 = vst.msk [vmem:[%s2 + $0x34] sm:$0xf] %vm591, %v572
  %606 = vst.msk [vmem:[%s2 + $0x38] sm:$0xf] %vm591, %v573
  %607 = vst.msk [vmem:[%s2 + $0x3c] sm:$0xf] %vm591, %v574
  // Predicated region
  $region10: #{generator_forward.13} parent=0 // pred_check
    _
  $region11: #{generator_forward.13} parent=0 // pred_check_branch
    %609 = sbr.rel (0) target = $region13
  $region12: #{generator_forward.13} parent=0 // pred_region
    _
  $region13: #{generator_forward.13} parent=0 // pred_fallthru
    _
  // Predicated region
  $region14: #{generator_forward.13} parent=0 // pred_check
    _
  $region15: #{generator_forward.13} parent=0 // pred_check_branch
    %611 = sbr.rel (0) target = $region17
  $region16: #{generator_forward.13} parent=0 // pred_region
    _
  $region17: #{generator_forward.13} parent=0 // pred_fallthru
    _

// kernel: generator_forward.15
$region0: #{generator_forward.15}
  #allocation0 [shape = 'u32[]', space=smem, size = 0x4, offset = 0x4, fixed_abs, tag = 'smem constant byte address 0x4 - core index']
  #allocation1 [shape = 'u32[144,128]{1,0:T(1,128)}', space=vmem, size = 0x12000, scoped, tag = 'internal scratch']
  %s0 = inlined_call_operand.vmem [shape: bf16[512,144], index: 0, kind: input, shape index: {}]
  %s1 = inlined_call_operand.vmem [shape: bf16[144,32], index: 1, kind: input, shape index: {}]
  %s2 = inlined_call_operand.vmem [shape: bf16[512,32], index: 2, kind: output, shape index: {}]
  %s3 = sld [smem:[#allocation0]]
  $region18: #{generator_forward.15} parent=0
    _
  %s5 = ssub.s32 1, %s3
  %s6 = scalar_select 0, %s5, %s3
  // Predicated region
  $region2: #{generator_forward.15} parent=0 // pred_check
    _
  $region3: #{generator_forward.15} parent=0 // pred_check_branch
    %8 = sbr.rel (0) target = $region5
  $region4: #{generator_forward.15} parent=0 // pred_region
    _
  $region5: #{generator_forward.15} parent=0 // pred_fallthru
    _
  // Predicated region
  $region6: #{generator_forward.15} parent=0 // pred_check
    _
  $region7: #{generator_forward.15} parent=0 // pred_check_branch
    %10 = sbr.rel (0) target = $region9
  $region8: #{generator_forward.15} parent=0 // pred_region
    _
  $region9: #{generator_forward.15} parent=0 // pred_fallthru
    _
  %v12 = vld [vmem:[%s0] sm:$0xff]
  %v13 = vld [vmem:[%s0 + $0x8] sm:$0xff]
  %v14 = vld [vmem:[%s0 + $0x10] sm:$0xff]
  %v15 = vld [vmem:[%s0 + $0x18] sm:$0xff]
  %v16 = vld [vmem:[%s0 + $0x20] sm:$0xff]
  %v17 = vld [vmem:[%s0 + $0x28] sm:$0xff]
  %v18 = vld [vmem:[%s0 + $0x30] sm:$0xff]
  %v19 = vld [vmem:[%s0 + $0x38] sm:$0xff]
  %v20 = vld [vmem:[%s0 + $0x40] sm:$0xff]
  %v21 = vld [vmem:[%s0 + $0x48] sm:$0xff]
  %v22 = vld [vmem:[%s0 + $0x50] sm:$0xff]
  %v23 = vld [vmem:[%s0 + $0x58] sm:$0xff]
  %v24 = vld [vmem:[%s0 + $0x60] sm:$0xff]
  %v25 = vld [vmem:[%s0 + $0x68] sm:$0xff]
  %v26 = vld [vmem:[%s0 + $0x70] sm:$0xff]
  %v27 = vld [vmem:[%s0 + $0x78] sm:$0xff]
  %v28 = vld [vmem:[%s0 + $0x80] sm:$0xff]
  %v29 = vld [vmem:[%s0 + $0x88] sm:$0xff]
  %v30 = vld [vmem:[%s0 + $0x90] sm:$0xff]
  %v31 = vld [vmem:[%s0 + $0x98] sm:$0xff]
  %v32 = vld [vmem:[%s0 + $0xa0] sm:$0xff]
  %v33 = vld [vmem:[%s0 + $0xa8] sm:$0xff]
  %v34 = vld [vmem:[%s0 + $0xb0] sm:$0xff]
  %v35 = vld [vmem:[%s0 + $0xb8] sm:$0xff]
  %v36 = vld [vmem:[%s0 + $0xc0] sm:$0xff]
  %v37 = vld [vmem:[%s0 + $0xc8] sm:$0xff]
  %v38 = vld [vmem:[%s0 + $0xd0] sm:$0xff]
  %v39 = vld [vmem:[%s0 + $0xd8] sm:$0xff]
  %v40 = vld [vmem:[%s0 + $0xe0] sm:$0xff]
  %v41 = vld [vmem:[%s0 + $0xe8] sm:$0xff]
  %v42 = vld [vmem:[%s0 + $0xf0] sm:$0xff]
  %v43 = vld [vmem:[%s0 + $0xf8] sm:$0xff]
  %v44 = vld [vmem:[%s0 + $0x100] sm:$0xff]
  %v45 = vld [vmem:[%s0 + $0x108] sm:$0xff]
  %v46 = vld [vmem:[%s0 + $0x110] sm:$0xff]
  %v47 = vld [vmem:[%s0 + $0x118] sm:$0xff]
  %v48 = vld [vmem:[%s0 + $0x120] sm:$0xff]
  %v49 = vld [vmem:[%s0 + $0x128] sm:$0xff]
  %v50 = vld [vmem:[%s0 + $0x130] sm:$0xff]
  %v51 = vld [vmem:[%s0 + $0x138] sm:$0xff]
  %v52 = vld [vmem:[%s0 + $0x140] sm:$0xff]
  %v53 = vld [vmem:[%s0 + $0x148] sm:$0xff]
  %v54 = vld [vmem:[%s0 + $0x150] sm:$0xff]
  %v55 = vld [vmem:[%s0 + $0x158] sm:$0xff]
  %v56 = vld [vmem:[%s0 + $0x160] sm:$0xff]
  %v57 = vld [vmem:[%s0 + $0x168] sm:$0xff]
  %v58 = vld [vmem:[%s0 + $0x170] sm:$0xff]
  %v59 = vld [vmem:[%s0 + $0x178] sm:$0xff]
  %v60 = vld [vmem:[%s0 + $0x180] sm:$0xff]
  %v61 = vld [vmem:[%s0 + $0x188] sm:$0xff]
  %v62 = vld [vmem:[%s0 + $0x190] sm:$0xff]
  %v63 = vld [vmem:[%s0 + $0x198] sm:$0xff]
  %v64 = vld [vmem:[%s0 + $0x1a0] sm:$0xff]
  %v65 = vld [vmem:[%s0 + $0x1a8] sm:$0xff]
  %v66 = vld [vmem:[%s0 + $0x1b0] sm:$0xff]
  %v67 = vld [vmem:[%s0 + $0x1b8] sm:$0xff]
  %v68 = vld [vmem:[%s0 + $0x1c0] sm:$0xff]
  %v69 = vld [vmem:[%s0 + $0x1c8] sm:$0xff]
  %v70 = vld [vmem:[%s0 + $0x1d0] sm:$0xff]
  %v71 = vld [vmem:[%s0 + $0x1d8] sm:$0xff]
  %v72 = vld [vmem:[%s0 + $0x1e0] sm:$0xff]
  %v73 = vld [vmem:[%s0 + $0x1e8] sm:$0xff]
  %v74 = vld [vmem:[%s0 + $0x1f0] sm:$0xff]
  %v75 = vld [vmem:[%s0 + $0x1f8] sm:$0xff]
  %v76 = vld [vmem:[%s1] sm:$0xf]
  %v77 = vld [vmem:[%s1 + $0x4] sm:$0xf]
  %v78 = vld [vmem:[%s1 + $0x8] sm:$0xf]
  %v79 = vld [vmem:[%s1 + $0xc] sm:$0xf]
  %v80 = vld [vmem:[%s1 + $0x10] sm:$0xf]
  %v81 = vld [vmem:[%s1 + $0x14] sm:$0xf]
  %v82 = vld [vmem:[%s1 + $0x18] sm:$0xf]
  %v83 = vld [vmem:[%s1 + $0x1c] sm:$0xf]
  %v84 = vld [vmem:[%s1 + $0x20] sm:$0xf]
  %v85 = vld [vmem:[%s1 + $0x24] sm:$0xf]
  %v86 = vld [vmem:[%s1 + $0x28] sm:$0xf]
  %v87 = vld [vmem:[%s1 + $0x2c] sm:$0xf]
  %v88 = vld [vmem:[%s1 + $0x30] sm:$0xf]
  %v89 = vld [vmem:[%s1 + $0x34] sm:$0xf]
  %v90 = vld [vmem:[%s1 + $0x38] sm:$0xf]
  %v91 = vld [vmem:[%s1 + $0x3c] sm:$0xf]
  %v92 = vld [vmem:[%s1 + $0x40] sm:$0xf]
  %v93 = vld [vmem:[%s1 + $0x44] sm:$0xf]
  %v158 = vunpack.c.l.b16 %v12
  %v159 = vunpack.c.h.b16 %v12
  %v160 = vunpack.c.l.b16 %v13
  %v161 = vunpack.c.h.b16 %v13
  %v162 = vunpack.c.l.b16 %v14
  %v163 = vunpack.c.h.b16 %v14
  %v164 = vunpack.c.l.b16 %v15
  %v165 = vunpack.c.h.b16 %v15
  %v166 = vunpack.c.l.b16 %v16
  %v167 = vunpack.c.h.b16 %v16
  %v168 = vunpack.c.l.b16 %v17
  %v169 = vunpack.c.h.b16 %v17
  %v170 = vunpack.c.l.b16 %v18
  %v171 = vunpack.c.h.b16 %v18
  %v172 = vunpack.c.l.b16 %v19
  %v173 = vunpack.c.h.b16 %v19
  %v174 = vunpack.c.l.b16 %v20
  %v175 = vunpack.c.h.b16 %v20
  %v176 = vunpack.c.l.b16 %v21
  %v177 = vunpack.c.h.b16 %v21
  %v178 = vunpack.c.l.b16 %v22
  %v179 = vunpack.c.h.b16 %v22
  %v180 = vunpack.c.l.b16 %v23
  %v181 = vunpack.c.h.b16 %v23
  %v182 = vunpack.c.l.b16 %v24
  %v183 = vunpack.c.h.b16 %v24
  %v184 = vunpack.c.l.b16 %v25
  %v185 = vunpack.c.h.b16 %v25
  %v186 = vunpack.c.l.b16 %v26
  %v187 = vunpack.c.h.b16 %v26
  %v188 = vunpack.c.l.b16 %v27
  %v189 = vunpack.c.h.b16 %v27
  %v190 = vunpack.c.l.b16 %v28
  %v191 = vunpack.c.h.b16 %v28
  %v192 = vunpack.c.l.b16 %v29
  %v193 = vunpack.c.h.b16 %v29
  %v194 = vunpack.c.l.b16 %v30
  %v195 = vunpack.c.h.b16 %v30
  %v196 = vunpack.c.l.b16 %v31
  %v197 = vunpack.c.h.b16 %v31
  %v198 = vunpack.c.l.b16 %v32
  %v199 = vunpack.c.h.b16 %v32
  %v200 = vunpack.c.l.b16 %v33
  %v201 = vunpack.c.h.b16 %v33
  %v202 = vunpack.c.l.b16 %v34
  %v203 = vunpack.c.h.b16 %v34
  %v204 = vunpack.c.l.b16 %v35
  %v205 = vunpack.c.h.b16 %v35
  %v206 = vunpack.c.l.b16 %v36
  %v207 = vunpack.c.h.b16 %v36
  %v208 = vunpack.c.l.b16 %v37
  %v209 = vunpack.c.h.b16 %v37
  %v210 = vunpack.c.l.b16 %v38
  %v211 = vunpack.c.h.b16 %v38
  %v212 = vunpack.c.l.b16 %v39
  %v213 = vunpack.c.h.b16 %v39
  %v214 = vunpack.c.l.b16 %v40
  %v215 = vunpack.c.h.b16 %v40
  %v216 = vunpack.c.l.b16 %v41
  %v217 = vunpack.c.h.b16 %v41
  %v218 = vunpack.c.l.b16 %v42
  %v219 = vunpack.c.h.b16 %v42
  %v220 = vunpack.c.l.b16 %v43
  %v221 = vunpack.c.h.b16 %v43
  %v222 = vunpack.c.l.b16 %v44
  %v223 = vunpack.c.h.b16 %v44
  %v224 = vunpack.c.l.b16 %v45
  %v225 = vunpack.c.h.b16 %v45
  %v226 = vunpack.c.l.b16 %v46
  %v227 = vunpack.c.h.b16 %v46
  %v228 = vunpack.c.l.b16 %v47
  %v229 = vunpack.c.h.b16 %v47
  %v230 = vunpack.c.l.b16 %v48
  %v231 = vunpack.c.h.b16 %v48
  %v232 = vunpack.c.l.b16 %v49
  %v233 = vunpack.c.h.b16 %v49
  %v234 = vunpack.c.l.b16 %v50
  %v235 = vunpack.c.h.b16 %v50
  %v236 = vunpack.c.l.b16 %v51
  %v237 = vunpack.c.h.b16 %v51
  %v238 = vunpack.c.l.b16 %v52
  %v239 = vunpack.c.h.b16 %v52
  %v240 = vunpack.c.l.b16 %v53
  %v241 = vunpack.c.h.b16 %v53
  %v242 = vunpack.c.l.b16 %v54
  %v243 = vunpack.c.h.b16 %v54
  %v244 = vunpack.c.l.b16 %v55
  %v245 = vunpack.c.h.b16 %v55
  %v246 = vunpack.c.l.b16 %v56
  %v247 = vunpack.c.h.b16 %v56
  %v248 = vunpack.c.l.b16 %v57
  %v249 = vunpack.c.h.b16 %v57
  %v250 = vunpack.c.l.b16 %v58
  %v251 = vunpack.c.h.b16 %v58
  %v252 = vunpack.c.l.b16 %v59
  %v253 = vunpack.c.h.b16 %v59
  %v254 = vunpack.c.l.b16 %v60
  %v255 = vunpack.c.h.b16 %v60
  %v256 = vunpack.c.l.b16 %v61
  %v257 = vunpack.c.h.b16 %v61
  %v258 = vunpack.c.l.b16 %v62
  %v259 = vunpack.c.h.b16 %v62
  %v260 = vunpack.c.l.b16 %v63
  %v261 = vunpack.c.h.b16 %v63
  %v262 = vunpack.c.l.b16 %v64
  %v263 = vunpack.c.h.b16 %v64
  %v264 = vunpack.c.l.b16 %v65
  %v265 = vunpack.c.h.b16 %v65
  %v266 = vunpack.c.l.b16 %v66
  %v267 = vunpack.c.h.b16 %v66
  %v268 = vunpack.c.l.b16 %v67
  %v269 = vunpack.c.h.b16 %v67
  %v270 = vunpack.c.l.b16 %v68
  %v271 = vunpack.c.h.b16 %v68
  %v272 = vunpack.c.l.b16 %v69
  %v273 = vunpack.c.h.b16 %v69
  %v274 = vunpack.c.l.b16 %v70
  %v275 = vunpack.c.h.b16 %v70
  %v276 = vunpack.c.l.b16 %v71
  %v277 = vunpack.c.h.b16 %v71
  %v278 = vunpack.c.l.b16 %v72
  %v279 = vunpack.c.h.b16 %v72
  %v280 = vunpack.c.l.b16 %v73
  %v281 = vunpack.c.h.b16 %v73
  %v282 = vunpack.c.l.b16 %v74
  %v283 = vunpack.c.h.b16 %v74
  %v284 = vunpack.c.l.b16 %v75
  %v285 = vunpack.c.h.b16 %v75
  %v286 = vpack.c.b16 %v160, %v158
  %v287 = vpack.c.b16 %v161, %v159
  %v288 = vpack.c.b16 %v164, %v162
  %v289 = vpack.c.b16 %v165, %v163
  %v290 = vpack.c.b16 %v168, %v166
  %v291 = vpack.c.b16 %v169, %v167
  %v292 = vpack.c.b16 %v172, %v170
  %v293 = vpack.c.b16 %v173, %v171
  %v294 = vpack.c.b16 %v176, %v174
  %v295 = vpack.c.b16 %v177, %v175
  %v296 = vpack.c.b16 %v180, %v178
  %v297 = vpack.c.b16 %v181, %v179
  %v298 = vpack.c.b16 %v184, %v182
  %v299 = vpack.c.b16 %v185, %v183
  %v300 = vpack.c.b16 %v188, %v186
  %v301 = vpack.c.b16 %v189, %v187
  %v302 = vpack.c.b16 %v192, %v190
  %v303 = vpack.c.b16 %v193, %v191
  %v304 = vpack.c.b16 %v196, %v194
  %v305 = vpack.c.b16 %v197, %v195
  %v306 = vpack.c.b16 %v200, %v198
  %v307 = vpack.c.b16 %v201, %v199
  %v308 = vpack.c.b16 %v204, %v202
  %v309 = vpack.c.b16 %v205, %v203
  %v310 = vpack.c.b16 %v208, %v206
  %v311 = vpack.c.b16 %v209, %v207
  %v312 = vpack.c.b16 %v212, %v210
  %v313 = vpack.c.b16 %v213, %v211
  %v314 = vpack.c.b16 %v216, %v214
  %v315 = vpack.c.b16 %v217, %v215
  %v316 = vpack.c.b16 %v220, %v218
  %v317 = vpack.c.b16 %v221, %v219
  %v318 = vpack.c.b16 %v224, %v222
  %v319 = vpack.c.b16 %v225, %v223
  %v320 = vpack.c.b16 %v228, %v226
  %v321 = vpack.c.b16 %v229, %v227
  %v322 = vpack.c.b16 %v232, %v230
  %v323 = vpack.c.b16 %v233, %v231
  %v324 = vpack.c.b16 %v236, %v234
  %v325 = vpack.c.b16 %v237, %v235
  %v326 = vpack.c.b16 %v240, %v238
  %v327 = vpack.c.b16 %v241, %v239
  %v328 = vpack.c.b16 %v244, %v242
  %v329 = vpack.c.b16 %v245, %v243
  %v330 = vpack.c.b16 %v248, %v246
  %v331 = vpack.c.b16 %v249, %v247
  %v332 = vpack.c.b16 %v252, %v250
  %v333 = vpack.c.b16 %v253, %v251
  %v334 = vpack.c.b16 %v256, %v254
  %v335 = vpack.c.b16 %v257, %v255
  %v336 = vpack.c.b16 %v260, %v258
  %v337 = vpack.c.b16 %v261, %v259
  %v338 = vpack.c.b16 %v264, %v262
  %v339 = vpack.c.b16 %v265, %v263
  %v340 = vpack.c.b16 %v268, %v266
  %v341 = vpack.c.b16 %v269, %v267
  %v342 = vpack.c.b16 %v272, %v270
  %v343 = vpack.c.b16 %v273, %v271
  %v344 = vpack.c.b16 %v276, %v274
  %v345 = vpack.c.b16 %v277, %v275
  %v346 = vpack.c.b16 %v280, %v278
  %v347 = vpack.c.b16 %v281, %v279
  %v348 = vpack.c.b16 %v284, %v282
  %v349 = vpack.c.b16 %v285, %v283
  %v400 = vunpack.c.l.b16 %v76
  %v401 = vunpack.c.l.b16 %v77
  %v402 = vunpack.c.l.b16 %v78
  %v403 = vunpack.c.l.b16 %v79
  %v404 = vunpack.c.l.b16 %v80
  %v405 = vunpack.c.l.b16 %v81
  %v406 = vunpack.c.l.b16 %v82
  %v407 = vunpack.c.l.b16 %v83
  %v408 = vunpack.c.l.b16 %v84
  %v409 = vunpack.c.l.b16 %v85
  %v410 = vunpack.c.l.b16 %v86
  %v411 = vunpack.c.l.b16 %v87
  %v412 = vunpack.c.l.b16 %v88
  %v413 = vunpack.c.l.b16 %v89
  %v414 = vunpack.c.l.b16 %v90
  %v415 = vunpack.c.l.b16 %v91
  %v416 = vunpack.c.l.b16 %v92
  %v417 = vunpack.c.l.b16 %v93
  %v418 = vpack.c.b16 %v401, %v400
  %v419 = vpack.c.b16 %v403, %v402
  %v420 = vpack.c.b16 %v405, %v404
  %v421 = vpack.c.b16 %v407, %v406
  %v422 = vpack.c.b16 %v409, %v408
  %v423 = vpack.c.b16 %v411, %v410
  %v424 = vpack.c.b16 %v413, %v412
  %v425 = vpack.c.b16 %v415, %v414
  %v426 = vpack.c.b16 %v417, %v416
  %vm436 = vcmask 130048
  %v438 = vsel %vm436, %v287, 0
  %v441 = vsel %vm436, %v289, 0
  %v444 = vsel %vm436, %v291, 0
  %v447 = vsel %vm436, %v293, 0
  %v450 = vsel %vm436, %v295, 0
  %v453 = vsel %vm436, %v297, 0
  %v456 = vsel %vm436, %v299, 0
  %v459 = vsel %vm436, %v301, 0
  %v462 = vsel %vm436, %v303, 0
  %v465 = vsel %vm436, %v305, 0
  %v468 = vsel %vm436, %v307, 0
  %v471 = vsel %vm436, %v309, 0
  %v474 = vsel %vm436, %v311, 0
  %v477 = vsel %vm436, %v313, 0
  %v480 = vsel %vm436, %v315, 0
  %v483 = vsel %vm436, %v317, 0
  %v486 = vsel %vm436, %v319, 0
  %v489 = vsel %vm436, %v321, 0
  %v492 = vsel %vm436, %v323, 0
  %v495 = vsel %vm436, %v325, 0
  %v498 = vsel %vm436, %v327, 0
  %v501 = vsel %vm436, %v329, 0
  %v504 = vsel %vm436, %v331, 0
  %v507 = vsel %vm436, %v333, 0
  %v510 = vsel %vm436, %v335, 0
  %v513 = vsel %vm436, %v337, 0
  %v516 = vsel %vm436, %v339, 0
  %v519 = vsel %vm436, %v341, 0
  %v522 = vsel %vm436, %v343, 0
  %v525 = vsel %vm436, %v345, 0
  %v528 = vsel %vm436, %v347, 0
  %v531 = vsel %vm436, %v349, 0
  %533 = vmatprep.subr.bf16.mxu0 0
  %534 = vmatpush1.bf16.msra.mxu0 %v425
  %535 = vmatprep.subr.bf16.mxu0 0
  %536 = vmatpush1.bf16.msra.mxu0 %v424
  %537 = vmatprep.subr.bf16.mxu0 0
  %538 = vmatpush1.bf16.msra.mxu0 %v423
  %539 = vmatprep.subr.bf16.mxu0 0
  %540 = vmatpush1.bf16.msra.mxu0 %v422
  %541 = vmatprep.subr.bf16.mxu0 0
  %542 = vmatpush1.bf16.msra.mxu0 %v421
  %543 = vmatprep.subr.bf16.mxu0 0
  %544 = vmatpush1.bf16.msra.mxu0 %v420
  %545 = vmatprep.subr.bf16.mxu0 0
  %546 = vmatpush1.bf16.msra.mxu0 %v419
  %547 = vmatprep.subr.bf16.mxu0 0
  %548 = vmatpush1.bf16.msra.mxu0 %v418
  %549 = vmatprep.subr.bf16.mxu0 0
  %550 = vmatpush2.bf16.msra.mxu0 0
  %551 = vmatprep.subr.bf16.mxu0 0
  %552 = vmatpush2.bf16.msra.mxu0 0
  %553 = vmatprep.subr.bf16.mxu0 0
  %554 = vmatpush2.bf16.msra.mxu0 0
  %555 = vmatprep.subr.bf16.mxu0 0
  %556 = vmatpush2.bf16.msra.mxu0 0
  %557 = vmatprep.subr.bf16.mxu0 0
  %558 = vmatpush2.bf16.msra.mxu0 0
  %559 = vmatprep.subr.bf16.mxu0 0
  %560 = vmatpush2.bf16.msra.mxu0 0
  %561 = vmatprep.subr.bf16.mxu0 0
  %562 = vmatpush2.bf16.msra.mxu0 0
  %563 = vmatprep.subr.bf16.mxu0 0
  %564 = vmatpush2.bf16.msra.mxu0 %v426
  %565 = vmatprep.mubr.bf16.mxu0 %v438
  %566 = vmatmul.mubr.bf16.gmra.mxu0 %v286
  %v567 = vpop.f32.mrf.mxu0
  %v568 = vadd.f32 0.0, %v567
  %v569 = vpop.f32.mrf.mxu0
  %v570 = vpop.f32.mrf.mxu0
  %v571 = vadd.f32 0.0, %v570
  %v572 = vpop.f32.mrf.mxu0
  %573 = vmatprep.mubr.bf16.mxu0 %v441
  %574 = vmatmul.mubr.bf16.gmra.mxu0 %v288
  %v575 = vpop.f32.mrf.mxu0
  %v576 = vadd.f32 0.0, %v575
  %v577 = vpop.f32.mrf.mxu0
  %v578 = vpop.f32.mrf.mxu0
  %v579 = vadd.f32 0.0, %v578
  %v580 = vpop.f32.mrf.mxu0
  %581 = vmatprep.mubr.bf16.mxu0 %v444
  %582 = vmatmul.mubr.bf16.gmra.mxu0 %v290
  %v583 = vpop.f32.mrf.mxu0
  %v584 = vadd.f32 0.0, %v583
  %v585 = vpop.f32.mrf.mxu0
  %v586 = vpop.f32.mrf.mxu0
  %v587 = vadd.f32 0.0, %v586
  %v588 = vpop.f32.mrf.mxu0
  %589 = vmatprep.mubr.bf16.mxu0 %v447
  %590 = vmatmul.mubr.bf16.gmra.mxu0 %v292
  %v591 = vpop.f32.mrf.mxu0
  %v592 = vadd.f32 0.0, %v591
  %v593 = vpop.f32.mrf.mxu0
  %v594 = vpop.f32.mrf.mxu0
  %v595 = vadd.f32 0.0, %v594
  %v596 = vpop.f32.mrf.mxu0
  %597 = vmatprep.mubr.bf16.mxu0 %v450
  %598 = vmatmul.mubr.bf16.gmra.mxu0 %v294
  %v599 = vpop.f32.mrf.mxu0
  %v600 = vadd.f32 0.0, %v599
  %v601 = vpop.f32.mrf.mxu0
  %v602 = vpop.f32.mrf.mxu0
  %v603 = vadd.f32 0.0, %v602
  %v604 = vpop.f32.mrf.mxu0
  %605 = vmatprep.mubr.bf16.mxu0 %v453
  %606 = vmatmul.mubr.bf16.gmra.mxu0 %v296
  %v607 = vpop.f32.mrf.mxu0
  %v608 = vadd.f32 0.0, %v607
  %v609 = vpop.f32.mrf.mxu0
  %v610 = vpop.f32.mrf.mxu0
  %v611 = vadd.f32 0.0, %v610
  %v612 = vpop.f32.mrf.mxu0
  %613 = vmatprep.mubr.bf16.mxu0 %v456
  %614 = vmatmul.mubr.bf16.gmra.mxu0 %v298
  %v615 = vpop.f32.mrf.mxu0
  %v616 = vadd.f32 0.0, %v615
  %v617 = vpop.f32.mrf.mxu0
  %v618 = vpop.f32.mrf.mxu0
  %v619 = vadd.f32 0.0, %v618
  %v620 = vpop.f32.mrf.mxu0
  %621 = vmatprep.mubr.bf16.mxu0 %v459
  %622 = vmatmul.mubr.bf16.gmra.mxu0 %v300
  %v623 = vpop.f32.mrf.mxu0
  %v624 = vadd.f32 0.0, %v623
  %v625 = vpop.f32.mrf.mxu0
  %v626 = vpop.f32.mrf.mxu0
  %v627 = vadd.f32 0.0, %v626
  %v628 = vpop.f32.mrf.mxu0
  %629 = vmatprep.mubr.bf16.mxu0 %v462
  %630 = vmatmul.mubr.bf16.gmra.mxu0 %v302
  %v631 = vpop.f32.mrf.mxu0
  %v632 = vadd.f32 0.0, %v631
  %v633 = vpop.f32.mrf.mxu0
  %v634 = vpop.f32.mrf.mxu0
  %v635 = vadd.f32 0.0, %v634
  %v636 = vpop.f32.mrf.mxu0
  %637 = vmatprep.mubr.bf16.mxu0 %v465
  %638 = vmatmul.mubr.bf16.gmra.mxu0 %v304
  %v639 = vpop.f32.mrf.mxu0
  %v640 = vadd.f32 0.0, %v639
  %v641 = vpop.f32.mrf.mxu0
  %v642 = vpop.f32.mrf.mxu0
  %v643 = vadd.f32 0.0, %v642
  %v644 = vpop.f32.mrf.mxu0
  %645 = vmatprep.mubr.bf16.mxu0 %v468
  %646 = vmatmul.mubr.bf16.gmra.mxu0 %v306
  %v647 = vpop.f32.mrf.mxu0
  %v648 = vadd.f32 0.0, %v647
  %v649 = vpop.f32.mrf.mxu0
  %v650 = vpop.f32.mrf.mxu0
  %v651 = vadd.f32 0.0, %v650
  %v652 = vpop.f32.mrf.mxu0
  %653 = vmatprep.mubr.bf16.mxu0 %v471
  %654 = vmatmul.mubr.bf16.gmra.mxu0 %v308
  %v655 = vpop.f32.mrf.mxu0
  %v656 = vadd.f32 0.0, %v655
  %v657 = vpop.f32.mrf.mxu0
  %v658 = vpop.f32.mrf.mxu0
  %v659 = vadd.f32 0.0, %v658
  %v660 = vpop.f32.mrf.mxu0
  %661 = vmatprep.mubr.bf16.mxu0 %v474
  %662 = vmatmul.mubr.bf16.gmra.mxu0 %v310
  %v663 = vpop.f32.mrf.mxu0
  %v664 = vadd.f32 0.0, %v663
  %v665 = vpop.f32.mrf.mxu0
  %v666 = vpop.f32.mrf.mxu0
  %v667 = vadd.f32 0.0, %v666
  %v668 = vpop.f32.mrf.mxu0
  %669 = vmatprep.mubr.bf16.mxu0 %v477
  %670 = vmatmul.mubr.bf16.gmra.mxu0 %v312
  %v671 = vpop.f32.mrf.mxu0
  %v672 = vadd.f32 0.0, %v671
  %v673 = vpop.f32.mrf.mxu0
  %v674 = vpop.f32.mrf.mxu0
  %v675 = vadd.f32 0.0, %v674
  %v676 = vpop.f32.mrf.mxu0
  %677 = vmatprep.mubr.bf16.mxu0 %v480
  %678 = vmatmul.mubr.bf16.gmra.mxu0 %v314
  %v679 = vpop.f32.mrf.mxu0
  %v680 = vadd.f32 0.0, %v679
  %v681 = vpop.f32.mrf.mxu0
  %v682 = vpop.f32.mrf.mxu0
  %v683 = vadd.f32 0.0, %v682
  %v684 = vpop.f32.mrf.mxu0
  %685 = vmatprep.mubr.bf16.mxu0 %v483
  %686 = vmatmul.mubr.bf16.gmra.mxu0 %v316
  %v687 = vpop.f32.mrf.mxu0
  %v688 = vadd.f32 0.0, %v687
  %v689 = vpop.f32.mrf.mxu0
  %v690 = vpop.f32.mrf.mxu0
  %v691 = vadd.f32 0.0, %v690
  %v692 = vpop.f32.mrf.mxu0
  %693 = vmatprep.mubr.bf16.mxu0 %v486
  %694 = vmatmul.mubr.bf16.gmra.mxu0 %v318
  %v695 = vpop.f32.mrf.mxu0
  %v696 = vadd.f32 0.0, %v695
  %v697 = vpop.f32.mrf.mxu0
  %v698 = vpop.f32.mrf.mxu0
  %v699 = vadd.f32 0.0, %v698
  %v700 = vpop.f32.mrf.mxu0
  %701 = vmatprep.mubr.bf16.mxu0 %v489
  %702 = vmatmul.mubr.bf16.gmra.mxu0 %v320
  %v703 = vpop.f32.mrf.mxu0
  %v704 = vadd.f32 0.0, %v703
  %v705 = vpop.f32.mrf.mxu0
  %v706 = vpop.f32.mrf.mxu0
  %v707 = vadd.f32 0.0, %v706
  %v708 = vpop.f32.mrf.mxu0
  %709 = vmatprep.mubr.bf16.mxu0 %v492
  %710 = vmatmul.mubr.bf16.gmra.mxu0 %v322
  %v711 = vpop.f32.mrf.mxu0
  %v712 = vadd.f32 0.0, %v711
  %v713 = vpop.f32.mrf.mxu0
  %v714 = vpop.f32.mrf.mxu0
  %v715 = vadd.f32 0.0, %v714
  %v716 = vpop.f32.mrf.mxu0
  %717 = vmatprep.mubr.bf16.mxu0 %v495
  %718 = vmatmul.mubr.bf16.gmra.mxu0 %v324
  %v719 = vpop.f32.mrf.mxu0
  %v720 = vadd.f32 0.0, %v719
  %v721 = vpop.f32.mrf.mxu0
  %v722 = vpop.f32.mrf.mxu0
  %v723 = vadd.f32 0.0, %v722
  %v724 = vpop.f32.mrf.mxu0
  %725 = vmatprep.mubr.bf16.mxu0 %v498
  %726 = vmatmul.mubr.bf16.gmra.mxu0 %v326
  %v727 = vpop.f32.mrf.mxu0
  %v728 = vadd.f32 0.0, %v727
  %v729 = vpop.f32.mrf.mxu0
  %v730 = vpop.f32.mrf.mxu0
  %v731 = vadd.f32 0.0, %v730
  %v732 = vpop.f32.mrf.mxu0
  %733 = vmatprep.mubr.bf16.mxu0 %v501
  %734 = vmatmul.mubr.bf16.gmra.mxu0 %v328
  %v735 = vpop.f32.mrf.mxu0
  %v736 = vadd.f32 0.0, %v735
  %v737 = vpop.f32.mrf.mxu0
  %v738 = vpop.f32.mrf.mxu0
  %v739 = vadd.f32 0.0, %v738
  %v740 = vpop.f32.mrf.mxu0
  %741 = vmatprep.mubr.bf16.mxu0 %v504
  %742 = vmatmul.mubr.bf16.gmra.mxu0 %v330
  %v743 = vpop.f32.mrf.mxu0
  %v744 = vadd.f32 0.0, %v743
  %v745 = vpop.f32.mrf.mxu0
  %v746 = vpop.f32.mrf.mxu0
  %v747 = vadd.f32 0.0, %v746
  %v748 = vpop.f32.mrf.mxu0
  %749 = vmatprep.mubr.bf16.mxu0 %v507
  %750 = vmatmul.mubr.bf16.gmra.mxu0 %v332
  %v751 = vpop.f32.mrf.mxu0
  %v752 = vadd.f32 0.0, %v751
  %v753 = vpop.f32.mrf.mxu0
  %v754 = vpop.f32.mrf.mxu0
  %v755 = vadd.f32 0.0, %v754
  %v756 = vpop.f32.mrf.mxu0
  %757 = vmatprep.mubr.bf16.mxu0 %v510
  %758 = vmatmul.mubr.bf16.gmra.mxu0 %v334
  %v759 = vpop.f32.mrf.mxu0
  %v760 = vadd.f32 0.0, %v759
  %v761 = vpop.f32.mrf.mxu0
  %v762 = vpop.f32.mrf.mxu0
  %v763 = vadd.f32 0.0, %v762
  %v764 = vpop.f32.mrf.mxu0
  %765 = vmatprep.mubr.bf16.mxu0 %v513
  %766 = vmatmul.mubr.bf16.gmra.mxu0 %v336
  %v767 = vpop.f32.mrf.mxu0
  %v768 = vadd.f32 0.0, %v767
  %v769 = vpop.f32.mrf.mxu0
  %v770 = vpop.f32.mrf.mxu0
  %v771 = vadd.f32 0.0, %v770
  %v772 = vpop.f32.mrf.mxu0
  %773 = vmatprep.mubr.bf16.mxu0 %v516
  %774 = vmatmul.mubr.bf16.gmra.mxu0 %v338
  %v775 = vpop.f32.mrf.mxu0
  %v776 = vadd.f32 0.0, %v775
  %v777 = vpop.f32.mrf.mxu0
  %v778 = vpop.f32.mrf.mxu0
  %v779 = vadd.f32 0.0, %v778
  %v780 = vpop.f32.mrf.mxu0
  %781 = vmatprep.mubr.bf16.mxu0 %v519
  %782 = vmatmul.mubr.bf16.gmra.mxu0 %v340
  %v783 = vpop.f32.mrf.mxu0
  %v784 = vadd.f32 0.0, %v783
  %v785 = vpop.f32.mrf.mxu0
  %v786 = vpop.f32.mrf.mxu0
  %v787 = vadd.f32 0.0, %v786
  %v788 = vpop.f32.mrf.mxu0
  %789 = vmatprep.mubr.bf16.mxu0 %v522
  %790 = vmatmul.mubr.bf16.gmra.mxu0 %v342
  %v791 = vpop.f32.mrf.mxu0
  %v792 = vadd.f32 0.0, %v791
  %v793 = vpop.f32.mrf.mxu0
  %v794 = vpop.f32.mrf.mxu0
  %v795 = vadd.f32 0.0, %v794
  %v796 = vpop.f32.mrf.mxu0
  %797 = vmatprep.mubr.bf16.mxu0 %v525
  %798 = vmatmul.mubr.bf16.gmra.mxu0 %v344
  %v799 = vpop.f32.mrf.mxu0
  %v800 = vadd.f32 0.0, %v799
  %v801 = vpop.f32.mrf.mxu0
  %v802 = vpop.f32.mrf.mxu0
  %v803 = vadd.f32 0.0, %v802
  %v804 = vpop.f32.mrf.mxu0
  %805 = vmatprep.mubr.bf16.mxu0 %v528
  %806 = vmatmul.mubr.bf16.gmra.mxu0 %v346
  %v807 = vpop.f32.mrf.mxu0
  %v808 = vadd.f32 0.0, %v807
  %v809 = vpop.f32.mrf.mxu0
  %v810 = vpop.f32.mrf.mxu0
  %v811 = vadd.f32 0.0, %v810
  %v812 = vpop.f32.mrf.mxu0
  %813 = vmatprep.mubr.bf16.mxu0 %v531
  %814 = vmatmul.mubr.bf16.gmra.mxu0 %v348
  %v815 = vpop.f32.mrf.mxu0
  %v816 = vadd.f32 0.0, %v815
  %v817 = vpop.f32.mrf.mxu0
  %v818 = vpop.f32.mrf.mxu0
  %v819 = vadd.f32 0.0, %v818
  %v820 = vpop.f32.mrf.mxu0
  %821 = vdwg.mxu0
  %v822 = vpack.c.bf16 %v571, %v568
  %v823 = vpack.c.bf16 %v579, %v576
  %v824 = vpack.c.bf16 %v587, %v584
  %v825 = vpack.c.bf16 %v595, %v592
  %v826 = vpack.c.bf16 %v603, %v600
  %v827 = vpack.c.bf16 %v611, %v608
  %v828 = vpack.c.bf16 %v619, %v616
  %v829 = vpack.c.bf16 %v627, %v624
  %v830 = vpack.c.bf16 %v635, %v632
  %v831 = vpack.c.bf16 %v643, %v640
  %v832 = vpack.c.bf16 %v651, %v648
  %v833 = vpack.c.bf16 %v659, %v656
  %v834 = vpack.c.bf16 %v667, %v664
  %v835 = vpack.c.bf16 %v675, %v672
  %v836 = vpack.c.bf16 %v683, %v680
  %v837 = vpack.c.bf16 %v691, %v688
  %v838 = vpack.c.bf16 %v699, %v696
  %v839 = vpack.c.bf16 %v707, %v704
  %v840 = vpack.c.bf16 %v715, %v712
  %v841 = vpack.c.bf16 %v723, %v720
  %v842 = vpack.c.bf16 %v731, %v728
  %v843 = vpack.c.bf16 %v739, %v736
  %v844 = vpack.c.bf16 %v747, %v744
  %v845 = vpack.c.bf16 %v755, %v752
  %v846 = vpack.c.bf16 %v763, %v760
  %v847 = vpack.c.bf16 %v771, %v768
  %v848 = vpack.c.bf16 %v779, %v776
  %v849 = vpack.c.bf16 %v787, %v784
  %v850 = vpack.c.bf16 %v795, %v792
  %v851 = vpack.c.bf16 %v803, %v800
  %v852 = vpack.c.bf16 %v811, %v808
  %v853 = vpack.c.bf16 %v819, %v816
  %v886 = vunpack.c.l.b16 %v822
  %v887 = vunpack.c.h.b16 %v822
  %v888 = vunpack.c.l.b16 %v823
  %v889 = vunpack.c.h.b16 %v823
  %v890 = vunpack.c.l.b16 %v824
  %v891 = vunpack.c.h.b16 %v824
  %v892 = vunpack.c.l.b16 %v825
  %v893 = vunpack.c.h.b16 %v825
  %v894 = vunpack.c.l.b16 %v826
  %v895 = vunpack.c.h.b16 %v826
  %v896 = vunpack.c.l.b16 %v827
  %v897 = vunpack.c.h.b16 %v827
  %v898 = vunpack.c.l.b16 %v828
  %v899 = vunpack.c.h.b16 %v828
  %v900 = vunpack.c.l.b16 %v829
  %v901 = vunpack.c.h.b16 %v829
  %v902 = vunpack.c.l.b16 %v830
  %v903 = vunpack.c.h.b16 %v830
  %v904 = vunpack.c.l.b16 %v831
  %v905 = vunpack.c.h.b16 %v831
  %v906 = vunpack.c.l.b16 %v832
  %v907 = vunpack.c.h.b16 %v832
  %v908 = vunpack.c.l.b16 %v833
  %v909 = vunpack.c.h.b16 %v833
  %v910 = vunpack.c.l.b16 %v834
  %v911 = vunpack.c.h.b16 %v834
  %v912 = vunpack.c.l.b16 %v835
  %v913 = vunpack.c.h.b16 %v835
  %v914 = vunpack.c.l.b16 %v836
  %v915 = vunpack.c.h.b16 %v836
  %v916 = vunpack.c.l.b16 %v837
  %v917 = vunpack.c.h.b16 %v837
  %v918 = vunpack.c.l.b16 %v838
  %v919 = vunpack.c.h.b16 %v838
  %v920 = vunpack.c.l.b16 %v839
  %v921 = vunpack.c.h.b16 %v839
  %v922 = vunpack.c.l.b16 %v840
  %v923 = vunpack.c.h.b16 %v840
  %v924 = vunpack.c.l.b16 %v841
  %v925 = vunpack.c.h.b16 %v841
  %v926 = vunpack.c.l.b16 %v842
  %v927 = vunpack.c.h.b16 %v842
  %v928 = vunpack.c.l.b16 %v843
  %v929 = vunpack.c.h.b16 %v843
  %v930 = vunpack.c.l.b16 %v844
  %v931 = vunpack.c.h.b16 %v844
  %v932 = vunpack.c.l.b16 %v845
  %v933 = vunpack.c.h.b16 %v845
  %v934 = vunpack.c.l.b16 %v846
  %v935 = vunpack.c.h.b16 %v846
  %v936 = vunpack.c.l.b16 %v847
  %v937 = vunpack.c.h.b16 %v847
  %v938 = vunpack.c.l.b16 %v848
  %v939 = vunpack.c.h.b16 %v848
  %v940 = vunpack.c.l.b16 %v849
  %v941 = vunpack.c.h.b16 %v849
  %v942 = vunpack.c.l.b16 %v850
  %v943 = vunpack.c.h.b16 %v850
  %v944 = vunpack.c.l.b16 %v851
  %v945 = vunpack.c.h.b16 %v851
  %v946 = vunpack.c.l.b16 %v852
  %v947 = vunpack.c.h.b16 %v852
  %v948 = vunpack.c.l.b16 %v853
  %v949 = vunpack.c.h.b16 %v853
  %v950 = vpack.c.b16 %v886, %v886
  %v951 = vpack.c.b16 %v887, %v887
  %v952 = vpack.c.b16 %v888, %v888
  %v953 = vpack.c.b16 %v889, %v889
  %v954 = vpack.c.b16 %v890, %v890
  %v955 = vpack.c.b16 %v891, %v891
  %v956 = vpack.c.b16 %v892, %v892
  %v957 = vpack.c.b16 %v893, %v893
  %v958 = vpack.c.b16 %v894, %v894
  %v959 = vpack.c.b16 %v895, %v895
  %v960 = vpack.c.b16 %v896, %v896
  %v961 = vpack.c.b16 %v897, %v897
  %v962 = vpack.c.b16 %v898, %v898
  %v963 = vpack.c.b16 %v899, %v899
  %v964 = vpack.c.b16 %v900, %v900
  %v965 = vpack.c.b16 %v901, %v901
  %v966 = vpack.c.b16 %v902, %v902
  %v967 = vpack.c.b16 %v903, %v903
  %v968 = vpack.c.b16 %v904, %v904
  %v969 = vpack.c.b16 %v905, %v905
  %v970 = vpack.c.b16 %v906, %v906
  %v971 = vpack.c.b16 %v907, %v907
  %v972 = vpack.c.b16 %v908, %v908
  %v973 = vpack.c.b16 %v909, %v909
  %v974 = vpack.c.b16 %v910, %v910
  %v975 = vpack.c.b16 %v911, %v911
  %v976 = vpack.c.b16 %v912, %v912
  %v977 = vpack.c.b16 %v913, %v913
  %v978 = vpack.c.b16 %v914, %v914
  %v979 = vpack.c.b16 %v915, %v915
  %v980 = vpack.c.b16 %v916, %v916
  %v981 = vpack.c.b16 %v917, %v917
  %v982 = vpack.c.b16 %v918, %v918
  %v983 = vpack.c.b16 %v919, %v919
  %v984 = vpack.c.b16 %v920, %v920
  %v985 = vpack.c.b16 %v921, %v921
  %v986 = vpack.c.b16 %v922, %v922
  %v987 = vpack.c.b16 %v923, %v923
  %v988 = vpack.c.b16 %v924, %v924
  %v989 = vpack.c.b16 %v925, %v925
  %v990 = vpack.c.b16 %v926, %v926
  %v991 = vpack.c.b16 %v927, %v927
  %v992 = vpack.c.b16 %v928, %v928
  %v993 = vpack.c.b16 %v929, %v929
  %v994 = vpack.c.b16 %v930, %v930
  %v995 = vpack.c.b16 %v931, %v931
  %v996 = vpack.c.b16 %v932, %v932
  %v997 = vpack.c.b16 %v933, %v933
  %v998 = vpack.c.b16 %v934, %v934
  %v999 = vpack.c.b16 %v935, %v935
  %v1000 = vpack.c.b16 %v936, %v936
  %v1001 = vpack.c.b16 %v937, %v937
  %v1002 = vpack.c.b16 %v938, %v938
  %v1003 = vpack.c.b16 %v939, %v939
  %v1004 = vpack.c.b16 %v940, %v940
  %v1005 = vpack.c.b16 %v941, %v941
  %v1006 = vpack.c.b16 %v942, %v942
  %v1007 = vpack.c.b16 %v943, %v943
  %v1008 = vpack.c.b16 %v944, %v944
  %v1009 = vpack.c.b16 %v945, %v945
  %v1010 = vpack.c.b16 %v946, %v946
  %v1011 = vpack.c.b16 %v947, %v947
  %v1012 = vpack.c.b16 %v948, %v948
  %v1013 = vpack.c.b16 %v949, %v949
  %vm1078 = vcmask 257024
  %1079 = vst.msk [vmem:[%s2] sm:$0xf] %vm1078, %v950
  %1080 = vst.msk [vmem:[%s2 + $0x4] sm:$0xf] %vm1078, %v951
  %1081 = vst.msk [vmem:[%s2 + $0x8] sm:$0xf] %vm1078, %v952
  %1082 = vst.msk [vmem:[%s2 + $0xc] sm:$0xf] %vm1078, %v953
  %1083 = vst.msk [vmem:[%s2 + $0x10] sm:$0xf] %vm1078, %v954
  %1084 = vst.msk [vmem:[%s2 + $0x14] sm:$0xf] %vm1078, %v955
  %1085 = vst.msk [vmem:[%s2 + $0x18] sm:$0xf] %vm1078, %v956
  %1086 = vst.msk [vmem:[%s2 + $0x1c] sm:$0xf] %vm1078, %v957
  %1087 = vst.msk [vmem:[%s2 + $0x20] sm:$0xf] %vm1078, %v958
  %1088 = vst.msk [vmem:[%s2 + $0x24] sm:$0xf] %vm1078, %v959
  %1089 = vst.msk [vmem:[%s2 + $0x28] sm:$0xf] %vm1078, %v960
  %1090 = vst.msk [vmem:[%s2 + $0x2c] sm:$0xf] %vm1078, %v961
  %1091 = vst.msk [vmem:[%s2 + $0x30] sm:$0xf] %vm1078, %v962
  %1092 = vst.msk [vmem:[%s2 + $0x34] sm:$0xf] %vm1078, %v963
  %1093 = vst.msk [vmem:[%s2 + $0x38] sm:$0xf] %vm1078, %v964
  %1094 = vst.msk [vmem:[%s2 + $0x3c] sm:$0xf] %vm1078, %v965
  %1095 = vst.msk [vmem:[%s2 + $0x40] sm:$0xf] %vm1078, %v966
  %1096 = vst.msk [vmem:[%s2 + $0x44] sm:$0xf] %vm1078, %v967
  %1097 = vst.msk [vmem:[%s2 + $0x48] sm:$0xf] %vm1078, %v968
  %1098 = vst.msk [vmem:[%s2 + $0x4c] sm:$0xf] %vm1078, %v969
  %1099 = vst.msk [vmem:[%s2 + $0x50] sm:$0xf] %vm1078, %v970
  %1100 = vst.msk [vmem:[%s2 + $0x54] sm:$0xf] %vm1078, %v971
  %1101 = vst.msk [vmem:[%s2 + $0x58] sm:$0xf] %vm1078, %v972
  %1102 = vst.msk [vmem:[%s2 + $0x5c] sm:$0xf] %vm1078, %v973
  %1103 = vst.msk [vmem:[%s2 + $0x60] sm:$0xf] %vm1078, %v974
  %1104 = vst.msk [vmem:[%s2 + $0x64] sm:$0xf] %vm1078, %v975
  %1105 = vst.msk [vmem:[%s2 + $0x68] sm:$0xf] %vm1078, %v976
  %1106 = vst.msk [vmem:[%s2 + $0x6c] sm:$0xf] %vm1078, %v977
  %1107 = vst.msk [vmem:[%s2 + $0x70] sm:$0xf] %vm1078, %v978
  %1108 = vst.msk [vmem:[%s2 + $0x74] sm:$0xf] %vm1078, %v979
  %1109 = vst.msk [vmem:[%s2 + $0x78] sm:$0xf] %vm1078, %v980
  %1110 = vst.msk [vmem:[%s2 + $0x7c] sm:$0xf] %vm1078, %v981
  %1111 = vst.msk [vmem:[%s2 + $0x80] sm:$0xf] %vm1078, %v982
  %1112 = vst.msk [vmem:[%s2 + $0x84] sm:$0xf] %vm1078, %v983
  %1113 = vst.msk [vmem:[%s2 + $0x88] sm:$0xf] %vm1078, %v984
  %1114 = vst.msk [vmem:[%s2 + $0x8c] sm:$0xf] %vm1078, %v985
  %1115 = vst.msk [vmem:[%s2 + $0x90] sm:$0xf] %vm1078, %v986
  %1116 = vst.msk [vmem:[%s2 + $0x94] sm:$0xf] %vm1078, %v987
  %1117 = vst.msk [vmem:[%s2 + $0x98] sm:$0xf] %vm1078, %v988
  %1118 = vst.msk [vmem:[%s2 + $0x9c] sm:$0xf] %vm1078, %v989
  %1119 = vst.msk [vmem:[%s2 + $0xa0] sm:$0xf] %vm1078, %v990
  %1120 = vst.msk [vmem:[%s2 + $0xa4] sm:$0xf] %vm1078, %v991
  %1121 = vst.msk [vmem:[%s2 + $0xa8] sm:$0xf] %vm1078, %v992
  %1122 = vst.msk [vmem:[%s2 + $0xac] sm:$0xf] %vm1078, %v993
  %1123 = vst.msk [vmem:[%s2 + $0xb0] sm:$0xf] %vm1078, %v994
  %1124 = vst.msk [vmem:[%s2 + $0xb4] sm:$0xf] %vm1078, %v995
  %1125 = vst.msk [vmem:[%s2 + $0xb8] sm:$0xf] %vm1078, %v996
  %1126 = vst.msk [vmem:[%s2 + $0xbc] sm:$0xf] %vm1078, %v997
  %1127 = vst.msk [vmem:[%s2 + $0xc0] sm:$0xf] %vm1078, %v998
  %1128 = vst.msk [vmem:[%s2 + $0xc4] sm:$0xf] %vm1078, %v999
  %1129 = vst.msk [vmem:[%s2 + $0xc8] sm:$0xf] %vm1078, %v1000
  %1130 = vst.msk [vmem:[%s2 + $0xcc] sm:$0xf] %vm1078, %v1001
  %1131 = vst.msk [vmem:[%s2 + $0xd0] sm:$0xf] %vm1078, %v1002
  %1132 = vst.msk [vmem:[%s2 + $0xd4] sm:$0xf] %vm1078, %v1003
  %1133 = vst.msk [vmem:[%s2 + $0xd8] sm:$0xf] %vm1078, %v1004
  %1134 = vst.msk [vmem:[%s2 + $0xdc] sm:$0xf] %vm1078, %v1005
  %1135 = vst.msk [vmem:[%s2 + $0xe0] sm:$0xf] %vm1078, %v1006
  %1136 = vst.msk [vmem:[%s2 + $0xe4] sm:$0xf] %vm1078, %v1007
  %1137 = vst.msk [vmem:[%s2 + $0xe8] sm:$0xf] %vm1078, %v1008
  %1138 = vst.msk [vmem:[%s2 + $0xec] sm:$0xf] %vm1078, %v1009
  %1139 = vst.msk [vmem:[%s2 + $0xf0] sm:$0xf] %vm1078, %v1010
  %1140 = vst.msk [vmem:[%s2 + $0xf4] sm:$0xf] %vm1078, %v1011
  %1141 = vst.msk [vmem:[%s2 + $0xf8] sm:$0xf] %vm1078, %v1012
  %1142 = vst.msk [vmem:[%s2 + $0xfc] sm:$0xf] %vm1078, %v1013
  // Predicated region
  $region10: #{generator_forward.15} parent=0 // pred_check
    _
  $region11: #{generator_forward.15} parent=0 // pred_check_branch
    %1144 = sbr.rel (0) target = $region13
  $region12: #{generator_forward.15} parent=0 // pred_region
    _
  $region13: #{generator_forward.15} parent=0 // pred_fallthru
    _
  // Predicated region
  $region14: #{generator_forward.15} parent=0 // pred_check
    _
  $region15: #{generator_forward.15} parent=0 // pred_check_branch
    %1146 = sbr.rel (0) target = $region17
  $region16: #{generator_forward.15} parent=0 // pred_region
    _
  $region17: #{generator_forward.15} parent=0 // pred_fallthru
    _

// kernel: generator_forward.16
$region0: #{generator_forward.16}
  #allocation0 [shape = 'u32[]', space=smem, size = 0x4, offset = 0x4, fixed_abs, tag = 'smem constant byte address 0x4 - core index']
  #allocation1 [shape = 'u32[144,128]{1,0:T(1,128)}', space=vmem, size = 0x12000, scoped, tag = 'internal scratch']
  %s0 = inlined_call_operand.vmem [shape: bf16[128,128], index: 0, kind: input, shape index: {}]
  %s1 = inlined_call_operand.vmem [shape: f32[1,128], index: 1, kind: input, shape index: {}]
  %s2 = inlined_call_operand.vmem [shape: f32[1,128], index: 2, kind: input, shape index: {}]
  %s3 = inlined_call_operand.vmem [shape: bf16[128,128], index: 3, kind: output, shape index: {}]
  %s4 = sld [smem:[#allocation0]]
  $region22: #{generator_forward.16} parent=0
    _
  %s6 = ssub.s32 1, %s4
  %s7 = scalar_select 0, %s6, %s4
  // Predicated region
  $region2: #{generator_forward.16} parent=0 // pred_check
    _
  $region3: #{generator_forward.16} parent=0 // pred_check_branch
    %9 = sbr.rel (0) target = $region5
  $region4: #{generator_forward.16} parent=0 // pred_region
    _
  $region5: #{generator_forward.16} parent=0 // pred_fallthru
    _
  // Predicated region
  $region6: #{generator_forward.16} parent=0 // pred_check
    _
  $region7: #{generator_forward.16} parent=0 // pred_check_branch
    %11 = sbr.rel (0) target = $region9
  $region8: #{generator_forward.16} parent=0 // pred_region
    _
  $region9: #{generator_forward.16} parent=0 // pred_fallthru
    _
  // Predicated region
  $region10: #{generator_forward.16} parent=0 // pred_check
    _
  $region11: #{generator_forward.16} parent=0 // pred_check_branch
    %13 = sbr.rel (0) target = $region13
  $region12: #{generator_forward.16} parent=0 // pred_region
    _
  $region13: #{generator_forward.16} parent=0 // pred_fallthru
    _
  %v14 = vld [vmem:[%s0] sm:$0xf]
  %v15 = vld [vmem:[%s0 + $0x4] sm:$0xf]
  %v16 = vld [vmem:[%s0 + $0x8] sm:$0xf]
  %v17 = vld [vmem:[%s0 + $0xc] sm:$0xf]
  %v18 = vld [vmem:[%s0 + $0x10] sm:$0xf]
  %v19 = vld [vmem:[%s0 + $0x14] sm:$0xf]
  %v20 = vld [vmem:[%s0 + $0x18] sm:$0xf]
  %v21 = vld [vmem:[%s0 + $0x1c] sm:$0xf]
  %v22 = vld [vmem:[%s0 + $0x20] sm:$0xf]
  %v23 = vld [vmem:[%s0 + $0x24] sm:$0xf]
  %v24 = vld [vmem:[%s0 + $0x28] sm:$0xf]
  %v25 = vld [vmem:[%s0 + $0x2c] sm:$0xf]
  %v26 = vld [vmem:[%s0 + $0x30] sm:$0xf]
  %v27 = vld [vmem:[%s0 + $0x34] sm:$0xf]
  %v28 = vld [vmem:[%s0 + $0x38] sm:$0xf]
  %v29 = vld [vmem:[%s0 + $0x3c] sm:$0xf]
  %v30 = vunpack.c.l.bf16 %v14
  %v31 = vunpack.c.l.bf16 %v15
  %v32 = vunpack.c.l.bf16 %v16
  %v33 = vunpack.c.l.bf16 %v17
  %v34 = vunpack.c.l.bf16 %v18
  %v35 = vunpack.c.l.bf16 %v19
  %v36 = vunpack.c.l.bf16 %v20
  %v37 = vunpack.c.l.bf16 %v21
  %v38 = vunpack.c.l.bf16 %v22
  %v39 = vunpack.c.l.bf16 %v23
  %v40 = vunpack.c.l.bf16 %v24
  %v41 = vunpack.c.l.bf16 %v25
  %v42 = vunpack.c.l.bf16 %v26
  %v43 = vunpack.c.l.bf16 %v27
  %v44 = vunpack.c.l.bf16 %v28
  %v45 = vunpack.c.l.bf16 %v29
  %v46 = vadd.f32 %v30, %v31
  %v47 = vadd.f32 %v46, %v32
  %v48 = vadd.f32 %v47, %v33
  %v49 = vadd.f32 %v48, %v34
  %v50 = vadd.f32 %v49, %v35
  %v51 = vadd.f32 %v50, %v36
  %v52 = vadd.f32 %v51, %v37
  %v53 = vadd.f32 %v52, %v38
  %v54 = vadd.f32 %v53, %v39
  %v55 = vadd.f32 %v54, %v40
  %v56 = vadd.f32 %v55, %v41
  %v57 = vadd.f32 %v56, %v42
  %v58 = vadd.f32 %v57, %v43
  %v59 = vadd.f32 %v58, %v44
  %v60 = vadd.f32 %v59, %v45
  %v61 = vrot.slane %v60, 4
  %v62 = vadd.f32 %v60, %v61
  %v63 = vrot.slane %v62, 2
  %v64 = vadd.f32 %v62, %v63
  %v65 = vrot.slane %v64, 1
  %v66 = vadd.f32 %v64, %v65
  %v67 = vmul.f32 %v30, %v30
  %v68 = vmul.f32 %v31, %v31
  %v69 = vmul.f32 %v32, %v32
  %v70 = vmul.f32 %v33, %v33
  %v71 = vmul.f32 %v34, %v34
  %v72 = vmul.f32 %v35, %v35
  %v73 = vmul.f32 %v36, %v36
  %v74 = vmul.f32 %v37, %v37
  %v75 = vmul.f32 %v38, %v38
  %v76 = vmul.f32 %v39, %v39
  %v77 = vmul.f32 %v40, %v40
  %v78 = vmul.f32 %v41, %v41
  %v79 = vmul.f32 %v42, %v42
  %v80 = vmul.f32 %v43, %v43
  %v81 = vmul.f32 %v44, %v44
  %v82 = vmul.f32 %v45, %v45
  %v83 = vadd.f32 %v67, %v68
  %v84 = vadd.f32 %v83, %v69
  %v85 = vadd.f32 %v84, %v70
  %v86 = vadd.f32 %v85, %v71
  %v87 = vadd.f32 %v86, %v72
  %v88 = vadd.f32 %v87, %v73
  %v89 = vadd.f32 %v88, %v74
  %v90 = vadd.f32 %v89, %v75
  %v91 = vadd.f32 %v90, %v76
  %v92 = vadd.f32 %v91, %v77
  %v93 = vadd.f32 %v92, %v78
  %v94 = vadd.f32 %v93, %v79
  %v95 = vadd.f32 %v94, %v80
  %v96 = vadd.f32 %v95, %v81
  %v97 = vadd.f32 %v96, %v82
  %v98 = vrot.slane %v97, 4
  %v99 = vadd.f32 %v97, %v98
  %v100 = vrot.slane %v99, 2
  %v101 = vadd.f32 %v99, %v100
  %v102 = vrot.slane %v101, 1
  %v103 = vadd.f32 %v101, %v102
  %104 = vrot.lane.b32.xlu0 %v66, 8
  %v105 = vpop.permute.xlu0 %104
  %v106 = vadd.f32 %v66, %v105
  %107 = vrot.lane.b32.xlu0 %v103, 8
  %v108 = vpop.permute.xlu0 %107
  %v109 = vadd.f32 %v103, %v108
  %110 = vrot.lane.b32.xlu0 %v106, 16
  %v111 = vpop.permute.xlu0 %110
  %v112 = vadd.f32 %v106, %v111
  %113 = vrot.lane.b32.xlu0 %v109, 16
  %v114 = vpop.permute.xlu0 %113
  %v115 = vadd.f32 %v109, %v114
  %116 = vrot.lane.b32.xlu0 %v112, 32
  %v117 = vpop.permute.xlu0 %116
  %v118 = vadd.f32 %v112, %v117
  %119 = vrot.lane.b32.xlu0 %v115, 32
  %v120 = vpop.permute.xlu0 %119
  %v121 = vadd.f32 %v115, %v120
  %122 = vrot.lane.b32.xlu0 %v118, 64
  %v123 = vpop.permute.xlu0 %122
  %v124 = vadd.f32 %v118, %v123
  %125 = vrot.lane.b32.xlu0 %v121, 64
  %v126 = vpop.permute.xlu0 %125
  %v127 = vadd.f32 %v121, %v126
  %v128 = vmul.f32 %v124, 0.00048828125
  %v129 = vmul.f32 %v127, 0.00048828125
  %v130 = vmul.f32 %v128, %v128
  %v131 = vsub.f32 %v129, %v130
  %v132 = vld [vmem:[%s1] sm:$0x1]
  %v133 = vadd.f32 %v131, 1e-05
  %v134 = vrsqrt.pop %v133
  %v135 = vmul.f32 %v132, %v134
  %v136 = vld [vmem:[%s2] sm:$0x1]
  %v137 = vmul.f32 %v128, %v135
  %v138 = vsub.f32 %v136, %v137
  %v140 = vlaneseq
  %v141 = vshrl.u32 %v140, 7
  %v142 = vsub.s32 0, %v141
  %v143 = vrot.slane %v135, %v142
  %v145 = vmul.f32 %v30, %v143
  %v146 = vmul.f32 %v31, %v143
  %v147 = vmul.f32 %v32, %v143
  %v148 = vmul.f32 %v33, %v143
  %v149 = vmul.f32 %v34, %v143
  %v150 = vmul.f32 %v35, %v143
  %v151 = vmul.f32 %v36, %v143
  %v152 = vmul.f32 %v37, %v143
  %v153 = vmul.f32 %v38, %v143
  %v154 = vmul.f32 %v39, %v143
  %v155 = vmul.f32 %v40, %v143
  %v156 = vmul.f32 %v41, %v143
  %v157 = vmul.f32 %v42, %v143
  %v158 = vmul.f32 %v43, %v143
  %v159 = vmul.f32 %v44, %v143
  %v160 = vmul.f32 %v45, %v143
  %v162 = vlaneseq
  %v163 = vshrl.u32 %v162, 7
  %v164 = vsub.s32 0, %v163
  %v165 = vrot.slane %v138, %v164
  %v167 = vadd.f32 %v145, %v165
  %v168 = vadd.f32 %v146, %v165
  %v169 = vadd.f32 %v147, %v165
  %v170 = vadd.f32 %v148, %v165
  %v171 = vadd.f32 %v149, %v165
  %v172 = vadd.f32 %v150, %v165
  %v173 = vadd.f32 %v151, %v165
  %v174 = vadd.f32 %v152, %v165
  %v175 = vadd.f32 %v153, %v165
  %v176 = vadd.f32 %v154, %v165
  %v177 = vadd.f32 %v155, %v165
  %v178 = vadd.f32 %v156, %v165
  %v179 = vadd.f32 %v157, %v165
  %v180 = vadd.f32 %v158, %v165
  %v181 = vadd.f32 %v159, %v165
  %v182 = vadd.f32 %v160, %v165
  %v183 = vmax.f32 %v167, 0.0
  %v184 = vmax.f32 %v168, 0.0
  %v185 = vmax.f32 %v169, 0.0
  %v186 = vmax.f32 %v170, 0.0
  %v187 = vmax.f32 %v171, 0.0
  %v188 = vmax.f32 %v172, 0.0
  %v189 = vmax.f32 %v173, 0.0
  %v190 = vmax.f32 %v174, 0.0
  %v191 = vmax.f32 %v175, 0.0
  %v192 = vmax.f32 %v176, 0.0
  %v193 = vmax.f32 %v177, 0.0
  %v194 = vmax.f32 %v178, 0.0
  %v195 = vmax.f32 %v179, 0.0
  %v196 = vmax.f32 %v180, 0.0
  %v197 = vmax.f32 %v181, 0.0
  %v198 = vmax.f32 %v182, 0.0
  %v199 = vpack.c.bf16 %v184, %v183
  %v200 = vpack.c.bf16 %v186, %v185
  %v201 = vpack.c.bf16 %v188, %v187
  %v202 = vpack.c.bf16 %v190, %v189
  %v203 = vpack.c.bf16 %v192, %v191
  %v204 = vpack.c.bf16 %v194, %v193
  %v205 = vpack.c.bf16 %v196, %v195
  %v206 = vpack.c.bf16 %v198, %v197
  %v215 = vunpack.c.l.b16 %v199
  %v216 = vunpack.c.h.b16 %v199
  %v217 = vunpack.c.l.b16 %v200
  %v218 = vunpack.c.h.b16 %v200
  %v219 = vunpack.c.l.b16 %v201
  %v220 = vunpack.c.h.b16 %v201
  %v221 = vunpack.c.l.b16 %v202
  %v222 = vunpack.c.h.b16 %v202
  %v223 = vunpack.c.l.b16 %v203
  %v224 = vunpack.c.h.b16 %v203
  %v225 = vunpack.c.l.b16 %v204
  %v226 = vunpack.c.h.b16 %v204
  %v227 = vunpack.c.l.b16 %v205
  %v228 = vunpack.c.h.b16 %v205
  %v229 = vunpack.c.l.b16 %v206
  %v230 = vunpack.c.h.b16 %v206
  %v231 = vpack.c.b16 %v215, %v215
  %v232 = vpack.c.b16 %v216, %v216
  %v233 = vpack.c.b16 %v217, %v217
  %v234 = vpack.c.b16 %v218, %v218
  %v235 = vpack.c.b16 %v219, %v219
  %v236 = vpack.c.b16 %v220, %v220
  %v237 = vpack.c.b16 %v221, %v221
  %v238 = vpack.c.b16 %v222, %v222
  %v239 = vpack.c.b16 %v223, %v223
  %v240 = vpack.c.b16 %v224, %v224
  %v241 = vpack.c.b16 %v225, %v225
  %v242 = vpack.c.b16 %v226, %v226
  %v243 = vpack.c.b16 %v227, %v227
  %v244 = vpack.c.b16 %v228, %v228
  %v245 = vpack.c.b16 %v229, %v229
  %v246 = vpack.c.b16 %v230, %v230
  %263 = vst [vmem:[%s3] sm:$0xf] %v231
  %264 = vst [vmem:[%s3 + $0x4] sm:$0xf] %v232
  %265 = vst [vmem:[%s3 + $0x8] sm:$0xf] %v233
  %266 = vst [vmem:[%s3 + $0xc] sm:$0xf] %v234
  %267 = vst [vmem:[%s3 + $0x10] sm:$0xf] %v235
  %268 = vst [vmem:[%s3 + $0x14] sm:$0xf] %v236
  %269 = vst [vmem:[%s3 + $0x18] sm:$0xf] %v237
  %270 = vst [vmem:[%s3 + $0x1c] sm:$0xf] %v238
  %271 = vst [vmem:[%s3 + $0x20] sm:$0xf] %v239
  %272 = vst [vmem:[%s3 + $0x24] sm:$0xf] %v240
  %273 = vst [vmem:[%s3 + $0x28] sm:$0xf] %v241
  %274 = vst [vmem:[%s3 + $0x2c] sm:$0xf] %v242
  %275 = vst [vmem:[%s3 + $0x30] sm:$0xf] %v243
  %276 = vst [vmem:[%s3 + $0x34] sm:$0xf] %v244
  %277 = vst [vmem:[%s3 + $0x38] sm:$0xf] %v245
  %278 = vst [vmem:[%s3 + $0x3c] sm:$0xf] %v246
  // Predicated region
  $region14: #{generator_forward.16} parent=0 // pred_check
    _
  $region15: #{generator_forward.16} parent=0 // pred_check_branch
    %280 = sbr.rel (0) target = $region17
  $region16: #{generator_forward.16} parent=0 // pred_region
    _
  $region17: #{generator_forward.16} parent=0 // pred_fallthru
    _
  // Predicated region
  $region18: #{generator_forward.16} parent=0 // pred_check
    _
  $region19: #{generator_forward.16} parent=0 // pred_check_branch
    %282 = sbr.rel (0) target = $region21
  $region20: #{generator_forward.16} parent=0 // pred_region
    _
  $region21: #{generator_forward.16} parent=0 // pred_fallthru
    _

// kernel: generator_forward.17
$region0: #{generator_forward.17}
  #allocation0 [shape = 'u32[]', space=smem, size = 0x4, offset = 0x4, fixed_abs, tag = 'smem constant byte address 0x4 - core index']
  #allocation1 [shape = 'u32[144,128]{1,0:T(1,128)}', space=vmem, size = 0x12000, scoped, tag = 'internal scratch']
  %s0 = inlined_call_operand.vmem [shape: bf16[2048,72], index: 0, kind: input, shape index: {}]
  %s1 = inlined_call_operand.vmem [shape: bf16[72,32], index: 1, kind: input, shape index: {}]
  %s2 = inlined_call_operand.vmem [shape: bf16[2048,32], index: 2, kind: output, shape index: {}]
  %s3 = sld [smem:[#allocation0]]
  $region41: #{generator_forward.17} parent=0
    _
  %s5 = ssub.s32 1, %s3
  %s6 = scalar_select 0, %s5, %s3
  loop: start=0, step=1, limit=4
  $region2: #{generator_forward.17} parent=0 // loop_pre_header
    _
  $region3: #{generator_forward.17} parent=0 // loop_header
    %s8 = sphi 0, %s12
    %p9 = scmp.ge.s32.totalorder %s8, 4
    %s18 = sphi 0, %s20
    %s21 = sphi 0, %s18
    %s22 = sphi 0, %s21
    %s38 = sphi 0, %s22
    %s42 = sphi 0, %s42
    %s44 = sphi 0, %s42
    %s45 = sphi 0, %s44
    %s59 = sphi 0, %s45
    %s65 = sphi 0, %s67
    %s68 = sphi 0, %s65
    %s69 = sphi 0, %s68
    %s85 = sphi 0, %s69
  $region4: #{generator_forward.17} parent=0 // loop_header_branch
    %11 = sbr.rel (%p9) target = $region8
  $region5: #{generator_forward.17} parent=0 // loop_body
    %s13 = ssub.s32 %s8, 1
    %s14 = ssub.s32 %s8, 2
    %s15 = sadd.s32 %s8, 1
    %s16 = ssub.s32 %s8, %s15
    %p17 = scmp.eq.s32.totalorder %s16, 0
    %s19 = sadd.s32 %s18, 1
    %s20 = scalar_select %p17, %s18, %s19
    %p23 = pneg %p17
    %p24 = scmp.eq.s32.totalorder %s8, 1
    %p25 = por %p23, %p24
    %p26 = scmp.ne.s32.totalorder %s18, %s21
    %p27 = scmp.eq.s32.totalorder %s8, 0
    %p28 = por %p26, %p27
    %p29 = scmp.ne.s32.totalorder %s18, %s21
    %p30 = scmp.eq.s32.totalorder %s13, 1
    %p31 = por %p29, %p30
    %p32 = scmp.ne.s32.totalorder %s21, %s22
    %p33 = scmp.eq.s32.totalorder %s13, 0
    %p34 = por %p32, %p33
    %p35 = scmp.ne.s32.totalorder %s21, %s22
    %p36 = scmp.eq.s32.totalorder %s14, 1
    %p37 = por %p35, %p36
    %p39 = scmp.ne.s32.totalorder %s22, %s38
    %p40 = scmp.eq.s32.totalorder %s14, 0
    %p41 = por %p39, %p40
    %s43 = sadd.s32 %s42, 1
    %p46 = scmp.eq.s32.totalorder %s8, 1
    %p47 = scmp.ne.s32.totalorder %s42, %s44
    %p48 = scmp.eq.s32.totalorder %s8, 0
    %p49 = por %p47, %p48
    %p50 = scmp.ne.s32.totalorder %s42, %s44
    %p51 = scmp.eq.s32.totalorder %s13, 1
    %p52 = por %p50, %p51
    %p53 = scmp.ne.s32.totalorder %s44, %s45
    %p54 = scmp.eq.s32.totalorder %s13, 0
    %p55 = por %p53, %p54
    %p56 = scmp.ne.s32.totalorder %s44, %s45
    %p57 = scmp.eq.s32.totalorder %s14, 1
    %p58 = por %p56, %p57
    %p60 = scmp.ne.s32.totalorder %s45, %s59
    %p61 = scmp.eq.s32.totalorder %s14, 0
    %p62 = por %p60, %p61
    %s63 = ssub.s32 %s8, %s15
    %p64 = scmp.eq.s32.totalorder %s63, 0
    %s66 = sadd.s32 %s65, 1
    %s67 = scalar_select %p64, %s65, %s66
    %p70 = pneg %p64
    %p71 = scmp.eq.s32.totalorder %s8, 1
    %p72 = por %p70, %p71
    %p73 = scmp.ne.s32.totalorder %s65, %s68
    %p74 = scmp.eq.s32.totalorder %s8, 0
    %p75 = por %p73, %p74
    %p76 = scmp.ne.s32.totalorder %s65, %s68
    %p77 = scmp.eq.s32.totalorder %s13, 1
    %p78 = por %p76, %p77
    %p79 = scmp.ne.s32.totalorder %s68, %s69
    %p80 = scmp.eq.s32.totalorder %s13, 0
    %p81 = por %p79, %p80
    %p82 = scmp.ne.s32.totalorder %s68, %s69
    %p83 = scmp.eq.s32.totalorder %s14, 1
    %p84 = por %p82, %p83
    %p86 = scmp.ne.s32.totalorder %s69, %s85
    %p87 = scmp.eq.s32.totalorder %s14, 0
    %p88 = por %p86, %p87
    %p89 = scmp.le.s32.totalorder 1, %s8
    %p90 = scmp.lt.s32.totalorder %s8, 3
    %p91 = pnand %p89, %p90
    %p92 = pneg %p91
    // Predicated region
    $region9: #{generator_forward.17} parent=5 // pred_check
      _
    $region10: #{generator_forward.17} parent=5 // pred_check_branch
      %94 = sbr.rel (%p91) target = $region12
    $region11: #{generator_forward.17} parent=5 // pred_region
      %s95 = ssub.s32 %s8, 1
      // Predicated region
      $region13: #{generator_forward.17} parent=11 // pred_check
        %p96 = pneg %p55
      $region14: #{generator_forward.17} parent=11 // pred_check_branch
        %98 = sbr.rel (%p96) target = $region16
      $region15: #{generator_forward.17} parent=11 // pred_region
        _
      $region16: #{generator_forward.17} parent=11 // pred_fallthru
        _
    $region12: #{generator_forward.17} parent=5 // pred_fallthru
      _
    %p99 = scmp.lt.s32.totalorder %s8, 2
    // Predicated region
    $region17: #{generator_forward.17} parent=5 // pred_check
      %p100 = pneg %p99
    $region18: #{generator_forward.17} parent=5 // pred_check_branch
      %102 = sbr.rel (%p100) target = $region20
    $region19: #{generator_forward.17} parent=5 // pred_region
      // Predicated region
      $region21: #{generator_forward.17} parent=19 // pred_check
        %p103 = pneg %p28
      $region22: #{generator_forward.17} parent=19 // pred_check_branch
        %105 = sbr.rel (%p103) target = $region24
      $region23: #{generator_forward.17} parent=19 // pred_region
        %s106 = smul.u32 128, %s8
        %p107 = scmp.lt.s32.totalorder %s106, 255
        %s108 = scalar_select %p107, %s106, 255
        %s109 = smul.addr %s108, 4
        %s110 = scalar_lea.vmem %s0, %s109
        %s111 = smul.u32 128, %s8
      $region24: #{generator_forward.17} parent=19 // pred_fallthru
        _
    $region20: #{generator_forward.17} parent=5 // pred_fallthru
      _
    %p112 = scmp.le.s32.totalorder 1, %s8
    %p113 = scmp.lt.s32.totalorder %s8, 3
    %p114 = pnand %p112, %p113
    %p115 = pneg %p114
    // Predicated region
    $region25: #{generator_forward.17} parent=5 // pred_check
      _
    $region26: #{generator_forward.17} parent=5 // pred_check_branch
      %117 = sbr.rel (%p114) target = $region28
    $region27: #{generator_forward.17} parent=5 // pred_region
      %s118 = ssub.s32 %s8, 1
      %s119 = smul.u32 128, %s13
      %p120 = scmp.lt.s32.totalorder %s119, 255
      %s121 = scalar_select %p120, %s119, 255
      %s122 = smul.addr %s121, 4
      %s123 = scalar_lea.vmem %s0, %s122
      %p124 = pneg %p34
      %p125 = pneg %p31
      %p126 = pneg %p55
      %p127 = pneg %p52
      %p128 = pneg %p81
      %p129 = pneg %p78
      %s130 = smul.u32 128, %s13
      %p131 = scmp.lt.s32.totalorder %s130, 255
      %s132 = scalar_select %p131, %s130, 255
      %s133 = smul.addr %s132, 4
      %s134 = scalar_lea.vmem %s2, %s133
      %s135 = smul.u32 128, %s13
      %p136 = scmp.lt.s32.totalorder %s135, 255
      %s137 = scalar_select %p136, %s135, 255
      %s138 = smul.addr %s137, 4
      %s139 = scalar_lea.vmem %s0, %s138
      %s140 = smul.u32 128, %s13
      %s141 = smul.u32 128, %s13
      %p142 = scmp.lt.s32.totalorder %s141, 255
      %s143 = scalar_select %p142, %s141, 255
      %s144 = smul.addr %s143, 4
      %s145 = scalar_lea.vmem %s2, %s144
      %s146 = smul.u32 128, %s13
      %v148 = vld [vmem:[%s139] sm:$0xf]
      %v149 = vld [vmem:[%s139 + $0x4] sm:$0xf]
      %v150 = vld [vmem:[%s139 + $0x8] sm:$0xf]
      %v151 = vld [vmem:[%s139 + $0xc] sm:$0xf]
      %v152 = vld [vmem:[%s139 + $0x10] sm:$0xf]
      %v153 = vld [vmem:[%s139 + $0x14] sm:$0xf]
      %v154 = vld [vmem:[%s139 + $0x18] sm:$0xf]
      %v155 = vld [vmem:[%s139 + $0x1c] sm:$0xf]
      %v156 = vld [vmem:[%s139 + $0x20] sm:$0xf]
      %v157 = vld [vmem:[%s139 + $0x24] sm:$0xf]
      %v158 = vld [vmem:[%s139 + $0x28] sm:$0xf]
      %v159 = vld [vmem:[%s139 + $0x2c] sm:$0xf]
      %v160 = vld [vmem:[%s139 + $0x30] sm:$0xf]
      %v161 = vld [vmem:[%s139 + $0x34] sm:$0xf]
      %v162 = vld [vmem:[%s139 + $0x38] sm:$0xf]
      %v163 = vld [vmem:[%s139 + $0x3c] sm:$0xf]
      %v164 = vld [vmem:[%s139 + $0x40] sm:$0xf]
      %v165 = vld [vmem:[%s139 + $0x44] sm:$0xf]
      %v166 = vld [vmem:[%s139 + $0x48] sm:$0xf]
      %v167 = vld [vmem:[%s139 + $0x4c] sm:$0xf]
      %v168 = vld [vmem:[%s139 + $0x50] sm:$0xf]
      %v169 = vld [vmem:[%s139 + $0x54] sm:$0xf]
      %v170 = vld [vmem:[%s139 + $0x58] sm:$0xf]
      %v171 = vld [vmem:[%s139 + $0x5c] sm:$0xf]
      %v172 = vld [vmem:[%s139 + $0x60] sm:$0xf]
      %v173 = vld [vmem:[%s139 + $0x64] sm:$0xf]
      %v174 = vld [vmem:[%s139 + $0x68] sm:$0xf]
      %v175 = vld [vmem:[%s139 + $0x6c] sm:$0xf]
      %v176 = vld [vmem:[%s139 + $0x70] sm:$0xf]
      %v177 = vld [vmem:[%s139 + $0x74] sm:$0xf]
      %v178 = vld [vmem:[%s139 + $0x78] sm:$0xf]
      %v179 = vld [vmem:[%s139 + $0x7c] sm:$0xf]
      %v180 = vld [vmem:[%s139 + $0x80] sm:$0xf]
      %v181 = vld [vmem:[%s139 + $0x84] sm:$0xf]
      %v182 = vld [vmem:[%s139 + $0x88] sm:$0xf]
      %v183 = vld [vmem:[%s139 + $0x8c] sm:$0xf]
      %v184 = vld [vmem:[%s139 + $0x90] sm:$0xf]
      %v185 = vld [vmem:[%s139 + $0x94] sm:$0xf]
      %v186 = vld [vmem:[%s139 + $0x98] sm:$0xf]
      %v187 = vld [vmem:[%s139 + $0x9c] sm:$0xf]
      %v188 = vld [vmem:[%s139 + $0xa0] sm:$0xf]
      %v189 = vld [vmem:[%s139 + $0xa4] sm:$0xf]
      %v190 = vld [vmem:[%s139 + $0xa8] sm:$0xf]
      %v191 = vld [vmem:[%s139 + $0xac] sm:$0xf]
      %v192 = vld [vmem:[%s139 + $0xb0] sm:$0xf]
      %v193 = vld [vmem:[%s139 + $0xb4] sm:$0xf]
      %v194 = vld [vmem:[%s139 + $0xb8] sm:$0xf]
      %v195 = vld [vmem:[%s139 + $0xbc] sm:$0xf]
      %v196 = vld [vmem:[%s139 + $0xc0] sm:$0xf]
      %v197 = vld [vmem:[%s139 + $0xc4] sm:$0xf]
      %v198 = vld [vmem:[%s139 + $0xc8] sm:$0xf]
      %v199 = vld [vmem:[%s139 + $0xcc] sm:$0xf]
      %v200 = vld [vmem:[%s139 + $0xd0] sm:$0xf]
      %v201 = vld [vmem:[%s139 + $0xd4] sm:$0xf]
      %v202 = vld [vmem:[%s139 + $0xd8] sm:$0xf]
      %v203 = vld [vmem:[%s139 + $0xdc] sm:$0xf]
      %v204 = vld [vmem:[%s139 + $0xe0] sm:$0xf]
      %v205 = vld [vmem:[%s139 + $0xe4] sm:$0xf]
      %v206 = vld [vmem:[%s139 + $0xe8] sm:$0xf]
      %v207 = vld [vmem:[%s139 + $0xec] sm:$0xf]
      %v208 = vld [vmem:[%s139 + $0xf0] sm:$0xf]
      %v209 = vld [vmem:[%s139 + $0xf4] sm:$0xf]
      %v210 = vld [vmem:[%s139 + $0xf8] sm:$0xf]
      %v211 = vld [vmem:[%s139 + $0xfc] sm:$0xf]
      %v212 = vld [vmem:[%s139 + $0x100] sm:$0xf]
      %v213 = vld [vmem:[%s139 + $0x104] sm:$0xf]
      %v214 = vld [vmem:[%s139 + $0x108] sm:$0xf]
      %v215 = vld [vmem:[%s139 + $0x10c] sm:$0xf]
      %v216 = vld [vmem:[%s139 + $0x110] sm:$0xf]
      %v217 = vld [vmem:[%s139 + $0x114] sm:$0xf]
      %v218 = vld [vmem:[%s139 + $0x118] sm:$0xf]
      %v219 = vld [vmem:[%s139 + $0x11c] sm:$0xf]
      %v220 = vld [vmem:[%s139 + $0x120] sm:$0xf]
      %v221 = vld [vmem:[%s139 + $0x124] sm:$0xf]
      %v222 = vld [vmem:[%s139 + $0x128] sm:$0xf]
      %v223 = vld [vmem:[%s139 + $0x12c] sm:$0xf]
      %v224 = vld [vmem:[%s139 + $0x130] sm:$0xf]
      %v225 = vld [vmem:[%s139 + $0x134] sm:$0xf]
      %v226 = vld [vmem:[%s139 + $0x138] sm:$0xf]
      %v227 = vld [vmem:[%s139 + $0x13c] sm:$0xf]
      %v228 = vld [vmem:[%s139 + $0x140] sm:$0xf]
      %v229 = vld [vmem:[%s139 + $0x144] sm:$0xf]
      %v230 = vld [vmem:[%s139 + $0x148] sm:$0xf]
      %v231 = vld [vmem:[%s139 + $0x14c] sm:$0xf]
      %v232 = vld [vmem:[%s139 + $0x150] sm:$0xf]
      %v233 = vld [vmem:[%s139 + $0x154] sm:$0xf]
      %v234 = vld [vmem:[%s139 + $0x158] sm:$0xf]
      %v235 = vld [vmem:[%s139 + $0x15c] sm:$0xf]
      %v236 = vld [vmem:[%s139 + $0x160] sm:$0xf]
      %v237 = vld [vmem:[%s139 + $0x164] sm:$0xf]
      %v238 = vld [vmem:[%s139 + $0x168] sm:$0xf]
      %v239 = vld [vmem:[%s139 + $0x16c] sm:$0xf]
      %v240 = vld [vmem:[%s139 + $0x170] sm:$0xf]
      %v241 = vld [vmem:[%s139 + $0x174] sm:$0xf]
      %v242 = vld [vmem:[%s139 + $0x178] sm:$0xf]
      %v243 = vld [vmem:[%s139 + $0x17c] sm:$0xf]
      %v244 = vld [vmem:[%s139 + $0x180] sm:$0xf]
      %v245 = vld [vmem:[%s139 + $0x184] sm:$0xf]
      %v246 = vld [vmem:[%s139 + $0x188] sm:$0xf]
      %v247 = vld [vmem:[%s139 + $0x18c] sm:$0xf]
      %v248 = vld [vmem:[%s139 + $0x190] sm:$0xf]
      %v249 = vld [vmem:[%s139 + $0x194] sm:$0xf]
      %v250 = vld [vmem:[%s139 + $0x198] sm:$0xf]
      %v251 = vld [vmem:[%s139 + $0x19c] sm:$0xf]
      %v252 = vld [vmem:[%s139 + $0x1a0] sm:$0xf]
      %v253 = vld [vmem:[%s139 + $0x1a4] sm:$0xf]
      %v254 = vld [vmem:[%s139 + $0x1a8] sm:$0xf]
      %v255 = vld [vmem:[%s139 + $0x1ac] sm:$0xf]
      %v256 = vld [vmem:[%s139 + $0x1b0] sm:$0xf]
      %v257 = vld [vmem:[%s139 + $0x1b4] sm:$0xf]
      %v258 = vld [vmem:[%s139 + $0x1b8] sm:$0xf]
      %v259 = vld [vmem:[%s139 + $0x1bc] sm:$0xf]
      %v260 = vld [vmem:[%s139 + $0x1c0] sm:$0xf]
      %v261 = vld [vmem:[%s139 + $0x1c4] sm:$0xf]
      %v262 = vld [vmem:[%s139 + $0x1c8] sm:$0xf]
      %v263 = vld [vmem:[%s139 + $0x1cc] sm:$0xf]
      %v264 = vld [vmem:[%s139 + $0x1d0] sm:$0xf]
      %v265 = vld [vmem:[%s139 + $0x1d4] sm:$0xf]
      %v266 = vld [vmem:[%s139 + $0x1d8] sm:$0xf]
      %v267 = vld [vmem:[%s139 + $0x1dc] sm:$0xf]
      %v268 = vld [vmem:[%s139 + $0x1e0] sm:$0xf]
      %v269 = vld [vmem:[%s139 + $0x1e4] sm:$0xf]
      %v270 = vld [vmem:[%s139 + $0x1e8] sm:$0xf]
      %v271 = vld [vmem:[%s139 + $0x1ec] sm:$0xf]
      %v272 = vld [vmem:[%s139 + $0x1f0] sm:$0xf]
      %v273 = vld [vmem:[%s139 + $0x1f4] sm:$0xf]
      %v274 = vld [vmem:[%s139 + $0x1f8] sm:$0xf]
      %v275 = vld [vmem:[%s139 + $0x1fc] sm:$0xf]
      %v276 = vld [vmem:[%s1] sm:$0xf]
      %v277 = vld [vmem:[%s1 + $0x4] sm:$0xf]
      %v278 = vld [vmem:[%s1 + $0x8] sm:$0xf]
      %v279 = vld [vmem:[%s1 + $0xc] sm:$0xf]
      %v280 = vld [vmem:[%s1 + $0x10] sm:$0xf]
      %v281 = vld [vmem:[%s1 + $0x14] sm:$0xf]
      %v282 = vld [vmem:[%s1 + $0x18] sm:$0xf]
      %v283 = vld [vmem:[%s1 + $0x1c] sm:$0xf]
      %v284 = vld [vmem:[%s1 + $0x20] sm:$0xf]
      %v413 = vunpack.c.l.b16 %v148
      %v414 = vunpack.c.l.b16 %v149
      %v415 = vunpack.c.l.b16 %v150
      %v416 = vunpack.c.l.b16 %v151
      %v417 = vunpack.c.l.b16 %v152
      %v418 = vunpack.c.l.b16 %v153
      %v419 = vunpack.c.l.b16 %v154
      %v420 = vunpack.c.l.b16 %v155
      %v421 = vunpack.c.l.b16 %v156
      %v422 = vunpack.c.l.b16 %v157
      %v423 = vunpack.c.l.b16 %v158
      %v424 = vunpack.c.l.b16 %v159
      %v425 = vunpack.c.l.b16 %v160
      %v426 = vunpack.c.l.b16 %v161
      %v427 = vunpack.c.l.b16 %v162
      %v428 = vunpack.c.l.b16 %v163
      %v429 = vunpack.c.l.b16 %v164
      %v430 = vunpack.c.l.b16 %v165
      %v431 = vunpack.c.l.b16 %v166
      %v432 = vunpack.c.l.b16 %v167
      %v433 = vunpack.c.l.b16 %v168
      %v434 = vunpack.c.l.b16 %v169
      %v435 = vunpack.c.l.b16 %v170
      %v436 = vunpack.c.l.b16 %v171
      %v437 = vunpack.c.l.b16 %v172
      %v438 = vunpack.c.l.b16 %v173
      %v439 = vunpack.c.l.b16 %v174
      %v440 = vunpack.c.l.b16 %v175
      %v441 = vunpack.c.l.b16 %v176
      %v442 = vunpack.c.l.b16 %v177
      %v443 = vunpack.c.l.b16 %v178
      %v444 = vunpack.c.l.b16 %v179
      %v445 = vunpack.c.l.b16 %v180
      %v446 = vunpack.c.l.b16 %v181
      %v447 = vunpack.c.l.b16 %v182
      %v448 = vunpack.c.l.b16 %v183
      %v449 = vunpack.c.l.b16 %v184
      %v450 = vunpack.c.l.b16 %v185
      %v451 = vunpack.c.l.b16 %v186
      %v452 = vunpack.c.l.b16 %v187
      %v453 = vunpack.c.l.b16 %v188
      %v454 = vunpack.c.l.b16 %v189
      %v455 = vunpack.c.l.b16 %v190
      %v456 = vunpack.c.l.b16 %v191
      %v457 = vunpack.c.l.b16 %v192
      %v458 = vunpack.c.l.b16 %v193
      %v459 = vunpack.c.l.b16 %v194
      %v460 = vunpack.c.l.b16 %v195
      %v461 = vunpack.c.l.b16 %v196
      %v462 = vunpack.c.l.b16 %v197
      %v463 = vunpack.c.l.b16 %v198
      %v464 = vunpack.c.l.b16 %v199
      %v465 = vunpack.c.l.b16 %v200
      %v466 = vunpack.c.l.b16 %v201
      %v467 = vunpack.c.l.b16 %v202
      %v468 = vunpack.c.l.b16 %v203
      %v469 = vunpack.c.l.b16 %v204
      %v470 = vunpack.c.l.b16 %v205
      %v471 = vunpack.c.l.b16 %v206
      %v472 = vunpack.c.l.b16 %v207
      %v473 = vunpack.c.l.b16 %v208
      %v474 = vunpack.c.l.b16 %v209
      %v475 = vunpack.c.l.b16 %v210
      %v476 = vunpack.c.l.b16 %v211
      %v477 = vunpack.c.l.b16 %v212
      %v478 = vunpack.c.l.b16 %v213
      %v479 = vunpack.c.l.b16 %v214
      %v480 = vunpack.c.l.b16 %v215
      %v481 = vunpack.c.l.b16 %v216
      %v482 = vunpack.c.l.b16 %v217
      %v483 = vunpack.c.l.b16 %v218
      %v484 = vunpack.c.l.b16 %v219
      %v485 = vunpack.c.l.b16 %v220
      %v486 = vunpack.c.l.b16 %v221
      %v487 = vunpack.c.l.b16 %v222
      %v488 = vunpack.c.l.b16 %v223
      %v489 = vunpack.c.l.b16 %v224
      %v490 = vunpack.c.l.b16 %v225
      %v491 = vunpack.c.l.b16 %v226
      %v492 = vunpack.c.l.b16 %v227
      %v493 = vunpack.c.l.b16 %v228
      %v494 = vunpack.c.l.b16 %v229
      %v495 = vunpack.c.l.b16 %v230
      %v496 = vunpack.c.l.b16 %v231
      %v497 = vunpack.c.l.b16 %v232
      %v498 = vunpack.c.l.b16 %v233
      %v499 = vunpack.c.l.b16 %v234
      %v500 = vunpack.c.l.b16 %v235
      %v501 = vunpack.c.l.b16 %v236
      %v502 = vunpack.c.l.b16 %v237
      %v503 = vunpack.c.l.b16 %v238
      %v504 = vunpack.c.l.b16 %v239
      %v505 = vunpack.c.l.b16 %v240
      %v506 = vunpack.c.l.b16 %v241
      %v507 = vunpack.c.l.b16 %v242
      %v508 = vunpack.c.l.b16 %v243
      %v509 = vunpack.c.l.b16 %v244
      %v510 = vunpack.c.l.b16 %v245
      %v511 = vunpack.c.l.b16 %v246
      %v512 = vunpack.c.l.b16 %v247
      %v513 = vunpack.c.l.b16 %v248
      %v514 = vunpack.c.l.b16 %v249
      %v515 = vunpack.c.l.b16 %v250
      %v516 = vunpack.c.l.b16 %v251
      %v517 = vunpack.c.l.b16 %v252
      %v518 = vunpack.c.l.b16 %v253
      %v519 = vunpack.c.l.b16 %v254
      %v520 = vunpack.c.l.b16 %v255
      %v521 = vunpack.c.l.b16 %v256
      %v522 = vunpack.c.l.b16 %v257
      %v523 = vunpack.c.l.b16 %v258
      %v524 = vunpack.c.l.b16 %v259
      %v525 = vunpack.c.l.b16 %v260
      %v526 = vunpack.c.l.b16 %v261
      %v527 = vunpack.c.l.b16 %v262
      %v528 = vunpack.c.l.b16 %v263
      %v529 = vunpack.c.l.b16 %v264
      %v530 = vunpack.c.l.b16 %v265
      %v531 = vunpack.c.l.b16 %v266
      %v532 = vunpack.c.l.b16 %v267
      %v533 = vunpack.c.l.b16 %v268
      %v534 = vunpack.c.l.b16 %v269
      %v535 = vunpack.c.l.b16 %v270
      %v536 = vunpack.c.l.b16 %v271
      %v537 = vunpack.c.l.b16 %v272
      %v538 = vunpack.c.l.b16 %v273
      %v539 = vunpack.c.l.b16 %v274
      %v540 = vunpack.c.l.b16 %v275
      %v541 = vpack.c.b16 %v414, %v413
      %v542 = vpack.c.b16 %v416, %v415
      %v543 = vpack.c.b16 %v418, %v417
      %v544 = vpack.c.b16 %v420, %v419
      %v545 = vpack.c.b16 %v422, %v421
      %v546 = vpack.c.b16 %v424, %v423
      %v547 = vpack.c.b16 %v426, %v425
      %v548 = vpack.c.b16 %v428, %v427
      %v549 = vpack.c.b16 %v430, %v429
      %v550 = vpack.c.b16 %v432, %v431
      %v551 = vpack.c.b16 %v434, %v433
      %v552 = vpack.c.b16 %v436, %v435
      %v553 = vpack.c.b16 %v438, %v437
      %v554 = vpack.c.b16 %v440, %v439
      %v555 = vpack.c.b16 %v442, %v441
      %v556 = vpack.c.b16 %v444, %v443
      %v557 = vpack.c.b16 %v446, %v445
      %v558 = vpack.c.b16 %v448, %v447
      %v559 = vpack.c.b16 %v450, %v449
      %v560 = vpack.c.b16 %v452, %v451
      %v561 = vpack.c.b16 %v454, %v453
      %v562 = vpack.c.b16 %v456, %v455
      %v563 = vpack.c.b16 %v458, %v457
      %v564 = vpack.c.b16 %v460, %v459
      %v565 = vpack.c.b16 %v462, %v461
      %v566 = vpack.c.b16 %v464, %v463
      %v567 = vpack.c.b16 %v466, %v465
      %v568 = vpack.c.b16 %v468, %v467
      %v569 = vpack.c.b16 %v470, %v469
      %v570 = vpack.c.b16 %v472, %v471
      %v571 = vpack.c.b16 %v474, %v473
      %v572 = vpack.c.b16 %v476, %v475
      %v573 = vpack.c.b16 %v478, %v477
      %v574 = vpack.c.b16 %v480, %v479
      %v575 = vpack.c.b16 %v482, %v481
      %v576 = vpack.c.b16 %v484, %v483
      %v577 = vpack.c.b16 %v486, %v485
      %v578 = vpack.c.b16 %v488, %v487
      %v579 = vpack.c.b16 %v490, %v489
      %v580 = vpack.c.b16 %v492, %v491
      %v581 = vpack.c.b16 %v494, %v493
      %v582 = vpack.c.b16 %v496, %v495
      %v583 = vpack.c.b16 %v498, %v497
      %v584 = vpack.c.b16 %v500, %v499
      %v585 = vpack.c.b16 %v502, %v501
      %v586 = vpack.c.b16 %v504, %v503
      %v587 = vpack.c.b16 %v506, %v505
      %v588 = vpack.c.b16 %v508, %v507
      %v589 = vpack.c.b16 %v510, %v509
      %v590 = vpack.c.b16 %v512, %v511
      %v591 = vpack.c.b16 %v514, %v513
      %v592 = vpack.c.b16 %v516, %v515
      %v593 = vpack.c.b16 %v518, %v517
      %v594 = vpack.c.b16 %v520, %v519
      %v595 = vpack.c.b16 %v522, %v521
      %v596 = vpack.c.b16 %v524, %v523
      %v597 = vpack.c.b16 %v526, %v525
      %v598 = vpack.c.b16 %v528, %v527
      %v599 = vpack.c.b16 %v530, %v529
      %v600 = vpack.c.b16 %v532, %v531
      %v601 = vpack.c.b16 %v534, %v533
      %v602 = vpack.c.b16 %v536, %v535
      %v603 = vpack.c.b16 %v538, %v537
      %v604 = vpack.c.b16 %v540, %v539
      %v614 = vunpack.c.l.b16 %v276
      %v615 = vunpack.c.l.b16 %v277
      %v616 = vunpack.c.l.b16 %v278
      %v617 = vunpack.c.l.b16 %v279
      %v618 = vunpack.c.l.b16 %v280
      %v619 = vunpack.c.l.b16 %v281
      %v620 = vunpack.c.l.b16 %v282
      %v621 = vunpack.c.l.b16 %v283
      %v622 = vunpack.c.l.b16 %v284
      %v623 = vpack.c.b16 %v615, %v614
      %v624 = vpack.c.b16 %v617, %v616
      %v625 = vpack.c.b16 %v619, %v618
      %v626 = vpack.c.b16 %v621, %v620
      %v627 = vpack.c.b16 %v622, %v622
      %vm632 = vcmask 588800
      %v634 = vsel %vm632, %v541, 0
      %v637 = vsel %vm632, %v542, 0
      %v640 = vsel %vm632, %v543, 0
      %v643 = vsel %vm632, %v544, 0
      %v646 = vsel %vm632, %v545, 0
      %v649 = vsel %vm632, %v546, 0
      %v652 = vsel %vm632, %v547, 0
      %v655 = vsel %vm632, %v548, 0
      %v658 = vsel %vm632, %v549, 0
      %v661 = vsel %vm632, %v550, 0
      %v664 = vsel %vm632, %v551, 0
      %v667 = vsel %vm632, %v552, 0
      %v670 = vsel %vm632, %v553, 0
      %v673 = vsel %vm632, %v554, 0
      %v676 = vsel %vm632, %v555, 0
      %v679 = vsel %vm632, %v556, 0
      %v682 = vsel %vm632, %v557, 0
      %v685 = vsel %vm632, %v558, 0
      %v688 = vsel %vm632, %v559, 0
      %v691 = vsel %vm632, %v560, 0
      %v694 = vsel %vm632, %v561, 0
      %v697 = vsel %vm632, %v562, 0
      %v700 = vsel %vm632, %v563, 0
      %v703 = vsel %vm632, %v564, 0
      %v706 = vsel %vm632, %v565, 0
      %v709 = vsel %vm632, %v566, 0
      %v712 = vsel %vm632, %v567, 0
      %v715 = vsel %vm632, %v568, 0
      %v718 = vsel %vm632, %v569, 0
      %v721 = vsel %vm632, %v570, 0
      %v724 = vsel %vm632, %v571, 0
      %v727 = vsel %vm632, %v572, 0
      %v730 = vsel %vm632, %v573, 0
      %v733 = vsel %vm632, %v574, 0
      %v736 = vsel %vm632, %v575, 0
      %v739 = vsel %vm632, %v576, 0
      %v742 = vsel %vm632, %v577, 0
      %v745 = vsel %vm632, %v578, 0
      %v748 = vsel %vm632, %v579, 0
      %v751 = vsel %vm632, %v580, 0
      %v754 = vsel %vm632, %v581, 0
      %v757 = vsel %vm632, %v582, 0
      %v760 = vsel %vm632, %v583, 0
      %v763 = vsel %vm632, %v584, 0
      %v766 = vsel %vm632, %v585, 0
      %v769 = vsel %vm632, %v586, 0
      %v772 = vsel %vm632, %v587, 0
      %v775 = vsel %vm632, %v588, 0
      %v778 = vsel %vm632, %v589, 0
      %v781 = vsel %vm632, %v590, 0
      %v784 = vsel %vm632, %v591, 0
      %v787 = vsel %vm632, %v592, 0
      %v790 = vsel %vm632, %v593, 0
      %v793 = vsel %vm632, %v594, 0
      %v796 = vsel %vm632, %v595, 0
      %v799 = vsel %vm632, %v596, 0
      %v802 = vsel %vm632, %v597, 0
      %v805 = vsel %vm632, %v598, 0
      %v808 = vsel %vm632, %v599, 0
      %v811 = vsel %vm632, %v600, 0
      %v814 = vsel %vm632, %v601, 0
      %v817 = vsel %vm632, %v602, 0
      %v820 = vsel %vm632, %v603, 0
      %v823 = vsel %vm632, %v604, 0
      %vm825 = vcmask 1043456
      %v827 = vsel %vm825, %v627, 0
      %829 = vmatprep.subr.bf16.mxu0 0
      %830 = vmatpush1.bf16.msra.mxu0 0
      %831 = vmatprep.subr.bf16.mxu0 0
      %832 = vmatpush1.bf16.msra.mxu0 0
      %833 = vmatprep.subr.bf16.mxu0 0
      %834 = vmatpush1.bf16.msra.mxu0 0
      %835 = vmatprep.subr.bf16.mxu0 0
      %836 = vmatpush1.bf16.msra.mxu0 %v827
      %837 = vmatprep.subr.bf16.mxu0 0
      %838 = vmatpush1.bf16.msra.mxu0 %v626
      %839 = vmatprep.subr.bf16.mxu0 0
      %840 = vmatpush1.bf16.msra.mxu0 %v625
      %841 = vmatprep.subr.bf16.mxu0 0
      %842 = vmatpush1.bf16.msra.mxu0 %v624
      %843 = vmatprep.subr.bf16.mxu0 0
      %844 = vmatpush1.bf16.msra.mxu0 %v623
      %845 = vmatprep.subr.bf16.mxu0 0
      %846 = vmatpush2.bf16.msra.mxu0 0
      %847 = vmatprep.subr.bf16.mxu0 0
      %848 = vmatpush2.bf16.msra.mxu0 0
      %849 = vmatprep.subr.bf16.mxu0 0
      %850 = vmatpush2.bf16.msra.mxu0 0
      %851 = vmatprep.subr.bf16.mxu0 0
      %852 = vmatpush2.bf16.msra.mxu0 0
      %853 = vmatprep.subr.bf16.mxu0 0
      %854 = vmatpush2.bf16.msra.mxu0 0
      %855 = vmatprep.subr.bf16.mxu0 0
      %856 = vmatpush2.bf16.msra.mxu0 0
      %857 = vmatprep.subr.bf16.mxu0 0
      %858 = vmatpush2.bf16.msra.mxu0 0
      %859 = vmatprep.subr.bf16.mxu0 0
      %860 = vmatpush2.bf16.msra.mxu0 0
      %861 = vmatprep.mubr.bf16.mxu0 0
      %862 = vmatmul.mubr.bf16.gmra.mxu0 %v634
      %v863 = vpop.f32.mrf.mxu0
      %v864 = vadd.f32 0.0, %v863
      %v865 = vpop.f32.mrf.mxu0
      %v866 = vpop.f32.mrf.mxu0
      %v867 = vadd.f32 0.0, %v866
      %v868 = vpop.f32.mrf.mxu0
      %869 = vmatprep.mubr.bf16.mxu0 0
      %870 = vmatmul.mubr.bf16.gmra.mxu0 %v637
      %v871 = vpop.f32.mrf.mxu0
      %v872 = vadd.f32 0.0, %v871
      %v873 = vpop.f32.mrf.mxu0
      %v874 = vpop.f32.mrf.mxu0
      %v875 = vadd.f32 0.0, %v874
      %v876 = vpop.f32.mrf.mxu0
      %877 = vmatprep.mubr.bf16.mxu0 0
      %878 = vmatmul.mubr.bf16.gmra.mxu0 %v640
      %v879 = vpop.f32.mrf.mxu0
      %v880 = vadd.f32 0.0, %v879
      %v881 = vpop.f32.mrf.mxu0
      %v882 = vpop.f32.mrf.mxu0
      %v883 = vadd.f32 0.0, %v882
      %v884 = vpop.f32.mrf.mxu0
      %885 = vmatprep.mubr.bf16.mxu0 0
      %886 = vmatmul.mubr.bf16.gmra.mxu0 %v643
      %v887 = vpop.f32.mrf.mxu0
      %v888 = vadd.f32 0.0, %v887
      %v889 = vpop.f32.mrf.mxu0
      %v890 = vpop.f32.mrf.mxu0
      %v891 = vadd.f32 0.0, %v890
      %v892 = vpop.f32.mrf.mxu0
      %893 = vmatprep.mubr.bf16.mxu0 0
      %894 = vmatmul.mubr.bf16.gmra.mxu0 %v646
      %v895 = vpop.f32.mrf.mxu0
      %v896 = vadd.f32 0.0, %v895
      %v897 = vpop.f32.mrf.mxu0
      %v898 = vpop.f32.mrf.mxu0
      %v899 = vadd.f32 0.0, %v898
      %v900 = vpop.f32.mrf.mxu0
      %901 = vmatprep.mubr.bf16.mxu0 0
      %902 = vmatmul.mubr.bf16.gmra.mxu0 %v649
      %v903 = vpop.f32.mrf.mxu0
      %v904 = vadd.f32 0.0, %v903
      %v905 = vpop.f32.mrf.mxu0
      %v906 = vpop.f32.mrf.mxu0
      %v907 = vadd.f32 0.0, %v906
      %v908 = vpop.f32.mrf.mxu0
      %909 = vmatprep.mubr.bf16.mxu0 0
      %910 = vmatmul.mubr.bf16.gmra.mxu0 %v652
      %v911 = vpop.f32.mrf.mxu0
      %v912 = vadd.f32 0.0, %v911
      %v913 = vpop.f32.mrf.mxu0
      %v914 = vpop.f32.mrf.mxu0
      %v915 = vadd.f32 0.0, %v914
      %v916 = vpop.f32.mrf.mxu0
      %917 = vmatprep.mubr.bf16.mxu0 0
      %918 = vmatmul.mubr.bf16.gmra.mxu0 %v655
      %v919 = vpop.f32.mrf.mxu0
      %v920 = vadd.f32 0.0, %v919
      %v921 = vpop.f32.mrf.mxu0
      %v922 = vpop.f32.mrf.mxu0
      %v923 = vadd.f32 0.0, %v922
      %v924 = vpop.f32.mrf.mxu0
      %925 = vmatprep.mubr.bf16.mxu0 0
      %926 = vmatmul.mubr.bf16.gmra.mxu0 %v658
      %v927 = vpop.f32.mrf.mxu0
      %v928 = vadd.f32 0.0, %v927
      %v929 = vpop.f32.mrf.mxu0
      %v930 = vpop.f32.mrf.mxu0
      %v931 = vadd.f32 0.0, %v930
      %v932 = vpop.f32.mrf.mxu0
      %933 = vmatprep.mubr.bf16.mxu0 0
      %934 = vmatmul.mubr.bf16.gmra.mxu0 %v661
      %v935 = vpop.f32.mrf.mxu0
      %v936 = vadd.f32 0.0, %v935
      %v937 = vpop.f32.mrf.mxu0
      %v938 = vpop.f32.mrf.mxu0
      %v939 = vadd.f32 0.0, %v938
      %v940 = vpop.f32.mrf.mxu0
      %941 = vmatprep.mubr.bf16.mxu0 0
      %942 = vmatmul.mubr.bf16.gmra.mxu0 %v664
      %v943 = vpop.f32.mrf.mxu0
      %v944 = vadd.f32 0.0, %v943
      %v945 = vpop.f32.mrf.mxu0
      %v946 = vpop.f32.mrf.mxu0
      %v947 = vadd.f32 0.0, %v946
      %v948 = vpop.f32.mrf.mxu0
      %949 = vmatprep.mubr.bf16.mxu0 0
      %950 = vmatmul.mubr.bf16.gmra.mxu0 %v667
      %v951 = vpop.f32.mrf.mxu0
      %v952 = vadd.f32 0.0, %v951
      %v953 = vpop.f32.mrf.mxu0
      %v954 = vpop.f32.mrf.mxu0
      %v955 = vadd.f32 0.0, %v954
      %v956 = vpop.f32.mrf.mxu0
      %957 = vmatprep.mubr.bf16.mxu0 0
      %958 = vmatmul.mubr.bf16.gmra.mxu0 %v670
      %v959 = vpop.f32.mrf.mxu0
      %v960 = vadd.f32 0.0, %v959
      %v961 = vpop.f32.mrf.mxu0
      %v962 = vpop.f32.mrf.mxu0
      %v963 = vadd.f32 0.0, %v962
      %v964 = vpop.f32.mrf.mxu0
      %965 = vmatprep.mubr.bf16.mxu0 0
      %966 = vmatmul.mubr.bf16.gmra.mxu0 %v673
      %v967 = vpop.f32.mrf.mxu0
      %v968 = vadd.f32 0.0, %v967
      %v969 = vpop.f32.mrf.mxu0
      %v970 = vpop.f32.mrf.mxu0
      %v971 = vadd.f32 0.0, %v970
      %v972 = vpop.f32.mrf.mxu0
      %973 = vmatprep.mubr.bf16.mxu0 0
      %974 = vmatmul.mubr.bf16.gmra.mxu0 %v676
      %v975 = vpop.f32.mrf.mxu0
      %v976 = vadd.f32 0.0, %v975
      %v977 = vpop.f32.mrf.mxu0
      %v978 = vpop.f32.mrf.mxu0
      %v979 = vadd.f32 0.0, %v978
      %v980 = vpop.f32.mrf.mxu0
      %981 = vmatprep.mubr.bf16.mxu0 0
      %982 = vmatmul.mubr.bf16.gmra.mxu0 %v679
      %v983 = vpop.f32.mrf.mxu0
      %v984 = vadd.f32 0.0, %v983
      %v985 = vpop.f32.mrf.mxu0
      %v986 = vpop.f32.mrf.mxu0
      %v987 = vadd.f32 0.0, %v986
      %v988 = vpop.f32.mrf.mxu0
      %989 = vmatprep.mubr.bf16.mxu0 0
      %990 = vmatmul.mubr.bf16.gmra.mxu0 %v682
      %v991 = vpop.f32.mrf.mxu0
      %v992 = vadd.f32 0.0, %v991
      %v993 = vpop.f32.mrf.mxu0
      %v994 = vpop.f32.mrf.mxu0
      %v995 = vadd.f32 0.0, %v994
      %v996 = vpop.f32.mrf.mxu0
      %997 = vmatprep.mubr.bf16.mxu0 0
      %998 = vmatmul.mubr.bf16.gmra.mxu0 %v685
      %v999 = vpop.f32.mrf.mxu0
      %v1000 = vadd.f32 0.0, %v999
      %v1001 = vpop.f32.mrf.mxu0
      %v1002 = vpop.f32.mrf.mxu0
      %v1003 = vadd.f32 0.0, %v1002
      %v1004 = vpop.f32.mrf.mxu0
      %1005 = vmatprep.mubr.bf16.mxu0 0
      %1006 = vmatmul.mubr.bf16.gmra.mxu0 %v688
      %v1007 = vpop.f32.mrf.mxu0
      %v1008 = vadd.f32 0.0, %v1007
      %v1009 = vpop.f32.mrf.mxu0
      %v1010 = vpop.f32.mrf.mxu0
      %v1011 = vadd.f32 0.0, %v1010
      %v1012 = vpop.f32.mrf.mxu0
      %1013 = vmatprep.mubr.bf16.mxu0 0
      %1014 = vmatmul.mubr.bf16.gmra.mxu0 %v691
      %v1015 = vpop.f32.mrf.mxu0
      %v1016 = vadd.f32 0.0, %v1015
      %v1017 = vpop.f32.mrf.mxu0
      %v1018 = vpop.f32.mrf.mxu0
      %v1019 = vadd.f32 0.0, %v1018
      %v1020 = vpop.f32.mrf.mxu0
      %1021 = vmatprep.mubr.bf16.mxu0 0
      %1022 = vmatmul.mubr.bf16.gmra.mxu0 %v694
      %v1023 = vpop.f32.mrf.mxu0
      %v1024 = vadd.f32 0.0, %v1023
      %v1025 = vpop.f32.mrf.mxu0
      %v1026 = vpop.f32.mrf.mxu0
      %v1027 = vadd.f32 0.0, %v1026
      %v1028 = vpop.f32.mrf.mxu0
      %1029 = vmatprep.mubr.bf16.mxu0 0
      %1030 = vmatmul.mubr.bf16.gmra.mxu0 %v697
      %v1031 = vpop.f32.mrf.mxu0
      %v1032 = vadd.f32 0.0, %v1031
      %v1033 = vpop.f32.mrf.mxu0
      %v1034 = vpop.f32.mrf.mxu0
      %v1035 = vadd.f32 0.0, %v1034
      %v1036 = vpop.f32.mrf.mxu0
      %1037 = vmatprep.mubr.bf16.mxu0 0
      %1038 = vmatmul.mubr.bf16.gmra.mxu0 %v700
      %v1039 = vpop.f32.mrf.mxu0
      %v1040 = vadd.f32 0.0, %v1039
      %v1041 = vpop.f32.mrf.mxu0
      %v1042 = vpop.f32.mrf.mxu0
      %v1043 = vadd.f32 0.0, %v1042
      %v1044 = vpop.f32.mrf.mxu0
      %1045 = vmatprep.mubr.bf16.mxu0 0
      %1046 = vmatmul.mubr.bf16.gmra.mxu0 %v703
      %v1047 = vpop.f32.mrf.mxu0
      %v1048 = vadd.f32 0.0, %v1047
      %v1049 = vpop.f32.mrf.mxu0
      %v1050 = vpop.f32.mrf.mxu0
      %v1051 = vadd.f32 0.0, %v1050
      %v1052 = vpop.f32.mrf.mxu0
      %1053 = vmatprep.mubr.bf16.mxu0 0
      %1054 = vmatmul.mubr.bf16.gmra.mxu0 %v706
      %v1055 = vpop.f32.mrf.mxu0
      %v1056 = vadd.f32 0.0, %v1055
      %v1057 = vpop.f32.mrf.mxu0
      %v1058 = vpop.f32.mrf.mxu0
      %v1059 = vadd.f32 0.0, %v1058
      %v1060 = vpop.f32.mrf.mxu0
      %1061 = vmatprep.mubr.bf16.mxu0 0
      %1062 = vmatmul.mubr.bf16.gmra.mxu0 %v709
      %v1063 = vpop.f32.mrf.mxu0
      %v1064 = vadd.f32 0.0, %v1063
      %v1065 = vpop.f32.mrf.mxu0
      %v1066 = vpop.f32.mrf.mxu0
      %v1067 = vadd.f32 0.0, %v1066
      %v1068 = vpop.f32.mrf.mxu0
      %1069 = vmatprep.mubr.bf16.mxu0 0
      %1070 = vmatmul.mubr.bf16.gmra.mxu0 %v712
      %v1071 = vpop.f32.mrf.mxu0
      %v1072 = vadd.f32 0.0, %v1071
      %v1073 = vpop.f32.mrf.mxu0
      %v1074 = vpop.f32.mrf.mxu0
      %v1075 = vadd.f32 0.0, %v1074
      %v1076 = vpop.f32.mrf.mxu0
      %1077 = vmatprep.mubr.bf16.mxu0 0
      %1078 = vmatmul.mubr.bf16.gmra.mxu0 %v715
      %v1079 = vpop.f32.mrf.mxu0
      %v1080 = vadd.f32 0.0, %v1079
      %v1081 = vpop.f32.mrf.mxu0
      %v1082 = vpop.f32.mrf.mxu0
      %v1083 = vadd.f32 0.0, %v1082
      %v1084 = vpop.f32.mrf.mxu0
      %1085 = vmatprep.mubr.bf16.mxu0 0
      %1086 = vmatmul.mubr.bf16.gmra.mxu0 %v718
      %v1087 = vpop.f32.mrf.mxu0
      %v1088 = vadd.f32 0.0, %v1087
      %v1089 = vpop.f32.mrf.mxu0
      %v1090 = vpop.f32.mrf.mxu0
      %v1091 = vadd.f32 0.0, %v1090
      %v1092 = vpop.f32.mrf.mxu0
      %1093 = vmatprep.mubr.bf16.mxu0 0
      %1094 = vmatmul.mubr.bf16.gmra.mxu0 %v721
      %v1095 = vpop.f32.mrf.mxu0
      %v1096 = vadd.f32 0.0, %v1095
      %v1097 = vpop.f32.mrf.mxu0
      %v1098 = vpop.f32.mrf.mxu0
      %v1099 = vadd.f32 0.0, %v1098
      %v1100 = vpop.f32.mrf.mxu0
      %1101 = vmatprep.mubr.bf16.mxu0 0
      %1102 = vmatmul.mubr.bf16.gmra.mxu0 %v724
      %v1103 = vpop.f32.mrf.mxu0
      %v1104 = vadd.f32 0.0, %v1103
      %v1105 = vpop.f32.mrf.mxu0
      %v1106 = vpop.f32.mrf.mxu0
      %v1107 = vadd.f32 0.0, %v1106
      %v1108 = vpop.f32.mrf.mxu0
      %1109 = vmatprep.mubr.bf16.mxu0 0
      %1110 = vmatmul.mubr.bf16.gmra.mxu0 %v727
      %v1111 = vpop.f32.mrf.mxu0
      %v1112 = vadd.f32 0.0, %v1111
      %v1113 = vpop.f32.mrf.mxu0
      %v1114 = vpop.f32.mrf.mxu0
      %v1115 = vadd.f32 0.0, %v1114
      %v1116 = vpop.f32.mrf.mxu0
      %1117 = vmatprep.mubr.bf16.mxu0 0
      %1118 = vmatmul.mubr.bf16.gmra.mxu0 %v730
      %v1119 = vpop.f32.mrf.mxu0
      %v1120 = vadd.f32 0.0, %v1119
      %v1121 = vpop.f32.mrf.mxu0
      %v1122 = vpop.f32.mrf.mxu0
      %v1123 = vadd.f32 0.0, %v1122
      %v1124 = vpop.f32.mrf.mxu0
      %1125 = vmatprep.mubr.bf16.mxu0 0
      %1126 = vmatmul.mubr.bf16.gmra.mxu0 %v733
      %v1127 = vpop.f32.mrf.mxu0
      %v1128 = vadd.f32 0.0, %v1127
      %v1129 = vpop.f32.mrf.mxu0
      %v1130 = vpop.f32.mrf.mxu0
      %v1131 = vadd.f32 0.0, %v1130
      %v1132 = vpop.f32.mrf.mxu0
      %1133 = vmatprep.mubr.bf16.mxu0 0
      %1134 = vmatmul.mubr.bf16.gmra.mxu0 %v736
      %v1135 = vpop.f32.mrf.mxu0
      %v1136 = vadd.f32 0.0, %v1135
      %v1137 = vpop.f32.mrf.mxu0
      %v1138 = vpop.f32.mrf.mxu0
      %v1139 = vadd.f32 0.0, %v1138
      %v1140 = vpop.f32.mrf.mxu0
      %1141 = vmatprep.mubr.bf16.mxu0 0
      %1142 = vmatmul.mubr.bf16.gmra.mxu0 %v739
      %v1143 = vpop.f32.mrf.mxu0
      %v1144 = vadd.f32 0.0, %v1143
      %v1145 = vpop.f32.mrf.mxu0
      %v1146 = vpop.f32.mrf.mxu0
      %v1147 = vadd.f32 0.0, %v1146
      %v1148 = vpop.f32.mrf.mxu0
      %1149 = vmatprep.mubr.bf16.mxu0 0
      %1150 = vmatmul.mubr.bf16.gmra.mxu0 %v742
      %v1151 = vpop.f32.mrf.mxu0
      %v1152 = vadd.f32 0.0, %v1151
      %v1153 = vpop.f32.mrf.mxu0
      %v1154 = vpop.f32.mrf.mxu0
      %v1155 = vadd.f32 0.0, %v1154
      %v1156 = vpop.f32.mrf.mxu0
      %1157 = vmatprep.mubr.bf16.mxu0 0
      %1158 = vmatmul.mubr.bf16.gmra.mxu0 %v745
      %v1159 = vpop.f32.mrf.mxu0
      %v1160 = vadd.f32 0.0, %v1159
      %v1161 = vpop.f32.mrf.mxu0
      %v1162 = vpop.f32.mrf.mxu0
      %v1163 = vadd.f32 0.0, %v1162
      %v1164 = vpop.f32.mrf.mxu0
      %1165 = vmatprep.mubr.bf16.mxu0 0
      %1166 = vmatmul.mubr.bf16.gmra.mxu0 %v748
      %v1167 = vpop.f32.mrf.mxu0
      %v1168 = vadd.f32 0.0, %v1167
      %v1169 = vpop.f32.mrf.mxu0
      %v1170 = vpop.f32.mrf.mxu0
      %v1171 = vadd.f32 0.0, %v1170
      %v1172 = vpop.f32.mrf.mxu0
      %1173 = vmatprep.mubr.bf16.mxu0 0
      %1174 = vmatmul.mubr.bf16.gmra.mxu0 %v751
      %v1175 = vpop.f32.mrf.mxu0
      %v1176 = vadd.f32 0.0, %v1175
      %v1177 = vpop.f32.mrf.mxu0
      %v1178 = vpop.f32.mrf.mxu0
      %v1179 = vadd.f32 0.0, %v1178
      %v1180 = vpop.f32.mrf.mxu0
      %1181 = vmatprep.mubr.bf16.mxu0 0
      %1182 = vmatmul.mubr.bf16.gmra.mxu0 %v754
      %v1183 = vpop.f32.mrf.mxu0
      %v1184 = vadd.f32 0.0, %v1183
      %v1185 = vpop.f32.mrf.mxu0
      %v1186 = vpop.f32.mrf.mxu0
      %v1187 = vadd.f32 0.0, %v1186
      %v1188 = vpop.f32.mrf.mxu0
      %1189 = vmatprep.mubr.bf16.mxu0 0
      %1190 = vmatmul.mubr.bf16.gmra.mxu0 %v757
      %v1191 = vpop.f32.mrf.mxu0
      %v1192 = vadd.f32 0.0, %v1191
      %v1193 = vpop.f32.mrf.mxu0
      %v1194 = vpop.f32.mrf.mxu0
      %v1195 = vadd.f32 0.0, %v1194
      %v1196 = vpop.f32.mrf.mxu0
      %1197 = vmatprep.mubr.bf16.mxu0 0
      %1198 = vmatmul.mubr.bf16.gmra.mxu0 %v760
      %v1199 = vpop.f32.mrf.mxu0
      %v1200 = vadd.f32 0.0, %v1199
      %v1201 = vpop.f32.mrf.mxu0
      %v1202 = vpop.f32.mrf.mxu0
      %v1203 = vadd.f32 0.0, %v1202
      %v1204 = vpop.f32.mrf.mxu0
      %1205 = vmatprep.mubr.bf16.mxu0 0
      %1206 = vmatmul.mubr.bf16.gmra.mxu0 %v763
      %v1207 = vpop.f32.mrf.mxu0
      %v1208 = vadd.f32 0.0, %v1207
      %v1209 = vpop.f32.mrf.mxu0
      %v1210 = vpop.f32.mrf.mxu0
      %v1211 = vadd.f32 0.0, %v1210
      %v1212 = vpop.f32.mrf.mxu0
      %1213 = vmatprep.mubr.bf16.mxu0 0
      %1214 = vmatmul.mubr.bf16.gmra.mxu0 %v766
      %v1215 = vpop.f32.mrf.mxu0
      %v1216 = vadd.f32 0.0, %v1215
      %v1217 = vpop.f32.mrf.mxu0
      %v1218 = vpop.f32.mrf.mxu0
      %v1219 = vadd.f32 0.0, %v1218
      %v1220 = vpop.f32.mrf.mxu0
      %1221 = vmatprep.mubr.bf16.mxu0 0
      %1222 = vmatmul.mubr.bf16.gmra.mxu0 %v769
      %v1223 = vpop.f32.mrf.mxu0
      %v1224 = vadd.f32 0.0, %v1223
      %v1225 = vpop.f32.mrf.mxu0
      %v1226 = vpop.f32.mrf.mxu0
      %v1227 = vadd.f32 0.0, %v1226
      %v1228 = vpop.f32.mrf.mxu0
      %1229 = vmatprep.mubr.bf16.mxu0 0
      %1230 = vmatmul.mubr.bf16.gmra.mxu0 %v772
      %v1231 = vpop.f32.mrf.mxu0
      %v1232 = vadd.f32 0.0, %v1231
      %v1233 = vpop.f32.mrf.mxu0
      %v1234 = vpop.f32.mrf.mxu0
      %v1235 = vadd.f32 0.0, %v1234
      %v1236 = vpop.f32.mrf.mxu0
      %1237 = vmatprep.mubr.bf16.mxu0 0
      %1238 = vmatmul.mubr.bf16.gmra.mxu0 %v775
      %v1239 = vpop.f32.mrf.mxu0
      %v1240 = vadd.f32 0.0, %v1239
      %v1241 = vpop.f32.mrf.mxu0
      %v1242 = vpop.f32.mrf.mxu0
      %v1243 = vadd.f32 0.0, %v1242
      %v1244 = vpop.f32.mrf.mxu0
      %1245 = vmatprep.mubr.bf16.mxu0 0
      %1246 = vmatmul.mubr.bf16.gmra.mxu0 %v778
      %v1247 = vpop.f32.mrf.mxu0
      %v1248 = vadd.f32 0.0, %v1247
      %v1249 = vpop.f32.mrf.mxu0
      %v1250 = vpop.f32.mrf.mxu0
      %v1251 = vadd.f32 0.0, %v1250
      %v1252 = vpop.f32.mrf.mxu0
      %1253 = vmatprep.mubr.bf16.mxu0 0
      %1254 = vmatmul.mubr.bf16.gmra.mxu0 %v781
      %v1255 = vpop.f32.mrf.mxu0
      %v1256 = vadd.f32 0.0, %v1255
      %v1257 = vpop.f32.mrf.mxu0
      %v1258 = vpop.f32.mrf.mxu0
      %v1259 = vadd.f32 0.0, %v1258
      %v1260 = vpop.f32.mrf.mxu0
      %1261 = vmatprep.mubr.bf16.mxu0 0
      %1262 = vmatmul.mubr.bf16.gmra.mxu0 %v784
      %v1263 = vpop.f32.mrf.mxu0
      %v1264 = vadd.f32 0.0, %v1263
      %v1265 = vpop.f32.mrf.mxu0
      %v1266 = vpop.f32.mrf.mxu0
      %v1267 = vadd.f32 0.0, %v1266
      %v1268 = vpop.f32.mrf.mxu0
      %1269 = vmatprep.mubr.bf16.mxu0 0
      %1270 = vmatmul.mubr.bf16.gmra.mxu0 %v787
      %v1271 = vpop.f32.mrf.mxu0
      %v1272 = vadd.f32 0.0, %v1271
      %v1273 = vpop.f32.mrf.mxu0
      %v1274 = vpop.f32.mrf.mxu0
      %v1275 = vadd.f32 0.0, %v1274
      %v1276 = vpop.f32.mrf.mxu0
      %1277 = vmatprep.mubr.bf16.mxu0 0
      %1278 = vmatmul.mubr.bf16.gmra.mxu0 %v790
      %v1279 = vpop.f32.mrf.mxu0
      %v1280 = vadd.f32 0.0, %v1279
      %v1281 = vpop.f32.mrf.mxu0
      %v1282 = vpop.f32.mrf.mxu0
      %v1283 = vadd.f32 0.0, %v1282
      %v1284 = vpop.f32.mrf.mxu0
      %1285 = vmatprep.mubr.bf16.mxu0 0
      %1286 = vmatmul.mubr.bf16.gmra.mxu0 %v793
      %v1287 = vpop.f32.mrf.mxu0
      %v1288 = vadd.f32 0.0, %v1287
      %v1289 = vpop.f32.mrf.mxu0
      %v1290 = vpop.f32.mrf.mxu0
      %v1291 = vadd.f32 0.0, %v1290
      %v1292 = vpop.f32.mrf.mxu0
      %1293 = vmatprep.mubr.bf16.mxu0 0
      %1294 = vmatmul.mubr.bf16.gmra.mxu0 %v796
      %v1295 = vpop.f32.mrf.mxu0
      %v1296 = vadd.f32 0.0, %v1295
      %v1297 = vpop.f32.mrf.mxu0
      %v1298 = vpop.f32.mrf.mxu0
      %v1299 = vadd.f32 0.0, %v1298
      %v1300 = vpop.f32.mrf.mxu0
      %1301 = vmatprep.mubr.bf16.mxu0 0
      %1302 = vmatmul.mubr.bf16.gmra.mxu0 %v799
      %v1303 = vpop.f32.mrf.mxu0
      %v1304 = vadd.f32 0.0, %v1303
      %v1305 = vpop.f32.mrf.mxu0
      %v1306 = vpop.f32.mrf.mxu0
      %v1307 = vadd.f32 0.0, %v1306
      %v1308 = vpop.f32.mrf.mxu0
      %1309 = vmatprep.mubr.bf16.mxu0 0
      %1310 = vmatmul.mubr.bf16.gmra.mxu0 %v802
      %v1311 = vpop.f32.mrf.mxu0
      %v1312 = vadd.f32 0.0, %v1311
      %v1313 = vpop.f32.mrf.mxu0
      %v1314 = vpop.f32.mrf.mxu0
      %v1315 = vadd.f32 0.0, %v1314
      %v1316 = vpop.f32.mrf.mxu0
      %1317 = vmatprep.mubr.bf16.mxu0 0
      %1318 = vmatmul.mubr.bf16.gmra.mxu0 %v805
      %v1319 = vpop.f32.mrf.mxu0
      %v1320 = vadd.f32 0.0, %v1319
      %v1321 = vpop.f32.mrf.mxu0
      %v1322 = vpop.f32.mrf.mxu0
      %v1323 = vadd.f32 0.0, %v1322
      %v1324 = vpop.f32.mrf.mxu0
      %1325 = vmatprep.mubr.bf16.mxu0 0
      %1326 = vmatmul.mubr.bf16.gmra.mxu0 %v808
      %v1327 = vpop.f32.mrf.mxu0
      %v1328 = vadd.f32 0.0, %v1327
      %v1329 = vpop.f32.mrf.mxu0
      %v1330 = vpop.f32.mrf.mxu0
      %v1331 = vadd.f32 0.0, %v1330
      %v1332 = vpop.f32.mrf.mxu0
      %1333 = vmatprep.mubr.bf16.mxu0 0
      %1334 = vmatmul.mubr.bf16.gmra.mxu0 %v811
      %v1335 = vpop.f32.mrf.mxu0
      %v1336 = vadd.f32 0.0, %v1335
      %v1337 = vpop.f32.mrf.mxu0
      %v1338 = vpop.f32.mrf.mxu0
      %v1339 = vadd.f32 0.0, %v1338
      %v1340 = vpop.f32.mrf.mxu0
      %1341 = vmatprep.mubr.bf16.mxu0 0
      %1342 = vmatmul.mubr.bf16.gmra.mxu0 %v814
      %v1343 = vpop.f32.mrf.mxu0
      %v1344 = vadd.f32 0.0, %v1343
      %v1345 = vpop.f32.mrf.mxu0
      %v1346 = vpop.f32.mrf.mxu0
      %v1347 = vadd.f32 0.0, %v1346
      %v1348 = vpop.f32.mrf.mxu0
      %1349 = vmatprep.mubr.bf16.mxu0 0
      %1350 = vmatmul.mubr.bf16.gmra.mxu0 %v817
      %v1351 = vpop.f32.mrf.mxu0
      %v1352 = vadd.f32 0.0, %v1351
      %v1353 = vpop.f32.mrf.mxu0
      %v1354 = vpop.f32.mrf.mxu0
      %v1355 = vadd.f32 0.0, %v1354
      %v1356 = vpop.f32.mrf.mxu0
      %1357 = vmatprep.mubr.bf16.mxu0 0
      %1358 = vmatmul.mubr.bf16.gmra.mxu0 %v820
      %v1359 = vpop.f32.mrf.mxu0
      %v1360 = vadd.f32 0.0, %v1359
      %v1361 = vpop.f32.mrf.mxu0
      %v1362 = vpop.f32.mrf.mxu0
      %v1363 = vadd.f32 0.0, %v1362
      %v1364 = vpop.f32.mrf.mxu0
      %1365 = vmatprep.mubr.bf16.mxu0 0
      %1366 = vmatmul.mubr.bf16.gmra.mxu0 %v823
      %v1367 = vpop.f32.mrf.mxu0
      %v1368 = vadd.f32 0.0, %v1367
      %v1369 = vpop.f32.mrf.mxu0
      %v1370 = vpop.f32.mrf.mxu0
      %v1371 = vadd.f32 0.0, %v1370
      %v1372 = vpop.f32.mrf.mxu0
      %1373 = vdwg.mxu0
      %v1374 = vpack.c.bf16 %v867, %v864
      %v1375 = vpack.c.bf16 %v875, %v872
      %v1376 = vpack.c.bf16 %v883, %v880
      %v1377 = vpack.c.bf16 %v891, %v888
      %v1378 = vpack.c.bf16 %v899, %v896
      %v1379 = vpack.c.bf16 %v907, %v904
      %v1380 = vpack.c.bf16 %v915, %v912
      %v1381 = vpack.c.bf16 %v923, %v920
      %v1382 = vpack.c.bf16 %v931, %v928
      %v1383 = vpack.c.bf16 %v939, %v936
      %v1384 = vpack.c.bf16 %v947, %v944
      %v1385 = vpack.c.bf16 %v955, %v952
      %v1386 = vpack.c.bf16 %v963, %v960
      %v1387 = vpack.c.bf16 %v971, %v968
      %v1388 = vpack.c.bf16 %v979, %v976
      %v1389 = vpack.c.bf16 %v987, %v984
      %v1390 = vpack.c.bf16 %v995, %v992
      %v1391 = vpack.c.bf16 %v1003, %v1000
      %v1392 = vpack.c.bf16 %v1011, %v1008
      %v1393 = vpack.c.bf16 %v1019, %v1016
      %v1394 = vpack.c.bf16 %v1027, %v1024
      %v1395 = vpack.c.bf16 %v1035, %v1032
      %v1396 = vpack.c.bf16 %v1043, %v1040
      %v1397 = vpack.c.bf16 %v1051, %v1048
      %v1398 = vpack.c.bf16 %v1059, %v1056
      %v1399 = vpack.c.bf16 %v1067, %v1064
      %v1400 = vpack.c.bf16 %v1075, %v1072
      %v1401 = vpack.c.bf16 %v1083, %v1080
      %v1402 = vpack.c.bf16 %v1091, %v1088
      %v1403 = vpack.c.bf16 %v1099, %v1096
      %v1404 = vpack.c.bf16 %v1107, %v1104
      %v1405 = vpack.c.bf16 %v1115, %v1112
      %v1406 = vpack.c.bf16 %v1123, %v1120
      %v1407 = vpack.c.bf16 %v1131, %v1128
      %v1408 = vpack.c.bf16 %v1139, %v1136
      %v1409 = vpack.c.bf16 %v1147, %v1144
      %v1410 = vpack.c.bf16 %v1155, %v1152
      %v1411 = vpack.c.bf16 %v1163, %v1160
      %v1412 = vpack.c.bf16 %v1171, %v1168
      %v1413 = vpack.c.bf16 %v1179, %v1176
      %v1414 = vpack.c.bf16 %v1187, %v1184
      %v1415 = vpack.c.bf16 %v1195, %v1192
      %v1416 = vpack.c.bf16 %v1203, %v1200
      %v1417 = vpack.c.bf16 %v1211, %v1208
      %v1418 = vpack.c.bf16 %v1219, %v1216
      %v1419 = vpack.c.bf16 %v1227, %v1224
      %v1420 = vpack.c.bf16 %v1235, %v1232
      %v1421 = vpack.c.bf16 %v1243, %v1240
      %v1422 = vpack.c.bf16 %v1251, %v1248
      %v1423 = vpack.c.bf16 %v1259, %v1256
      %v1424 = vpack.c.bf16 %v1267, %v1264
      %v1425 = vpack.c.bf16 %v1275, %v1272
      %v1426 = vpack.c.bf16 %v1283, %v1280
      %v1427 = vpack.c.bf16 %v1291, %v1288
      %v1428 = vpack.c.bf16 %v1299, %v1296
      %v1429 = vpack.c.bf16 %v1307, %v1304
      %v1430 = vpack.c.bf16 %v1315, %v1312
      %v1431 = vpack.c.bf16 %v1323, %v1320
      %v1432 = vpack.c.bf16 %v1331, %v1328
      %v1433 = vpack.c.bf16 %v1339, %v1336
      %v1434 = vpack.c.bf16 %v1347, %v1344
      %v1435 = vpack.c.bf16 %v1355, %v1352
      %v1436 = vpack.c.bf16 %v1363, %v1360
      %v1437 = vpack.c.bf16 %v1371, %v1368
      %v1502 = vunpack.c.l.b16 %v1374
      %v1503 = vunpack.c.h.b16 %v1374
      %v1504 = vunpack.c.l.b16 %v1375
      %v1505 = vunpack.c.h.b16 %v1375
      %v1506 = vunpack.c.l.b16 %v1376
      %v1507 = vunpack.c.h.b16 %v1376
      %v1508 = vunpack.c.l.b16 %v1377
      %v1509 = vunpack.c.h.b16 %v1377
      %v1510 = vunpack.c.l.b16 %v1378
      %v1511 = vunpack.c.h.b16 %v1378
      %v1512 = vunpack.c.l.b16 %v1379
      %v1513 = vunpack.c.h.b16 %v1379
      %v1514 = vunpack.c.l.b16 %v1380
      %v1515 = vunpack.c.h.b16 %v1380
      %v1516 = vunpack.c.l.b16 %v1381
      %v1517 = vunpack.c.h.b16 %v1381
      %v1518 = vunpack.c.l.b16 %v1382
      %v1519 = vunpack.c.h.b16 %v1382
      %v1520 = vunpack.c.l.b16 %v1383
      %v1521 = vunpack.c.h.b16 %v1383
      %v1522 = vunpack.c.l.b16 %v1384
      %v1523 = vunpack.c.h.b16 %v1384
      %v1524 = vunpack.c.l.b16 %v1385
      %v1525 = vunpack.c.h.b16 %v1385
      %v1526 = vunpack.c.l.b16 %v1386
      %v1527 = vunpack.c.h.b16 %v1386
      %v1528 = vunpack.c.l.b16 %v1387
      %v1529 = vunpack.c.h.b16 %v1387
      %v1530 = vunpack.c.l.b16 %v1388
      %v1531 = vunpack.c.h.b16 %v1388
      %v1532 = vunpack.c.l.b16 %v1389
      %v1533 = vunpack.c.h.b16 %v1389
      %v1534 = vunpack.c.l.b16 %v1390
      %v1535 = vunpack.c.h.b16 %v1390
      %v1536 = vunpack.c.l.b16 %v1391
      %v1537 = vunpack.c.h.b16 %v1391
      %v1538 = vunpack.c.l.b16 %v1392
      %v1539 = vunpack.c.h.b16 %v1392
      %v1540 = vunpack.c.l.b16 %v1393
      %v1541 = vunpack.c.h.b16 %v1393
      %v1542 = vunpack.c.l.b16 %v1394
      %v1543 = vunpack.c.h.b16 %v1394
      %v1544 = vunpack.c.l.b16 %v1395
      %v1545 = vunpack.c.h.b16 %v1395
      %v1546 = vunpack.c.l.b16 %v1396
      %v1547 = vunpack.c.h.b16 %v1396
      %v1548 = vunpack.c.l.b16 %v1397
      %v1549 = vunpack.c.h.b16 %v1397
      %v1550 = vunpack.c.l.b16 %v1398
      %v1551 = vunpack.c.h.b16 %v1398
      %v1552 = vunpack.c.l.b16 %v1399
      %v1553 = vunpack.c.h.b16 %v1399
      %v1554 = vunpack.c.l.b16 %v1400
      %v1555 = vunpack.c.h.b16 %v1400
      %v1556 = vunpack.c.l.b16 %v1401
      %v1557 = vunpack.c.h.b16 %v1401
      %v1558 = vunpack.c.l.b16 %v1402
      %v1559 = vunpack.c.h.b16 %v1402
      %v1560 = vunpack.c.l.b16 %v1403
      %v1561 = vunpack.c.h.b16 %v1403
      %v1562 = vunpack.c.l.b16 %v1404
      %v1563 = vunpack.c.h.b16 %v1404
      %v1564 = vunpack.c.l.b16 %v1405
      %v1565 = vunpack.c.h.b16 %v1405
      %v1566 = vunpack.c.l.b16 %v1406
      %v1567 = vunpack.c.h.b16 %v1406
      %v1568 = vunpack.c.l.b16 %v1407
      %v1569 = vunpack.c.h.b16 %v1407
      %v1570 = vunpack.c.l.b16 %v1408
      %v1571 = vunpack.c.h.b16 %v1408
      %v1572 = vunpack.c.l.b16 %v1409
      %v1573 = vunpack.c.h.b16 %v1409
      %v1574 = vunpack.c.l.b16 %v1410
      %v1575 = vunpack.c.h.b16 %v1410
      %v1576 = vunpack.c.l.b16 %v1411
      %v1577 = vunpack.c.h.b16 %v1411
      %v1578 = vunpack.c.l.b16 %v1412
      %v1579 = vunpack.c.h.b16 %v1412
      %v1580 = vunpack.c.l.b16 %v1413
      %v1581 = vunpack.c.h.b16 %v1413
      %v1582 = vunpack.c.l.b16 %v1414
      %v1583 = vunpack.c.h.b16 %v1414
      %v1584 = vunpack.c.l.b16 %v1415
      %v1585 = vunpack.c.h.b16 %v1415
      %v1586 = vunpack.c.l.b16 %v1416
      %v1587 = vunpack.c.h.b16 %v1416
      %v1588 = vunpack.c.l.b16 %v1417
      %v1589 = vunpack.c.h.b16 %v1417
      %v1590 = vunpack.c.l.b16 %v1418
      %v1591 = vunpack.c.h.b16 %v1418
      %v1592 = vunpack.c.l.b16 %v1419
      %v1593 = vunpack.c.h.b16 %v1419
      %v1594 = vunpack.c.l.b16 %v1420
      %v1595 = vunpack.c.h.b16 %v1420
      %v1596 = vunpack.c.l.b16 %v1421
      %v1597 = vunpack.c.h.b16 %v1421
      %v1598 = vunpack.c.l.b16 %v1422
      %v1599 = vunpack.c.h.b16 %v1422
      %v1600 = vunpack.c.l.b16 %v1423
      %v1601 = vunpack.c.h.b16 %v1423
      %v1602 = vunpack.c.l.b16 %v1424
      %v1603 = vunpack.c.h.b16 %v1424
      %v1604 = vunpack.c.l.b16 %v1425
      %v1605 = vunpack.c.h.b16 %v1425
      %v1606 = vunpack.c.l.b16 %v1426
      %v1607 = vunpack.c.h.b16 %v1426
      %v1608 = vunpack.c.l.b16 %v1427
      %v1609 = vunpack.c.h.b16 %v1427
      %v1610 = vunpack.c.l.b16 %v1428
      %v1611 = vunpack.c.h.b16 %v1428
      %v1612 = vunpack.c.l.b16 %v1429
      %v1613 = vunpack.c.h.b16 %v1429
      %v1614 = vunpack.c.l.b16 %v1430
      %v1615 = vunpack.c.h.b16 %v1430
      %v1616 = vunpack.c.l.b16 %v1431
      %v1617 = vunpack.c.h.b16 %v1431
      %v1618 = vunpack.c.l.b16 %v1432
      %v1619 = vunpack.c.h.b16 %v1432
      %v1620 = vunpack.c.l.b16 %v1433
      %v1621 = vunpack.c.h.b16 %v1433
      %v1622 = vunpack.c.l.b16 %v1434
      %v1623 = vunpack.c.h.b16 %v1434
      %v1624 = vunpack.c.l.b16 %v1435
      %v1625 = vunpack.c.h.b16 %v1435
      %v1626 = vunpack.c.l.b16 %v1436
      %v1627 = vunpack.c.h.b16 %v1436
      %v1628 = vunpack.c.l.b16 %v1437
      %v1629 = vunpack.c.h.b16 %v1437
      %v1630 = vpack.c.b16 %v1502, %v1502
      %v1631 = vpack.c.b16 %v1503, %v1503
      %v1632 = vpack.c.b16 %v1504, %v1504
      %v1633 = vpack.c.b16 %v1505, %v1505
      %v1634 = vpack.c.b16 %v1506, %v1506
      %v1635 = vpack.c.b16 %v1507, %v1507
      %v1636 = vpack.c.b16 %v1508, %v1508
      %v1637 = vpack.c.b16 %v1509, %v1509
      %v1638 = vpack.c.b16 %v1510, %v1510
      %v1639 = vpack.c.b16 %v1511, %v1511
      %v1640 = vpack.c.b16 %v1512, %v1512
      %v1641 = vpack.c.b16 %v1513, %v1513
      %v1642 = vpack.c.b16 %v1514, %v1514
      %v1643 = vpack.c.b16 %v1515, %v1515
      %v1644 = vpack.c.b16 %v1516, %v1516
      %v1645 = vpack.c.b16 %v1517, %v1517
      %v1646 = vpack.c.b16 %v1518, %v1518
      %v1647 = vpack.c.b16 %v1519, %v1519
      %v1648 = vpack.c.b16 %v1520, %v1520
      %v1649 = vpack.c.b16 %v1521, %v1521
      %v1650 = vpack.c.b16 %v1522, %v1522
      %v1651 = vpack.c.b16 %v1523, %v1523
      %v1652 = vpack.c.b16 %v1524, %v1524
      %v1653 = vpack.c.b16 %v1525, %v1525
      %v1654 = vpack.c.b16 %v1526, %v1526
      %v1655 = vpack.c.b16 %v1527, %v1527
      %v1656 = vpack.c.b16 %v1528, %v1528
      %v1657 = vpack.c.b16 %v1529, %v1529
      %v1658 = vpack.c.b16 %v1530, %v1530
      %v1659 = vpack.c.b16 %v1531, %v1531
      %v1660 = vpack.c.b16 %v1532, %v1532
      %v1661 = vpack.c.b16 %v1533, %v1533
      %v1662 = vpack.c.b16 %v1534, %v1534
      %v1663 = vpack.c.b16 %v1535, %v1535
      %v1664 = vpack.c.b16 %v1536, %v1536
      %v1665 = vpack.c.b16 %v1537, %v1537
      %v1666 = vpack.c.b16 %v1538, %v1538
      %v1667 = vpack.c.b16 %v1539, %v1539
      %v1668 = vpack.c.b16 %v1540, %v1540
      %v1669 = vpack.c.b16 %v1541, %v1541
      %v1670 = vpack.c.b16 %v1542, %v1542
      %v1671 = vpack.c.b16 %v1543, %v1543
      %v1672 = vpack.c.b16 %v1544, %v1544
      %v1673 = vpack.c.b16 %v1545, %v1545
      %v1674 = vpack.c.b16 %v1546, %v1546
      %v1675 = vpack.c.b16 %v1547, %v1547
      %v1676 = vpack.c.b16 %v1548, %v1548
      %v1677 = vpack.c.b16 %v1549, %v1549
      %v1678 = vpack.c.b16 %v1550, %v1550
      %v1679 = vpack.c.b16 %v1551, %v1551
      %v1680 = vpack.c.b16 %v1552, %v1552
      %v1681 = vpack.c.b16 %v1553, %v1553
      %v1682 = vpack.c.b16 %v1554, %v1554
      %v1683 = vpack.c.b16 %v1555, %v1555
      %v1684 = vpack.c.b16 %v1556, %v1556
      %v1685 = vpack.c.b16 %v1557, %v1557
      %v1686 = vpack.c.b16 %v1558, %v1558
      %v1687 = vpack.c.b16 %v1559, %v1559
      %v1688 = vpack.c.b16 %v1560, %v1560
      %v1689 = vpack.c.b16 %v1561, %v1561
      %v1690 = vpack.c.b16 %v1562, %v1562
      %v1691 = vpack.c.b16 %v1563, %v1563
      %v1692 = vpack.c.b16 %v1564, %v1564
      %v1693 = vpack.c.b16 %v1565, %v1565
      %v1694 = vpack.c.b16 %v1566, %v1566
      %v1695 = vpack.c.b16 %v1567, %v1567
      %v1696 = vpack.c.b16 %v1568, %v1568
      %v1697 = vpack.c.b16 %v1569, %v1569
      %v1698 = vpack.c.b16 %v1570, %v1570
      %v1699 = vpack.c.b16 %v1571, %v1571
      %v1700 = vpack.c.b16 %v1572, %v1572
      %v1701 = vpack.c.b16 %v1573, %v1573
      %v1702 = vpack.c.b16 %v1574, %v1574
      %v1703 = vpack.c.b16 %v1575, %v1575
      %v1704 = vpack.c.b16 %v1576, %v1576
      %v1705 = vpack.c.b16 %v1577, %v1577
      %v1706 = vpack.c.b16 %v1578, %v1578
      %v1707 = vpack.c.b16 %v1579, %v1579
      %v1708 = vpack.c.b16 %v1580, %v1580
      %v1709 = vpack.c.b16 %v1581, %v1581
      %v1710 = vpack.c.b16 %v1582, %v1582
      %v1711 = vpack.c.b16 %v1583, %v1583
      %v1712 = vpack.c.b16 %v1584, %v1584
      %v1713 = vpack.c.b16 %v1585, %v1585
      %v1714 = vpack.c.b16 %v1586, %v1586
      %v1715 = vpack.c.b16 %v1587, %v1587
      %v1716 = vpack.c.b16 %v1588, %v1588
      %v1717 = vpack.c.b16 %v1589, %v1589
      %v1718 = vpack.c.b16 %v1590, %v1590
      %v1719 = vpack.c.b16 %v1591, %v1591
      %v1720 = vpack.c.b16 %v1592, %v1592
      %v1721 = vpack.c.b16 %v1593, %v1593
      %v1722 = vpack.c.b16 %v1594, %v1594
      %v1723 = vpack.c.b16 %v1595, %v1595
      %v1724 = vpack.c.b16 %v1596, %v1596
      %v1725 = vpack.c.b16 %v1597, %v1597
      %v1726 = vpack.c.b16 %v1598, %v1598
      %v1727 = vpack.c.b16 %v1599, %v1599
      %v1728 = vpack.c.b16 %v1600, %v1600
      %v1729 = vpack.c.b16 %v1601, %v1601
      %v1730 = vpack.c.b16 %v1602, %v1602
      %v1731 = vpack.c.b16 %v1603, %v1603
      %v1732 = vpack.c.b16 %v1604, %v1604
      %v1733 = vpack.c.b16 %v1605, %v1605
      %v1734 = vpack.c.b16 %v1606, %v1606
      %v1735 = vpack.c.b16 %v1607, %v1607
      %v1736 = vpack.c.b16 %v1608, %v1608
      %v1737 = vpack.c.b16 %v1609, %v1609
      %v1738 = vpack.c.b16 %v1610, %v1610
      %v1739 = vpack.c.b16 %v1611, %v1611
      %v1740 = vpack.c.b16 %v1612, %v1612
      %v1741 = vpack.c.b16 %v1613, %v1613
      %v1742 = vpack.c.b16 %v1614, %v1614
      %v1743 = vpack.c.b16 %v1615, %v1615
      %v1744 = vpack.c.b16 %v1616, %v1616
      %v1745 = vpack.c.b16 %v1617, %v1617
      %v1746 = vpack.c.b16 %v1618, %v1618
      %v1747 = vpack.c.b16 %v1619, %v1619
      %v1748 = vpack.c.b16 %v1620, %v1620
      %v1749 = vpack.c.b16 %v1621, %v1621
      %v1750 = vpack.c.b16 %v1622, %v1622
      %v1751 = vpack.c.b16 %v1623, %v1623
      %v1752 = vpack.c.b16 %v1624, %v1624
      %v1753 = vpack.c.b16 %v1625, %v1625
      %v1754 = vpack.c.b16 %v1626, %v1626
      %v1755 = vpack.c.b16 %v1627, %v1627
      %v1756 = vpack.c.b16 %v1628, %v1628
      %v1757 = vpack.c.b16 %v1629, %v1629
      %vm1886 = vcmask 257024
      %1887 = vst.msk [vmem:[%s145] sm:$0xf] %vm1886, %v1630
      %1888 = vst.msk [vmem:[%s145 + $0x4] sm:$0xf] %vm1886, %v1631
      %1889 = vst.msk [vmem:[%s145 + $0x8] sm:$0xf] %vm1886, %v1632
      %1890 = vst.msk [vmem:[%s145 + $0xc] sm:$0xf] %vm1886, %v1633
      %1891 = vst.msk [vmem:[%s145 + $0x10] sm:$0xf] %vm1886, %v1634
      %1892 = vst.msk [vmem:[%s145 + $0x14] sm:$0xf] %vm1886, %v1635
      %1893 = vst.msk [vmem:[%s145 + $0x18] sm:$0xf] %vm1886, %v1636
      %1894 = vst.msk [vmem:[%s145 + $0x1c] sm:$0xf] %vm1886, %v1637
      %1895 = vst.msk [vmem:[%s145 + $0x20] sm:$0xf] %vm1886, %v1638
      %1896 = vst.msk [vmem:[%s145 + $0x24] sm:$0xf] %vm1886, %v1639
      %1897 = vst.msk [vmem:[%s145 + $0x28] sm:$0xf] %vm1886, %v1640
      %1898 = vst.msk [vmem:[%s145 + $0x2c] sm:$0xf] %vm1886, %v1641
      %1899 = vst.msk [vmem:[%s145 + $0x30] sm:$0xf] %vm1886, %v1642
      %1900 = vst.msk [vmem:[%s145 + $0x34] sm:$0xf] %vm1886, %v1643
      %1901 = vst.msk [vmem:[%s145 + $0x38] sm:$0xf] %vm1886, %v1644
      %1902 = vst.msk [vmem:[%s145 + $0x3c] sm:$0xf] %vm1886, %v1645
      %1903 = vst.msk [vmem:[%s145 + $0x40] sm:$0xf] %vm1886, %v1646
      %1904 = vst.msk [vmem:[%s145 + $0x44] sm:$0xf] %vm1886, %v1647
      %1905 = vst.msk [vmem:[%s145 + $0x48] sm:$0xf] %vm1886, %v1648
      %1906 = vst.msk [vmem:[%s145 + $0x4c] sm:$0xf] %vm1886, %v1649
      %1907 = vst.msk [vmem:[%s145 + $0x50] sm:$0xf] %vm1886, %v1650
      %1908 = vst.msk [vmem:[%s145 + $0x54] sm:$0xf] %vm1886, %v1651
      %1909 = vst.msk [vmem:[%s145 + $0x58] sm:$0xf] %vm1886, %v1652
      %1910 = vst.msk [vmem:[%s145 + $0x5c] sm:$0xf] %vm1886, %v1653
      %1911 = vst.msk [vmem:[%s145 + $0x60] sm:$0xf] %vm1886, %v1654
      %1912 = vst.msk [vmem:[%s145 + $0x64] sm:$0xf] %vm1886, %v1655
      %1913 = vst.msk [vmem:[%s145 + $0x68] sm:$0xf] %vm1886, %v1656
      %1914 = vst.msk [vmem:[%s145 + $0x6c] sm:$0xf] %vm1886, %v1657
      %1915 = vst.msk [vmem:[%s145 + $0x70] sm:$0xf] %vm1886, %v1658
      %1916 = vst.msk [vmem:[%s145 + $0x74] sm:$0xf] %vm1886, %v1659
      %1917 = vst.msk [vmem:[%s145 + $0x78] sm:$0xf] %vm1886, %v1660
      %1918 = vst.msk [vmem:[%s145 + $0x7c] sm:$0xf] %vm1886, %v1661
      %1919 = vst.msk [vmem:[%s145 + $0x80] sm:$0xf] %vm1886, %v1662
      %1920 = vst.msk [vmem:[%s145 + $0x84] sm:$0xf] %vm1886, %v1663
      %1921 = vst.msk [vmem:[%s145 + $0x88] sm:$0xf] %vm1886, %v1664
      %1922 = vst.msk [vmem:[%s145 + $0x8c] sm:$0xf] %vm1886, %v1665
      %1923 = vst.msk [vmem:[%s145 + $0x90] sm:$0xf] %vm1886, %v1666
      %1924 = vst.msk [vmem:[%s145 + $0x94] sm:$0xf] %vm1886, %v1667
      %1925 = vst.msk [vmem:[%s145 + $0x98] sm:$0xf] %vm1886, %v1668
      %1926 = vst.msk [vmem:[%s145 + $0x9c] sm:$0xf] %vm1886, %v1669
      %1927 = vst.msk [vmem:[%s145 + $0xa0] sm:$0xf] %vm1886, %v1670
      %1928 = vst.msk [vmem:[%s145 + $0xa4] sm:$0xf] %vm1886, %v1671
      %1929 = vst.msk [vmem:[%s145 + $0xa8] sm:$0xf] %vm1886, %v1672
      %1930 = vst.msk [vmem:[%s145 + $0xac] sm:$0xf] %vm1886, %v1673
      %1931 = vst.msk [vmem:[%s145 + $0xb0] sm:$0xf] %vm1886, %v1674
      %1932 = vst.msk [vmem:[%s145 + $0xb4] sm:$0xf] %vm1886, %v1675
      %1933 = vst.msk [vmem:[%s145 + $0xb8] sm:$0xf] %vm1886, %v1676
      %1934 = vst.msk [vmem:[%s145 + $0xbc] sm:$0xf] %vm1886, %v1677
      %1935 = vst.msk [vmem:[%s145 + $0xc0] sm:$0xf] %vm1886, %v1678
      %1936 = vst.msk [vmem:[%s145 + $0xc4] sm:$0xf] %vm1886, %v1679
      %1937 = vst.msk [vmem:[%s145 + $0xc8] sm:$0xf] %vm1886, %v1680
      %1938 = vst.msk [vmem:[%s145 + $0xcc] sm:$0xf] %vm1886, %v1681
      %1939 = vst.msk [vmem:[%s145 + $0xd0] sm:$0xf] %vm1886, %v1682
      %1940 = vst.msk [vmem:[%s145 + $0xd4] sm:$0xf] %vm1886, %v1683
      %1941 = vst.msk [vmem:[%s145 + $0xd8] sm:$0xf] %vm1886, %v1684
      %1942 = vst.msk [vmem:[%s145 + $0xdc] sm:$0xf] %vm1886, %v1685
      %1943 = vst.msk [vmem:[%s145 + $0xe0] sm:$0xf] %vm1886, %v1686
      %1944 = vst.msk [vmem:[%s145 + $0xe4] sm:$0xf] %vm1886, %v1687
      %1945 = vst.msk [vmem:[%s145 + $0xe8] sm:$0xf] %vm1886, %v1688
      %1946 = vst.msk [vmem:[%s145 + $0xec] sm:$0xf] %vm1886, %v1689
      %1947 = vst.msk [vmem:[%s145 + $0xf0] sm:$0xf] %vm1886, %v1690
      %1948 = vst.msk [vmem:[%s145 + $0xf4] sm:$0xf] %vm1886, %v1691
      %1949 = vst.msk [vmem:[%s145 + $0xf8] sm:$0xf] %vm1886, %v1692
      %1950 = vst.msk [vmem:[%s145 + $0xfc] sm:$0xf] %vm1886, %v1693
      %1951 = vst.msk [vmem:[%s145 + $0x100] sm:$0xf] %vm1886, %v1694
      %1952 = vst.msk [vmem:[%s145 + $0x104] sm:$0xf] %vm1886, %v1695
      %1953 = vst.msk [vmem:[%s145 + $0x108] sm:$0xf] %vm1886, %v1696
      %1954 = vst.msk [vmem:[%s145 + $0x10c] sm:$0xf] %vm1886, %v1697
      %1955 = vst.msk [vmem:[%s145 + $0x110] sm:$0xf] %vm1886, %v1698
      %1956 = vst.msk [vmem:[%s145 + $0x114] sm:$0xf] %vm1886, %v1699
      %1957 = vst.msk [vmem:[%s145 + $0x118] sm:$0xf] %vm1886, %v1700
      %1958 = vst.msk [vmem:[%s145 + $0x11c] sm:$0xf] %vm1886, %v1701
      %1959 = vst.msk [vmem:[%s145 + $0x120] sm:$0xf] %vm1886, %v1702
      %1960 = vst.msk [vmem:[%s145 + $0x124] sm:$0xf] %vm1886, %v1703
      %1961 = vst.msk [vmem:[%s145 + $0x128] sm:$0xf] %vm1886, %v1704
      %1962 = vst.msk [vmem:[%s145 + $0x12c] sm:$0xf] %vm1886, %v1705
      %1963 = vst.msk [vmem:[%s145 + $0x130] sm:$0xf] %vm1886, %v1706
      %1964 = vst.msk [vmem:[%s145 + $0x134] sm:$0xf] %vm1886, %v1707
      %1965 = vst.msk [vmem:[%s145 + $0x138] sm:$0xf] %vm1886, %v1708
      %1966 = vst.msk [vmem:[%s145 + $0x13c] sm:$0xf] %vm1886, %v1709
      %1967 = vst.msk [vmem:[%s145 + $0x140] sm:$0xf] %vm1886, %v1710
      %1968 = vst.msk [vmem:[%s145 + $0x144] sm:$0xf] %vm1886, %v1711
      %1969 = vst.msk [vmem:[%s145 + $0x148] sm:$0xf] %vm1886, %v1712
      %1970 = vst.msk [vmem:[%s145 + $0x14c] sm:$0xf] %vm1886, %v1713
      %1971 = vst.msk [vmem:[%s145 + $0x150] sm:$0xf] %vm1886, %v1714
      %1972 = vst.msk [vmem:[%s145 + $0x154] sm:$0xf] %vm1886, %v1715
      %1973 = vst.msk [vmem:[%s145 + $0x158] sm:$0xf] %vm1886, %v1716
      %1974 = vst.msk [vmem:[%s145 + $0x15c] sm:$0xf] %vm1886, %v1717
      %1975 = vst.msk [vmem:[%s145 + $0x160] sm:$0xf] %vm1886, %v1718
      %1976 = vst.msk [vmem:[%s145 + $0x164] sm:$0xf] %vm1886, %v1719
      %1977 = vst.msk [vmem:[%s145 + $0x168] sm:$0xf] %vm1886, %v1720
      %1978 = vst.msk [vmem:[%s145 + $0x16c] sm:$0xf] %vm1886, %v1721
      %1979 = vst.msk [vmem:[%s145 + $0x170] sm:$0xf] %vm1886, %v1722
      %1980 = vst.msk [vmem:[%s145 + $0x174] sm:$0xf] %vm1886, %v1723
      %1981 = vst.msk [vmem:[%s145 + $0x178] sm:$0xf] %vm1886, %v1724
      %1982 = vst.msk [vmem:[%s145 + $0x17c] sm:$0xf] %vm1886, %v1725
      %1983 = vst.msk [vmem:[%s145 + $0x180] sm:$0xf] %vm1886, %v1726
      %1984 = vst.msk [vmem:[%s145 + $0x184] sm:$0xf] %vm1886, %v1727
      %1985 = vst.msk [vmem:[%s145 + $0x188] sm:$0xf] %vm1886, %v1728
      %1986 = vst.msk [vmem:[%s145 + $0x18c] sm:$0xf] %vm1886, %v1729
      %1987 = vst.msk [vmem:[%s145 + $0x190] sm:$0xf] %vm1886, %v1730
      %1988 = vst.msk [vmem:[%s145 + $0x194] sm:$0xf] %vm1886, %v1731
      %1989 = vst.msk [vmem:[%s145 + $0x198] sm:$0xf] %vm1886, %v1732
      %1990 = vst.msk [vmem:[%s145 + $0x19c] sm:$0xf] %vm1886, %v1733
      %1991 = vst.msk [vmem:[%s145 + $0x1a0] sm:$0xf] %vm1886, %v1734
      %1992 = vst.msk [vmem:[%s145 + $0x1a4] sm:$0xf] %vm1886, %v1735
      %1993 = vst.msk [vmem:[%s145 + $0x1a8] sm:$0xf] %vm1886, %v1736
      %1994 = vst.msk [vmem:[%s145 + $0x1ac] sm:$0xf] %vm1886, %v1737
      %1995 = vst.msk [vmem:[%s145 + $0x1b0] sm:$0xf] %vm1886, %v1738
      %1996 = vst.msk [vmem:[%s145 + $0x1b4] sm:$0xf] %vm1886, %v1739
      %1997 = vst.msk [vmem:[%s145 + $0x1b8] sm:$0xf] %vm1886, %v1740
      %1998 = vst.msk [vmem:[%s145 + $0x1bc] sm:$0xf] %vm1886, %v1741
      %1999 = vst.msk [vmem:[%s145 + $0x1c0] sm:$0xf] %vm1886, %v1742
      %2000 = vst.msk [vmem:[%s145 + $0x1c4] sm:$0xf] %vm1886, %v1743
      %2001 = vst.msk [vmem:[%s145 + $0x1c8] sm:$0xf] %vm1886, %v1744
      %2002 = vst.msk [vmem:[%s145 + $0x1cc] sm:$0xf] %vm1886, %v1745
      %2003 = vst.msk [vmem:[%s145 + $0x1d0] sm:$0xf] %vm1886, %v1746
      %2004 = vst.msk [vmem:[%s145 + $0x1d4] sm:$0xf] %vm1886, %v1747
      %2005 = vst.msk [vmem:[%s145 + $0x1d8] sm:$0xf] %vm1886, %v1748
      %2006 = vst.msk [vmem:[%s145 + $0x1dc] sm:$0xf] %vm1886, %v1749
      %2007 = vst.msk [vmem:[%s145 + $0x1e0] sm:$0xf] %vm1886, %v1750
      %2008 = vst.msk [vmem:[%s145 + $0x1e4] sm:$0xf] %vm1886, %v1751
      %2009 = vst.msk [vmem:[%s145 + $0x1e8] sm:$0xf] %vm1886, %v1752
      %2010 = vst.msk [vmem:[%s145 + $0x1ec] sm:$0xf] %vm1886, %v1753
      %2011 = vst.msk [vmem:[%s145 + $0x1f0] sm:$0xf] %vm1886, %v1754
      %2012 = vst.msk [vmem:[%s145 + $0x1f4] sm:$0xf] %vm1886, %v1755
      %2013 = vst.msk [vmem:[%s145 + $0x1f8] sm:$0xf] %vm1886, %v1756
      %2014 = vst.msk [vmem:[%s145 + $0x1fc] sm:$0xf] %vm1886, %v1757
      %s2015 = smul.u32 128, %s13
      %p2016 = scmp.lt.s32.totalorder %s2015, 255
      %s2017 = scalar_select %p2016, %s2015, 255
      %s2018 = smul.addr %s2017, 4
      %s2019 = scalar_lea.vmem %s2, %s2018
      // Predicated region
      $region29: #{generator_forward.17} parent=27 // pred_check
        %p2020 = pneg %p78
      $region30: #{generator_forward.17} parent=27 // pred_check_branch
        %2022 = sbr.rel (%p2020) target = $region32
      $region31: #{generator_forward.17} parent=27 // pred_region
        %s2023 = smul.u32 128, %s13
      $region32: #{generator_forward.17} parent=27 // pred_fallthru
        _
    $region28: #{generator_forward.17} parent=5 // pred_fallthru
      _
    %p2024 = scmp.le.s32.totalorder 2, %s8
    // Predicated region
    $region33: #{generator_forward.17} parent=5 // pred_check
      %p2025 = pneg %p2024
    $region34: #{generator_forward.17} parent=5 // pred_check_branch
      %2027 = sbr.rel (%p2025) target = $region36
    $region35: #{generator_forward.17} parent=5 // pred_region
      %s2028 = ssub.s32 %s8, 2
      // Predicated region
      $region37: #{generator_forward.17} parent=35 // pred_check
        %p2029 = pneg %p84
      $region38: #{generator_forward.17} parent=35 // pred_check_branch
        %2031 = sbr.rel (%p2029) target = $region40
      $region39: #{generator_forward.17} parent=35 // pred_region
        %s2032 = smul.u32 128, %s14
        %p2033 = scmp.lt.s32.totalorder %s2032, 255
        %s2034 = scalar_select %p2033, %s2032, 255
        %s2035 = smul.addr %s2034, 4
        %s2036 = scalar_lea.vmem %s2, %s2035
      $region40: #{generator_forward.17} parent=35 // pred_fallthru
        _
    $region36: #{generator_forward.17} parent=5 // pred_fallthru
      _
  $region6: #{generator_forward.17} parent=0 // loop_footer
    %s12 = sadd.s32 1, %s8
  $region7: #{generator_forward.17} parent=0 // loop_footer_branch
    %7 = sbr.rel target = $region3
  $region8: #{generator_forward.17} parent=0 // loop_exit
    _

// kernel: generator_forward.18
$region0: #{generator_forward.18}
  #allocation0 [shape = 'u32[]', space=smem, size = 0x4, offset = 0x4, fixed_abs, tag = 'smem constant byte address 0x4 - core index']
  #allocation1 [shape = 'u32[144,128]{1,0:T(1,128)}', space=vmem, size = 0x12000, scoped, tag = 'internal scratch']
  %s0 = inlined_call_operand.vmem [shape: bf16[512,128], index: 0, kind: input, shape index: {}]
  %s1 = inlined_call_operand.vmem [shape: f32[1,128], index: 1, kind: input, shape index: {}]
  %s2 = inlined_call_operand.vmem [shape: f32[1,128], index: 2, kind: input, shape index: {}]
  %s3 = inlined_call_operand.vmem [shape: bf16[512,128], index: 3, kind: output, shape index: {}]
  %s4 = sld [smem:[#allocation0]]
  $region22: #{generator_forward.18} parent=0
    _
  %s6 = ssub.s32 1, %s4
  %s7 = scalar_select 0, %s6, %s4
  // Predicated region
  $region2: #{generator_forward.18} parent=0 // pred_check
    _
  $region3: #{generator_forward.18} parent=0 // pred_check_branch
    %9 = sbr.rel (0) target = $region5
  $region4: #{generator_forward.18} parent=0 // pred_region
    _
  $region5: #{generator_forward.18} parent=0 // pred_fallthru
    _
  // Predicated region
  $region6: #{generator_forward.18} parent=0 // pred_check
    _
  $region7: #{generator_forward.18} parent=0 // pred_check_branch
    %11 = sbr.rel (0) target = $region9
  $region8: #{generator_forward.18} parent=0 // pred_region
    _
  $region9: #{generator_forward.18} parent=0 // pred_fallthru
    _
  // Predicated region
  $region10: #{generator_forward.18} parent=0 // pred_check
    _
  $region11: #{generator_forward.18} parent=0 // pred_check_branch
    %13 = sbr.rel (0) target = $region13
  $region12: #{generator_forward.18} parent=0 // pred_region
    _
  $region13: #{generator_forward.18} parent=0 // pred_fallthru
    _
  %v14 = vld [vmem:[%s0] sm:$0xf]
  %v15 = vld [vmem:[%s0 + $0x4] sm:$0xf]
  %v16 = vld [vmem:[%s0 + $0x8] sm:$0xf]
  %v17 = vld [vmem:[%s0 + $0xc] sm:$0xf]
  %v18 = vld [vmem:[%s0 + $0x10] sm:$0xf]
  %v19 = vld [vmem:[%s0 + $0x14] sm:$0xf]
  %v20 = vld [vmem:[%s0 + $0x18] sm:$0xf]
  %v21 = vld [vmem:[%s0 + $0x1c] sm:$0xf]
  %v22 = vld [vmem:[%s0 + $0x20] sm:$0xf]
  %v23 = vld [vmem:[%s0 + $0x24] sm:$0xf]
  %v24 = vld [vmem:[%s0 + $0x28] sm:$0xf]
  %v25 = vld [vmem:[%s0 + $0x2c] sm:$0xf]
  %v26 = vld [vmem:[%s0 + $0x30] sm:$0xf]
  %v27 = vld [vmem:[%s0 + $0x34] sm:$0xf]
  %v28 = vld [vmem:[%s0 + $0x38] sm:$0xf]
  %v29 = vld [vmem:[%s0 + $0x3c] sm:$0xf]
  %v30 = vld [vmem:[%s0 + $0x40] sm:$0xf]
  %v31 = vld [vmem:[%s0 + $0x44] sm:$0xf]
  %v32 = vld [vmem:[%s0 + $0x48] sm:$0xf]
  %v33 = vld [vmem:[%s0 + $0x4c] sm:$0xf]
  %v34 = vld [vmem:[%s0 + $0x50] sm:$0xf]
  %v35 = vld [vmem:[%s0 + $0x54] sm:$0xf]
  %v36 = vld [vmem:[%s0 + $0x58] sm:$0xf]
  %v37 = vld [vmem:[%s0 + $0x5c] sm:$0xf]
  %v38 = vld [vmem:[%s0 + $0x60] sm:$0xf]
  %v39 = vld [vmem:[%s0 + $0x64] sm:$0xf]
  %v40 = vld [vmem:[%s0 + $0x68] sm:$0xf]
  %v41 = vld [vmem:[%s0 + $0x6c] sm:$0xf]
  %v42 = vld [vmem:[%s0 + $0x70] sm:$0xf]
  %v43 = vld [vmem:[%s0 + $0x74] sm:$0xf]
  %v44 = vld [vmem:[%s0 + $0x78] sm:$0xf]
  %v45 = vld [vmem:[%s0 + $0x7c] sm:$0xf]
  %v46 = vld [vmem:[%s0 + $0x80] sm:$0xf]
  %v47 = vld [vmem:[%s0 + $0x84] sm:$0xf]
  %v48 = vld [vmem:[%s0 + $0x88] sm:$0xf]
  %v49 = vld [vmem:[%s0 + $0x8c] sm:$0xf]
  %v50 = vld [vmem:[%s0 + $0x90] sm:$0xf]
  %v51 = vld [vmem:[%s0 + $0x94] sm:$0xf]
  %v52 = vld [vmem:[%s0 + $0x98] sm:$0xf]
  %v53 = vld [vmem:[%s0 + $0x9c] sm:$0xf]
  %v54 = vld [vmem:[%s0 + $0xa0] sm:$0xf]
  %v55 = vld [vmem:[%s0 + $0xa4] sm:$0xf]
  %v56 = vld [vmem:[%s0 + $0xa8] sm:$0xf]
  %v57 = vld [vmem:[%s0 + $0xac] sm:$0xf]
  %v58 = vld [vmem:[%s0 + $0xb0] sm:$0xf]
  %v59 = vld [vmem:[%s0 + $0xb4] sm:$0xf]
  %v60 = vld [vmem:[%s0 + $0xb8] sm:$0xf]
  %v61 = vld [vmem:[%s0 + $0xbc] sm:$0xf]
  %v62 = vld [vmem:[%s0 + $0xc0] sm:$0xf]
  %v63 = vld [vmem:[%s0 + $0xc4] sm:$0xf]
  %v64 = vld [vmem:[%s0 + $0xc8] sm:$0xf]
  %v65 = vld [vmem:[%s0 + $0xcc] sm:$0xf]
  %v66 = vld [vmem:[%s0 + $0xd0] sm:$0xf]
  %v67 = vld [vmem:[%s0 + $0xd4] sm:$0xf]
  %v68 = vld [vmem:[%s0 + $0xd8] sm:$0xf]
  %v69 = vld [vmem:[%s0 + $0xdc] sm:$0xf]
  %v70 = vld [vmem:[%s0 + $0xe0] sm:$0xf]
  %v71 = vld [vmem:[%s0 + $0xe4] sm:$0xf]
  %v72 = vld [vmem:[%s0 + $0xe8] sm:$0xf]
  %v73 = vld [vmem:[%s0 + $0xec] sm:$0xf]
  %v74 = vld [vmem:[%s0 + $0xf0] sm:$0xf]
  %v75 = vld [vmem:[%s0 + $0xf4] sm:$0xf]
  %v76 = vld [vmem:[%s0 + $0xf8] sm:$0xf]
  %v77 = vld [vmem:[%s0 + $0xfc] sm:$0xf]
  %v78 = vunpack.c.l.bf16 %v14
  %v79 = vunpack.c.l.bf16 %v15
  %v80 = vunpack.c.l.bf16 %v16
  %v81 = vunpack.c.l.bf16 %v17
  %v82 = vunpack.c.l.bf16 %v18
  %v83 = vunpack.c.l.bf16 %v19
  %v84 = vunpack.c.l.bf16 %v20
  %v85 = vunpack.c.l.bf16 %v21
  %v86 = vunpack.c.l.bf16 %v22
  %v87 = vunpack.c.l.bf16 %v23
  %v88 = vunpack.c.l.bf16 %v24
  %v89 = vunpack.c.l.bf16 %v25
  %v90 = vunpack.c.l.bf16 %v26
  %v91 = vunpack.c.l.bf16 %v27
  %v92 = vunpack.c.l.bf16 %v28
  %v93 = vunpack.c.l.bf16 %v29
  %v94 = vunpack.c.l.bf16 %v30
  %v95 = vunpack.c.l.bf16 %v31
  %v96 = vunpack.c.l.bf16 %v32
  %v97 = vunpack.c.l.bf16 %v33
  %v98 = vunpack.c.l.bf16 %v34
  %v99 = vunpack.c.l.bf16 %v35
  %v100 = vunpack.c.l.bf16 %v36
  %v101 = vunpack.c.l.bf16 %v37
  %v102 = vunpack.c.l.bf16 %v38
  %v103 = vunpack.c.l.bf16 %v39
  %v104 = vunpack.c.l.bf16 %v40
  %v105 = vunpack.c.l.bf16 %v41
  %v106 = vunpack.c.l.bf16 %v42
  %v107 = vunpack.c.l.bf16 %v43
  %v108 = vunpack.c.l.bf16 %v44
  %v109 = vunpack.c.l.bf16 %v45
  %v110 = vunpack.c.l.bf16 %v46
  %v111 = vunpack.c.l.bf16 %v47
  %v112 = vunpack.c.l.bf16 %v48
  %v113 = vunpack.c.l.bf16 %v49
  %v114 = vunpack.c.l.bf16 %v50
  %v115 = vunpack.c.l.bf16 %v51
  %v116 = vunpack.c.l.bf16 %v52
  %v117 = vunpack.c.l.bf16 %v53
  %v118 = vunpack.c.l.bf16 %v54
  %v119 = vunpack.c.l.bf16 %v55
  %v120 = vunpack.c.l.bf16 %v56
  %v121 = vunpack.c.l.bf16 %v57
  %v122 = vunpack.c.l.bf16 %v58
  %v123 = vunpack.c.l.bf16 %v59
  %v124 = vunpack.c.l.bf16 %v60
  %v125 = vunpack.c.l.bf16 %v61
  %v126 = vunpack.c.l.bf16 %v62
  %v127 = vunpack.c.l.bf16 %v63
  %v128 = vunpack.c.l.bf16 %v64
  %v129 = vunpack.c.l.bf16 %v65
  %v130 = vunpack.c.l.bf16 %v66
  %v131 = vunpack.c.l.bf16 %v67
  %v132 = vunpack.c.l.bf16 %v68
  %v133 = vunpack.c.l.bf16 %v69
  %v134 = vunpack.c.l.bf16 %v70
  %v135 = vunpack.c.l.bf16 %v71
  %v136 = vunpack.c.l.bf16 %v72
  %v137 = vunpack.c.l.bf16 %v73
  %v138 = vunpack.c.l.bf16 %v74
  %v139 = vunpack.c.l.bf16 %v75
  %v140 = vunpack.c.l.bf16 %v76
  %v141 = vunpack.c.l.bf16 %v77
  %v142 = vadd.f32 %v78, %v79
  %v143 = vadd.f32 %v142, %v80
  %v144 = vadd.f32 %v143, %v81
  %v145 = vadd.f32 %v144, %v82
  %v146 = vadd.f32 %v145, %v83
  %v147 = vadd.f32 %v146, %v84
  %v148 = vadd.f32 %v147, %v85
  %v149 = vadd.f32 %v148, %v86
  %v150 = vadd.f32 %v149, %v87
  %v151 = vadd.f32 %v150, %v88
  %v152 = vadd.f32 %v151, %v89
  %v153 = vadd.f32 %v152, %v90
  %v154 = vadd.f32 %v153, %v91
  %v155 = vadd.f32 %v154, %v92
  %v156 = vadd.f32 %v155, %v93
  %v157 = vadd.f32 %v156, %v94
  %v158 = vadd.f32 %v157, %v95
  %v159 = vadd.f32 %v158, %v96
  %v160 = vadd.f32 %v159, %v97
  %v161 = vadd.f32 %v160, %v98
  %v162 = vadd.f32 %v161, %v99
  %v163 = vadd.f32 %v162, %v100
  %v164 = vadd.f32 %v163, %v101
  %v165 = vadd.f32 %v164, %v102
  %v166 = vadd.f32 %v165, %v103
  %v167 = vadd.f32 %v166, %v104
  %v168 = vadd.f32 %v167, %v105
  %v169 = vadd.f32 %v168, %v106
  %v170 = vadd.f32 %v169, %v107
  %v171 = vadd.f32 %v170, %v108
  %v172 = vadd.f32 %v171, %v109
  %v173 = vadd.f32 %v172, %v110
  %v174 = vadd.f32 %v173, %v111
  %v175 = vadd.f32 %v174, %v112
  %v176 = vadd.f32 %v175, %v113
  %v177 = vadd.f32 %v176, %v114
  %v178 = vadd.f32 %v177, %v115
  %v179 = vadd.f32 %v178, %v116
  %v180 = vadd.f32 %v179, %v117
  %v181 = vadd.f32 %v180, %v118
  %v182 = vadd.f32 %v181, %v119
  %v183 = vadd.f32 %v182, %v120
  %v184 = vadd.f32 %v183, %v121
  %v185 = vadd.f32 %v184, %v122
  %v186 = vadd.f32 %v185, %v123
  %v187 = vadd.f32 %v186, %v124
  %v188 = vadd.f32 %v187, %v125
  %v189 = vadd.f32 %v188, %v126
  %v190 = vadd.f32 %v189, %v127
  %v191 = vadd.f32 %v190, %v128
  %v192 = vadd.f32 %v191, %v129
  %v193 = vadd.f32 %v192, %v130
  %v194 = vadd.f32 %v193, %v131
  %v195 = vadd.f32 %v194, %v132
  %v196 = vadd.f32 %v195, %v133
  %v197 = vadd.f32 %v196, %v134
  %v198 = vadd.f32 %v197, %v135
  %v199 = vadd.f32 %v198, %v136
  %v200 = vadd.f32 %v199, %v137
  %v201 = vadd.f32 %v200, %v138
  %v202 = vadd.f32 %v201, %v139
  %v203 = vadd.f32 %v202, %v140
  %v204 = vadd.f32 %v203, %v141
  %v205 = vrot.slane %v204, 4
  %v206 = vadd.f32 %v204, %v205
  %v207 = vrot.slane %v206, 2
  %v208 = vadd.f32 %v206, %v207
  %v209 = vrot.slane %v208, 1
  %v210 = vadd.f32 %v208, %v209
  %v211 = vmul.f32 %v78, %v78
  %v212 = vmul.f32 %v79, %v79
  %v213 = vmul.f32 %v80, %v80
  %v214 = vmul.f32 %v81, %v81
  %v215 = vmul.f32 %v82, %v82
  %v216 = vmul.f32 %v83, %v83
  %v217 = vmul.f32 %v84, %v84
  %v218 = vmul.f32 %v85, %v85
  %v219 = vmul.f32 %v86, %v86
  %v220 = vmul.f32 %v87, %v87
  %v221 = vmul.f32 %v88, %v88
  %v222 = vmul.f32 %v89, %v89
  %v223 = vmul.f32 %v90, %v90
  %v224 = vmul.f32 %v91, %v91
  %v225 = vmul.f32 %v92, %v92
  %v226 = vmul.f32 %v93, %v93
  %v227 = vmul.f32 %v94, %v94
  %v228 = vmul.f32 %v95, %v95
  %v229 = vmul.f32 %v96, %v96
  %v230 = vmul.f32 %v97, %v97
  %v231 = vmul.f32 %v98, %v98
  %v232 = vmul.f32 %v99, %v99
  %v233 = vmul.f32 %v100, %v100
  %v234 = vmul.f32 %v101, %v101
  %v235 = vmul.f32 %v102, %v102
  %v236 = vmul.f32 %v103, %v103
  %v237 = vmul.f32 %v104, %v104
  %v238 = vmul.f32 %v105, %v105
  %v239 = vmul.f32 %v106, %v106
  %v240 = vmul.f32 %v107, %v107
  %v241 = vmul.f32 %v108, %v108
  %v242 = vmul.f32 %v109, %v109
  %v243 = vmul.f32 %v110, %v110
  %v244 = vmul.f32 %v111, %v111
  %v245 = vmul.f32 %v112, %v112
  %v246 = vmul.f32 %v113, %v113
  %v247 = vmul.f32 %v114, %v114
  %v248 = vmul.f32 %v115, %v115
  %v249 = vmul.f32 %v116, %v116
  %v250 = vmul.f32 %v117, %v117
  %v251 = vmul.f32 %v118, %v118
  %v252 = vmul.f32 %v119, %v119
  %v253 = vmul.f32 %v120, %v120
  %v254 = vmul.f32 %v121, %v121
  %v255 = vmul.f32 %v122, %v122
  %v256 = vmul.f32 %v123, %v123
  %v257 = vmul.f32 %v124, %v124
  %v258 = vmul.f32 %v125, %v125
  %v259 = vmul.f32 %v126, %v126
  %v260 = vmul.f32 %v127, %v127
  %v261 = vmul.f32 %v128, %v128
  %v262 = vmul.f32 %v129, %v129
  %v263 = vmul.f32 %v130, %v130
  %v264 = vmul.f32 %v131, %v131
  %v265 = vmul.f32 %v132, %v132
  %v266 = vmul.f32 %v133, %v133
  %v267 = vmul.f32 %v134, %v134
  %v268 = vmul.f32 %v135, %v135
  %v269 = vmul.f32 %v136, %v136
  %v270 = vmul.f32 %v137, %v137
  %v271 = vmul.f32 %v138, %v138
  %v272 = vmul.f32 %v139, %v139
  %v273 = vmul.f32 %v140, %v140
  %v274 = vmul.f32 %v141, %v141
  %v275 = vadd.f32 %v211, %v212
  %v276 = vadd.f32 %v275, %v213
  %v277 = vadd.f32 %v276, %v214
  %v278 = vadd.f32 %v277, %v215
  %v279 = vadd.f32 %v278, %v216
  %v280 = vadd.f32 %v279, %v217
  %v281 = vadd.f32 %v280, %v218
  %v282 = vadd.f32 %v281, %v219
  %v283 = vadd.f32 %v282, %v220
  %v284 = vadd.f32 %v283, %v221
  %v285 = vadd.f32 %v284, %v222
  %v286 = vadd.f32 %v285, %v223
  %v287 = vadd.f32 %v286, %v224
  %v288 = vadd.f32 %v287, %v225
  %v289 = vadd.f32 %v288, %v226
  %v290 = vadd.f32 %v289, %v227
  %v291 = vadd.f32 %v290, %v228
  %v292 = vadd.f32 %v291, %v229
  %v293 = vadd.f32 %v292, %v230
  %v294 = vadd.f32 %v293, %v231
  %v295 = vadd.f32 %v294, %v232
  %v296 = vadd.f32 %v295, %v233
  %v297 = vadd.f32 %v296, %v234
  %v298 = vadd.f32 %v297, %v235
  %v299 = vadd.f32 %v298, %v236
  %v300 = vadd.f32 %v299, %v237
  %v301 = vadd.f32 %v300, %v238
  %v302 = vadd.f32 %v301, %v239
  %v303 = vadd.f32 %v302, %v240
  %v304 = vadd.f32 %v303, %v241
  %v305 = vadd.f32 %v304, %v242
  %v306 = vadd.f32 %v305, %v243
  %v307 = vadd.f32 %v306, %v244
  %v308 = vadd.f32 %v307, %v245
  %v309 = vadd.f32 %v308, %v246
  %v310 = vadd.f32 %v309, %v247
  %v311 = vadd.f32 %v310, %v248
  %v312 = vadd.f32 %v311, %v249
  %v313 = vadd.f32 %v312, %v250
  %v314 = vadd.f32 %v313, %v251
  %v315 = vadd.f32 %v314, %v252
  %v316 = vadd.f32 %v315, %v253
  %v317 = vadd.f32 %v316, %v254
  %v318 = vadd.f32 %v317, %v255
  %v319 = vadd.f32 %v318, %v256
  %v320 = vadd.f32 %v319, %v257
  %v321 = vadd.f32 %v320, %v258
  %v322 = vadd.f32 %v321, %v259
  %v323 = vadd.f32 %v322, %v260
  %v324 = vadd.f32 %v323, %v261
  %v325 = vadd.f32 %v324, %v262
  %v326 = vadd.f32 %v325, %v263
  %v327 = vadd.f32 %v326, %v264
  %v328 = vadd.f32 %v327, %v265
  %v329 = vadd.f32 %v328, %v266
  %v330 = vadd.f32 %v329, %v267
  %v331 = vadd.f32 %v330, %v268
  %v332 = vadd.f32 %v331, %v269
  %v333 = vadd.f32 %v332, %v270
  %v334 = vadd.f32 %v333, %v271
  %v335 = vadd.f32 %v334, %v272
  %v336 = vadd.f32 %v335, %v273
  %v337 = vadd.f32 %v336, %v274
  %v338 = vrot.slane %v337, 4
  %v339 = vadd.f32 %v337, %v338
  %v340 = vrot.slane %v339, 2
  %v341 = vadd.f32 %v339, %v340
  %v342 = vrot.slane %v341, 1
  %v343 = vadd.f32 %v341, %v342
  %344 = vrot.lane.b32.xlu0 %v210, 8
  %v345 = vpop.permute.xlu0 %344
  %v346 = vadd.f32 %v210, %v345
  %347 = vrot.lane.b32.xlu0 %v343, 8
  %v348 = vpop.permute.xlu0 %347
  %v349 = vadd.f32 %v343, %v348
  %350 = vrot.lane.b32.xlu0 %v346, 16
  %v351 = vpop.permute.xlu0 %350
  %v352 = vadd.f32 %v346, %v351
  %353 = vrot.lane.b32.xlu0 %v349, 16
  %v354 = vpop.permute.xlu0 %353
  %v355 = vadd.f32 %v349, %v354
  %356 = vrot.lane.b32.xlu0 %v352, 32
  %v357 = vpop.permute.xlu0 %356
  %v358 = vadd.f32 %v352, %v357
  %359 = vrot.lane.b32.xlu0 %v355, 32
  %v360 = vpop.permute.xlu0 %359
  %v361 = vadd.f32 %v355, %v360
  %362 = vrot.lane.b32.xlu0 %v358, 64
  %v363 = vpop.permute.xlu0 %362
  %v364 = vadd.f32 %v358, %v363
  %365 = vrot.lane.b32.xlu0 %v361, 64
  %v366 = vpop.permute.xlu0 %365
  %v367 = vadd.f32 %v361, %v366
  %v368 = vmul.f32 %v364, 0.00012207031
  %v369 = vmul.f32 %v367, 0.00012207031
  %v370 = vmul.f32 %v368, %v368
  %v371 = vsub.f32 %v369, %v370
  %v372 = vld [vmem:[%s1] sm:$0x1]
  %v373 = vadd.f32 %v371, 1e-05
  %v374 = vrsqrt.pop %v373
  %v375 = vmul.f32 %v372, %v374
  %v376 = vld [vmem:[%s2] sm:$0x1]
  %v377 = vmul.f32 %v368, %v375
  %v378 = vsub.f32 %v376, %v377
  %v380 = vlaneseq
  %v381 = vshrl.u32 %v380, 7
  %v382 = vsub.s32 0, %v381
  %v383 = vrot.slane %v375, %v382
  %v385 = vmul.f32 %v78, %v383
  %v386 = vmul.f32 %v79, %v383
  %v387 = vmul.f32 %v80, %v383
  %v388 = vmul.f32 %v81, %v383
  %v389 = vmul.f32 %v82, %v383
  %v390 = vmul.f32 %v83, %v383
  %v391 = vmul.f32 %v84, %v383
  %v392 = vmul.f32 %v85, %v383
  %v393 = vmul.f32 %v86, %v383
  %v394 = vmul.f32 %v87, %v383
  %v395 = vmul.f32 %v88, %v383
  %v396 = vmul.f32 %v89, %v383
  %v397 = vmul.f32 %v90, %v383
  %v398 = vmul.f32 %v91, %v383
  %v399 = vmul.f32 %v92, %v383
  %v400 = vmul.f32 %v93, %v383
  %v401 = vmul.f32 %v94, %v383
  %v402 = vmul.f32 %v95, %v383
  %v403 = vmul.f32 %v96, %v383
  %v404 = vmul.f32 %v97, %v383
  %v405 = vmul.f32 %v98, %v383
  %v406 = vmul.f32 %v99, %v383
  %v407 = vmul.f32 %v100, %v383
  %v408 = vmul.f32 %v101, %v383
  %v409 = vmul.f32 %v102, %v383
  %v410 = vmul.f32 %v103, %v383
  %v411 = vmul.f32 %v104, %v383
  %v412 = vmul.f32 %v105, %v383
  %v413 = vmul.f32 %v106, %v383
  %v414 = vmul.f32 %v107, %v383
  %v415 = vmul.f32 %v108, %v383
  %v416 = vmul.f32 %v109, %v383
  %v417 = vmul.f32 %v110, %v383
  %v418 = vmul.f32 %v111, %v383
  %v419 = vmul.f32 %v112, %v383
  %v420 = vmul.f32 %v113, %v383
  %v421 = vmul.f32 %v114, %v383
  %v422 = vmul.f32 %v115, %v383
  %v423 = vmul.f32 %v116, %v383
  %v424 = vmul.f32 %v117, %v383
  %v425 = vmul.f32 %v118, %v383
  %v426 = vmul.f32 %v119, %v383
  %v427 = vmul.f32 %v120, %v383
  %v428 = vmul.f32 %v121, %v383
  %v429 = vmul.f32 %v122, %v383
  %v430 = vmul.f32 %v123, %v383
  %v431 = vmul.f32 %v124, %v383
  %v432 = vmul.f32 %v125, %v383
  %v433 = vmul.f32 %v126, %v383
  %v434 = vmul.f32 %v127, %v383
  %v435 = vmul.f32 %v128, %v383
  %v436 = vmul.f32 %v129, %v383
  %v437 = vmul.f32 %v130, %v383
  %v438 = vmul.f32 %v131, %v383
  %v439 = vmul.f32 %v132, %v383
  %v440 = vmul.f32 %v133, %v383
  %v441 = vmul.f32 %v134, %v383
  %v442 = vmul.f32 %v135, %v383
  %v443 = vmul.f32 %v136, %v383
  %v444 = vmul.f32 %v137, %v383
  %v445 = vmul.f32 %v138, %v383
  %v446 = vmul.f32 %v139, %v383
  %v447 = vmul.f32 %v140, %v383
  %v448 = vmul.f32 %v141, %v383
  %v450 = vlaneseq
  %v451 = vshrl.u32 %v450, 7
  %v452 = vsub.s32 0, %v451
  %v453 = vrot.slane %v378, %v452
  %v455 = vadd.f32 %v385, %v453
  %v456 = vadd.f32 %v386, %v453
  %v457 = vadd.f32 %v387, %v453
  %v458 = vadd.f32 %v388, %v453
  %v459 = vadd.f32 %v389, %v453
  %v460 = vadd.f32 %v390, %v453
  %v461 = vadd.f32 %v391, %v453
  %v462 = vadd.f32 %v392, %v453
  %v463 = vadd.f32 %v393, %v453
  %v464 = vadd.f32 %v394, %v453
  %v465 = vadd.f32 %v395, %v453
  %v466 = vadd.f32 %v396, %v453
  %v467 = vadd.f32 %v397, %v453
  %v468 = vadd.f32 %v398, %v453
  %v469 = vadd.f32 %v399, %v453
  %v470 = vadd.f32 %v400, %v453
  %v471 = vadd.f32 %v401, %v453
  %v472 = vadd.f32 %v402, %v453
  %v473 = vadd.f32 %v403, %v453
  %v474 = vadd.f32 %v404, %v453
  %v475 = vadd.f32 %v405, %v453
  %v476 = vadd.f32 %v406, %v453
  %v477 = vadd.f32 %v407, %v453
  %v478 = vadd.f32 %v408, %v453
  %v479 = vadd.f32 %v409, %v453
  %v480 = vadd.f32 %v410, %v453
  %v481 = vadd.f32 %v411, %v453
  %v482 = vadd.f32 %v412, %v453
  %v483 = vadd.f32 %v413, %v453
  %v484 = vadd.f32 %v414, %v453
  %v485 = vadd.f32 %v415, %v453
  %v486 = vadd.f32 %v416, %v453
  %v487 = vadd.f32 %v417, %v453
  %v488 = vadd.f32 %v418, %v453
  %v489 = vadd.f32 %v419, %v453
  %v490 = vadd.f32 %v420, %v453
  %v491 = vadd.f32 %v421, %v453
  %v492 = vadd.f32 %v422, %v453
  %v493 = vadd.f32 %v423, %v453
  %v494 = vadd.f32 %v424, %v453
  %v495 = vadd.f32 %v425, %v453
  %v496 = vadd.f32 %v426, %v453
  %v497 = vadd.f32 %v427, %v453
  %v498 = vadd.f32 %v428, %v453
  %v499 = vadd.f32 %v429, %v453
  %v500 = vadd.f32 %v430, %v453
  %v501 = vadd.f32 %v431, %v453
  %v502 = vadd.f32 %v432, %v453
  %v503 = vadd.f32 %v433, %v453
  %v504 = vadd.f32 %v434, %v453
  %v505 = vadd.f32 %v435, %v453
  %v506 = vadd.f32 %v436, %v453
  %v507 = vadd.f32 %v437, %v453
  %v508 = vadd.f32 %v438, %v453
  %v509 = vadd.f32 %v439, %v453
  %v510 = vadd.f32 %v440, %v453
  %v511 = vadd.f32 %v441, %v453
  %v512 = vadd.f32 %v442, %v453
  %v513 = vadd.f32 %v443, %v453
  %v514 = vadd.f32 %v444, %v453
  %v515 = vadd.f32 %v445, %v453
  %v516 = vadd.f32 %v446, %v453
  %v517 = vadd.f32 %v447, %v453
  %v518 = vadd.f32 %v448, %v453
  %v519 = vmax.f32 %v455, 0.0
  %v520 = vmax.f32 %v456, 0.0
  %v521 = vmax.f32 %v457, 0.0
  %v522 = vmax.f32 %v458, 0.0
  %v523 = vmax.f32 %v459, 0.0
  %v524 = vmax.f32 %v460, 0.0
  %v525 = vmax.f32 %v461, 0.0
  %v526 = vmax.f32 %v462, 0.0
  %v527 = vmax.f32 %v463, 0.0
  %v528 = vmax.f32 %v464, 0.0
  %v529 = vmax.f32 %v465, 0.0
  %v530 = vmax.f32 %v466, 0.0
  %v531 = vmax.f32 %v467, 0.0
  %v532 = vmax.f32 %v468, 0.0
  %v533 = vmax.f32 %v469, 0.0
  %v534 = vmax.f32 %v470, 0.0
  %v535 = vmax.f32 %v471, 0.0
  %v536 = vmax.f32 %v472, 0.0
  %v537 = vmax.f32 %v473, 0.0
  %v538 = vmax.f32 %v474, 0.0
  %v539 = vmax.f32 %v475, 0.0
  %v540 = vmax.f32 %v476, 0.0
  %v541 = vmax.f32 %v477, 0.0
  %v542 = vmax.f32 %v478, 0.0
  %v543 = vmax.f32 %v479, 0.0
  %v544 = vmax.f32 %v480, 0.0
  %v545 = vmax.f32 %v481, 0.0
  %v546 = vmax.f32 %v482, 0.0
  %v547 = vmax.f32 %v483, 0.0
  %v548 = vmax.f32 %v484, 0.0
  %v549 = vmax.f32 %v485, 0.0
  %v550 = vmax.f32 %v486, 0.0
  %v551 = vmax.f32 %v487, 0.0
  %v552 = vmax.f32 %v488, 0.0
  %v553 = vmax.f32 %v489, 0.0
  %v554 = vmax.f32 %v490, 0.0
  %v555 = vmax.f32 %v491, 0.0
  %v556 = vmax.f32 %v492, 0.0
  %v557 = vmax.f32 %v493, 0.0
  %v558 = vmax.f32 %v494, 0.0
  %v559 = vmax.f32 %v495, 0.0
  %v560 = vmax.f32 %v496, 0.0
  %v561 = vmax.f32 %v497, 0.0
  %v562 = vmax.f32 %v498, 0.0
  %v563 = vmax.f32 %v499, 0.0
  %v564 = vmax.f32 %v500, 0.0
  %v565 = vmax.f32 %v501, 0.0
  %v566 = vmax.f32 %v502, 0.0
  %v567 = vmax.f32 %v503, 0.0
  %v568 = vmax.f32 %v504, 0.0
  %v569 = vmax.f32 %v505, 0.0
  %v570 = vmax.f32 %v506, 0.0
  %v571 = vmax.f32 %v507, 0.0
  %v572 = vmax.f32 %v508, 0.0
  %v573 = vmax.f32 %v509, 0.0
  %v574 = vmax.f32 %v510, 0.0
  %v575 = vmax.f32 %v511, 0.0
  %v576 = vmax.f32 %v512, 0.0
  %v577 = vmax.f32 %v513, 0.0
  %v578 = vmax.f32 %v514, 0.0
  %v579 = vmax.f32 %v515, 0.0
  %v580 = vmax.f32 %v516, 0.0
  %v581 = vmax.f32 %v517, 0.0
  %v582 = vmax.f32 %v518, 0.0
  %v583 = vpack.c.bf16 %v520, %v519
  %v584 = vpack.c.bf16 %v522, %v521
  %v585 = vpack.c.bf16 %v524, %v523
  %v586 = vpack.c.bf16 %v526, %v525
  %v587 = vpack.c.bf16 %v528, %v527
  %v588 = vpack.c.bf16 %v530, %v529
  %v589 = vpack.c.bf16 %v532, %v531
  %v590 = vpack.c.bf16 %v534, %v533
  %v591 = vpack.c.bf16 %v536, %v535
  %v592 = vpack.c.bf16 %v538, %v537
  %v593 = vpack.c.bf16 %v540, %v539
  %v594 = vpack.c.bf16 %v542, %v541
  %v595 = vpack.c.bf16 %v544, %v543
  %v596 = vpack.c.bf16 %v546, %v545
  %v597 = vpack.c.bf16 %v548, %v547
  %v598 = vpack.c.bf16 %v550, %v549
  %v599 = vpack.c.bf16 %v552, %v551
  %v600 = vpack.c.bf16 %v554, %v553
  %v601 = vpack.c.bf16 %v556, %v555
  %v602 = vpack.c.bf16 %v558, %v557
  %v603 = vpack.c.bf16 %v560, %v559
  %v604 = vpack.c.bf16 %v562, %v561
  %v605 = vpack.c.bf16 %v564, %v563
  %v606 = vpack.c.bf16 %v566, %v565
  %v607 = vpack.c.bf16 %v568, %v567
  %v608 = vpack.c.bf16 %v570, %v569
  %v609 = vpack.c.bf16 %v572, %v571
  %v610 = vpack.c.bf16 %v574, %v573
  %v611 = vpack.c.bf16 %v576, %v575
  %v612 = vpack.c.bf16 %v578, %v577
  %v613 = vpack.c.bf16 %v580, %v579
  %v614 = vpack.c.bf16 %v582, %v581
  %v647 = vunpack.c.l.b16 %v583
  %v648 = vunpack.c.h.b16 %v583
  %v649 = vunpack.c.l.b16 %v584
  %v650 = vunpack.c.h.b16 %v584
  %v651 = vunpack.c.l.b16 %v585
  %v652 = vunpack.c.h.b16 %v585
  %v653 = vunpack.c.l.b16 %v586
  %v654 = vunpack.c.h.b16 %v586
  %v655 = vunpack.c.l.b16 %v587
  %v656 = vunpack.c.h.b16 %v587
  %v657 = vunpack.c.l.b16 %v588
  %v658 = vunpack.c.h.b16 %v588
  %v659 = vunpack.c.l.b16 %v589
  %v660 = vunpack.c.h.b16 %v589
  %v661 = vunpack.c.l.b16 %v590
  %v662 = vunpack.c.h.b16 %v590
  %v663 = vunpack.c.l.b16 %v591
  %v664 = vunpack.c.h.b16 %v591
  %v665 = vunpack.c.l.b16 %v592
  %v666 = vunpack.c.h.b16 %v592
  %v667 = vunpack.c.l.b16 %v593
  %v668 = vunpack.c.h.b16 %v593
  %v669 = vunpack.c.l.b16 %v594
  %v670 = vunpack.c.h.b16 %v594
  %v671 = vunpack.c.l.b16 %v595
  %v672 = vunpack.c.h.b16 %v595
  %v673 = vunpack.c.l.b16 %v596
  %v674 = vunpack.c.h.b16 %v596
  %v675 = vunpack.c.l.b16 %v597
  %v676 = vunpack.c.h.b16 %v597
  %v677 = vunpack.c.l.b16 %v598
  %v678 = vunpack.c.h.b16 %v598
  %v679 = vunpack.c.l.b16 %v599
  %v680 = vunpack.c.h.b16 %v599
  %v681 = vunpack.c.l.b16 %v600
  %v682 = vunpack.c.h.b16 %v600
  %v683 = vunpack.c.l.b16 %v601
  %v684 = vunpack.c.h.b16 %v601
  %v685 = vunpack.c.l.b16 %v602
  %v686 = vunpack.c.h.b16 %v602
  %v687 = vunpack.c.l.b16 %v603
  %v688 = vunpack.c.h.b16 %v603
  %v689 = vunpack.c.l.b16 %v604
  %v690 = vunpack.c.h.b16 %v604
  %v691 = vunpack.c.l.b16 %v605
  %v692 = vunpack.c.h.b16 %v605
  %v693 = vunpack.c.l.b16 %v606
  %v694 = vunpack.c.h.b16 %v606
  %v695 = vunpack.c.l.b16 %v607
  %v696 = vunpack.c.h.b16 %v607
  %v697 = vunpack.c.l.b16 %v608
  %v698 = vunpack.c.h.b16 %v608
  %v699 = vunpack.c.l.b16 %v609
  %v700 = vunpack.c.h.b16 %v609
  %v701 = vunpack.c.l.b16 %v610
  %v702 = vunpack.c.h.b16 %v610
  %v703 = vunpack.c.l.b16 %v611
  %v704 = vunpack.c.h.b16 %v611
  %v705 = vunpack.c.l.b16 %v612
  %v706 = vunpack.c.h.b16 %v612
  %v707 = vunpack.c.l.b16 %v613
  %v708 = vunpack.c.h.b16 %v613
  %v709 = vunpack.c.l.b16 %v614
  %v710 = vunpack.c.h.b16 %v614
  %v711 = vpack.c.b16 %v647, %v647
  %v712 = vpack.c.b16 %v648, %v648
  %v713 = vpack.c.b16 %v649, %v649
  %v714 = vpack.c.b16 %v650, %v650
  %v715 = vpack.c.b16 %v651, %v651
  %v716 = vpack.c.b16 %v652, %v652
  %v717 = vpack.c.b16 %v653, %v653
  %v718 = vpack.c.b16 %v654, %v654
  %v719 = vpack.c.b16 %v655, %v655
  %v720 = vpack.c.b16 %v656, %v656
  %v721 = vpack.c.b16 %v657, %v657
  %v722 = vpack.c.b16 %v658, %v658
  %v723 = vpack.c.b16 %v659, %v659
  %v724 = vpack.c.b16 %v660, %v660
  %v725 = vpack.c.b16 %v661, %v661
  %v726 = vpack.c.b16 %v662, %v662
  %v727 = vpack.c.b16 %v663, %v663
  %v728 = vpack.c.b16 %v664, %v664
  %v729 = vpack.c.b16 %v665, %v665
  %v730 = vpack.c.b16 %v666, %v666
  %v731 = vpack.c.b16 %v667, %v667
  %v732 = vpack.c.b16 %v668, %v668
  %v733 = vpack.c.b16 %v669, %v669
  %v734 = vpack.c.b16 %v670, %v670
  %v735 = vpack.c.b16 %v671, %v671
  %v736 = vpack.c.b16 %v672, %v672
  %v737 = vpack.c.b16 %v673, %v673
  %v738 = vpack.c.b16 %v674, %v674
  %v739 = vpack.c.b16 %v675, %v675
  %v740 = vpack.c.b16 %v676, %v676
  %v741 = vpack.c.b16 %v677, %v677
  %v742 = vpack.c.b16 %v678, %v678
  %v743 = vpack.c.b16 %v679, %v679
  %v744 = vpack.c.b16 %v680, %v680
  %v745 = vpack.c.b16 %v681, %v681
  %v746 = vpack.c.b16 %v682, %v682
  %v747 = vpack.c.b16 %v683, %v683
  %v748 = vpack.c.b16 %v684, %v684
  %v749 = vpack.c.b16 %v685, %v685
  %v750 = vpack.c.b16 %v686, %v686
  %v751 = vpack.c.b16 %v687, %v687
  %v752 = vpack.c.b16 %v688, %v688
  %v753 = vpack.c.b16 %v689, %v689
  %v754 = vpack.c.b16 %v690, %v690
  %v755 = vpack.c.b16 %v691, %v691
  %v756 = vpack.c.b16 %v692, %v692
  %v757 = vpack.c.b16 %v693, %v693
  %v758 = vpack.c.b16 %v694, %v694
  %v759 = vpack.c.b16 %v695, %v695
  %v760 = vpack.c.b16 %v696, %v696
  %v761 = vpack.c.b16 %v697, %v697
  %v762 = vpack.c.b16 %v698, %v698
  %v763 = vpack.c.b16 %v699, %v699
  %v764 = vpack.c.b16 %v700, %v700
  %v765 = vpack.c.b16 %v701, %v701
  %v766 = vpack.c.b16 %v702, %v702
  %v767 = vpack.c.b16 %v703, %v703
  %v768 = vpack.c.b16 %v704, %v704
  %v769 = vpack.c.b16 %v705, %v705
  %v770 = vpack.c.b16 %v706, %v706
  %v771 = vpack.c.b16 %v707, %v707
  %v772 = vpack.c.b16 %v708, %v708
  %v773 = vpack.c.b16 %v709, %v709
  %v774 = vpack.c.b16 %v710, %v710
  %839 = vst [vmem:[%s3] sm:$0xf] %v711
  %840 = vst [vmem:[%s3 + $0x4] sm:$0xf] %v712
  %841 = vst [vmem:[%s3 + $0x8] sm:$0xf] %v713
  %842 = vst [vmem:[%s3 + $0xc] sm:$0xf] %v714
  %843 = vst [vmem:[%s3 + $0x10] sm:$0xf] %v715
  %844 = vst [vmem:[%s3 + $0x14] sm:$0xf] %v716
  %845 = vst [vmem:[%s3 + $0x18] sm:$0xf] %v717
  %846 = vst [vmem:[%s3 + $0x1c] sm:$0xf] %v718
  %847 = vst [vmem:[%s3 + $0x20] sm:$0xf] %v719
  %848 = vst [vmem:[%s3 + $0x24] sm:$0xf] %v720
  %849 = vst [vmem:[%s3 + $0x28] sm:$0xf] %v721
  %850 = vst [vmem:[%s3 + $0x2c] sm:$0xf] %v722
  %851 = vst [vmem:[%s3 + $0x30] sm:$0xf] %v723
  %852 = vst [vmem:[%s3 + $0x34] sm:$0xf] %v724
  %853 = vst [vmem:[%s3 + $0x38] sm:$0xf] %v725
  %854 = vst [vmem:[%s3 + $0x3c] sm:$0xf] %v726
  %855 = vst [vmem:[%s3 + $0x40] sm:$0xf] %v727
  %856 = vst [vmem:[%s3 + $0x44] sm:$0xf] %v728
  %857 = vst [vmem:[%s3 + $0x48] sm:$0xf] %v729
  %858 = vst [vmem:[%s3 + $0x4c] sm:$0xf] %v730
  %859 = vst [vmem:[%s3 + $0x50] sm:$0xf] %v731
  %860 = vst [vmem:[%s3 + $0x54] sm:$0xf] %v732
  %861 = vst [vmem:[%s3 + $0x58] sm:$0xf] %v733
  %862 = vst [vmem:[%s3 + $0x5c] sm:$0xf] %v734
  %863 = vst [vmem:[%s3 + $0x60] sm:$0xf] %v735
  %864 = vst [vmem:[%s3 + $0x64] sm:$0xf] %v736
  %865 = vst [vmem:[%s3 + $0x68] sm:$0xf] %v737
  %866 = vst [vmem:[%s3 + $0x6c] sm:$0xf] %v738
  %867 = vst [vmem:[%s3 + $0x70] sm:$0xf] %v739
  %868 = vst [vmem:[%s3 + $0x74] sm:$0xf] %v740
  %869 = vst [vmem:[%s3 + $0x78] sm:$0xf] %v741
  %870 = vst [vmem:[%s3 + $0x7c] sm:$0xf] %v742
  %871 = vst [vmem:[%s3 + $0x80] sm:$0xf] %v743
  %872 = vst [vmem:[%s3 + $0x84] sm:$0xf] %v744
  %873 = vst [vmem:[%s3 + $0x88] sm:$0xf] %v745
  %874 = vst [vmem:[%s3 + $0x8c] sm:$0xf] %v746
  %875 = vst [vmem:[%s3 + $0x90] sm:$0xf] %v747
  %876 = vst [vmem:[%s3 + $0x94] sm:$0xf] %v748
  %877 = vst [vmem:[%s3 + $0x98] sm:$0xf] %v749
  %878 = vst [vmem:[%s3 + $0x9c] sm:$0xf] %v750
  %879 = vst [vmem:[%s3 + $0xa0] sm:$0xf] %v751
  %880 = vst [vmem:[%s3 + $0xa4] sm:$0xf] %v752
  %881 = vst [vmem:[%s3 + $0xa8] sm:$0xf] %v753
  %882 = vst [vmem:[%s3 + $0xac] sm:$0xf] %v754
  %883 = vst [vmem:[%s3 + $0xb0] sm:$0xf] %v755
  %884 = vst [vmem:[%s3 + $0xb4] sm:$0xf] %v756
  %885 = vst [vmem:[%s3 + $0xb8] sm:$0xf] %v757
  %886 = vst [vmem:[%s3 + $0xbc] sm:$0xf] %v758
  %887 = vst [vmem:[%s3 + $0xc0] sm:$0xf] %v759
  %888 = vst [vmem:[%s3 + $0xc4] sm:$0xf] %v760
  %889 = vst [vmem:[%s3 + $0xc8] sm:$0xf] %v761
  %890 = vst [vmem:[%s3 + $0xcc] sm:$0xf] %v762
  %891 = vst [vmem:[%s3 + $0xd0] sm:$0xf] %v763
  %892 = vst [vmem:[%s3 + $0xd4] sm:$0xf] %v764
  %893 = vst [vmem:[%s3 + $0xd8] sm:$0xf] %v765
  %894 = vst [vmem:[%s3 + $0xdc] sm:$0xf] %v766
  %895 = vst [vmem:[%s3 + $0xe0] sm:$0xf] %v767
  %896 = vst [vmem:[%s3 + $0xe4] sm:$0xf] %v768
  %897 = vst [vmem:[%s3 + $0xe8] sm:$0xf] %v769
  %898 = vst [vmem:[%s3 + $0xec] sm:$0xf] %v770
  %899 = vst [vmem:[%s3 + $0xf0] sm:$0xf] %v771
  %900 = vst [vmem:[%s3 + $0xf4] sm:$0xf] %v772
  %901 = vst [vmem:[%s3 + $0xf8] sm:$0xf] %v773
  %902 = vst [vmem:[%s3 + $0xfc] sm:$0xf] %v774
  // Predicated region
  $region14: #{generator_forward.18} parent=0 // pred_check
    _
  $region15: #{generator_forward.18} parent=0 // pred_check_branch
    %904 = sbr.rel (0) target = $region17
  $region16: #{generator_forward.18} parent=0 // pred_region
    _
  $region17: #{generator_forward.18} parent=0 // pred_fallthru
    _
  // Predicated region
  $region18: #{generator_forward.18} parent=0 // pred_check
    _
  $region19: #{generator_forward.18} parent=0 // pred_check_branch
    %906 = sbr.rel (0) target = $region21
  $region20: #{generator_forward.18} parent=0 // pred_region
    _
  $region21: #{generator_forward.18} parent=0 // pred_fallthru
    _

// kernel: generator_forward.19
$region0: #{generator_forward.19}
  #allocation0 [shape = 'u32[]', space=smem, size = 0x4, offset = 0x4, fixed_abs, tag = 'smem constant byte address 0x4 - core index']
  #allocation1 [shape = 'u32[144,128]{1,0:T(1,128)}', space=vmem, size = 0x12000, scoped, tag = 'internal scratch']
  %s0 = inlined_call_operand.vmem [shape: bf16[8192,72], index: 0, kind: input, shape index: {}]
  %s1 = inlined_call_operand.vmem [shape: bf16[72,12], index: 1, kind: input, shape index: {}]
  %s2 = inlined_call_operand.vmem [shape: f32[8192,12], index: 2, kind: output, shape index: {}]
  %s3 = sld [smem:[#allocation0]]
  $region41: #{generator_forward.19} parent=0
    _
  %s5 = ssub.s32 1, %s3
  %s6 = scalar_select 0, %s5, %s3
  loop: start=0, step=1, limit=6
  $region2: #{generator_forward.19} parent=0 // loop_pre_header
    _
  $region3: #{generator_forward.19} parent=0 // loop_header
    %s8 = sphi 0, %s12
    %p9 = scmp.ge.s32.totalorder %s8, 6
    %s18 = sphi 0, %s20
    %s21 = sphi 0, %s18
    %s22 = sphi 0, %s21
    %s38 = sphi 0, %s22
    %s42 = sphi 0, %s42
    %s44 = sphi 0, %s42
    %s45 = sphi 0, %s44
    %s59 = sphi 0, %s45
    %s65 = sphi 0, %s67
    %s68 = sphi 0, %s65
    %s69 = sphi 0, %s68
    %s85 = sphi 0, %s69
  $region4: #{generator_forward.19} parent=0 // loop_header_branch
    %11 = sbr.rel (%p9) target = $region8
  $region5: #{generator_forward.19} parent=0 // loop_body
    %s13 = ssub.s32 %s8, 1
    %s14 = ssub.s32 %s8, 2
    %s15 = sadd.s32 %s8, 1
    %s16 = ssub.s32 %s8, %s15
    %p17 = scmp.eq.s32.totalorder %s16, 0
    %s19 = sadd.s32 %s18, 1
    %s20 = scalar_select %p17, %s18, %s19
    %p23 = pneg %p17
    %p24 = scmp.eq.s32.totalorder %s8, 3
    %p25 = por %p23, %p24
    %p26 = scmp.ne.s32.totalorder %s18, %s21
    %p27 = scmp.eq.s32.totalorder %s8, 0
    %p28 = por %p26, %p27
    %p29 = scmp.ne.s32.totalorder %s18, %s21
    %p30 = scmp.eq.s32.totalorder %s13, 3
    %p31 = por %p29, %p30
    %p32 = scmp.ne.s32.totalorder %s21, %s22
    %p33 = scmp.eq.s32.totalorder %s13, 0
    %p34 = por %p32, %p33
    %p35 = scmp.ne.s32.totalorder %s21, %s22
    %p36 = scmp.eq.s32.totalorder %s14, 3
    %p37 = por %p35, %p36
    %p39 = scmp.ne.s32.totalorder %s22, %s38
    %p40 = scmp.eq.s32.totalorder %s14, 0
    %p41 = por %p39, %p40
    %s43 = sadd.s32 %s42, 1
    %p46 = scmp.eq.s32.totalorder %s8, 3
    %p47 = scmp.ne.s32.totalorder %s42, %s44
    %p48 = scmp.eq.s32.totalorder %s8, 0
    %p49 = por %p47, %p48
    %p50 = scmp.ne.s32.totalorder %s42, %s44
    %p51 = scmp.eq.s32.totalorder %s13, 3
    %p52 = por %p50, %p51
    %p53 = scmp.ne.s32.totalorder %s44, %s45
    %p54 = scmp.eq.s32.totalorder %s13, 0
    %p55 = por %p53, %p54
    %p56 = scmp.ne.s32.totalorder %s44, %s45
    %p57 = scmp.eq.s32.totalorder %s14, 3
    %p58 = por %p56, %p57
    %p60 = scmp.ne.s32.totalorder %s45, %s59
    %p61 = scmp.eq.s32.totalorder %s14, 0
    %p62 = por %p60, %p61
    %s63 = ssub.s32 %s8, %s15
    %p64 = scmp.eq.s32.totalorder %s63, 0
    %s66 = sadd.s32 %s65, 1
    %s67 = scalar_select %p64, %s65, %s66
    %p70 = pneg %p64
    %p71 = scmp.eq.s32.totalorder %s8, 3
    %p72 = por %p70, %p71
    %p73 = scmp.ne.s32.totalorder %s65, %s68
    %p74 = scmp.eq.s32.totalorder %s8, 0
    %p75 = por %p73, %p74
    %p76 = scmp.ne.s32.totalorder %s65, %s68
    %p77 = scmp.eq.s32.totalorder %s13, 3
    %p78 = por %p76, %p77
    %p79 = scmp.ne.s32.totalorder %s68, %s69
    %p80 = scmp.eq.s32.totalorder %s13, 0
    %p81 = por %p79, %p80
    %p82 = scmp.ne.s32.totalorder %s68, %s69
    %p83 = scmp.eq.s32.totalorder %s14, 3
    %p84 = por %p82, %p83
    %p86 = scmp.ne.s32.totalorder %s69, %s85
    %p87 = scmp.eq.s32.totalorder %s14, 0
    %p88 = por %p86, %p87
    %p89 = scmp.le.s32.totalorder 1, %s8
    %p90 = scmp.lt.s32.totalorder %s8, 5
    %p91 = pnand %p89, %p90
    %p92 = pneg %p91
    // Predicated region
    $region9: #{generator_forward.19} parent=5 // pred_check
      _
    $region10: #{generator_forward.19} parent=5 // pred_check_branch
      %94 = sbr.rel (%p91) target = $region12
    $region11: #{generator_forward.19} parent=5 // pred_region
      %s95 = ssub.s32 %s8, 1
      // Predicated region
      $region13: #{generator_forward.19} parent=11 // pred_check
        %p96 = pneg %p55
      $region14: #{generator_forward.19} parent=11 // pred_check_branch
        %98 = sbr.rel (%p96) target = $region16
      $region15: #{generator_forward.19} parent=11 // pred_region
        _
      $region16: #{generator_forward.19} parent=11 // pred_fallthru
        _
    $region12: #{generator_forward.19} parent=5 // pred_fallthru
      _
    %p99 = scmp.lt.s32.totalorder %s8, 4
    // Predicated region
    $region17: #{generator_forward.19} parent=5 // pred_check
      %p100 = pneg %p99
    $region18: #{generator_forward.19} parent=5 // pred_check_branch
      %102 = sbr.rel (%p100) target = $region20
    $region19: #{generator_forward.19} parent=5 // pred_region
      // Predicated region
      $region21: #{generator_forward.19} parent=19 // pred_check
        %p103 = pneg %p28
      $region22: #{generator_forward.19} parent=19 // pred_check_branch
        %105 = sbr.rel (%p103) target = $region24
      $region23: #{generator_forward.19} parent=19 // pred_region
        %s106 = smul.u32 256, %s8
        %p107 = scmp.lt.s32.totalorder %s106, 1023
        %s108 = scalar_select %p107, %s106, 1023
        %s109 = smul.addr %s108, 4
        %s110 = scalar_lea.vmem %s0, %s109
        %s111 = smul.u32 256, %s8
      $region24: #{generator_forward.19} parent=19 // pred_fallthru
        _
    $region20: #{generator_forward.19} parent=5 // pred_fallthru
      _
    %p112 = scmp.le.s32.totalorder 1, %s8
    %p113 = scmp.lt.s32.totalorder %s8, 5
    %p114 = pnand %p112, %p113
    %p115 = pneg %p114
    // Predicated region
    $region25: #{generator_forward.19} parent=5 // pred_check
      _
    $region26: #{generator_forward.19} parent=5 // pred_check_branch
      %117 = sbr.rel (%p114) target = $region28
    $region27: #{generator_forward.19} parent=5 // pred_region
      %s118 = ssub.s32 %s8, 1
      %s119 = smul.u32 256, %s13
      %p120 = scmp.lt.s32.totalorder %s119, 1023
      %s121 = scalar_select %p120, %s119, 1023
      %s122 = smul.addr %s121, 4
      %s123 = scalar_lea.vmem %s0, %s122
      %p124 = pneg %p34
      %p125 = pneg %p31
      %p126 = pneg %p55
      %p127 = pneg %p52
      %p128 = pneg %p81
      %p129 = pneg %p78
      %s130 = smul.u32 256, %s13
      %p131 = scmp.lt.s32.totalorder %s130, 1023
      %s132 = scalar_select %p131, %s130, 1023
      %s133 = smul.addr %s132, 8
      %s134 = scalar_lea.vmem %s2, %s133
      %s135 = smul.u32 256, %s13
      %p136 = scmp.lt.s32.totalorder %s135, 1023
      %s137 = scalar_select %p136, %s135, 1023
      %s138 = smul.addr %s137, 4
      %s139 = scalar_lea.vmem %s0, %s138
      %s140 = smul.u32 256, %s13
      %s141 = smul.u32 256, %s13
      %p142 = scmp.lt.s32.totalorder %s141, 1023
      %s143 = scalar_select %p142, %s141, 1023
      %s144 = smul.addr %s143, 8
      %s145 = scalar_lea.vmem %s2, %s144
      %s146 = smul.u32 256, %s13
      %v148 = vld [vmem:[%s139] sm:$0xf]
      %v149 = vld [vmem:[%s139 + $0x4] sm:$0xf]
      %v150 = vld [vmem:[%s139 + $0x8] sm:$0xf]
      %v151 = vld [vmem:[%s139 + $0xc] sm:$0xf]
      %v152 = vld [vmem:[%s139 + $0x10] sm:$0xf]
      %v153 = vld [vmem:[%s139 + $0x14] sm:$0xf]
      %v154 = vld [vmem:[%s139 + $0x18] sm:$0xf]
      %v155 = vld [vmem:[%s139 + $0x1c] sm:$0xf]
      %v156 = vld [vmem:[%s139 + $0x20] sm:$0xf]
      %v157 = vld [vmem:[%s139 + $0x24] sm:$0xf]
      %v158 = vld [vmem:[%s139 + $0x28] sm:$0xf]
      %v159 = vld [vmem:[%s139 + $0x2c] sm:$0xf]
      %v160 = vld [vmem:[%s139 + $0x30] sm:$0xf]
      %v161 = vld [vmem:[%s139 + $0x34] sm:$0xf]
      %v162 = vld [vmem:[%s139 + $0x38] sm:$0xf]
      %v163 = vld [vmem:[%s139 + $0x3c] sm:$0xf]
      %v164 = vld [vmem:[%s139 + $0x40] sm:$0xf]
      %v165 = vld [vmem:[%s139 + $0x44] sm:$0xf]
      %v166 = vld [vmem:[%s139 + $0x48] sm:$0xf]
      %v167 = vld [vmem:[%s139 + $0x4c] sm:$0xf]
      %v168 = vld [vmem:[%s139 + $0x50] sm:$0xf]
      %v169 = vld [vmem:[%s139 + $0x54] sm:$0xf]
      %v170 = vld [vmem:[%s139 + $0x58] sm:$0xf]
      %v171 = vld [vmem:[%s139 + $0x5c] sm:$0xf]
      %v172 = vld [vmem:[%s139 + $0x60] sm:$0xf]
      %v173 = vld [vmem:[%s139 + $0x64] sm:$0xf]
      %v174 = vld [vmem:[%s139 + $0x68] sm:$0xf]
      %v175 = vld [vmem:[%s139 + $0x6c] sm:$0xf]
      %v176 = vld [vmem:[%s139 + $0x70] sm:$0xf]
      %v177 = vld [vmem:[%s139 + $0x74] sm:$0xf]
      %v178 = vld [vmem:[%s139 + $0x78] sm:$0xf]
      %v179 = vld [vmem:[%s139 + $0x7c] sm:$0xf]
      %v180 = vld [vmem:[%s139 + $0x80] sm:$0xf]
      %v181 = vld [vmem:[%s139 + $0x84] sm:$0xf]
      %v182 = vld [vmem:[%s139 + $0x88] sm:$0xf]
      %v183 = vld [vmem:[%s139 + $0x8c] sm:$0xf]
      %v184 = vld [vmem:[%s139 + $0x90] sm:$0xf]
      %v185 = vld [vmem:[%s139 + $0x94] sm:$0xf]
      %v186 = vld [vmem:[%s139 + $0x98] sm:$0xf]
      %v187 = vld [vmem:[%s139 + $0x9c] sm:$0xf]
      %v188 = vld [vmem:[%s139 + $0xa0] sm:$0xf]
      %v189 = vld [vmem:[%s139 + $0xa4] sm:$0xf]
      %v190 = vld [vmem:[%s139 + $0xa8] sm:$0xf]
      %v191 = vld [vmem:[%s139 + $0xac] sm:$0xf]
      %v192 = vld [vmem:[%s139 + $0xb0] sm:$0xf]
      %v193 = vld [vmem:[%s139 + $0xb4] sm:$0xf]
      %v194 = vld [vmem:[%s139 + $0xb8] sm:$0xf]
      %v195 = vld [vmem:[%s139 + $0xbc] sm:$0xf]
      %v196 = vld [vmem:[%s139 + $0xc0] sm:$0xf]
      %v197 = vld [vmem:[%s139 + $0xc4] sm:$0xf]
      %v198 = vld [vmem:[%s139 + $0xc8] sm:$0xf]
      %v199 = vld [vmem:[%s139 + $0xcc] sm:$0xf]
      %v200 = vld [vmem:[%s139 + $0xd0] sm:$0xf]
      %v201 = vld [vmem:[%s139 + $0xd4] sm:$0xf]
      %v202 = vld [vmem:[%s139 + $0xd8] sm:$0xf]
      %v203 = vld [vmem:[%s139 + $0xdc] sm:$0xf]
      %v204 = vld [vmem:[%s139 + $0xe0] sm:$0xf]
      %v205 = vld [vmem:[%s139 + $0xe4] sm:$0xf]
      %v206 = vld [vmem:[%s139 + $0xe8] sm:$0xf]
      %v207 = vld [vmem:[%s139 + $0xec] sm:$0xf]
      %v208 = vld [vmem:[%s139 + $0xf0] sm:$0xf]
      %v209 = vld [vmem:[%s139 + $0xf4] sm:$0xf]
      %v210 = vld [vmem:[%s139 + $0xf8] sm:$0xf]
      %v211 = vld [vmem:[%s139 + $0xfc] sm:$0xf]
      %v212 = vld [vmem:[%s139 + $0x100] sm:$0xf]
      %v213 = vld [vmem:[%s139 + $0x104] sm:$0xf]
      %v214 = vld [vmem:[%s139 + $0x108] sm:$0xf]
      %v215 = vld [vmem:[%s139 + $0x10c] sm:$0xf]
      %v216 = vld [vmem:[%s139 + $0x110] sm:$0xf]
      %v217 = vld [vmem:[%s139 + $0x114] sm:$0xf]
      %v218 = vld [vmem:[%s139 + $0x118] sm:$0xf]
      %v219 = vld [vmem:[%s139 + $0x11c] sm:$0xf]
      %v220 = vld [vmem:[%s139 + $0x120] sm:$0xf]
      %v221 = vld [vmem:[%s139 + $0x124] sm:$0xf]
      %v222 = vld [vmem:[%s139 + $0x128] sm:$0xf]
      %v223 = vld [vmem:[%s139 + $0x12c] sm:$0xf]
      %v224 = vld [vmem:[%s139 + $0x130] sm:$0xf]
      %v225 = vld [vmem:[%s139 + $0x134] sm:$0xf]
      %v226 = vld [vmem:[%s139 + $0x138] sm:$0xf]
      %v227 = vld [vmem:[%s139 + $0x13c] sm:$0xf]
      %v228 = vld [vmem:[%s139 + $0x140] sm:$0xf]
      %v229 = vld [vmem:[%s139 + $0x144] sm:$0xf]
      %v230 = vld [vmem:[%s139 + $0x148] sm:$0xf]
      %v231 = vld [vmem:[%s139 + $0x14c] sm:$0xf]
      %v232 = vld [vmem:[%s139 + $0x150] sm:$0xf]
      %v233 = vld [vmem:[%s139 + $0x154] sm:$0xf]
      %v234 = vld [vmem:[%s139 + $0x158] sm:$0xf]
      %v235 = vld [vmem:[%s139 + $0x15c] sm:$0xf]
      %v236 = vld [vmem:[%s139 + $0x160] sm:$0xf]
      %v237 = vld [vmem:[%s139 + $0x164] sm:$0xf]
      %v238 = vld [vmem:[%s139 + $0x168] sm:$0xf]
      %v239 = vld [vmem:[%s139 + $0x16c] sm:$0xf]
      %v240 = vld [vmem:[%s139 + $0x170] sm:$0xf]
      %v241 = vld [vmem:[%s139 + $0x174] sm:$0xf]
      %v242 = vld [vmem:[%s139 + $0x178] sm:$0xf]
      %v243 = vld [vmem:[%s139 + $0x17c] sm:$0xf]
      %v244 = vld [vmem:[%s139 + $0x180] sm:$0xf]
      %v245 = vld [vmem:[%s139 + $0x184] sm:$0xf]
      %v246 = vld [vmem:[%s139 + $0x188] sm:$0xf]
      %v247 = vld [vmem:[%s139 + $0x18c] sm:$0xf]
      %v248 = vld [vmem:[%s139 + $0x190] sm:$0xf]
      %v249 = vld [vmem:[%s139 + $0x194] sm:$0xf]
      %v250 = vld [vmem:[%s139 + $0x198] sm:$0xf]
      %v251 = vld [vmem:[%s139 + $0x19c] sm:$0xf]
      %v252 = vld [vmem:[%s139 + $0x1a0] sm:$0xf]
      %v253 = vld [vmem:[%s139 + $0x1a4] sm:$0xf]
      %v254 = vld [vmem:[%s139 + $0x1a8] sm:$0xf]
      %v255 = vld [vmem:[%s139 + $0x1ac] sm:$0xf]
      %v256 = vld [vmem:[%s139 + $0x1b0] sm:$0xf]
      %v257 = vld [vmem:[%s139 + $0x1b4] sm:$0xf]
      %v258 = vld [vmem:[%s139 + $0x1b8] sm:$0xf]
      %v259 = vld [vmem:[%s139 + $0x1bc] sm:$0xf]
      %v260 = vld [vmem:[%s139 + $0x1c0] sm:$0xf]
      %v261 = vld [vmem:[%s139 + $0x1c4] sm:$0xf]
      %v262 = vld [vmem:[%s139 + $0x1c8] sm:$0xf]
      %v263 = vld [vmem:[%s139 + $0x1cc] sm:$0xf]
      %v264 = vld [vmem:[%s139 + $0x1d0] sm:$0xf]
      %v265 = vld [vmem:[%s139 + $0x1d4] sm:$0xf]
      %v266 = vld [vmem:[%s139 + $0x1d8] sm:$0xf]
      %v267 = vld [vmem:[%s139 + $0x1dc] sm:$0xf]
      %v268 = vld [vmem:[%s139 + $0x1e0] sm:$0xf]
      %v269 = vld [vmem:[%s139 + $0x1e4] sm:$0xf]
      %v270 = vld [vmem:[%s139 + $0x1e8] sm:$0xf]
      %v271 = vld [vmem:[%s139 + $0x1ec] sm:$0xf]
      %v272 = vld [vmem:[%s139 + $0x1f0] sm:$0xf]
      %v273 = vld [vmem:[%s139 + $0x1f4] sm:$0xf]
      %v274 = vld [vmem:[%s139 + $0x1f8] sm:$0xf]
      %v275 = vld [vmem:[%s139 + $0x1fc] sm:$0xf]
      %v276 = vld [vmem:[%s139 + $0x200] sm:$0xf]
      %v277 = vld [vmem:[%s139 + $0x204] sm:$0xf]
      %v278 = vld [vmem:[%s139 + $0x208] sm:$0xf]
      %v279 = vld [vmem:[%s139 + $0x20c] sm:$0xf]
      %v280 = vld [vmem:[%s139 + $0x210] sm:$0xf]
      %v281 = vld [vmem:[%s139 + $0x214] sm:$0xf]
      %v282 = vld [vmem:[%s139 + $0x218] sm:$0xf]
      %v283 = vld [vmem:[%s139 + $0x21c] sm:$0xf]
      %v284 = vld [vmem:[%s139 + $0x220] sm:$0xf]
      %v285 = vld [vmem:[%s139 + $0x224] sm:$0xf]
      %v286 = vld [vmem:[%s139 + $0x228] sm:$0xf]
      %v287 = vld [vmem:[%s139 + $0x22c] sm:$0xf]
      %v288 = vld [vmem:[%s139 + $0x230] sm:$0xf]
      %v289 = vld [vmem:[%s139 + $0x234] sm:$0xf]
      %v290 = vld [vmem:[%s139 + $0x238] sm:$0xf]
      %v291 = vld [vmem:[%s139 + $0x23c] sm:$0xf]
      %v292 = vld [vmem:[%s139 + $0x240] sm:$0xf]
      %v293 = vld [vmem:[%s139 + $0x244] sm:$0xf]
      %v294 = vld [vmem:[%s139 + $0x248] sm:$0xf]
      %v295 = vld [vmem:[%s139 + $0x24c] sm:$0xf]
      %v296 = vld [vmem:[%s139 + $0x250] sm:$0xf]
      %v297 = vld [vmem:[%s139 + $0x254] sm:$0xf]
      %v298 = vld [vmem:[%s139 + $0x258] sm:$0xf]
      %v299 = vld [vmem:[%s139 + $0x25c] sm:$0xf]
      %v300 = vld [vmem:[%s139 + $0x260] sm:$0xf]
      %v301 = vld [vmem:[%s139 + $0x264] sm:$0xf]
      %v302 = vld [vmem:[%s139 + $0x268] sm:$0xf]
      %v303 = vld [vmem:[%s139 + $0x26c] sm:$0xf]
      %v304 = vld [vmem:[%s139 + $0x270] sm:$0xf]
      %v305 = vld [vmem:[%s139 + $0x274] sm:$0xf]
      %v306 = vld [vmem:[%s139 + $0x278] sm:$0xf]
      %v307 = vld [vmem:[%s139 + $0x27c] sm:$0xf]
      %v308 = vld [vmem:[%s139 + $0x280] sm:$0xf]
      %v309 = vld [vmem:[%s139 + $0x284] sm:$0xf]
      %v310 = vld [vmem:[%s139 + $0x288] sm:$0xf]
      %v311 = vld [vmem:[%s139 + $0x28c] sm:$0xf]
      %v312 = vld [vmem:[%s139 + $0x290] sm:$0xf]
      %v313 = vld [vmem:[%s139 + $0x294] sm:$0xf]
      %v314 = vld [vmem:[%s139 + $0x298] sm:$0xf]
      %v315 = vld [vmem:[%s139 + $0x29c] sm:$0xf]
      %v316 = vld [vmem:[%s139 + $0x2a0] sm:$0xf]
      %v317 = vld [vmem:[%s139 + $0x2a4] sm:$0xf]
      %v318 = vld [vmem:[%s139 + $0x2a8] sm:$0xf]
      %v319 = vld [vmem:[%s139 + $0x2ac] sm:$0xf]
      %v320 = vld [vmem:[%s139 + $0x2b0] sm:$0xf]
      %v321 = vld [vmem:[%s139 + $0x2b4] sm:$0xf]
      %v322 = vld [vmem:[%s139 + $0x2b8] sm:$0xf]
      %v323 = vld [vmem:[%s139 + $0x2bc] sm:$0xf]
      %v324 = vld [vmem:[%s139 + $0x2c0] sm:$0xf]
      %v325 = vld [vmem:[%s139 + $0x2c4] sm:$0xf]
      %v326 = vld [vmem:[%s139 + $0x2c8] sm:$0xf]
      %v327 = vld [vmem:[%s139 + $0x2cc] sm:$0xf]
      %v328 = vld [vmem:[%s139 + $0x2d0] sm:$0xf]
      %v329 = vld [vmem:[%s139 + $0x2d4] sm:$0xf]
      %v330 = vld [vmem:[%s139 + $0x2d8] sm:$0xf]
      %v331 = vld [vmem:[%s139 + $0x2dc] sm:$0xf]
      %v332 = vld [vmem:[%s139 + $0x2e0] sm:$0xf]
      %v333 = vld [vmem:[%s139 + $0x2e4] sm:$0xf]
      %v334 = vld [vmem:[%s139 + $0x2e8] sm:$0xf]
      %v335 = vld [vmem:[%s139 + $0x2ec] sm:$0xf]
      %v336 = vld [vmem:[%s139 + $0x2f0] sm:$0xf]
      %v337 = vld [vmem:[%s139 + $0x2f4] sm:$0xf]
      %v338 = vld [vmem:[%s139 + $0x2f8] sm:$0xf]
      %v339 = vld [vmem:[%s139 + $0x2fc] sm:$0xf]
      %v340 = vld [vmem:[%s139 + $0x300] sm:$0xf]
      %v341 = vld [vmem:[%s139 + $0x304] sm:$0xf]
      %v342 = vld [vmem:[%s139 + $0x308] sm:$0xf]
      %v343 = vld [vmem:[%s139 + $0x30c] sm:$0xf]
      %v344 = vld [vmem:[%s139 + $0x310] sm:$0xf]
      %v345 = vld [vmem:[%s139 + $0x314] sm:$0xf]
      %v346 = vld [vmem:[%s139 + $0x318] sm:$0xf]
      %v347 = vld [vmem:[%s139 + $0x31c] sm:$0xf]
      %v348 = vld [vmem:[%s139 + $0x320] sm:$0xf]
      %v349 = vld [vmem:[%s139 + $0x324] sm:$0xf]
      %v350 = vld [vmem:[%s139 + $0x328] sm:$0xf]
      %v351 = vld [vmem:[%s139 + $0x32c] sm:$0xf]
      %v352 = vld [vmem:[%s139 + $0x330] sm:$0xf]
      %v353 = vld [vmem:[%s139 + $0x334] sm:$0xf]
      %v354 = vld [vmem:[%s139 + $0x338] sm:$0xf]
      %v355 = vld [vmem:[%s139 + $0x33c] sm:$0xf]
      %v356 = vld [vmem:[%s139 + $0x340] sm:$0xf]
      %v357 = vld [vmem:[%s139 + $0x344] sm:$0xf]
      %v358 = vld [vmem:[%s139 + $0x348] sm:$0xf]
      %v359 = vld [vmem:[%s139 + $0x34c] sm:$0xf]
      %v360 = vld [vmem:[%s139 + $0x350] sm:$0xf]
      %v361 = vld [vmem:[%s139 + $0x354] sm:$0xf]
      %v362 = vld [vmem:[%s139 + $0x358] sm:$0xf]
      %v363 = vld [vmem:[%s139 + $0x35c] sm:$0xf]
      %v364 = vld [vmem:[%s139 + $0x360] sm:$0xf]
      %v365 = vld [vmem:[%s139 + $0x364] sm:$0xf]
      %v366 = vld [vmem:[%s139 + $0x368] sm:$0xf]
      %v367 = vld [vmem:[%s139 + $0x36c] sm:$0xf]
      %v368 = vld [vmem:[%s139 + $0x370] sm:$0xf]
      %v369 = vld [vmem:[%s139 + $0x374] sm:$0xf]
      %v370 = vld [vmem:[%s139 + $0x378] sm:$0xf]
      %v371 = vld [vmem:[%s139 + $0x37c] sm:$0xf]
      %v372 = vld [vmem:[%s139 + $0x380] sm:$0xf]
      %v373 = vld [vmem:[%s139 + $0x384] sm:$0xf]
      %v374 = vld [vmem:[%s139 + $0x388] sm:$0xf]
      %v375 = vld [vmem:[%s139 + $0x38c] sm:$0xf]
      %v376 = vld [vmem:[%s139 + $0x390] sm:$0xf]
      %v377 = vld [vmem:[%s139 + $0x394] sm:$0xf]
      %v378 = vld [vmem:[%s139 + $0x398] sm:$0xf]
      %v379 = vld [vmem:[%s139 + $0x39c] sm:$0xf]
      %v380 = vld [vmem:[%s139 + $0x3a0] sm:$0xf]
      %v381 = vld [vmem:[%s139 + $0x3a4] sm:$0xf]
      %v382 = vld [vmem:[%s139 + $0x3a8] sm:$0xf]
      %v383 = vld [vmem:[%s139 + $0x3ac] sm:$0xf]
      %v384 = vld [vmem:[%s139 + $0x3b0] sm:$0xf]
      %v385 = vld [vmem:[%s139 + $0x3b4] sm:$0xf]
      %v386 = vld [vmem:[%s139 + $0x3b8] sm:$0xf]
      %v387 = vld [vmem:[%s139 + $0x3bc] sm:$0xf]
      %v388 = vld [vmem:[%s139 + $0x3c0] sm:$0xf]
      %v389 = vld [vmem:[%s139 + $0x3c4] sm:$0xf]
      %v390 = vld [vmem:[%s139 + $0x3c8] sm:$0xf]
      %v391 = vld [vmem:[%s139 + $0x3cc] sm:$0xf]
      %v392 = vld [vmem:[%s139 + $0x3d0] sm:$0xf]
      %v393 = vld [vmem:[%s139 + $0x3d4] sm:$0xf]
      %v394 = vld [vmem:[%s139 + $0x3d8] sm:$0xf]
      %v395 = vld [vmem:[%s139 + $0x3dc] sm:$0xf]
      %v396 = vld [vmem:[%s139 + $0x3e0] sm:$0xf]
      %v397 = vld [vmem:[%s139 + $0x3e4] sm:$0xf]
      %v398 = vld [vmem:[%s139 + $0x3e8] sm:$0xf]
      %v399 = vld [vmem:[%s139 + $0x3ec] sm:$0xf]
      %v400 = vld [vmem:[%s139 + $0x3f0] sm:$0xf]
      %v401 = vld [vmem:[%s139 + $0x3f4] sm:$0xf]
      %v402 = vld [vmem:[%s139 + $0x3f8] sm:$0xf]
      %v403 = vld [vmem:[%s139 + $0x3fc] sm:$0xf]
      %v404 = vld [vmem:[%s1] sm:$0xf]
      %v405 = vld [vmem:[%s1 + $0x4] sm:$0xf]
      %v406 = vld [vmem:[%s1 + $0x8] sm:$0xf]
      %v407 = vld [vmem:[%s1 + $0xc] sm:$0xf]
      %v408 = vld [vmem:[%s1 + $0x10] sm:$0xf]
      %v409 = vld [vmem:[%s1 + $0x14] sm:$0xf]
      %v410 = vld [vmem:[%s1 + $0x18] sm:$0xf]
      %v411 = vld [vmem:[%s1 + $0x1c] sm:$0xf]
      %v412 = vld [vmem:[%s1 + $0x20] sm:$0xf]
      %v669 = vunpack.c.l.b16 %v148
      %v670 = vunpack.c.l.b16 %v149
      %v671 = vunpack.c.l.b16 %v150
      %v672 = vunpack.c.l.b16 %v151
      %v673 = vunpack.c.l.b16 %v152
      %v674 = vunpack.c.l.b16 %v153
      %v675 = vunpack.c.l.b16 %v154
      %v676 = vunpack.c.l.b16 %v155
      %v677 = vunpack.c.l.b16 %v156
      %v678 = vunpack.c.l.b16 %v157
      %v679 = vunpack.c.l.b16 %v158
      %v680 = vunpack.c.l.b16 %v159
      %v681 = vunpack.c.l.b16 %v160
      %v682 = vunpack.c.l.b16 %v161
      %v683 = vunpack.c.l.b16 %v162
      %v684 = vunpack.c.l.b16 %v163
      %v685 = vunpack.c.l.b16 %v164
      %v686 = vunpack.c.l.b16 %v165
      %v687 = vunpack.c.l.b16 %v166
      %v688 = vunpack.c.l.b16 %v167
      %v689 = vunpack.c.l.b16 %v168
      %v690 = vunpack.c.l.b16 %v169
      %v691 = vunpack.c.l.b16 %v170
      %v692 = vunpack.c.l.b16 %v171
      %v693 = vunpack.c.l.b16 %v172
      %v694 = vunpack.c.l.b16 %v173
      %v695 = vunpack.c.l.b16 %v174
      %v696 = vunpack.c.l.b16 %v175
      %v697 = vunpack.c.l.b16 %v176
      %v698 = vunpack.c.l.b16 %v177
      %v699 = vunpack.c.l.b16 %v178
      %v700 = vunpack.c.l.b16 %v179
      %v701 = vunpack.c.l.b16 %v180
      %v702 = vunpack.c.l.b16 %v181
      %v703 = vunpack.c.l.b16 %v182
      %v704 = vunpack.c.l.b16 %v183
      %v705 = vunpack.c.l.b16 %v184
      %v706 = vunpack.c.l.b16 %v185
      %v707 = vunpack.c.l.b16 %v186
      %v708 = vunpack.c.l.b16 %v187
      %v709 = vunpack.c.l.b16 %v188
      %v710 = vunpack.c.l.b16 %v189
      %v711 = vunpack.c.l.b16 %v190
      %v712 = vunpack.c.l.b16 %v191
      %v713 = vunpack.c.l.b16 %v192
      %v714 = vunpack.c.l.b16 %v193
      %v715 = vunpack.c.l.b16 %v194
      %v716 = vunpack.c.l.b16 %v195
      %v717 = vunpack.c.l.b16 %v196
      %v718 = vunpack.c.l.b16 %v197
      %v719 = vunpack.c.l.b16 %v198
      %v720 = vunpack.c.l.b16 %v199
      %v721 = vunpack.c.l.b16 %v200
      %v722 = vunpack.c.l.b16 %v201
      %v723 = vunpack.c.l.b16 %v202
      %v724 = vunpack.c.l.b16 %v203
      %v725 = vunpack.c.l.b16 %v204
      %v726 = vunpack.c.l.b16 %v205
      %v727 = vunpack.c.l.b16 %v206
      %v728 = vunpack.c.l.b16 %v207
      %v729 = vunpack.c.l.b16 %v208
      %v730 = vunpack.c.l.b16 %v209
      %v731 = vunpack.c.l.b16 %v210
      %v732 = vunpack.c.l.b16 %v211
      %v733 = vunpack.c.l.b16 %v212
      %v734 = vunpack.c.l.b16 %v213
      %v735 = vunpack.c.l.b16 %v214
      %v736 = vunpack.c.l.b16 %v215
      %v737 = vunpack.c.l.b16 %v216
      %v738 = vunpack.c.l.b16 %v217
      %v739 = vunpack.c.l.b16 %v218
      %v740 = vunpack.c.l.b16 %v219
      %v741 = vunpack.c.l.b16 %v220
      %v742 = vunpack.c.l.b16 %v221
      %v743 = vunpack.c.l.b16 %v222
      %v744 = vunpack.c.l.b16 %v223
      %v745 = vunpack.c.l.b16 %v224
      %v746 = vunpack.c.l.b16 %v225
      %v747 = vunpack.c.l.b16 %v226
      %v748 = vunpack.c.l.b16 %v227
      %v749 = vunpack.c.l.b16 %v228
      %v750 = vunpack.c.l.b16 %v229
      %v751 = vunpack.c.l.b16 %v230
      %v752 = vunpack.c.l.b16 %v231
      %v753 = vunpack.c.l.b16 %v232
      %v754 = vunpack.c.l.b16 %v233
      %v755 = vunpack.c.l.b16 %v234
      %v756 = vunpack.c.l.b16 %v235
      %v757 = vunpack.c.l.b16 %v236
      %v758 = vunpack.c.l.b16 %v237
      %v759 = vunpack.c.l.b16 %v238
      %v760 = vunpack.c.l.b16 %v239
      %v761 = vunpack.c.l.b16 %v240
      %v762 = vunpack.c.l.b16 %v241
      %v763 = vunpack.c.l.b16 %v242
      %v764 = vunpack.c.l.b16 %v243
      %v765 = vunpack.c.l.b16 %v244
      %v766 = vunpack.c.l.b16 %v245
      %v767 = vunpack.c.l.b16 %v246
      %v768 = vunpack.c.l.b16 %v247
      %v769 = vunpack.c.l.b16 %v248
      %v770 = vunpack.c.l.b16 %v249
      %v771 = vunpack.c.l.b16 %v250
      %v772 = vunpack.c.l.b16 %v251
      %v773 = vunpack.c.l.b16 %v252
      %v774 = vunpack.c.l.b16 %v253
      %v775 = vunpack.c.l.b16 %v254
      %v776 = vunpack.c.l.b16 %v255
      %v777 = vunpack.c.l.b16 %v256
      %v778 = vunpack.c.l.b16 %v257
      %v779 = vunpack.c.l.b16 %v258
      %v780 = vunpack.c.l.b16 %v259
      %v781 = vunpack.c.l.b16 %v260
      %v782 = vunpack.c.l.b16 %v261
      %v783 = vunpack.c.l.b16 %v262
      %v784 = vunpack.c.l.b16 %v263
      %v785 = vunpack.c.l.b16 %v264
      %v786 = vunpack.c.l.b16 %v265
      %v787 = vunpack.c.l.b16 %v266
      %v788 = vunpack.c.l.b16 %v267
      %v789 = vunpack.c.l.b16 %v268
      %v790 = vunpack.c.l.b16 %v269
      %v791 = vunpack.c.l.b16 %v270
      %v792 = vunpack.c.l.b16 %v271
      %v793 = vunpack.c.l.b16 %v272
      %v794 = vunpack.c.l.b16 %v273
      %v795 = vunpack.c.l.b16 %v274
      %v796 = vunpack.c.l.b16 %v275
      %v797 = vunpack.c.l.b16 %v276
      %v798 = vunpack.c.l.b16 %v277
      %v799 = vunpack.c.l.b16 %v278
      %v800 = vunpack.c.l.b16 %v279
      %v801 = vunpack.c.l.b16 %v280
      %v802 = vunpack.c.l.b16 %v281
      %v803 = vunpack.c.l.b16 %v282
      %v804 = vunpack.c.l.b16 %v283
      %v805 = vunpack.c.l.b16 %v284
      %v806 = vunpack.c.l.b16 %v285
      %v807 = vunpack.c.l.b16 %v286
      %v808 = vunpack.c.l.b16 %v287
      %v809 = vunpack.c.l.b16 %v288
      %v810 = vunpack.c.l.b16 %v289
      %v811 = vunpack.c.l.b16 %v290
      %v812 = vunpack.c.l.b16 %v291
      %v813 = vunpack.c.l.b16 %v292
      %v814 = vunpack.c.l.b16 %v293
      %v815 = vunpack.c.l.b16 %v294
      %v816 = vunpack.c.l.b16 %v295
      %v817 = vunpack.c.l.b16 %v296
      %v818 = vunpack.c.l.b16 %v297
      %v819 = vunpack.c.l.b16 %v298
      %v820 = vunpack.c.l.b16 %v299
      %v821 = vunpack.c.l.b16 %v300
      %v822 = vunpack.c.l.b16 %v301
      %v823 = vunpack.c.l.b16 %v302
      %v824 = vunpack.c.l.b16 %v303
      %v825 = vunpack.c.l.b16 %v304
      %v826 = vunpack.c.l.b16 %v305
      %v827 = vunpack.c.l.b16 %v306
      %v828 = vunpack.c.l.b16 %v307
      %v829 = vunpack.c.l.b16 %v308
      %v830 = vunpack.c.l.b16 %v309
      %v831 = vunpack.c.l.b16 %v310
      %v832 = vunpack.c.l.b16 %v311
      %v833 = vunpack.c.l.b16 %v312
      %v834 = vunpack.c.l.b16 %v313
      %v835 = vunpack.c.l.b16 %v314
      %v836 = vunpack.c.l.b16 %v315
      %v837 = vunpack.c.l.b16 %v316
      %v838 = vunpack.c.l.b16 %v317
      %v839 = vunpack.c.l.b16 %v318
      %v840 = vunpack.c.l.b16 %v319
      %v841 = vunpack.c.l.b16 %v320
      %v842 = vunpack.c.l.b16 %v321
      %v843 = vunpack.c.l.b16 %v322
      %v844 = vunpack.c.l.b16 %v323
      %v845 = vunpack.c.l.b16 %v324
      %v846 = vunpack.c.l.b16 %v325
      %v847 = vunpack.c.l.b16 %v326
      %v848 = vunpack.c.l.b16 %v327
      %v849 = vunpack.c.l.b16 %v328
      %v850 = vunpack.c.l.b16 %v329
      %v851 = vunpack.c.l.b16 %v330
      %v852 = vunpack.c.l.b16 %v331
      %v853 = vunpack.c.l.b16 %v332
      %v854 = vunpack.c.l.b16 %v333
      %v855 = vunpack.c.l.b16 %v334
      %v856 = vunpack.c.l.b16 %v335
      %v857 = vunpack.c.l.b16 %v336
      %v858 = vunpack.c.l.b16 %v337
      %v859 = vunpack.c.l.b16 %v338
      %v860 = vunpack.c.l.b16 %v339
      %v861 = vunpack.c.l.b16 %v340
      %v862 = vunpack.c.l.b16 %v341
      %v863 = vunpack.c.l.b16 %v342
      %v864 = vunpack.c.l.b16 %v343
      %v865 = vunpack.c.l.b16 %v344
      %v866 = vunpack.c.l.b16 %v345
      %v867 = vunpack.c.l.b16 %v346
      %v868 = vunpack.c.l.b16 %v347
      %v869 = vunpack.c.l.b16 %v348
      %v870 = vunpack.c.l.b16 %v349
      %v871 = vunpack.c.l.b16 %v350
      %v872 = vunpack.c.l.b16 %v351
      %v873 = vunpack.c.l.b16 %v352
      %v874 = vunpack.c.l.b16 %v353
      %v875 = vunpack.c.l.b16 %v354
      %v876 = vunpack.c.l.b16 %v355
      %v877 = vunpack.c.l.b16 %v356
      %v878 = vunpack.c.l.b16 %v357
      %v879 = vunpack.c.l.b16 %v358
      %v880 = vunpack.c.l.b16 %v359
      %v881 = vunpack.c.l.b16 %v360
      %v882 = vunpack.c.l.b16 %v361
      %v883 = vunpack.c.l.b16 %v362
      %v884 = vunpack.c.l.b16 %v363
      %v885 = vunpack.c.l.b16 %v364
      %v886 = vunpack.c.l.b16 %v365
      %v887 = vunpack.c.l.b16 %v366
      %v888 = vunpack.c.l.b16 %v367
      %v889 = vunpack.c.l.b16 %v368
      %v890 = vunpack.c.l.b16 %v369
      %v891 = vunpack.c.l.b16 %v370
      %v892 = vunpack.c.l.b16 %v371
      %v893 = vunpack.c.l.b16 %v372
      %v894 = vunpack.c.l.b16 %v373
      %v895 = vunpack.c.l.b16 %v374
      %v896 = vunpack.c.l.b16 %v375
      %v897 = vunpack.c.l.b16 %v376
      %v898 = vunpack.c.l.b16 %v377
      %v899 = vunpack.c.l.b16 %v378
      %v900 = vunpack.c.l.b16 %v379
      %v901 = vunpack.c.l.b16 %v380
      %v902 = vunpack.c.l.b16 %v381
      %v903 = vunpack.c.l.b16 %v382
      %v904 = vunpack.c.l.b16 %v383
      %v905 = vunpack.c.l.b16 %v384
      %v906 = vunpack.c.l.b16 %v385
      %v907 = vunpack.c.l.b16 %v386
      %v908 = vunpack.c.l.b16 %v387
      %v909 = vunpack.c.l.b16 %v388
      %v910 = vunpack.c.l.b16 %v389
      %v911 = vunpack.c.l.b16 %v390
      %v912 = vunpack.c.l.b16 %v391
      %v913 = vunpack.c.l.b16 %v392
      %v914 = vunpack.c.l.b16 %v393
      %v915 = vunpack.c.l.b16 %v394
      %v916 = vunpack.c.l.b16 %v395
      %v917 = vunpack.c.l.b16 %v396
      %v918 = vunpack.c.l.b16 %v397
      %v919 = vunpack.c.l.b16 %v398
      %v920 = vunpack.c.l.b16 %v399
      %v921 = vunpack.c.l.b16 %v400
      %v922 = vunpack.c.l.b16 %v401
      %v923 = vunpack.c.l.b16 %v402
      %v924 = vunpack.c.l.b16 %v403
      %v925 = vpack.c.b16 %v670, %v669
      %v926 = vpack.c.b16 %v672, %v671
      %v927 = vpack.c.b16 %v674, %v673
      %v928 = vpack.c.b16 %v676, %v675
      %v929 = vpack.c.b16 %v678, %v677
      %v930 = vpack.c.b16 %v680, %v679
      %v931 = vpack.c.b16 %v682, %v681
      %v932 = vpack.c.b16 %v684, %v683
      %v933 = vpack.c.b16 %v686, %v685
      %v934 = vpack.c.b16 %v688, %v687
      %v935 = vpack.c.b16 %v690, %v689
      %v936 = vpack.c.b16 %v692, %v691
      %v937 = vpack.c.b16 %v694, %v693
      %v938 = vpack.c.b16 %v696, %v695
      %v939 = vpack.c.b16 %v698, %v697
      %v940 = vpack.c.b16 %v700, %v699
      %v941 = vpack.c.b16 %v702, %v701
      %v942 = vpack.c.b16 %v704, %v703
      %v943 = vpack.c.b16 %v706, %v705
      %v944 = vpack.c.b16 %v708, %v707
      %v945 = vpack.c.b16 %v710, %v709
      %v946 = vpack.c.b16 %v712, %v711
      %v947 = vpack.c.b16 %v714, %v713
      %v948 = vpack.c.b16 %v716, %v715
      %v949 = vpack.c.b16 %v718, %v717
      %v950 = vpack.c.b16 %v720, %v719
      %v951 = vpack.c.b16 %v722, %v721
      %v952 = vpack.c.b16 %v724, %v723
      %v953 = vpack.c.b16 %v726, %v725
      %v954 = vpack.c.b16 %v728, %v727
      %v955 = vpack.c.b16 %v730, %v729
      %v956 = vpack.c.b16 %v732, %v731
      %v957 = vpack.c.b16 %v734, %v733
      %v958 = vpack.c.b16 %v736, %v735
      %v959 = vpack.c.b16 %v738, %v737
      %v960 = vpack.c.b16 %v740, %v739
      %v961 = vpack.c.b16 %v742, %v741
      %v962 = vpack.c.b16 %v744, %v743
      %v963 = vpack.c.b16 %v746, %v745
      %v964 = vpack.c.b16 %v748, %v747
      %v965 = vpack.c.b16 %v750, %v749
      %v966 = vpack.c.b16 %v752, %v751
      %v967 = vpack.c.b16 %v754, %v753
      %v968 = vpack.c.b16 %v756, %v755
      %v969 = vpack.c.b16 %v758, %v757
      %v970 = vpack.c.b16 %v760, %v759
      %v971 = vpack.c.b16 %v762, %v761
      %v972 = vpack.c.b16 %v764, %v763
      %v973 = vpack.c.b16 %v766, %v765
      %v974 = vpack.c.b16 %v768, %v767
      %v975 = vpack.c.b16 %v770, %v769
      %v976 = vpack.c.b16 %v772, %v771
      %v977 = vpack.c.b16 %v774, %v773
      %v978 = vpack.c.b16 %v776, %v775
      %v979 = vpack.c.b16 %v778, %v777
      %v980 = vpack.c.b16 %v780, %v779
      %v981 = vpack.c.b16 %v782, %v781
      %v982 = vpack.c.b16 %v784, %v783
      %v983 = vpack.c.b16 %v786, %v785
      %v984 = vpack.c.b16 %v788, %v787
      %v985 = vpack.c.b16 %v790, %v789
      %v986 = vpack.c.b16 %v792, %v791
      %v987 = vpack.c.b16 %v794, %v793
      %v988 = vpack.c.b16 %v796, %v795
      %v989 = vpack.c.b16 %v798, %v797
      %v990 = vpack.c.b16 %v800, %v799
      %v991 = vpack.c.b16 %v802, %v801
      %v992 = vpack.c.b16 %v804, %v803
      %v993 = vpack.c.b16 %v806, %v805
      %v994 = vpack.c.b16 %v808, %v807
      %v995 = vpack.c.b16 %v810, %v809
      %v996 = vpack.c.b16 %v812, %v811
      %v997 = vpack.c.b16 %v814, %v813
      %v998 = vpack.c.b16 %v816, %v815
      %v999 = vpack.c.b16 %v818, %v817
      %v1000 = vpack.c.b16 %v820, %v819
      %v1001 = vpack.c.b16 %v822, %v821
      %v1002 = vpack.c.b16 %v824, %v823
      %v1003 = vpack.c.b16 %v826, %v825
      %v1004 = vpack.c.b16 %v828, %v827
      %v1005 = vpack.c.b16 %v830, %v829
      %v1006 = vpack.c.b16 %v832, %v831
      %v1007 = vpack.c.b16 %v834, %v833
      %v1008 = vpack.c.b16 %v836, %v835
      %v1009 = vpack.c.b16 %v838, %v837
      %v1010 = vpack.c.b16 %v840, %v839
      %v1011 = vpack.c.b16 %v842, %v841
      %v1012 = vpack.c.b16 %v844, %v843
      %v1013 = vpack.c.b16 %v846, %v845
      %v1014 = vpack.c.b16 %v848, %v847
      %v1015 = vpack.c.b16 %v850, %v849
      %v1016 = vpack.c.b16 %v852, %v851
      %v1017 = vpack.c.b16 %v854, %v853
      %v1018 = vpack.c.b16 %v856, %v855
      %v1019 = vpack.c.b16 %v858, %v857
      %v1020 = vpack.c.b16 %v860, %v859
      %v1021 = vpack.c.b16 %v862, %v861
      %v1022 = vpack.c.b16 %v864, %v863
      %v1023 = vpack.c.b16 %v866, %v865
      %v1024 = vpack.c.b16 %v868, %v867
      %v1025 = vpack.c.b16 %v870, %v869
      %v1026 = vpack.c.b16 %v872, %v871
      %v1027 = vpack.c.b16 %v874, %v873
      %v1028 = vpack.c.b16 %v876, %v875
      %v1029 = vpack.c.b16 %v878, %v877
      %v1030 = vpack.c.b16 %v880, %v879
      %v1031 = vpack.c.b16 %v882, %v881
      %v1032 = vpack.c.b16 %v884, %v883
      %v1033 = vpack.c.b16 %v886, %v885
      %v1034 = vpack.c.b16 %v888, %v887
      %v1035 = vpack.c.b16 %v890, %v889
      %v1036 = vpack.c.b16 %v892, %v891
      %v1037 = vpack.c.b16 %v894, %v893
      %v1038 = vpack.c.b16 %v896, %v895
      %v1039 = vpack.c.b16 %v898, %v897
      %v1040 = vpack.c.b16 %v900, %v899
      %v1041 = vpack.c.b16 %v902, %v901
      %v1042 = vpack.c.b16 %v904, %v903
      %v1043 = vpack.c.b16 %v906, %v905
      %v1044 = vpack.c.b16 %v908, %v907
      %v1045 = vpack.c.b16 %v910, %v909
      %v1046 = vpack.c.b16 %v912, %v911
      %v1047 = vpack.c.b16 %v914, %v913
      %v1048 = vpack.c.b16 %v916, %v915
      %v1049 = vpack.c.b16 %v918, %v917
      %v1050 = vpack.c.b16 %v920, %v919
      %v1051 = vpack.c.b16 %v922, %v921
      %v1052 = vpack.c.b16 %v924, %v923
      %v1062 = vunpack.c.l.b16 %v404
      %v1063 = vunpack.c.l.b16 %v405
      %v1064 = vunpack.c.l.b16 %v406
      %v1065 = vunpack.c.l.b16 %v407
      %v1066 = vunpack.c.l.b16 %v408
      %v1067 = vunpack.c.l.b16 %v409
      %v1068 = vunpack.c.l.b16 %v410
      %v1069 = vunpack.c.l.b16 %v411
      %v1070 = vunpack.c.l.b16 %v412
      %v1071 = vpack.c.b16 %v1063, %v1062
      %v1072 = vpack.c.b16 %v1065, %v1064
      %v1073 = vpack.c.b16 %v1067, %v1066
      %v1074 = vpack.c.b16 %v1069, %v1068
      %v1075 = vpack.c.b16 %v1070, %v1070
      %vm1080 = vcmask 588800
      %v1082 = vsel %vm1080, %v925, 0
      %v1085 = vsel %vm1080, %v926, 0
      %v1088 = vsel %vm1080, %v927, 0
      %v1091 = vsel %vm1080, %v928, 0
      %v1094 = vsel %vm1080, %v929, 0
      %v1097 = vsel %vm1080, %v930, 0
      %v1100 = vsel %vm1080, %v931, 0
      %v1103 = vsel %vm1080, %v932, 0
      %v1106 = vsel %vm1080, %v933, 0
      %v1109 = vsel %vm1080, %v934, 0
      %v1112 = vsel %vm1080, %v935, 0
      %v1115 = vsel %vm1080, %v936, 0
      %v1118 = vsel %vm1080, %v937, 0
      %v1121 = vsel %vm1080, %v938, 0
      %v1124 = vsel %vm1080, %v939, 0
      %v1127 = vsel %vm1080, %v940, 0
      %v1130 = vsel %vm1080, %v941, 0
      %v1133 = vsel %vm1080, %v942, 0
      %v1136 = vsel %vm1080, %v943, 0
      %v1139 = vsel %vm1080, %v944, 0
      %v1142 = vsel %vm1080, %v945, 0
      %v1145 = vsel %vm1080, %v946, 0
      %v1148 = vsel %vm1080, %v947, 0
      %v1151 = vsel %vm1080, %v948, 0
      %v1154 = vsel %vm1080, %v949, 0
      %v1157 = vsel %vm1080, %v950, 0
      %v1160 = vsel %vm1080, %v951, 0
      %v1163 = vsel %vm1080, %v952, 0
      %v1166 = vsel %vm1080, %v953, 0
      %v1169 = vsel %vm1080, %v954, 0
      %v1172 = vsel %vm1080, %v955, 0
      %v1175 = vsel %vm1080, %v956, 0
      %v1178 = vsel %vm1080, %v957, 0
      %v1181 = vsel %vm1080, %v958, 0
      %v1184 = vsel %vm1080, %v959, 0
      %v1187 = vsel %vm1080, %v960, 0
      %v1190 = vsel %vm1080, %v961, 0
      %v1193 = vsel %vm1080, %v962, 0
      %v1196 = vsel %vm1080, %v963, 0
      %v1199 = vsel %vm1080, %v964, 0
      %v1202 = vsel %vm1080, %v965, 0
      %v1205 = vsel %vm1080, %v966, 0
      %v1208 = vsel %vm1080, %v967, 0
      %v1211 = vsel %vm1080, %v968, 0
      %v1214 = vsel %vm1080, %v969, 0
      %v1217 = vsel %vm1080, %v970, 0
      %v1220 = vsel %vm1080, %v971, 0
      %v1223 = vsel %vm1080, %v972, 0
      %v1226 = vsel %vm1080, %v973, 0
      %v1229 = vsel %vm1080, %v974, 0
      %v1232 = vsel %vm1080, %v975, 0
      %v1235 = vsel %vm1080, %v976, 0
      %v1238 = vsel %vm1080, %v977, 0
      %v1241 = vsel %vm1080, %v978, 0
      %v1244 = vsel %vm1080, %v979, 0
      %v1247 = vsel %vm1080, %v980, 0
      %v1250 = vsel %vm1080, %v981, 0
      %v1253 = vsel %vm1080, %v982, 0
      %v1256 = vsel %vm1080, %v983, 0
      %v1259 = vsel %vm1080, %v984, 0
      %v1262 = vsel %vm1080, %v985, 0
      %v1265 = vsel %vm1080, %v986, 0
      %v1268 = vsel %vm1080, %v987, 0
      %v1271 = vsel %vm1080, %v988, 0
      %v1274 = vsel %vm1080, %v989, 0
      %v1277 = vsel %vm1080, %v990, 0
      %v1280 = vsel %vm1080, %v991, 0
      %v1283 = vsel %vm1080, %v992, 0
      %v1286 = vsel %vm1080, %v993, 0
      %v1289 = vsel %vm1080, %v994, 0
      %v1292 = vsel %vm1080, %v995, 0
      %v1295 = vsel %vm1080, %v996, 0
      %v1298 = vsel %vm1080, %v997, 0
      %v1301 = vsel %vm1080, %v998, 0
      %v1304 = vsel %vm1080, %v999, 0
      %v1307 = vsel %vm1080, %v1000, 0
      %v1310 = vsel %vm1080, %v1001, 0
      %v1313 = vsel %vm1080, %v1002, 0
      %v1316 = vsel %vm1080, %v1003, 0
      %v1319 = vsel %vm1080, %v1004, 0
      %v1322 = vsel %vm1080, %v1005, 0
      %v1325 = vsel %vm1080, %v1006, 0
      %v1328 = vsel %vm1080, %v1007, 0
      %v1331 = vsel %vm1080, %v1008, 0
      %v1334 = vsel %vm1080, %v1009, 0
      %v1337 = vsel %vm1080, %v1010, 0
      %v1340 = vsel %vm1080, %v1011, 0
      %v1343 = vsel %vm1080, %v1012, 0
      %v1346 = vsel %vm1080, %v1013, 0
      %v1349 = vsel %vm1080, %v1014, 0
      %v1352 = vsel %vm1080, %v1015, 0
      %v1355 = vsel %vm1080, %v1016, 0
      %v1358 = vsel %vm1080, %v1017, 0
      %v1361 = vsel %vm1080, %v1018, 0
      %v1364 = vsel %vm1080, %v1019, 0
      %v1367 = vsel %vm1080, %v1020, 0
      %v1370 = vsel %vm1080, %v1021, 0
      %v1373 = vsel %vm1080, %v1022, 0
      %v1376 = vsel %vm1080, %v1023, 0
      %v1379 = vsel %vm1080, %v1024, 0
      %v1382 = vsel %vm1080, %v1025, 0
      %v1385 = vsel %vm1080, %v1026, 0
      %v1388 = vsel %vm1080, %v1027, 0
      %v1391 = vsel %vm1080, %v1028, 0
      %v1394 = vsel %vm1080, %v1029, 0
      %v1397 = vsel %vm1080, %v1030, 0
      %v1400 = vsel %vm1080, %v1031, 0
      %v1403 = vsel %vm1080, %v1032, 0
      %v1406 = vsel %vm1080, %v1033, 0
      %v1409 = vsel %vm1080, %v1034, 0
      %v1412 = vsel %vm1080, %v1035, 0
      %v1415 = vsel %vm1080, %v1036, 0
      %v1418 = vsel %vm1080, %v1037, 0
      %v1421 = vsel %vm1080, %v1038, 0
      %v1424 = vsel %vm1080, %v1039, 0
      %v1427 = vsel %vm1080, %v1040, 0
      %v1430 = vsel %vm1080, %v1041, 0
      %v1433 = vsel %vm1080, %v1042, 0
      %v1436 = vsel %vm1080, %v1043, 0
      %v1439 = vsel %vm1080, %v1044, 0
      %v1442 = vsel %vm1080, %v1045, 0
      %v1445 = vsel %vm1080, %v1046, 0
      %v1448 = vsel %vm1080, %v1047, 0
      %v1451 = vsel %vm1080, %v1048, 0
      %v1454 = vsel %vm1080, %v1049, 0
      %v1457 = vsel %vm1080, %v1050, 0
      %v1460 = vsel %vm1080, %v1051, 0
      %v1463 = vsel %vm1080, %v1052, 0
      %vm1465 = vcmask 1043456
      %v1467 = vsel %vm1465, %v1075, 0
      %1469 = vmatprep.subr.bf16.mxu0 0
      %1470 = vmatpush1.bf16.msra.mxu0 0
      %1471 = vmatprep.subr.bf16.mxu0 0
      %1472 = vmatpush1.bf16.msra.mxu0 0
      %1473 = vmatprep.subr.bf16.mxu0 0
      %1474 = vmatpush1.bf16.msra.mxu0 0
      %1475 = vmatprep.subr.bf16.mxu0 0
      %1476 = vmatpush1.bf16.msra.mxu0 %v1467
      %1477 = vmatprep.subr.bf16.mxu0 0
      %1478 = vmatpush1.bf16.msra.mxu0 %v1074
      %1479 = vmatprep.subr.bf16.mxu0 0
      %1480 = vmatpush1.bf16.msra.mxu0 %v1073
      %1481 = vmatprep.subr.bf16.mxu0 0
      %1482 = vmatpush1.bf16.msra.mxu0 %v1072
      %1483 = vmatprep.subr.bf16.mxu0 0
      %1484 = vmatpush1.bf16.msra.mxu0 %v1071
      %1485 = vmatprep.subr.bf16.mxu0 0
      %1486 = vmatpush2.bf16.msra.mxu0 0
      %1487 = vmatprep.subr.bf16.mxu0 0
      %1488 = vmatpush2.bf16.msra.mxu0 0
      %1489 = vmatprep.subr.bf16.mxu0 0
      %1490 = vmatpush2.bf16.msra.mxu0 0
      %1491 = vmatprep.subr.bf16.mxu0 0
      %1492 = vmatpush2.bf16.msra.mxu0 0
      %1493 = vmatprep.subr.bf16.mxu0 0
      %1494 = vmatpush2.bf16.msra.mxu0 0
      %1495 = vmatprep.subr.bf16.mxu0 0
      %1496 = vmatpush2.bf16.msra.mxu0 0
      %1497 = vmatprep.subr.bf16.mxu0 0
      %1498 = vmatpush2.bf16.msra.mxu0 0
      %1499 = vmatprep.subr.bf16.mxu0 0
      %1500 = vmatpush2.bf16.msra.mxu0 0
      %1501 = vmatprep.mubr.bf16.mxu0 0
      %1502 = vmatmul.mubr.bf16.gmra.mxu0 %v1082
      %v1503 = vpop.f32.mrf.mxu0
      %v1504 = vadd.f32 0.0, %v1503
      %v1505 = vpop.f32.mrf.mxu0
      %v1506 = vpop.f32.mrf.mxu0
      %v1507 = vadd.f32 0.0, %v1506
      %v1508 = vpop.f32.mrf.mxu0
      %1509 = vmatprep.mubr.bf16.mxu0 0
      %1510 = vmatmul.mubr.bf16.gmra.mxu0 %v1085
      %v1511 = vpop.f32.mrf.mxu0
      %v1512 = vadd.f32 0.0, %v1511
      %v1513 = vpop.f32.mrf.mxu0
      %v1514 = vpop.f32.mrf.mxu0
      %v1515 = vadd.f32 0.0, %v1514
      %v1516 = vpop.f32.mrf.mxu0
      %1517 = vmatprep.mubr.bf16.mxu0 0
      %1518 = vmatmul.mubr.bf16.gmra.mxu0 %v1088
      %v1519 = vpop.f32.mrf.mxu0
      %v1520 = vadd.f32 0.0, %v1519
      %v1521 = vpop.f32.mrf.mxu0
      %v1522 = vpop.f32.mrf.mxu0
      %v1523 = vadd.f32 0.0, %v1522
      %v1524 = vpop.f32.mrf.mxu0
      %1525 = vmatprep.mubr.bf16.mxu0 0
      %1526 = vmatmul.mubr.bf16.gmra.mxu0 %v1091
      %v1527 = vpop.f32.mrf.mxu0
      %v1528 = vadd.f32 0.0, %v1527
      %v1529 = vpop.f32.mrf.mxu0
      %v1530 = vpop.f32.mrf.mxu0
      %v1531 = vadd.f32 0.0, %v1530
      %v1532 = vpop.f32.mrf.mxu0
      %1533 = vmatprep.mubr.bf16.mxu0 0
      %1534 = vmatmul.mubr.bf16.gmra.mxu0 %v1094
      %v1535 = vpop.f32.mrf.mxu0
      %v1536 = vadd.f32 0.0, %v1535
      %v1537 = vpop.f32.mrf.mxu0
      %v1538 = vpop.f32.mrf.mxu0
      %v1539 = vadd.f32 0.0, %v1538
      %v1540 = vpop.f32.mrf.mxu0
      %1541 = vmatprep.mubr.bf16.mxu0 0
      %1542 = vmatmul.mubr.bf16.gmra.mxu0 %v1097
      %v1543 = vpop.f32.mrf.mxu0
      %v1544 = vadd.f32 0.0, %v1543
      %v1545 = vpop.f32.mrf.mxu0
      %v1546 = vpop.f32.mrf.mxu0
      %v1547 = vadd.f32 0.0, %v1546
      %v1548 = vpop.f32.mrf.mxu0
      %1549 = vmatprep.mubr.bf16.mxu0 0
      %1550 = vmatmul.mubr.bf16.gmra.mxu0 %v1100
      %v1551 = vpop.f32.mrf.mxu0
      %v1552 = vadd.f32 0.0, %v1551
      %v1553 = vpop.f32.mrf.mxu0
      %v1554 = vpop.f32.mrf.mxu0
      %v1555 = vadd.f32 0.0, %v1554
      %v1556 = vpop.f32.mrf.mxu0
      %1557 = vmatprep.mubr.bf16.mxu0 0
      %1558 = vmatmul.mubr.bf16.gmra.mxu0 %v1103
      %v1559 = vpop.f32.mrf.mxu0
      %v1560 = vadd.f32 0.0, %v1559
      %v1561 = vpop.f32.mrf.mxu0
      %v1562 = vpop.f32.mrf.mxu0
      %v1563 = vadd.f32 0.0, %v1562
      %v1564 = vpop.f32.mrf.mxu0
      %1565 = vmatprep.mubr.bf16.mxu0 0
      %1566 = vmatmul.mubr.bf16.gmra.mxu0 %v1106
      %v1567 = vpop.f32.mrf.mxu0
      %v1568 = vadd.f32 0.0, %v1567
      %v1569 = vpop.f32.mrf.mxu0
      %v1570 = vpop.f32.mrf.mxu0
      %v1571 = vadd.f32 0.0, %v1570
      %v1572 = vpop.f32.mrf.mxu0
      %1573 = vmatprep.mubr.bf16.mxu0 0
      %1574 = vmatmul.mubr.bf16.gmra.mxu0 %v1109
      %v1575 = vpop.f32.mrf.mxu0
      %v1576 = vadd.f32 0.0, %v1575
      %v1577 = vpop.f32.mrf.mxu0
      %v1578 = vpop.f32.mrf.mxu0
      %v1579 = vadd.f32 0.0, %v1578
      %v1580 = vpop.f32.mrf.mxu0
      %1581 = vmatprep.mubr.bf16.mxu0 0
      %1582 = vmatmul.mubr.bf16.gmra.mxu0 %v1112
      %v1583 = vpop.f32.mrf.mxu0
      %v1584 = vadd.f32 0.0, %v1583
      %v1585 = vpop.f32.mrf.mxu0
      %v1586 = vpop.f32.mrf.mxu0
      %v1587 = vadd.f32 0.0, %v1586
      %v1588 = vpop.f32.mrf.mxu0
      %1589 = vmatprep.mubr.bf16.mxu0 0
      %1590 = vmatmul.mubr.bf16.gmra.mxu0 %v1115
      %v1591 = vpop.f32.mrf.mxu0
      %v1592 = vadd.f32 0.0, %v1591
      %v1593 = vpop.f32.mrf.mxu0
      %v1594 = vpop.f32.mrf.mxu0
      %v1595 = vadd.f32 0.0, %v1594
      %v1596 = vpop.f32.mrf.mxu0
      %1597 = vmatprep.mubr.bf16.mxu0 0
      %1598 = vmatmul.mubr.bf16.gmra.mxu0 %v1118
      %v1599 = vpop.f32.mrf.mxu0
      %v1600 = vadd.f32 0.0, %v1599
      %v1601 = vpop.f32.mrf.mxu0
      %v1602 = vpop.f32.mrf.mxu0
      %v1603 = vadd.f32 0.0, %v1602
      %v1604 = vpop.f32.mrf.mxu0
      %1605 = vmatprep.mubr.bf16.mxu0 0
      %1606 = vmatmul.mubr.bf16.gmra.mxu0 %v1121
      %v1607 = vpop.f32.mrf.mxu0
      %v1608 = vadd.f32 0.0, %v1607
      %v1609 = vpop.f32.mrf.mxu0
      %v1610 = vpop.f32.mrf.mxu0
      %v1611 = vadd.f32 0.0, %v1610
      %v1612 = vpop.f32.mrf.mxu0
      %1613 = vmatprep.mubr.bf16.mxu0 0
      %1614 = vmatmul.mubr.bf16.gmra.mxu0 %v1124
      %v1615 = vpop.f32.mrf.mxu0
      %v1616 = vadd.f32 0.0, %v1615
      %v1617 = vpop.f32.mrf.mxu0
      %v1618 = vpop.f32.mrf.mxu0
      %v1619 = vadd.f32 0.0, %v1618
      %v1620 = vpop.f32.mrf.mxu0
      %1621 = vmatprep.mubr.bf16.mxu0 0
      %1622 = vmatmul.mubr.bf16.gmra.mxu0 %v1127
      %v1623 = vpop.f32.mrf.mxu0
      %v1624 = vadd.f32 0.0, %v1623
      %v1625 = vpop.f32.mrf.mxu0
      %v1626 = vpop.f32.mrf.mxu0
      %v1627 = vadd.f32 0.0, %v1626
      %v1628 = vpop.f32.mrf.mxu0
      %1629 = vmatprep.mubr.bf16.mxu0 0
      %1630 = vmatmul.mubr.bf16.gmra.mxu0 %v1130
      %v1631 = vpop.f32.mrf.mxu0
      %v1632 = vadd.f32 0.0, %v1631
      %v1633 = vpop.f32.mrf.mxu0
      %v1634 = vpop.f32.mrf.mxu0
      %v1635 = vadd.f32 0.0, %v1634
      %v1636 = vpop.f32.mrf.mxu0
      %1637 = vmatprep.mubr.bf16.mxu0 0
      %1638 = vmatmul.mubr.bf16.gmra.mxu0 %v1133
      %v1639 = vpop.f32.mrf.mxu0
      %v1640 = vadd.f32 0.0, %v1639
      %v1641 = vpop.f32.mrf.mxu0
      %v1642 = vpop.f32.mrf.mxu0
      %v1643 = vadd.f32 0.0, %v1642
      %v1644 = vpop.f32.mrf.mxu0
      %1645 = vmatprep.mubr.bf16.mxu0 0
      %1646 = vmatmul.mubr.bf16.gmra.mxu0 %v1136
      %v1647 = vpop.f32.mrf.mxu0
      %v1648 = vadd.f32 0.0, %v1647
      %v1649 = vpop.f32.mrf.mxu0
      %v1650 = vpop.f32.mrf.mxu0
      %v1651 = vadd.f32 0.0, %v1650
      %v1652 = vpop.f32.mrf.mxu0
      %1653 = vmatprep.mubr.bf16.mxu0 0
      %1654 = vmatmul.mubr.bf16.gmra.mxu0 %v1139
      %v1655 = vpop.f32.mrf.mxu0
      %v1656 = vadd.f32 0.0, %v1655
      %v1657 = vpop.f32.mrf.mxu0
      %v1658 = vpop.f32.mrf.mxu0
      %v1659 = vadd.f32 0.0, %v1658
      %v1660 = vpop.f32.mrf.mxu0
      %1661 = vmatprep.mubr.bf16.mxu0 0
      %1662 = vmatmul.mubr.bf16.gmra.mxu0 %v1142
      %v1663 = vpop.f32.mrf.mxu0
      %v1664 = vadd.f32 0.0, %v1663
      %v1665 = vpop.f32.mrf.mxu0
      %v1666 = vpop.f32.mrf.mxu0
      %v1667 = vadd.f32 0.0, %v1666
      %v1668 = vpop.f32.mrf.mxu0
      %1669 = vmatprep.mubr.bf16.mxu0 0
      %1670 = vmatmul.mubr.bf16.gmra.mxu0 %v1145
      %v1671 = vpop.f32.mrf.mxu0
      %v1672 = vadd.f32 0.0, %v1671
      %v1673 = vpop.f32.mrf.mxu0
      %v1674 = vpop.f32.mrf.mxu0
      %v1675 = vadd.f32 0.0, %v1674
      %v1676 = vpop.f32.mrf.mxu0
      %1677 = vmatprep.mubr.bf16.mxu0 0
      %1678 = vmatmul.mubr.bf16.gmra.mxu0 %v1148
      %v1679 = vpop.f32.mrf.mxu0
      %v1680 = vadd.f32 0.0, %v1679
      %v1681 = vpop.f32.mrf.mxu0
      %v1682 = vpop.f32.mrf.mxu0
      %v1683 = vadd.f32 0.0, %v1682
      %v1684 = vpop.f32.mrf.mxu0
      %1685 = vmatprep.mubr.bf16.mxu0 0
      %1686 = vmatmul.mubr.bf16.gmra.mxu0 %v1151
      %v1687 = vpop.f32.mrf.mxu0
      %v1688 = vadd.f32 0.0, %v1687
      %v1689 = vpop.f32.mrf.mxu0
      %v1690 = vpop.f32.mrf.mxu0
      %v1691 = vadd.f32 0.0, %v1690
      %v1692 = vpop.f32.mrf.mxu0
      %1693 = vmatprep.mubr.bf16.mxu0 0
      %1694 = vmatmul.mubr.bf16.gmra.mxu0 %v1154
      %v1695 = vpop.f32.mrf.mxu0
      %v1696 = vadd.f32 0.0, %v1695
      %v1697 = vpop.f32.mrf.mxu0
      %v1698 = vpop.f32.mrf.mxu0
      %v1699 = vadd.f32 0.0, %v1698
      %v1700 = vpop.f32.mrf.mxu0
      %1701 = vmatprep.mubr.bf16.mxu0 0
      %1702 = vmatmul.mubr.bf16.gmra.mxu0 %v1157
      %v1703 = vpop.f32.mrf.mxu0
      %v1704 = vadd.f32 0.0, %v1703
      %v1705 = vpop.f32.mrf.mxu0
      %v1706 = vpop.f32.mrf.mxu0
      %v1707 = vadd.f32 0.0, %v1706
      %v1708 = vpop.f32.mrf.mxu0
      %1709 = vmatprep.mubr.bf16.mxu0 0
      %1710 = vmatmul.mubr.bf16.gmra.mxu0 %v1160
      %v1711 = vpop.f32.mrf.mxu0
      %v1712 = vadd.f32 0.0, %v1711
      %v1713 = vpop.f32.mrf.mxu0
      %v1714 = vpop.f32.mrf.mxu0
      %v1715 = vadd.f32 0.0, %v1714
      %v1716 = vpop.f32.mrf.mxu0
      %1717 = vmatprep.mubr.bf16.mxu0 0
      %1718 = vmatmul.mubr.bf16.gmra.mxu0 %v1163
      %v1719 = vpop.f32.mrf.mxu0
      %v1720 = vadd.f32 0.0, %v1719
      %v1721 = vpop.f32.mrf.mxu0
      %v1722 = vpop.f32.mrf.mxu0
      %v1723 = vadd.f32 0.0, %v1722
      %v1724 = vpop.f32.mrf.mxu0
      %1725 = vmatprep.mubr.bf16.mxu0 0
      %1726 = vmatmul.mubr.bf16.gmra.mxu0 %v1166
      %v1727 = vpop.f32.mrf.mxu0
      %v1728 = vadd.f32 0.0, %v1727
      %v1729 = vpop.f32.mrf.mxu0
      %v1730 = vpop.f32.mrf.mxu0
      %v1731 = vadd.f32 0.0, %v1730
      %v1732 = vpop.f32.mrf.mxu0
      %1733 = vmatprep.mubr.bf16.mxu0 0
      %1734 = vmatmul.mubr.bf16.gmra.mxu0 %v1169
      %v1735 = vpop.f32.mrf.mxu0
      %v1736 = vadd.f32 0.0, %v1735
      %v1737 = vpop.f32.mrf.mxu0
      %v1738 = vpop.f32.mrf.mxu0
      %v1739 = vadd.f32 0.0, %v1738
      %v1740 = vpop.f32.mrf.mxu0
      %1741 = vmatprep.mubr.bf16.mxu0 0
      %1742 = vmatmul.mubr.bf16.gmra.mxu0 %v1172
      %v1743 = vpop.f32.mrf.mxu0
      %v1744 = vadd.f32 0.0, %v1743
      %v1745 = vpop.f32.mrf.mxu0
      %v1746 = vpop.f32.mrf.mxu0
      %v1747 = vadd.f32 0.0, %v1746
      %v1748 = vpop.f32.mrf.mxu0
      %1749 = vmatprep.mubr.bf16.mxu0 0
      %1750 = vmatmul.mubr.bf16.gmra.mxu0 %v1175
      %v1751 = vpop.f32.mrf.mxu0
      %v1752 = vadd.f32 0.0, %v1751
      %v1753 = vpop.f32.mrf.mxu0
      %v1754 = vpop.f32.mrf.mxu0
      %v1755 = vadd.f32 0.0, %v1754
      %v1756 = vpop.f32.mrf.mxu0
      %1757 = vmatprep.mubr.bf16.mxu0 0
      %1758 = vmatmul.mubr.bf16.gmra.mxu0 %v1178
      %v1759 = vpop.f32.mrf.mxu0
      %v1760 = vadd.f32 0.0, %v1759
      %v1761 = vpop.f32.mrf.mxu0
      %v1762 = vpop.f32.mrf.mxu0
      %v1763 = vadd.f32 0.0, %v1762
      %v1764 = vpop.f32.mrf.mxu0
      %1765 = vmatprep.mubr.bf16.mxu0 0
      %1766 = vmatmul.mubr.bf16.gmra.mxu0 %v1181
      %v1767 = vpop.f32.mrf.mxu0
      %v1768 = vadd.f32 0.0, %v1767
      %v1769 = vpop.f32.mrf.mxu0
      %v1770 = vpop.f32.mrf.mxu0
      %v1771 = vadd.f32 0.0, %v1770
      %v1772 = vpop.f32.mrf.mxu0
      %1773 = vmatprep.mubr.bf16.mxu0 0
      %1774 = vmatmul.mubr.bf16.gmra.mxu0 %v1184
      %v1775 = vpop.f32.mrf.mxu0
      %v1776 = vadd.f32 0.0, %v1775
      %v1777 = vpop.f32.mrf.mxu0
      %v1778 = vpop.f32.mrf.mxu0
      %v1779 = vadd.f32 0.0, %v1778
      %v1780 = vpop.f32.mrf.mxu0
      %1781 = vmatprep.mubr.bf16.mxu0 0
      %1782 = vmatmul.mubr.bf16.gmra.mxu0 %v1187
      %v1783 = vpop.f32.mrf.mxu0
      %v1784 = vadd.f32 0.0, %v1783
      %v1785 = vpop.f32.mrf.mxu0
      %v1786 = vpop.f32.mrf.mxu0
      %v1787 = vadd.f32 0.0, %v1786
      %v1788 = vpop.f32.mrf.mxu0
      %1789 = vmatprep.mubr.bf16.mxu0 0
      %1790 = vmatmul.mubr.bf16.gmra.mxu0 %v1190
      %v1791 = vpop.f32.mrf.mxu0
      %v1792 = vadd.f32 0.0, %v1791
      %v1793 = vpop.f32.mrf.mxu0
      %v1794 = vpop.f32.mrf.mxu0
      %v1795 = vadd.f32 0.0, %v1794
      %v1796 = vpop.f32.mrf.mxu0
      %1797 = vmatprep.mubr.bf16.mxu0 0
      %1798 = vmatmul.mubr.bf16.gmra.mxu0 %v1193
      %v1799 = vpop.f32.mrf.mxu0
      %v1800 = vadd.f32 0.0, %v1799
      %v1801 = vpop.f32.mrf.mxu0
      %v1802 = vpop.f32.mrf.mxu0
      %v1803 = vadd.f32 0.0, %v1802
      %v1804 = vpop.f32.mrf.mxu0
      %1805 = vmatprep.mubr.bf16.mxu0 0
      %1806 = vmatmul.mubr.bf16.gmra.mxu0 %v1196
      %v1807 = vpop.f32.mrf.mxu0
      %v1808 = vadd.f32 0.0, %v1807
      %v1809 = vpop.f32.mrf.mxu0
      %v1810 = vpop.f32.mrf.mxu0
      %v1811 = vadd.f32 0.0, %v1810
      %v1812 = vpop.f32.mrf.mxu0
      %1813 = vmatprep.mubr.bf16.mxu0 0
      %1814 = vmatmul.mubr.bf16.gmra.mxu0 %v1199
      %v1815 = vpop.f32.mrf.mxu0
      %v1816 = vadd.f32 0.0, %v1815
      %v1817 = vpop.f32.mrf.mxu0
      %v1818 = vpop.f32.mrf.mxu0
      %v1819 = vadd.f32 0.0, %v1818
      %v1820 = vpop.f32.mrf.mxu0
      %1821 = vmatprep.mubr.bf16.mxu0 0
      %1822 = vmatmul.mubr.bf16.gmra.mxu0 %v1202
      %v1823 = vpop.f32.mrf.mxu0
      %v1824 = vadd.f32 0.0, %v1823
      %v1825 = vpop.f32.mrf.mxu0
      %v1826 = vpop.f32.mrf.mxu0
      %v1827 = vadd.f32 0.0, %v1826
      %v1828 = vpop.f32.mrf.mxu0
      %1829 = vmatprep.mubr.bf16.mxu0 0
      %1830 = vmatmul.mubr.bf16.gmra.mxu0 %v1205
      %v1831 = vpop.f32.mrf.mxu0
      %v1832 = vadd.f32 0.0, %v1831
      %v1833 = vpop.f32.mrf.mxu0
      %v1834 = vpop.f32.mrf.mxu0
      %v1835 = vadd.f32 0.0, %v1834
      %v1836 = vpop.f32.mrf.mxu0
      %1837 = vmatprep.mubr.bf16.mxu0 0
      %1838 = vmatmul.mubr.bf16.gmra.mxu0 %v1208
      %v1839 = vpop.f32.mrf.mxu0
      %v1840 = vadd.f32 0.0, %v1839
      %v1841 = vpop.f32.mrf.mxu0
      %v1842 = vpop.f32.mrf.mxu0
      %v1843 = vadd.f32 0.0, %v1842
      %v1844 = vpop.f32.mrf.mxu0
      %1845 = vmatprep.mubr.bf16.mxu0 0
      %1846 = vmatmul.mubr.bf16.gmra.mxu0 %v1211
      %v1847 = vpop.f32.mrf.mxu0
      %v1848 = vadd.f32 0.0, %v1847
      %v1849 = vpop.f32.mrf.mxu0
      %v1850 = vpop.f32.mrf.mxu0
      %v1851 = vadd.f32 0.0, %v1850
      %v1852 = vpop.f32.mrf.mxu0
      %1853 = vmatprep.mubr.bf16.mxu0 0
      %1854 = vmatmul.mubr.bf16.gmra.mxu0 %v1214
      %v1855 = vpop.f32.mrf.mxu0
      %v1856 = vadd.f32 0.0, %v1855
      %v1857 = vpop.f32.mrf.mxu0
      %v1858 = vpop.f32.mrf.mxu0
      %v1859 = vadd.f32 0.0, %v1858
      %v1860 = vpop.f32.mrf.mxu0
      %1861 = vmatprep.mubr.bf16.mxu0 0
      %1862 = vmatmul.mubr.bf16.gmra.mxu0 %v1217
      %v1863 = vpop.f32.mrf.mxu0
      %v1864 = vadd.f32 0.0, %v1863
      %v1865 = vpop.f32.mrf.mxu0
      %v1866 = vpop.f32.mrf.mxu0
      %v1867 = vadd.f32 0.0, %v1866
      %v1868 = vpop.f32.mrf.mxu0
      %1869 = vmatprep.mubr.bf16.mxu0 0
      %1870 = vmatmul.mubr.bf16.gmra.mxu0 %v1220
      %v1871 = vpop.f32.mrf.mxu0
      %v1872 = vadd.f32 0.0, %v1871
      %v1873 = vpop.f32.mrf.mxu0
      %v1874 = vpop.f32.mrf.mxu0
      %v1875 = vadd.f32 0.0, %v1874
      %v1876 = vpop.f32.mrf.mxu0
      %1877 = vmatprep.mubr.bf16.mxu0 0
      %1878 = vmatmul.mubr.bf16.gmra.mxu0 %v1223
      %v1879 = vpop.f32.mrf.mxu0
      %v1880 = vadd.f32 0.0, %v1879
      %v1881 = vpop.f32.mrf.mxu0
      %v1882 = vpop.f32.mrf.mxu0
      %v1883 = vadd.f32 0.0, %v1882
      %v1884 = vpop.f32.mrf.mxu0
      %1885 = vmatprep.mubr.bf16.mxu0 0
      %1886 = vmatmul.mubr.bf16.gmra.mxu0 %v1226
      %v1887 = vpop.f32.mrf.mxu0
      %v1888 = vadd.f32 0.0, %v1887
      %v1889 = vpop.f32.mrf.mxu0
      %v1890 = vpop.f32.mrf.mxu0
      %v1891 = vadd.f32 0.0, %v1890
      %v1892 = vpop.f32.mrf.mxu0
      %1893 = vmatprep.mubr.bf16.mxu0 0
      %1894 = vmatmul.mubr.bf16.gmra.mxu0 %v1229
      %v1895 = vpop.f32.mrf.mxu0
      %v1896 = vadd.f32 0.0, %v1895
      %v1897 = vpop.f32.mrf.mxu0
      %v1898 = vpop.f32.mrf.mxu0
      %v1899 = vadd.f32 0.0, %v1898
      %v1900 = vpop.f32.mrf.mxu0
      %1901 = vmatprep.mubr.bf16.mxu0 0
      %1902 = vmatmul.mubr.bf16.gmra.mxu0 %v1232
      %v1903 = vpop.f32.mrf.mxu0
      %v1904 = vadd.f32 0.0, %v1903
      %v1905 = vpop.f32.mrf.mxu0
      %v1906 = vpop.f32.mrf.mxu0
      %v1907 = vadd.f32 0.0, %v1906
      %v1908 = vpop.f32.mrf.mxu0
      %1909 = vmatprep.mubr.bf16.mxu0 0
      %1910 = vmatmul.mubr.bf16.gmra.mxu0 %v1235
      %v1911 = vpop.f32.mrf.mxu0
      %v1912 = vadd.f32 0.0, %v1911
      %v1913 = vpop.f32.mrf.mxu0
      %v1914 = vpop.f32.mrf.mxu0
      %v1915 = vadd.f32 0.0, %v1914
      %v1916 = vpop.f32.mrf.mxu0
      %1917 = vmatprep.mubr.bf16.mxu0 0
      %1918 = vmatmul.mubr.bf16.gmra.mxu0 %v1238
      %v1919 = vpop.f32.mrf.mxu0
      %v1920 = vadd.f32 0.0, %v1919
      %v1921 = vpop.f32.mrf.mxu0
      %v1922 = vpop.f32.mrf.mxu0
      %v1923 = vadd.f32 0.0, %v1922
      %v1924 = vpop.f32.mrf.mxu0
      %1925 = vmatprep.mubr.bf16.mxu0 0
      %1926 = vmatmul.mubr.bf16.gmra.mxu0 %v1241
      %v1927 = vpop.f32.mrf.mxu0
      %v1928 = vadd.f32 0.0, %v1927
      %v1929 = vpop.f32.mrf.mxu0
      %v1930 = vpop.f32.mrf.mxu0
      %v1931 = vadd.f32 0.0, %v1930
      %v1932 = vpop.f32.mrf.mxu0
      %1933 = vmatprep.mubr.bf16.mxu0 0
      %1934 = vmatmul.mubr.bf16.gmra.mxu0 %v1244
      %v1935 = vpop.f32.mrf.mxu0
      %v1936 = vadd.f32 0.0, %v1935
      %v1937 = vpop.f32.mrf.mxu0
      %v1938 = vpop.f32.mrf.mxu0
      %v1939 = vadd.f32 0.0, %v1938
      %v1940 = vpop.f32.mrf.mxu0
      %1941 = vmatprep.mubr.bf16.mxu0 0
      %1942 = vmatmul.mubr.bf16.gmra.mxu0 %v1247
      %v1943 = vpop.f32.mrf.mxu0
      %v1944 = vadd.f32 0.0, %v1943
      %v1945 = vpop.f32.mrf.mxu0
      %v1946 = vpop.f32.mrf.mxu0
      %v1947 = vadd.f32 0.0, %v1946
      %v1948 = vpop.f32.mrf.mxu0
      %1949 = vmatprep.mubr.bf16.mxu0 0
      %1950 = vmatmul.mubr.bf16.gmra.mxu0 %v1250
      %v1951 = vpop.f32.mrf.mxu0
      %v1952 = vadd.f32 0.0, %v1951
      %v1953 = vpop.f32.mrf.mxu0
      %v1954 = vpop.f32.mrf.mxu0
      %v1955 = vadd.f32 0.0, %v1954
      %v1956 = vpop.f32.mrf.mxu0
      %1957 = vmatprep.mubr.bf16.mxu0 0
      %1958 = vmatmul.mubr.bf16.gmra.mxu0 %v1253
      %v1959 = vpop.f32.mrf.mxu0
      %v1960 = vadd.f32 0.0, %v1959
      %v1961 = vpop.f32.mrf.mxu0
      %v1962 = vpop.f32.mrf.mxu0
      %v1963 = vadd.f32 0.0, %v1962
      %v1964 = vpop.f32.mrf.mxu0
      %1965 = vmatprep.mubr.bf16.mxu0 0
      %1966 = vmatmul.mubr.bf16.gmra.mxu0 %v1256
      %v1967 = vpop.f32.mrf.mxu0
      %v1968 = vadd.f32 0.0, %v1967
      %v1969 = vpop.f32.mrf.mxu0
      %v1970 = vpop.f32.mrf.mxu0
      %v1971 = vadd.f32 0.0, %v1970
      %v1972 = vpop.f32.mrf.mxu0
      %1973 = vmatprep.mubr.bf16.mxu0 0
      %1974 = vmatmul.mubr.bf16.gmra.mxu0 %v1259
      %v1975 = vpop.f32.mrf.mxu0
      %v1976 = vadd.f32 0.0, %v1975
      %v1977 = vpop.f32.mrf.mxu0
      %v1978 = vpop.f32.mrf.mxu0
      %v1979 = vadd.f32 0.0, %v1978
      %v1980 = vpop.f32.mrf.mxu0
      %1981 = vmatprep.mubr.bf16.mxu0 0
      %1982 = vmatmul.mubr.bf16.gmra.mxu0 %v1262
      %v1983 = vpop.f32.mrf.mxu0
      %v1984 = vadd.f32 0.0, %v1983
      %v1985 = vpop.f32.mrf.mxu0
      %v1986 = vpop.f32.mrf.mxu0
      %v1987 = vadd.f32 0.0, %v1986
      %v1988 = vpop.f32.mrf.mxu0
      %1989 = vmatprep.mubr.bf16.mxu0 0
      %1990 = vmatmul.mubr.bf16.gmra.mxu0 %v1265
      %v1991 = vpop.f32.mrf.mxu0
      %v1992 = vadd.f32 0.0, %v1991
      %v1993 = vpop.f32.mrf.mxu0
      %v1994 = vpop.f32.mrf.mxu0
      %v1995 = vadd.f32 0.0, %v1994
      %v1996 = vpop.f32.mrf.mxu0
      %1997 = vmatprep.mubr.bf16.mxu0 0
      %1998 = vmatmul.mubr.bf16.gmra.mxu0 %v1268
      %v1999 = vpop.f32.mrf.mxu0
      %v2000 = vadd.f32 0.0, %v1999
      %v2001 = vpop.f32.mrf.mxu0
      %v2002 = vpop.f32.mrf.mxu0
      %v2003 = vadd.f32 0.0, %v2002
      %v2004 = vpop.f32.mrf.mxu0
      %2005 = vmatprep.mubr.bf16.mxu0 0
      %2006 = vmatmul.mubr.bf16.gmra.mxu0 %v1271
      %v2007 = vpop.f32.mrf.mxu0
      %v2008 = vadd.f32 0.0, %v2007
      %v2009 = vpop.f32.mrf.mxu0
      %v2010 = vpop.f32.mrf.mxu0
      %v2011 = vadd.f32 0.0, %v2010
      %v2012 = vpop.f32.mrf.mxu0
      %2013 = vmatprep.mubr.bf16.mxu0 0
      %2014 = vmatmul.mubr.bf16.gmra.mxu0 %v1274
      %v2015 = vpop.f32.mrf.mxu0
      %v2016 = vadd.f32 0.0, %v2015
      %v2017 = vpop.f32.mrf.mxu0
      %v2018 = vpop.f32.mrf.mxu0
      %v2019 = vadd.f32 0.0, %v2018
      %v2020 = vpop.f32.mrf.mxu0
      %2021 = vmatprep.mubr.bf16.mxu0 0
      %2022 = vmatmul.mubr.bf16.gmra.mxu0 %v1277
      %v2023 = vpop.f32.mrf.mxu0
      %v2024 = vadd.f32 0.0, %v2023
      %v2025 = vpop.f32.mrf.mxu0
      %v2026 = vpop.f32.mrf.mxu0
      %v2027 = vadd.f32 0.0, %v2026
      %v2028 = vpop.f32.mrf.mxu0
      %2029 = vmatprep.mubr.bf16.mxu0 0
      %2030 = vmatmul.mubr.bf16.gmra.mxu0 %v1280
      %v2031 = vpop.f32.mrf.mxu0
      %v2032 = vadd.f32 0.0, %v2031
      %v2033 = vpop.f32.mrf.mxu0
      %v2034 = vpop.f32.mrf.mxu0
      %v2035 = vadd.f32 0.0, %v2034
      %v2036 = vpop.f32.mrf.mxu0
      %2037 = vmatprep.mubr.bf16.mxu0 0
      %2038 = vmatmul.mubr.bf16.gmra.mxu0 %v1283
      %v2039 = vpop.f32.mrf.mxu0
      %v2040 = vadd.f32 0.0, %v2039
      %v2041 = vpop.f32.mrf.mxu0
      %v2042 = vpop.f32.mrf.mxu0
      %v2043 = vadd.f32 0.0, %v2042
      %v2044 = vpop.f32.mrf.mxu0
      %2045 = vmatprep.mubr.bf16.mxu0 0
      %2046 = vmatmul.mubr.bf16.gmra.mxu0 %v1286
      %v2047 = vpop.f32.mrf.mxu0
      %v2048 = vadd.f32 0.0, %v2047
      %v2049 = vpop.f32.mrf.mxu0
      %v2050 = vpop.f32.mrf.mxu0
      %v2051 = vadd.f32 0.0, %v2050
      %v2052 = vpop.f32.mrf.mxu0
      %2053 = vmatprep.mubr.bf16.mxu0 0
      %2054 = vmatmul.mubr.bf16.gmra.mxu0 %v1289
      %v2055 = vpop.f32.mrf.mxu0
      %v2056 = vadd.f32 0.0, %v2055
      %v2057 = vpop.f32.mrf.mxu0
      %v2058 = vpop.f32.mrf.mxu0
      %v2059 = vadd.f32 0.0, %v2058
      %v2060 = vpop.f32.mrf.mxu0
      %2061 = vmatprep.mubr.bf16.mxu0 0
      %2062 = vmatmul.mubr.bf16.gmra.mxu0 %v1292
      %v2063 = vpop.f32.mrf.mxu0
      %v2064 = vadd.f32 0.0, %v2063
      %v2065 = vpop.f32.mrf.mxu0
      %v2066 = vpop.f32.mrf.mxu0
      %v2067 = vadd.f32 0.0, %v2066
      %v2068 = vpop.f32.mrf.mxu0
      %2069 = vmatprep.mubr.bf16.mxu0 0
      %2070 = vmatmul.mubr.bf16.gmra.mxu0 %v1295
      %v2071 = vpop.f32.mrf.mxu0
      %v2072 = vadd.f32 0.0, %v2071
      %v2073 = vpop.f32.mrf.mxu0
      %v2074 = vpop.f32.mrf.mxu0
      %v2075 = vadd.f32 0.0, %v2074
      %v2076 = vpop.f32.mrf.mxu0
      %2077 = vmatprep.mubr.bf16.mxu0 0
      %2078 = vmatmul.mubr.bf16.gmra.mxu0 %v1298
      %v2079 = vpop.f32.mrf.mxu0
      %v2080 = vadd.f32 0.0, %v2079
      %v2081 = vpop.f32.mrf.mxu0
      %v2082 = vpop.f32.mrf.mxu0
      %v2083 = vadd.f32 0.0, %v2082
      %v2084 = vpop.f32.mrf.mxu0
      %2085 = vmatprep.mubr.bf16.mxu0 0
      %2086 = vmatmul.mubr.bf16.gmra.mxu0 %v1301
      %v2087 = vpop.f32.mrf.mxu0
      %v2088 = vadd.f32 0.0, %v2087
      %v2089 = vpop.f32.mrf.mxu0
      %v2090 = vpop.f32.mrf.mxu0
      %v2091 = vadd.f32 0.0, %v2090
      %v2092 = vpop.f32.mrf.mxu0
      %2093 = vmatprep.mubr.bf16.mxu0 0
      %2094 = vmatmul.mubr.bf16.gmra.mxu0 %v1304
      %v2095 = vpop.f32.mrf.mxu0
      %v2096 = vadd.f32 0.0, %v2095
      %v2097 = vpop.f32.mrf.mxu0
      %v2098 = vpop.f32.mrf.mxu0
      %v2099 = vadd.f32 0.0, %v2098
      %v2100 = vpop.f32.mrf.mxu0
      %2101 = vmatprep.mubr.bf16.mxu0 0
      %2102 = vmatmul.mubr.bf16.gmra.mxu0 %v1307
      %v2103 = vpop.f32.mrf.mxu0
      %v2104 = vadd.f32 0.0, %v2103
      %v2105 = vpop.f32.mrf.mxu0
      %v2106 = vpop.f32.mrf.mxu0
      %v2107 = vadd.f32 0.0, %v2106
      %v2108 = vpop.f32.mrf.mxu0
      %2109 = vmatprep.mubr.bf16.mxu0 0
      %2110 = vmatmul.mubr.bf16.gmra.mxu0 %v1310
      %v2111 = vpop.f32.mrf.mxu0
      %v2112 = vadd.f32 0.0, %v2111
      %v2113 = vpop.f32.mrf.mxu0
      %v2114 = vpop.f32.mrf.mxu0
      %v2115 = vadd.f32 0.0, %v2114
      %v2116 = vpop.f32.mrf.mxu0
      %2117 = vmatprep.mubr.bf16.mxu0 0
      %2118 = vmatmul.mubr.bf16.gmra.mxu0 %v1313
      %v2119 = vpop.f32.mrf.mxu0
      %v2120 = vadd.f32 0.0, %v2119
      %v2121 = vpop.f32.mrf.mxu0
      %v2122 = vpop.f32.mrf.mxu0
      %v2123 = vadd.f32 0.0, %v2122
      %v2124 = vpop.f32.mrf.mxu0
      %2125 = vmatprep.mubr.bf16.mxu0 0
      %2126 = vmatmul.mubr.bf16.gmra.mxu0 %v1316
      %v2127 = vpop.f32.mrf.mxu0
      %v2128 = vadd.f32 0.0, %v2127
      %v2129 = vpop.f32.mrf.mxu0
      %v2130 = vpop.f32.mrf.mxu0
      %v2131 = vadd.f32 0.0, %v2130
      %v2132 = vpop.f32.mrf.mxu0
      %2133 = vmatprep.mubr.bf16.mxu0 0
      %2134 = vmatmul.mubr.bf16.gmra.mxu0 %v1319
      %v2135 = vpop.f32.mrf.mxu0
      %v2136 = vadd.f32 0.0, %v2135
      %v2137 = vpop.f32.mrf.mxu0
      %v2138 = vpop.f32.mrf.mxu0
      %v2139 = vadd.f32 0.0, %v2138
      %v2140 = vpop.f32.mrf.mxu0
      %2141 = vmatprep.mubr.bf16.mxu0 0
      %2142 = vmatmul.mubr.bf16.gmra.mxu0 %v1322
      %v2143 = vpop.f32.mrf.mxu0
      %v2144 = vadd.f32 0.0, %v2143
      %v2145 = vpop.f32.mrf.mxu0
      %v2146 = vpop.f32.mrf.mxu0
      %v2147 = vadd.f32 0.0, %v2146
      %v2148 = vpop.f32.mrf.mxu0
      %2149 = vmatprep.mubr.bf16.mxu0 0
      %2150 = vmatmul.mubr.bf16.gmra.mxu0 %v1325
      %v2151 = vpop.f32.mrf.mxu0
      %v2152 = vadd.f32 0.0, %v2151
      %v2153 = vpop.f32.mrf.mxu0
      %v2154 = vpop.f32.mrf.mxu0
      %v2155 = vadd.f32 0.0, %v2154
      %v2156 = vpop.f32.mrf.mxu0
      %2157 = vmatprep.mubr.bf16.mxu0 0
      %2158 = vmatmul.mubr.bf16.gmra.mxu0 %v1328
      %v2159 = vpop.f32.mrf.mxu0
      %v2160 = vadd.f32 0.0, %v2159
      %v2161 = vpop.f32.mrf.mxu0
      %v2162 = vpop.f32.mrf.mxu0
      %v2163 = vadd.f32 0.0, %v2162
      %v2164 = vpop.f32.mrf.mxu0
      %2165 = vmatprep.mubr.bf16.mxu0 0
      %2166 = vmatmul.mubr.bf16.gmra.mxu0 %v1331
      %v2167 = vpop.f32.mrf.mxu0
      %v2168 = vadd.f32 0.0, %v2167
      %v2169 = vpop.f32.mrf.mxu0
      %v2170 = vpop.f32.mrf.mxu0
      %v2171 = vadd.f32 0.0, %v2170
      %v2172 = vpop.f32.mrf.mxu0
      %2173 = vmatprep.mubr.bf16.mxu0 0
      %2174 = vmatmul.mubr.bf16.gmra.mxu0 %v1334
      %v2175 = vpop.f32.mrf.mxu0
      %v2176 = vadd.f32 0.0, %v2175
      %v2177 = vpop.f32.mrf.mxu0
      %v2178 = vpop.f32.mrf.mxu0
      %v2179 = vadd.f32 0.0, %v2178
      %v2180 = vpop.f32.mrf.mxu0
      %2181 = vmatprep.mubr.bf16.mxu0 0
      %2182 = vmatmul.mubr.bf16.gmra.mxu0 %v1337
      %v2183 = vpop.f32.mrf.mxu0
      %v2184 = vadd.f32 0.0, %v2183
      %v2185 = vpop.f32.mrf.mxu0
      %v2186 = vpop.f32.mrf.mxu0
      %v2187 = vadd.f32 0.0, %v2186
      %v2188 = vpop.f32.mrf.mxu0
      %2189 = vmatprep.mubr.bf16.mxu0 0
      %2190 = vmatmul.mubr.bf16.gmra.mxu0 %v1340
      %v2191 = vpop.f32.mrf.mxu0
      %v2192 = vadd.f32 0.0, %v2191
      %v2193 = vpop.f32.mrf.mxu0
      %v2194 = vpop.f32.mrf.mxu0
      %v2195 = vadd.f32 0.0, %v2194
      %v2196 = vpop.f32.mrf.mxu0
      %2197 = vmatprep.mubr.bf16.mxu0 0
      %2198 = vmatmul.mubr.bf16.gmra.mxu0 %v1343
      %v2199 = vpop.f32.mrf.mxu0
      %v2200 = vadd.f32 0.0, %v2199
      %v2201 = vpop.f32.mrf.mxu0
      %v2202 = vpop.f32.mrf.mxu0
      %v2203 = vadd.f32 0.0, %v2202
      %v2204 = vpop.f32.mrf.mxu0
      %2205 = vmatprep.mubr.bf16.mxu0 0
      %2206 = vmatmul.mubr.bf16.gmra.mxu0 %v1346
      %v2207 = vpop.f32.mrf.mxu0
      %v2208 = vadd.f32 0.0, %v2207
      %v2209 = vpop.f32.mrf.mxu0
      %v2210 = vpop.f32.mrf.mxu0
      %v2211 = vadd.f32 0.0, %v2210
      %v2212 = vpop.f32.mrf.mxu0
      %2213 = vmatprep.mubr.bf16.mxu0 0
      %2214 = vmatmul.mubr.bf16.gmra.mxu0 %v1349
      %v2215 = vpop.f32.mrf.mxu0
      %v2216 = vadd.f32 0.0, %v2215
      %v2217 = vpop.f32.mrf.mxu0
      %v2218 = vpop.f32.mrf.mxu0
      %v2219 = vadd.f32 0.0, %v2218
      %v2220 = vpop.f32.mrf.mxu0
      %2221 = vmatprep.mubr.bf16.mxu0 0
      %2222 = vmatmul.mubr.bf16.gmra.mxu0 %v1352
      %v2223 = vpop.f32.mrf.mxu0
      %v2224 = vadd.f32 0.0, %v2223
      %v2225 = vpop.f32.mrf.mxu0
      %v2226 = vpop.f32.mrf.mxu0
      %v2227 = vadd.f32 0.0, %v2226
      %v2228 = vpop.f32.mrf.mxu0
      %2229 = vmatprep.mubr.bf16.mxu0 0
      %2230 = vmatmul.mubr.bf16.gmra.mxu0 %v1355
      %v2231 = vpop.f32.mrf.mxu0
      %v2232 = vadd.f32 0.0, %v2231
      %v2233 = vpop.f32.mrf.mxu0
      %v2234 = vpop.f32.mrf.mxu0
      %v2235 = vadd.f32 0.0, %v2234
      %v2236 = vpop.f32.mrf.mxu0
      %2237 = vmatprep.mubr.bf16.mxu0 0
      %2238 = vmatmul.mubr.bf16.gmra.mxu0 %v1358
      %v2239 = vpop.f32.mrf.mxu0
      %v2240 = vadd.f32 0.0, %v2239
      %v2241 = vpop.f32.mrf.mxu0
      %v2242 = vpop.f32.mrf.mxu0
      %v2243 = vadd.f32 0.0, %v2242
      %v2244 = vpop.f32.mrf.mxu0
      %2245 = vmatprep.mubr.bf16.mxu0 0
      %2246 = vmatmul.mubr.bf16.gmra.mxu0 %v1361
      %v2247 = vpop.f32.mrf.mxu0
      %v2248 = vadd.f32 0.0, %v2247
      %v2249 = vpop.f32.mrf.mxu0
      %v2250 = vpop.f32.mrf.mxu0
      %v2251 = vadd.f32 0.0, %v2250
      %v2252 = vpop.f32.mrf.mxu0
      %2253 = vmatprep.mubr.bf16.mxu0 0
      %2254 = vmatmul.mubr.bf16.gmra.mxu0 %v1364
      %v2255 = vpop.f32.mrf.mxu0
      %v2256 = vadd.f32 0.0, %v2255
      %v2257 = vpop.f32.mrf.mxu0
      %v2258 = vpop.f32.mrf.mxu0
      %v2259 = vadd.f32 0.0, %v2258
      %v2260 = vpop.f32.mrf.mxu0
      %2261 = vmatprep.mubr.bf16.mxu0 0
      %2262 = vmatmul.mubr.bf16.gmra.mxu0 %v1367
      %v2263 = vpop.f32.mrf.mxu0
      %v2264 = vadd.f32 0.0, %v2263
      %v2265 = vpop.f32.mrf.mxu0
      %v2266 = vpop.f32.mrf.mxu0
      %v2267 = vadd.f32 0.0, %v2266
      %v2268 = vpop.f32.mrf.mxu0
      %2269 = vmatprep.mubr.bf16.mxu0 0
      %2270 = vmatmul.mubr.bf16.gmra.mxu0 %v1370
      %v2271 = vpop.f32.mrf.mxu0
      %v2272 = vadd.f32 0.0, %v2271
      %v2273 = vpop.f32.mrf.mxu0
      %v2274 = vpop.f32.mrf.mxu0
      %v2275 = vadd.f32 0.0, %v2274
      %v2276 = vpop.f32.mrf.mxu0
      %2277 = vmatprep.mubr.bf16.mxu0 0
      %2278 = vmatmul.mubr.bf16.gmra.mxu0 %v1373
      %v2279 = vpop.f32.mrf.mxu0
      %v2280 = vadd.f32 0.0, %v2279
      %v2281 = vpop.f32.mrf.mxu0
      %v2282 = vpop.f32.mrf.mxu0
      %v2283 = vadd.f32 0.0, %v2282
      %v2284 = vpop.f32.mrf.mxu0
      %2285 = vmatprep.mubr.bf16.mxu0 0
      %2286 = vmatmul.mubr.bf16.gmra.mxu0 %v1376
      %v2287 = vpop.f32.mrf.mxu0
      %v2288 = vadd.f32 0.0, %v2287
      %v2289 = vpop.f32.mrf.mxu0
      %v2290 = vpop.f32.mrf.mxu0
      %v2291 = vadd.f32 0.0, %v2290
      %v2292 = vpop.f32.mrf.mxu0
      %2293 = vmatprep.mubr.bf16.mxu0 0
      %2294 = vmatmul.mubr.bf16.gmra.mxu0 %v1379
      %v2295 = vpop.f32.mrf.mxu0
      %v2296 = vadd.f32 0.0, %v2295
      %v2297 = vpop.f32.mrf.mxu0
      %v2298 = vpop.f32.mrf.mxu0
      %v2299 = vadd.f32 0.0, %v2298
      %v2300 = vpop.f32.mrf.mxu0
      %2301 = vmatprep.mubr.bf16.mxu0 0
      %2302 = vmatmul.mubr.bf16.gmra.mxu0 %v1382
      %v2303 = vpop.f32.mrf.mxu0
      %v2304 = vadd.f32 0.0, %v2303
      %v2305 = vpop.f32.mrf.mxu0
      %v2306 = vpop.f32.mrf.mxu0
      %v2307 = vadd.f32 0.0, %v2306
      %v2308 = vpop.f32.mrf.mxu0
      %2309 = vmatprep.mubr.bf16.mxu0 0
      %2310 = vmatmul.mubr.bf16.gmra.mxu0 %v1385
      %v2311 = vpop.f32.mrf.mxu0
      %v2312 = vadd.f32 0.0, %v2311
      %v2313 = vpop.f32.mrf.mxu0
      %v2314 = vpop.f32.mrf.mxu0
      %v2315 = vadd.f32 0.0, %v2314
      %v2316 = vpop.f32.mrf.mxu0
      %2317 = vmatprep.mubr.bf16.mxu0 0
      %2318 = vmatmul.mubr.bf16.gmra.mxu0 %v1388
      %v2319 = vpop.f32.mrf.mxu0
      %v2320 = vadd.f32 0.0, %v2319
      %v2321 = vpop.f32.mrf.mxu0
      %v2322 = vpop.f32.mrf.mxu0
      %v2323 = vadd.f32 0.0, %v2322
      %v2324 = vpop.f32.mrf.mxu0
      %2325 = vmatprep.mubr.bf16.mxu0 0
      %2326 = vmatmul.mubr.bf16.gmra.mxu0 %v1391
      %v2327 = vpop.f32.mrf.mxu0
      %v2328 = vadd.f32 0.0, %v2327
      %v2329 = vpop.f32.mrf.mxu0
      %v2330 = vpop.f32.mrf.mxu0
      %v2331 = vadd.f32 0.0, %v2330
      %v2332 = vpop.f32.mrf.mxu0
      %2333 = vmatprep.mubr.bf16.mxu0 0
      %2334 = vmatmul.mubr.bf16.gmra.mxu0 %v1394
      %v2335 = vpop.f32.mrf.mxu0
      %v2336 = vadd.f32 0.0, %v2335
      %v2337 = vpop.f32.mrf.mxu0
      %v2338 = vpop.f32.mrf.mxu0
      %v2339 = vadd.f32 0.0, %v2338
      %v2340 = vpop.f32.mrf.mxu0
      %2341 = vmatprep.mubr.bf16.mxu0 0
      %2342 = vmatmul.mubr.bf16.gmra.mxu0 %v1397
      %v2343 = vpop.f32.mrf.mxu0
      %v2344 = vadd.f32 0.0, %v2343
      %v2345 = vpop.f32.mrf.mxu0
      %v2346 = vpop.f32.mrf.mxu0
      %v2347 = vadd.f32 0.0, %v2346
      %v2348 = vpop.f32.mrf.mxu0
      %2349 = vmatprep.mubr.bf16.mxu0 0
      %2350 = vmatmul.mubr.bf16.gmra.mxu0 %v1400
      %v2351 = vpop.f32.mrf.mxu0
      %v2352 = vadd.f32 0.0, %v2351
      %v2353 = vpop.f32.mrf.mxu0
      %v2354 = vpop.f32.mrf.mxu0
      %v2355 = vadd.f32 0.0, %v2354
      %v2356 = vpop.f32.mrf.mxu0
      %2357 = vmatprep.mubr.bf16.mxu0 0
      %2358 = vmatmul.mubr.bf16.gmra.mxu0 %v1403
      %v2359 = vpop.f32.mrf.mxu0
      %v2360 = vadd.f32 0.0, %v2359
      %v2361 = vpop.f32.mrf.mxu0
      %v2362 = vpop.f32.mrf.mxu0
      %v2363 = vadd.f32 0.0, %v2362
      %v2364 = vpop.f32.mrf.mxu0
      %2365 = vmatprep.mubr.bf16.mxu0 0
      %2366 = vmatmul.mubr.bf16.gmra.mxu0 %v1406
      %v2367 = vpop.f32.mrf.mxu0
      %v2368 = vadd.f32 0.0, %v2367
      %v2369 = vpop.f32.mrf.mxu0
      %v2370 = vpop.f32.mrf.mxu0
      %v2371 = vadd.f32 0.0, %v2370
      %v2372 = vpop.f32.mrf.mxu0
      %2373 = vmatprep.mubr.bf16.mxu0 0
      %2374 = vmatmul.mubr.bf16.gmra.mxu0 %v1409
      %v2375 = vpop.f32.mrf.mxu0
      %v2376 = vadd.f32 0.0, %v2375
      %v2377 = vpop.f32.mrf.mxu0
      %v2378 = vpop.f32.mrf.mxu0
      %v2379 = vadd.f32 0.0, %v2378
      %v2380 = vpop.f32.mrf.mxu0
      %2381 = vmatprep.mubr.bf16.mxu0 0
      %2382 = vmatmul.mubr.bf16.gmra.mxu0 %v1412
      %v2383 = vpop.f32.mrf.mxu0
      %v2384 = vadd.f32 0.0, %v2383
      %v2385 = vpop.f32.mrf.mxu0
      %v2386 = vpop.f32.mrf.mxu0
      %v2387 = vadd.f32 0.0, %v2386
      %v2388 = vpop.f32.mrf.mxu0
      %2389 = vmatprep.mubr.bf16.mxu0 0
      %2390 = vmatmul.mubr.bf16.gmra.mxu0 %v1415
      %v2391 = vpop.f32.mrf.mxu0
      %v2392 = vadd.f32 0.0, %v2391
      %v2393 = vpop.f32.mrf.mxu0
      %v2394 = vpop.f32.mrf.mxu0
      %v2395 = vadd.f32 0.0, %v2394
      %v2396 = vpop.f32.mrf.mxu0
      %2397 = vmatprep.mubr.bf16.mxu0 0
      %2398 = vmatmul.mubr.bf16.gmra.mxu0 %v1418
      %v2399 = vpop.f32.mrf.mxu0
      %v2400 = vadd.f32 0.0, %v2399
      %v2401 = vpop.f32.mrf.mxu0
      %v2402 = vpop.f32.mrf.mxu0
      %v2403 = vadd.f32 0.0, %v2402
      %v2404 = vpop.f32.mrf.mxu0
      %2405 = vmatprep.mubr.bf16.mxu0 0
      %2406 = vmatmul.mubr.bf16.gmra.mxu0 %v1421
      %v2407 = vpop.f32.mrf.mxu0
      %v2408 = vadd.f32 0.0, %v2407
      %v2409 = vpop.f32.mrf.mxu0
      %v2410 = vpop.f32.mrf.mxu0
      %v2411 = vadd.f32 0.0, %v2410
      %v2412 = vpop.f32.mrf.mxu0
      %2413 = vmatprep.mubr.bf16.mxu0 0
      %2414 = vmatmul.mubr.bf16.gmra.mxu0 %v1424
      %v2415 = vpop.f32.mrf.mxu0
      %v2416 = vadd.f32 0.0, %v2415
      %v2417 = vpop.f32.mrf.mxu0
      %v2418 = vpop.f32.mrf.mxu0
      %v2419 = vadd.f32 0.0, %v2418
      %v2420 = vpop.f32.mrf.mxu0
      %2421 = vmatprep.mubr.bf16.mxu0 0
      %2422 = vmatmul.mubr.bf16.gmra.mxu0 %v1427
      %v2423 = vpop.f32.mrf.mxu0
      %v2424 = vadd.f32 0.0, %v2423
      %v2425 = vpop.f32.mrf.mxu0
      %v2426 = vpop.f32.mrf.mxu0
      %v2427 = vadd.f32 0.0, %v2426
      %v2428 = vpop.f32.mrf.mxu0
      %2429 = vmatprep.mubr.bf16.mxu0 0
      %2430 = vmatmul.mubr.bf16.gmra.mxu0 %v1430
      %v2431 = vpop.f32.mrf.mxu0
      %v2432 = vadd.f32 0.0, %v2431
      %v2433 = vpop.f32.mrf.mxu0
      %v2434 = vpop.f32.mrf.mxu0
      %v2435 = vadd.f32 0.0, %v2434
      %v2436 = vpop.f32.mrf.mxu0
      %2437 = vmatprep.mubr.bf16.mxu0 0
      %2438 = vmatmul.mubr.bf16.gmra.mxu0 %v1433
      %v2439 = vpop.f32.mrf.mxu0
      %v2440 = vadd.f32 0.0, %v2439
      %v2441 = vpop.f32.mrf.mxu0
      %v2442 = vpop.f32.mrf.mxu0
      %v2443 = vadd.f32 0.0, %v2442
      %v2444 = vpop.f32.mrf.mxu0
      %2445 = vmatprep.mubr.bf16.mxu0 0
      %2446 = vmatmul.mubr.bf16.gmra.mxu0 %v1436
      %v2447 = vpop.f32.mrf.mxu0
      %v2448 = vadd.f32 0.0, %v2447
      %v2449 = vpop.f32.mrf.mxu0
      %v2450 = vpop.f32.mrf.mxu0
      %v2451 = vadd.f32 0.0, %v2450
      %v2452 = vpop.f32.mrf.mxu0
      %2453 = vmatprep.mubr.bf16.mxu0 0
      %2454 = vmatmul.mubr.bf16.gmra.mxu0 %v1439
      %v2455 = vpop.f32.mrf.mxu0
      %v2456 = vadd.f32 0.0, %v2455
      %v2457 = vpop.f32.mrf.mxu0
      %v2458 = vpop.f32.mrf.mxu0
      %v2459 = vadd.f32 0.0, %v2458
      %v2460 = vpop.f32.mrf.mxu0
      %2461 = vmatprep.mubr.bf16.mxu0 0
      %2462 = vmatmul.mubr.bf16.gmra.mxu0 %v1442
      %v2463 = vpop.f32.mrf.mxu0
      %v2464 = vadd.f32 0.0, %v2463
      %v2465 = vpop.f32.mrf.mxu0
      %v2466 = vpop.f32.mrf.mxu0
      %v2467 = vadd.f32 0.0, %v2466
      %v2468 = vpop.f32.mrf.mxu0
      %2469 = vmatprep.mubr.bf16.mxu0 0
      %2470 = vmatmul.mubr.bf16.gmra.mxu0 %v1445
      %v2471 = vpop.f32.mrf.mxu0
      %v2472 = vadd.f32 0.0, %v2471
      %v2473 = vpop.f32.mrf.mxu0
      %v2474 = vpop.f32.mrf.mxu0
      %v2475 = vadd.f32 0.0, %v2474
      %v2476 = vpop.f32.mrf.mxu0
      %2477 = vmatprep.mubr.bf16.mxu0 0
      %2478 = vmatmul.mubr.bf16.gmra.mxu0 %v1448
      %v2479 = vpop.f32.mrf.mxu0
      %v2480 = vadd.f32 0.0, %v2479
      %v2481 = vpop.f32.mrf.mxu0
      %v2482 = vpop.f32.mrf.mxu0
      %v2483 = vadd.f32 0.0, %v2482
      %v2484 = vpop.f32.mrf.mxu0
      %2485 = vmatprep.mubr.bf16.mxu0 0
      %2486 = vmatmul.mubr.bf16.gmra.mxu0 %v1451
      %v2487 = vpop.f32.mrf.mxu0
      %v2488 = vadd.f32 0.0, %v2487
      %v2489 = vpop.f32.mrf.mxu0
      %v2490 = vpop.f32.mrf.mxu0
      %v2491 = vadd.f32 0.0, %v2490
      %v2492 = vpop.f32.mrf.mxu0
      %2493 = vmatprep.mubr.bf16.mxu0 0
      %2494 = vmatmul.mubr.bf16.gmra.mxu0 %v1454
      %v2495 = vpop.f32.mrf.mxu0
      %v2496 = vadd.f32 0.0, %v2495
      %v2497 = vpop.f32.mrf.mxu0
      %v2498 = vpop.f32.mrf.mxu0
      %v2499 = vadd.f32 0.0, %v2498
      %v2500 = vpop.f32.mrf.mxu0
      %2501 = vmatprep.mubr.bf16.mxu0 0
      %2502 = vmatmul.mubr.bf16.gmra.mxu0 %v1457
      %v2503 = vpop.f32.mrf.mxu0
      %v2504 = vadd.f32 0.0, %v2503
      %v2505 = vpop.f32.mrf.mxu0
      %v2506 = vpop.f32.mrf.mxu0
      %v2507 = vadd.f32 0.0, %v2506
      %v2508 = vpop.f32.mrf.mxu0
      %2509 = vmatprep.mubr.bf16.mxu0 0
      %2510 = vmatmul.mubr.bf16.gmra.mxu0 %v1460
      %v2511 = vpop.f32.mrf.mxu0
      %v2512 = vadd.f32 0.0, %v2511
      %v2513 = vpop.f32.mrf.mxu0
      %v2514 = vpop.f32.mrf.mxu0
      %v2515 = vadd.f32 0.0, %v2514
      %v2516 = vpop.f32.mrf.mxu0
      %2517 = vmatprep.mubr.bf16.mxu0 0
      %2518 = vmatmul.mubr.bf16.gmra.mxu0 %v1463
      %v2519 = vpop.f32.mrf.mxu0
      %v2520 = vadd.f32 0.0, %v2519
      %v2521 = vpop.f32.mrf.mxu0
      %v2522 = vpop.f32.mrf.mxu0
      %v2523 = vadd.f32 0.0, %v2522
      %v2524 = vpop.f32.mrf.mxu0
      %2525 = vdwg.mxu0
      %v2526 = vtanh.pop %v1504
      %v2527 = vtanh.pop %v1507
      %v2528 = vtanh.pop %v1512
      %v2529 = vtanh.pop %v1515
      %v2530 = vtanh.pop %v1520
      %v2531 = vtanh.pop %v1523
      %v2532 = vtanh.pop %v1528
      %v2533 = vtanh.pop %v1531
      %v2534 = vtanh.pop %v1536
      %v2535 = vtanh.pop %v1539
      %v2536 = vtanh.pop %v1544
      %v2537 = vtanh.pop %v1547
      %v2538 = vtanh.pop %v1552
      %v2539 = vtanh.pop %v1555
      %v2540 = vtanh.pop %v1560
      %v2541 = vtanh.pop %v1563
      %v2542 = vtanh.pop %v1568
      %v2543 = vtanh.pop %v1571
      %v2544 = vtanh.pop %v1576
      %v2545 = vtanh.pop %v1579
      %v2546 = vtanh.pop %v1584
      %v2547 = vtanh.pop %v1587
      %v2548 = vtanh.pop %v1592
      %v2549 = vtanh.pop %v1595
      %v2550 = vtanh.pop %v1600
      %v2551 = vtanh.pop %v1603
      %v2552 = vtanh.pop %v1608
      %v2553 = vtanh.pop %v1611
      %v2554 = vtanh.pop %v1616
      %v2555 = vtanh.pop %v1619
      %v2556 = vtanh.pop %v1624
      %v2557 = vtanh.pop %v1627
      %v2558 = vtanh.pop %v1632
      %v2559 = vtanh.pop %v1635
      %v2560 = vtanh.pop %v1640
      %v2561 = vtanh.pop %v1643
      %v2562 = vtanh.pop %v1648
      %v2563 = vtanh.pop %v1651
      %v2564 = vtanh.pop %v1656
      %v2565 = vtanh.pop %v1659
      %v2566 = vtanh.pop %v1664
      %v2567 = vtanh.pop %v1667
      %v2568 = vtanh.pop %v1672
      %v2569 = vtanh.pop %v1675
      %v2570 = vtanh.pop %v1680
      %v2571 = vtanh.pop %v1683
      %v2572 = vtanh.pop %v1688
      %v2573 = vtanh.pop %v1691
      %v2574 = vtanh.pop %v1696
      %v2575 = vtanh.pop %v1699
      %v2576 = vtanh.pop %v1704
      %v2577 = vtanh.pop %v1707
      %v2578 = vtanh.pop %v1712
      %v2579 = vtanh.pop %v1715
      %v2580 = vtanh.pop %v1720
      %v2581 = vtanh.pop %v1723
      %v2582 = vtanh.pop %v1728
      %v2583 = vtanh.pop %v1731
      %v2584 = vtanh.pop %v1736
      %v2585 = vtanh.pop %v1739
      %v2586 = vtanh.pop %v1744
      %v2587 = vtanh.pop %v1747
      %v2588 = vtanh.pop %v1752
      %v2589 = vtanh.pop %v1755
      %v2590 = vtanh.pop %v1760
      %v2591 = vtanh.pop %v1763
      %v2592 = vtanh.pop %v1768
      %v2593 = vtanh.pop %v1771
      %v2594 = vtanh.pop %v1776
      %v2595 = vtanh.pop %v1779
      %v2596 = vtanh.pop %v1784
      %v2597 = vtanh.pop %v1787
      %v2598 = vtanh.pop %v1792
      %v2599 = vtanh.pop %v1795
      %v2600 = vtanh.pop %v1800
      %v2601 = vtanh.pop %v1803
      %v2602 = vtanh.pop %v1808
      %v2603 = vtanh.pop %v1811
      %v2604 = vtanh.pop %v1816
      %v2605 = vtanh.pop %v1819
      %v2606 = vtanh.pop %v1824
      %v2607 = vtanh.pop %v1827
      %v2608 = vtanh.pop %v1832
      %v2609 = vtanh.pop %v1835
      %v2610 = vtanh.pop %v1840
      %v2611 = vtanh.pop %v1843
      %v2612 = vtanh.pop %v1848
      %v2613 = vtanh.pop %v1851
      %v2614 = vtanh.pop %v1856
      %v2615 = vtanh.pop %v1859
      %v2616 = vtanh.pop %v1864
      %v2617 = vtanh.pop %v1867
      %v2618 = vtanh.pop %v1872
      %v2619 = vtanh.pop %v1875
      %v2620 = vtanh.pop %v1880
      %v2621 = vtanh.pop %v1883
      %v2622 = vtanh.pop %v1888
      %v2623 = vtanh.pop %v1891
      %v2624 = vtanh.pop %v1896
      %v2625 = vtanh.pop %v1899
      %v2626 = vtanh.pop %v1904
      %v2627 = vtanh.pop %v1907
      %v2628 = vtanh.pop %v1912
      %v2629 = vtanh.pop %v1915
      %v2630 = vtanh.pop %v1920
      %v2631 = vtanh.pop %v1923
      %v2632 = vtanh.pop %v1928
      %v2633 = vtanh.pop %v1931
      %v2634 = vtanh.pop %v1936
      %v2635 = vtanh.pop %v1939
      %v2636 = vtanh.pop %v1944
      %v2637 = vtanh.pop %v1947
      %v2638 = vtanh.pop %v1952
      %v2639 = vtanh.pop %v1955
      %v2640 = vtanh.pop %v1960
      %v2641 = vtanh.pop %v1963
      %v2642 = vtanh.pop %v1968
      %v2643 = vtanh.pop %v1971
      %v2644 = vtanh.pop %v1976
      %v2645 = vtanh.pop %v1979
      %v2646 = vtanh.pop %v1984
      %v2647 = vtanh.pop %v1987
      %v2648 = vtanh.pop %v1992
      %v2649 = vtanh.pop %v1995
      %v2650 = vtanh.pop %v2000
      %v2651 = vtanh.pop %v2003
      %v2652 = vtanh.pop %v2008
      %v2653 = vtanh.pop %v2011
      %v2654 = vtanh.pop %v2016
      %v2655 = vtanh.pop %v2019
      %v2656 = vtanh.pop %v2024
      %v2657 = vtanh.pop %v2027
      %v2658 = vtanh.pop %v2032
      %v2659 = vtanh.pop %v2035
      %v2660 = vtanh.pop %v2040
      %v2661 = vtanh.pop %v2043
      %v2662 = vtanh.pop %v2048
      %v2663 = vtanh.pop %v2051
      %v2664 = vtanh.pop %v2056
      %v2665 = vtanh.pop %v2059
      %v2666 = vtanh.pop %v2064
      %v2667 = vtanh.pop %v2067
      %v2668 = vtanh.pop %v2072
      %v2669 = vtanh.pop %v2075
      %v2670 = vtanh.pop %v2080
      %v2671 = vtanh.pop %v2083
      %v2672 = vtanh.pop %v2088
      %v2673 = vtanh.pop %v2091
      %v2674 = vtanh.pop %v2096
      %v2675 = vtanh.pop %v2099
      %v2676 = vtanh.pop %v2104
      %v2677 = vtanh.pop %v2107
      %v2678 = vtanh.pop %v2112
      %v2679 = vtanh.pop %v2115
      %v2680 = vtanh.pop %v2120
      %v2681 = vtanh.pop %v2123
      %v2682 = vtanh.pop %v2128
      %v2683 = vtanh.pop %v2131
      %v2684 = vtanh.pop %v2136
      %v2685 = vtanh.pop %v2139
      %v2686 = vtanh.pop %v2144
      %v2687 = vtanh.pop %v2147
      %v2688 = vtanh.pop %v2152
      %v2689 = vtanh.pop %v2155
      %v2690 = vtanh.pop %v2160
      %v2691 = vtanh.pop %v2163
      %v2692 = vtanh.pop %v2168
      %v2693 = vtanh.pop %v2171
      %v2694 = vtanh.pop %v2176
      %v2695 = vtanh.pop %v2179
      %v2696 = vtanh.pop %v2184
      %v2697 = vtanh.pop %v2187
      %v2698 = vtanh.pop %v2192
      %v2699 = vtanh.pop %v2195
      %v2700 = vtanh.pop %v2200
      %v2701 = vtanh.pop %v2203
      %v2702 = vtanh.pop %v2208
      %v2703 = vtanh.pop %v2211
      %v2704 = vtanh.pop %v2216
      %v2705 = vtanh.pop %v2219
      %v2706 = vtanh.pop %v2224
      %v2707 = vtanh.pop %v2227
      %v2708 = vtanh.pop %v2232
      %v2709 = vtanh.pop %v2235
      %v2710 = vtanh.pop %v2240
      %v2711 = vtanh.pop %v2243
      %v2712 = vtanh.pop %v2248
      %v2713 = vtanh.pop %v2251
      %v2714 = vtanh.pop %v2256
      %v2715 = vtanh.pop %v2259
      %v2716 = vtanh.pop %v2264
      %v2717 = vtanh.pop %v2267
      %v2718 = vtanh.pop %v2272
      %v2719 = vtanh.pop %v2275
      %v2720 = vtanh.pop %v2280
      %v2721 = vtanh.pop %v2283
      %v2722 = vtanh.pop %v2288
      %v2723 = vtanh.pop %v2291
      %v2724 = vtanh.pop %v2296
      %v2725 = vtanh.pop %v2299
      %v2726 = vtanh.pop %v2304
      %v2727 = vtanh.pop %v2307
      %v2728 = vtanh.pop %v2312
      %v2729 = vtanh.pop %v2315
      %v2730 = vtanh.pop %v2320
      %v2731 = vtanh.pop %v2323
      %v2732 = vtanh.pop %v2328
      %v2733 = vtanh.pop %v2331
      %v2734 = vtanh.pop %v2336
      %v2735 = vtanh.pop %v2339
      %v2736 = vtanh.pop %v2344
      %v2737 = vtanh.pop %v2347
      %v2738 = vtanh.pop %v2352
      %v2739 = vtanh.pop %v2355
      %v2740 = vtanh.pop %v2360
      %v2741 = vtanh.pop %v2363
      %v2742 = vtanh.pop %v2368
      %v2743 = vtanh.pop %v2371
      %v2744 = vtanh.pop %v2376
      %v2745 = vtanh.pop %v2379
      %v2746 = vtanh.pop %v2384
      %v2747 = vtanh.pop %v2387
      %v2748 = vtanh.pop %v2392
      %v2749 = vtanh.pop %v2395
      %v2750 = vtanh.pop %v2400
      %v2751 = vtanh.pop %v2403
      %v2752 = vtanh.pop %v2408
      %v2753 = vtanh.pop %v2411
      %v2754 = vtanh.pop %v2416
      %v2755 = vtanh.pop %v2419
      %v2756 = vtanh.pop %v2424
      %v2757 = vtanh.pop %v2427
      %v2758 = vtanh.pop %v2432
      %v2759 = vtanh.pop %v2435
      %v2760 = vtanh.pop %v2440
      %v2761 = vtanh.pop %v2443
      %v2762 = vtanh.pop %v2448
      %v2763 = vtanh.pop %v2451
      %v2764 = vtanh.pop %v2456
      %v2765 = vtanh.pop %v2459
      %v2766 = vtanh.pop %v2464
      %v2767 = vtanh.pop %v2467
      %v2768 = vtanh.pop %v2472
      %v2769 = vtanh.pop %v2475
      %v2770 = vtanh.pop %v2480
      %v2771 = vtanh.pop %v2483
      %v2772 = vtanh.pop %v2488
      %v2773 = vtanh.pop %v2491
      %v2774 = vtanh.pop %v2496
      %v2775 = vtanh.pop %v2499
      %v2776 = vtanh.pop %v2504
      %v2777 = vtanh.pop %v2507
      %v2778 = vtanh.pop %v2512
      %v2779 = vtanh.pop %v2515
      %v2780 = vtanh.pop %v2520
      %v2781 = vtanh.pop %v2523
      %vm2782 = vcmask 97280
      %2783 = vst.msk [vmem:[%s145] sm:$0xff] %vm2782, %v2526
      %2784 = vst.msk [vmem:[%s145 + $0x8] sm:$0xff] %vm2782, %v2527
      %2785 = vst.msk [vmem:[%s145 + $0x10] sm:$0xff] %vm2782, %v2528
      %2786 = vst.msk [vmem:[%s145 + $0x18] sm:$0xff] %vm2782, %v2529
      %2787 = vst.msk [vmem:[%s145 + $0x20] sm:$0xff] %vm2782, %v2530
      %2788 = vst.msk [vmem:[%s145 + $0x28] sm:$0xff] %vm2782, %v2531
      %2789 = vst.msk [vmem:[%s145 + $0x30] sm:$0xff] %vm2782, %v2532
      %2790 = vst.msk [vmem:[%s145 + $0x38] sm:$0xff] %vm2782, %v2533
      %2791 = vst.msk [vmem:[%s145 + $0x40] sm:$0xff] %vm2782, %v2534
      %2792 = vst.msk [vmem:[%s145 + $0x48] sm:$0xff] %vm2782, %v2535
      %2793 = vst.msk [vmem:[%s145 + $0x50] sm:$0xff] %vm2782, %v2536
      %2794 = vst.msk [vmem:[%s145 + $0x58] sm:$0xff] %vm2782, %v2537
      %2795 = vst.msk [vmem:[%s145 + $0x60] sm:$0xff] %vm2782, %v2538
      %2796 = vst.msk [vmem:[%s145 + $0x68] sm:$0xff] %vm2782, %v2539
      %2797 = vst.msk [vmem:[%s145 + $0x70] sm:$0xff] %vm2782, %v2540
      %2798 = vst.msk [vmem:[%s145 + $0x78] sm:$0xff] %vm2782, %v2541
      %2799 = vst.msk [vmem:[%s145 + $0x80] sm:$0xff] %vm2782, %v2542
      %2800 = vst.msk [vmem:[%s145 + $0x88] sm:$0xff] %vm2782, %v2543
      %2801 = vst.msk [vmem:[%s145 + $0x90] sm:$0xff] %vm2782, %v2544
      %2802 = vst.msk [vmem:[%s145 + $0x98] sm:$0xff] %vm2782, %v2545
      %2803 = vst.msk [vmem:[%s145 + $0xa0] sm:$0xff] %vm2782, %v2546
      %2804 = vst.msk [vmem:[%s145 + $0xa8] sm:$0xff] %vm2782, %v2547
      %2805 = vst.msk [vmem:[%s145 + $0xb0] sm:$0xff] %vm2782, %v2548
      %2806 = vst.msk [vmem:[%s145 + $0xb8] sm:$0xff] %vm2782, %v2549
      %2807 = vst.msk [vmem:[%s145 + $0xc0] sm:$0xff] %vm2782, %v2550
      %2808 = vst.msk [vmem:[%s145 + $0xc8] sm:$0xff] %vm2782, %v2551
      %2809 = vst.msk [vmem:[%s145 + $0xd0] sm:$0xff] %vm2782, %v2552
      %2810 = vst.msk [vmem:[%s145 + $0xd8] sm:$0xff] %vm2782, %v2553
      %2811 = vst.msk [vmem:[%s145 + $0xe0] sm:$0xff] %vm2782, %v2554
      %2812 = vst.msk [vmem:[%s145 + $0xe8] sm:$0xff] %vm2782, %v2555
      %2813 = vst.msk [vmem:[%s145 + $0xf0] sm:$0xff] %vm2782, %v2556
      %2814 = vst.msk [vmem:[%s145 + $0xf8] sm:$0xff] %vm2782, %v2557
      %2815 = vst.msk [vmem:[%s145 + $0x100] sm:$0xff] %vm2782, %v2558
      %2816 = vst.msk [vmem:[%s145 + $0x108] sm:$0xff] %vm2782, %v2559
      %2817 = vst.msk [vmem:[%s145 + $0x110] sm:$0xff] %vm2782, %v2560
      %2818 = vst.msk [vmem:[%s145 + $0x118] sm:$0xff] %vm2782, %v2561
      %2819 = vst.msk [vmem:[%s145 + $0x120] sm:$0xff] %vm2782, %v2562
      %2820 = vst.msk [vmem:[%s145 + $0x128] sm:$0xff] %vm2782, %v2563
      %2821 = vst.msk [vmem:[%s145 + $0x130] sm:$0xff] %vm2782, %v2564
      %2822 = vst.msk [vmem:[%s145 + $0x138] sm:$0xff] %vm2782, %v2565
      %2823 = vst.msk [vmem:[%s145 + $0x140] sm:$0xff] %vm2782, %v2566
      %2824 = vst.msk [vmem:[%s145 + $0x148] sm:$0xff] %vm2782, %v2567
      %2825 = vst.msk [vmem:[%s145 + $0x150] sm:$0xff] %vm2782, %v2568
      %2826 = vst.msk [vmem:[%s145 + $0x158] sm:$0xff] %vm2782, %v2569
      %2827 = vst.msk [vmem:[%s145 + $0x160] sm:$0xff] %vm2782, %v2570
      %2828 = vst.msk [vmem:[%s145 + $0x168] sm:$0xff] %vm2782, %v2571
      %2829 = vst.msk [vmem:[%s145 + $0x170] sm:$0xff] %vm2782, %v2572
      %2830 = vst.msk [vmem:[%s145 + $0x178] sm:$0xff] %vm2782, %v2573
      %2831 = vst.msk [vmem:[%s145 + $0x180] sm:$0xff] %vm2782, %v2574
      %2832 = vst.msk [vmem:[%s145 + $0x188] sm:$0xff] %vm2782, %v2575
      %2833 = vst.msk [vmem:[%s145 + $0x190] sm:$0xff] %vm2782, %v2576
      %2834 = vst.msk [vmem:[%s145 + $0x198] sm:$0xff] %vm2782, %v2577
      %2835 = vst.msk [vmem:[%s145 + $0x1a0] sm:$0xff] %vm2782, %v2578
      %2836 = vst.msk [vmem:[%s145 + $0x1a8] sm:$0xff] %vm2782, %v2579
      %2837 = vst.msk [vmem:[%s145 + $0x1b0] sm:$0xff] %vm2782, %v2580
      %2838 = vst.msk [vmem:[%s145 + $0x1b8] sm:$0xff] %vm2782, %v2581
      %2839 = vst.msk [vmem:[%s145 + $0x1c0] sm:$0xff] %vm2782, %v2582
      %2840 = vst.msk [vmem:[%s145 + $0x1c8] sm:$0xff] %vm2782, %v2583
      %2841 = vst.msk [vmem:[%s145 + $0x1d0] sm:$0xff] %vm2782, %v2584
      %2842 = vst.msk [vmem:[%s145 + $0x1d8] sm:$0xff] %vm2782, %v2585
      %2843 = vst.msk [vmem:[%s145 + $0x1e0] sm:$0xff] %vm2782, %v2586
      %2844 = vst.msk [vmem:[%s145 + $0x1e8] sm:$0xff] %vm2782, %v2587
      %2845 = vst.msk [vmem:[%s145 + $0x1f0] sm:$0xff] %vm2782, %v2588
      %2846 = vst.msk [vmem:[%s145 + $0x1f8] sm:$0xff] %vm2782, %v2589
      %2847 = vst.msk [vmem:[%s145 + $0x200] sm:$0xff] %vm2782, %v2590
      %2848 = vst.msk [vmem:[%s145 + $0x208] sm:$0xff] %vm2782, %v2591
      %2849 = vst.msk [vmem:[%s145 + $0x210] sm:$0xff] %vm2782, %v2592
      %2850 = vst.msk [vmem:[%s145 + $0x218] sm:$0xff] %vm2782, %v2593
      %2851 = vst.msk [vmem:[%s145 + $0x220] sm:$0xff] %vm2782, %v2594
      %2852 = vst.msk [vmem:[%s145 + $0x228] sm:$0xff] %vm2782, %v2595
      %2853 = vst.msk [vmem:[%s145 + $0x230] sm:$0xff] %vm2782, %v2596
      %2854 = vst.msk [vmem:[%s145 + $0x238] sm:$0xff] %vm2782, %v2597
      %2855 = vst.msk [vmem:[%s145 + $0x240] sm:$0xff] %vm2782, %v2598
      %2856 = vst.msk [vmem:[%s145 + $0x248] sm:$0xff] %vm2782, %v2599
      %2857 = vst.msk [vmem:[%s145 + $0x250] sm:$0xff] %vm2782, %v2600
      %2858 = vst.msk [vmem:[%s145 + $0x258] sm:$0xff] %vm2782, %v2601
      %2859 = vst.msk [vmem:[%s145 + $0x260] sm:$0xff] %vm2782, %v2602
      %2860 = vst.msk [vmem:[%s145 + $0x268] sm:$0xff] %vm2782, %v2603
      %2861 = vst.msk [vmem:[%s145 + $0x270] sm:$0xff] %vm2782, %v2604
      %2862 = vst.msk [vmem:[%s145 + $0x278] sm:$0xff] %vm2782, %v2605
      %2863 = vst.msk [vmem:[%s145 + $0x280] sm:$0xff] %vm2782, %v2606
      %2864 = vst.msk [vmem:[%s145 + $0x288] sm:$0xff] %vm2782, %v2607
      %2865 = vst.msk [vmem:[%s145 + $0x290] sm:$0xff] %vm2782, %v2608
      %2866 = vst.msk [vmem:[%s145 + $0x298] sm:$0xff] %vm2782, %v2609
      %2867 = vst.msk [vmem:[%s145 + $0x2a0] sm:$0xff] %vm2782, %v2610
      %2868 = vst.msk [vmem:[%s145 + $0x2a8] sm:$0xff] %vm2782, %v2611
      %2869 = vst.msk [vmem:[%s145 + $0x2b0] sm:$0xff] %vm2782, %v2612
      %2870 = vst.msk [vmem:[%s145 + $0x2b8] sm:$0xff] %vm2782, %v2613
      %2871 = vst.msk [vmem:[%s145 + $0x2c0] sm:$0xff] %vm2782, %v2614
      %2872 = vst.msk [vmem:[%s145 + $0x2c8] sm:$0xff] %vm2782, %v2615
      %2873 = vst.msk [vmem:[%s145 + $0x2d0] sm:$0xff] %vm2782, %v2616
      %2874 = vst.msk [vmem:[%s145 + $0x2d8] sm:$0xff] %vm2782, %v2617
      %2875 = vst.msk [vmem:[%s145 + $0x2e0] sm:$0xff] %vm2782, %v2618
      %2876 = vst.msk [vmem:[%s145 + $0x2e8] sm:$0xff] %vm2782, %v2619
      %2877 = vst.msk [vmem:[%s145 + $0x2f0] sm:$0xff] %vm2782, %v2620
      %2878 = vst.msk [vmem:[%s145 + $0x2f8] sm:$0xff] %vm2782, %v2621
      %2879 = vst.msk [vmem:[%s145 + $0x300] sm:$0xff] %vm2782, %v2622
      %2880 = vst.msk [vmem:[%s145 + $0x308] sm:$0xff] %vm2782, %v2623
      %2881 = vst.msk [vmem:[%s145 + $0x310] sm:$0xff] %vm2782, %v2624
      %2882 = vst.msk [vmem:[%s145 + $0x318] sm:$0xff] %vm2782, %v2625
      %2883 = vst.msk [vmem:[%s145 + $0x320] sm:$0xff] %vm2782, %v2626
      %2884 = vst.msk [vmem:[%s145 + $0x328] sm:$0xff] %vm2782, %v2627
      %2885 = vst.msk [vmem:[%s145 + $0x330] sm:$0xff] %vm2782, %v2628
      %2886 = vst.msk [vmem:[%s145 + $0x338] sm:$0xff] %vm2782, %v2629
      %2887 = vst.msk [vmem:[%s145 + $0x340] sm:$0xff] %vm2782, %v2630
      %2888 = vst.msk [vmem:[%s145 + $0x348] sm:$0xff] %vm2782, %v2631
      %2889 = vst.msk [vmem:[%s145 + $0x350] sm:$0xff] %vm2782, %v2632
      %2890 = vst.msk [vmem:[%s145 + $0x358] sm:$0xff] %vm2782, %v2633
      %2891 = vst.msk [vmem:[%s145 + $0x360] sm:$0xff] %vm2782, %v2634
      %2892 = vst.msk [vmem:[%s145 + $0x368] sm:$0xff] %vm2782, %v2635
      %2893 = vst.msk [vmem:[%s145 + $0x370] sm:$0xff] %vm2782, %v2636
      %2894 = vst.msk [vmem:[%s145 + $0x378] sm:$0xff] %vm2782, %v2637
      %2895 = vst.msk [vmem:[%s145 + $0x380] sm:$0xff] %vm2782, %v2638
      %2896 = vst.msk [vmem:[%s145 + $0x388] sm:$0xff] %vm2782, %v2639
      %2897 = vst.msk [vmem:[%s145 + $0x390] sm:$0xff] %vm2782, %v2640
      %2898 = vst.msk [vmem:[%s145 + $0x398] sm:$0xff] %vm2782, %v2641
      %2899 = vst.msk [vmem:[%s145 + $0x3a0] sm:$0xff] %vm2782, %v2642
      %2900 = vst.msk [vmem:[%s145 + $0x3a8] sm:$0xff] %vm2782, %v2643
      %2901 = vst.msk [vmem:[%s145 + $0x3b0] sm:$0xff] %vm2782, %v2644
      %2902 = vst.msk [vmem:[%s145 + $0x3b8] sm:$0xff] %vm2782, %v2645
      %2903 = vst.msk [vmem:[%s145 + $0x3c0] sm:$0xff] %vm2782, %v2646
      %2904 = vst.msk [vmem:[%s145 + $0x3c8] sm:$0xff] %vm2782, %v2647
      %2905 = vst.msk [vmem:[%s145 + $0x3d0] sm:$0xff] %vm2782, %v2648
      %2906 = vst.msk [vmem:[%s145 + $0x3d8] sm:$0xff] %vm2782, %v2649
      %2907 = vst.msk [vmem:[%s145 + $0x3e0] sm:$0xff] %vm2782, %v2650
      %2908 = vst.msk [vmem:[%s145 + $0x3e8] sm:$0xff] %vm2782, %v2651
      %2909 = vst.msk [vmem:[%s145 + $0x3f0] sm:$0xff] %vm2782, %v2652
      %2910 = vst.msk [vmem:[%s145 + $0x3f8] sm:$0xff] %vm2782, %v2653
      %2911 = vst.msk [vmem:[%s145 + $0x400] sm:$0xff] %vm2782, %v2654
      %2912 = vst.msk [vmem:[%s145 + $0x408] sm:$0xff] %vm2782, %v2655
      %2913 = vst.msk [vmem:[%s145 + $0x410] sm:$0xff] %vm2782, %v2656
      %2914 = vst.msk [vmem:[%s145 + $0x418] sm:$0xff] %vm2782, %v2657
      %2915 = vst.msk [vmem:[%s145 + $0x420] sm:$0xff] %vm2782, %v2658
      %2916 = vst.msk [vmem:[%s145 + $0x428] sm:$0xff] %vm2782, %v2659
      %2917 = vst.msk [vmem:[%s145 + $0x430] sm:$0xff] %vm2782, %v2660
      %2918 = vst.msk [vmem:[%s145 + $0x438] sm:$0xff] %vm2782, %v2661
      %2919 = vst.msk [vmem:[%s145 + $0x440] sm:$0xff] %vm2782, %v2662
      %2920 = vst.msk [vmem:[%s145 + $0x448] sm:$0xff] %vm2782, %v2663
      %2921 = vst.msk [vmem:[%s145 + $0x450] sm:$0xff] %vm2782, %v2664
      %2922 = vst.msk [vmem:[%s145 + $0x458] sm:$0xff] %vm2782, %v2665
      %2923 = vst.msk [vmem:[%s145 + $0x460] sm:$0xff] %vm2782, %v2666
      %2924 = vst.msk [vmem:[%s145 + $0x468] sm:$0xff] %vm2782, %v2667
      %2925 = vst.msk [vmem:[%s145 + $0x470] sm:$0xff] %vm2782, %v2668
      %2926 = vst.msk [vmem:[%s145 + $0x478] sm:$0xff] %vm2782, %v2669
      %2927 = vst.msk [vmem:[%s145 + $0x480] sm:$0xff] %vm2782, %v2670
      %2928 = vst.msk [vmem:[%s145 + $0x488] sm:$0xff] %vm2782, %v2671
      %2929 = vst.msk [vmem:[%s145 + $0x490] sm:$0xff] %vm2782, %v2672
      %2930 = vst.msk [vmem:[%s145 + $0x498] sm:$0xff] %vm2782, %v2673
      %2931 = vst.msk [vmem:[%s145 + $0x4a0] sm:$0xff] %vm2782, %v2674
      %2932 = vst.msk [vmem:[%s145 + $0x4a8] sm:$0xff] %vm2782, %v2675
      %2933 = vst.msk [vmem:[%s145 + $0x4b0] sm:$0xff] %vm2782, %v2676
      %2934 = vst.msk [vmem:[%s145 + $0x4b8] sm:$0xff] %vm2782, %v2677
      %2935 = vst.msk [vmem:[%s145 + $0x4c0] sm:$0xff] %vm2782, %v2678
      %2936 = vst.msk [vmem:[%s145 + $0x4c8] sm:$0xff] %vm2782, %v2679
      %2937 = vst.msk [vmem:[%s145 + $0x4d0] sm:$0xff] %vm2782, %v2680
      %2938 = vst.msk [vmem:[%s145 + $0x4d8] sm:$0xff] %vm2782, %v2681
      %2939 = vst.msk [vmem:[%s145 + $0x4e0] sm:$0xff] %vm2782, %v2682
      %2940 = vst.msk [vmem:[%s145 + $0x4e8] sm:$0xff] %vm2782, %v2683
      %2941 = vst.msk [vmem:[%s145 + $0x4f0] sm:$0xff] %vm2782, %v2684
      %2942 = vst.msk [vmem:[%s145 + $0x4f8] sm:$0xff] %vm2782, %v2685
      %2943 = vst.msk [vmem:[%s145 + $0x500] sm:$0xff] %vm2782, %v2686
      %2944 = vst.msk [vmem:[%s145 + $0x508] sm:$0xff] %vm2782, %v2687
      %2945 = vst.msk [vmem:[%s145 + $0x510] sm:$0xff] %vm2782, %v2688
      %2946 = vst.msk [vmem:[%s145 + $0x518] sm:$0xff] %vm2782, %v2689
      %2947 = vst.msk [vmem:[%s145 + $0x520] sm:$0xff] %vm2782, %v2690
      %2948 = vst.msk [vmem:[%s145 + $0x528] sm:$0xff] %vm2782, %v2691
      %2949 = vst.msk [vmem:[%s145 + $0x530] sm:$0xff] %vm2782, %v2692
      %2950 = vst.msk [vmem:[%s145 + $0x538] sm:$0xff] %vm2782, %v2693
      %2951 = vst.msk [vmem:[%s145 + $0x540] sm:$0xff] %vm2782, %v2694
      %2952 = vst.msk [vmem:[%s145 + $0x548] sm:$0xff] %vm2782, %v2695
      %2953 = vst.msk [vmem:[%s145 + $0x550] sm:$0xff] %vm2782, %v2696
      %2954 = vst.msk [vmem:[%s145 + $0x558] sm:$0xff] %vm2782, %v2697
      %2955 = vst.msk [vmem:[%s145 + $0x560] sm:$0xff] %vm2782, %v2698
      %2956 = vst.msk [vmem:[%s145 + $0x568] sm:$0xff] %vm2782, %v2699
      %2957 = vst.msk [vmem:[%s145 + $0x570] sm:$0xff] %vm2782, %v2700
      %2958 = vst.msk [vmem:[%s145 + $0x578] sm:$0xff] %vm2782, %v2701
      %2959 = vst.msk [vmem:[%s145 + $0x580] sm:$0xff] %vm2782, %v2702
      %2960 = vst.msk [vmem:[%s145 + $0x588] sm:$0xff] %vm2782, %v2703
      %2961 = vst.msk [vmem:[%s145 + $0x590] sm:$0xff] %vm2782, %v2704
      %2962 = vst.msk [vmem:[%s145 + $0x598] sm:$0xff] %vm2782, %v2705
      %2963 = vst.msk [vmem:[%s145 + $0x5a0] sm:$0xff] %vm2782, %v2706
      %2964 = vst.msk [vmem:[%s145 + $0x5a8] sm:$0xff] %vm2782, %v2707
      %2965 = vst.msk [vmem:[%s145 + $0x5b0] sm:$0xff] %vm2782, %v2708
      %2966 = vst.msk [vmem:[%s145 + $0x5b8] sm:$0xff] %vm2782, %v2709
      %2967 = vst.msk [vmem:[%s145 + $0x5c0] sm:$0xff] %vm2782, %v2710
      %2968 = vst.msk [vmem:[%s145 + $0x5c8] sm:$0xff] %vm2782, %v2711
      %2969 = vst.msk [vmem:[%s145 + $0x5d0] sm:$0xff] %vm2782, %v2712
      %2970 = vst.msk [vmem:[%s145 + $0x5d8] sm:$0xff] %vm2782, %v2713
      %2971 = vst.msk [vmem:[%s145 + $0x5e0] sm:$0xff] %vm2782, %v2714
      %2972 = vst.msk [vmem:[%s145 + $0x5e8] sm:$0xff] %vm2782, %v2715
      %2973 = vst.msk [vmem:[%s145 + $0x5f0] sm:$0xff] %vm2782, %v2716
      %2974 = vst.msk [vmem:[%s145 + $0x5f8] sm:$0xff] %vm2782, %v2717
      %2975 = vst.msk [vmem:[%s145 + $0x600] sm:$0xff] %vm2782, %v2718
      %2976 = vst.msk [vmem:[%s145 + $0x608] sm:$0xff] %vm2782, %v2719
      %2977 = vst.msk [vmem:[%s145 + $0x610] sm:$0xff] %vm2782, %v2720
      %2978 = vst.msk [vmem:[%s145 + $0x618] sm:$0xff] %vm2782, %v2721
      %2979 = vst.msk [vmem:[%s145 + $0x620] sm:$0xff] %vm2782, %v2722
      %2980 = vst.msk [vmem:[%s145 + $0x628] sm:$0xff] %vm2782, %v2723
      %2981 = vst.msk [vmem:[%s145 + $0x630] sm:$0xff] %vm2782, %v2724
      %2982 = vst.msk [vmem:[%s145 + $0x638] sm:$0xff] %vm2782, %v2725
      %2983 = vst.msk [vmem:[%s145 + $0x640] sm:$0xff] %vm2782, %v2726
      %2984 = vst.msk [vmem:[%s145 + $0x648] sm:$0xff] %vm2782, %v2727
      %2985 = vst.msk [vmem:[%s145 + $0x650] sm:$0xff] %vm2782, %v2728
      %2986 = vst.msk [vmem:[%s145 + $0x658] sm:$0xff] %vm2782, %v2729
      %2987 = vst.msk [vmem:[%s145 + $0x660] sm:$0xff] %vm2782, %v2730
      %2988 = vst.msk [vmem:[%s145 + $0x668] sm:$0xff] %vm2782, %v2731
      %2989 = vst.msk [vmem:[%s145 + $0x670] sm:$0xff] %vm2782, %v2732
      %2990 = vst.msk [vmem:[%s145 + $0x678] sm:$0xff] %vm2782, %v2733
      %2991 = vst.msk [vmem:[%s145 + $0x680] sm:$0xff] %vm2782, %v2734
      %2992 = vst.msk [vmem:[%s145 + $0x688] sm:$0xff] %vm2782, %v2735
      %2993 = vst.msk [vmem:[%s145 + $0x690] sm:$0xff] %vm2782, %v2736
      %2994 = vst.msk [vmem:[%s145 + $0x698] sm:$0xff] %vm2782, %v2737
      %2995 = vst.msk [vmem:[%s145 + $0x6a0] sm:$0xff] %vm2782, %v2738
      %2996 = vst.msk [vmem:[%s145 + $0x6a8] sm:$0xff] %vm2782, %v2739
      %2997 = vst.msk [vmem:[%s145 + $0x6b0] sm:$0xff] %vm2782, %v2740
      %2998 = vst.msk [vmem:[%s145 + $0x6b8] sm:$0xff] %vm2782, %v2741
      %2999 = vst.msk [vmem:[%s145 + $0x6c0] sm:$0xff] %vm2782, %v2742
      %3000 = vst.msk [vmem:[%s145 + $0x6c8] sm:$0xff] %vm2782, %v2743
      %3001 = vst.msk [vmem:[%s145 + $0x6d0] sm:$0xff] %vm2782, %v2744
      %3002 = vst.msk [vmem:[%s145 + $0x6d8] sm:$0xff] %vm2782, %v2745
      %3003 = vst.msk [vmem:[%s145 + $0x6e0] sm:$0xff] %vm2782, %v2746
      %3004 = vst.msk [vmem:[%s145 + $0x6e8] sm:$0xff] %vm2782, %v2747
      %3005 = vst.msk [vmem:[%s145 + $0x6f0] sm:$0xff] %vm2782, %v2748
      %3006 = vst.msk [vmem:[%s145 + $0x6f8] sm:$0xff] %vm2782, %v2749
      %3007 = vst.msk [vmem:[%s145 + $0x700] sm:$0xff] %vm2782, %v2750
      %3008 = vst.msk [vmem:[%s145 + $0x708] sm:$0xff] %vm2782, %v2751
      %3009 = vst.msk [vmem:[%s145 + $0x710] sm:$0xff] %vm2782, %v2752
      %3010 = vst.msk [vmem:[%s145 + $0x718] sm:$0xff] %vm2782, %v2753
      %3011 = vst.msk [vmem:[%s145 + $0x720] sm:$0xff] %vm2782, %v2754
      %3012 = vst.msk [vmem:[%s145 + $0x728] sm:$0xff] %vm2782, %v2755
      %3013 = vst.msk [vmem:[%s145 + $0x730] sm:$0xff] %vm2782, %v2756
      %3014 = vst.msk [vmem:[%s145 + $0x738] sm:$0xff] %vm2782, %v2757
      %3015 = vst.msk [vmem:[%s145 + $0x740] sm:$0xff] %vm2782, %v2758
      %3016 = vst.msk [vmem:[%s145 + $0x748] sm:$0xff] %vm2782, %v2759
      %3017 = vst.msk [vmem:[%s145 + $0x750] sm:$0xff] %vm2782, %v2760
      %3018 = vst.msk [vmem:[%s145 + $0x758] sm:$0xff] %vm2782, %v2761
      %3019 = vst.msk [vmem:[%s145 + $0x760] sm:$0xff] %vm2782, %v2762
      %3020 = vst.msk [vmem:[%s145 + $0x768] sm:$0xff] %vm2782, %v2763
      %3021 = vst.msk [vmem:[%s145 + $0x770] sm:$0xff] %vm2782, %v2764
      %3022 = vst.msk [vmem:[%s145 + $0x778] sm:$0xff] %vm2782, %v2765
      %3023 = vst.msk [vmem:[%s145 + $0x780] sm:$0xff] %vm2782, %v2766
      %3024 = vst.msk [vmem:[%s145 + $0x788] sm:$0xff] %vm2782, %v2767
      %3025 = vst.msk [vmem:[%s145 + $0x790] sm:$0xff] %vm2782, %v2768
      %3026 = vst.msk [vmem:[%s145 + $0x798] sm:$0xff] %vm2782, %v2769
      %3027 = vst.msk [vmem:[%s145 + $0x7a0] sm:$0xff] %vm2782, %v2770
      %3028 = vst.msk [vmem:[%s145 + $0x7a8] sm:$0xff] %vm2782, %v2771
      %3029 = vst.msk [vmem:[%s145 + $0x7b0] sm:$0xff] %vm2782, %v2772
      %3030 = vst.msk [vmem:[%s145 + $0x7b8] sm:$0xff] %vm2782, %v2773
      %3031 = vst.msk [vmem:[%s145 + $0x7c0] sm:$0xff] %vm2782, %v2774
      %3032 = vst.msk [vmem:[%s145 + $0x7c8] sm:$0xff] %vm2782, %v2775
      %3033 = vst.msk [vmem:[%s145 + $0x7d0] sm:$0xff] %vm2782, %v2776
      %3034 = vst.msk [vmem:[%s145 + $0x7d8] sm:$0xff] %vm2782, %v2777
      %3035 = vst.msk [vmem:[%s145 + $0x7e0] sm:$0xff] %vm2782, %v2778
      %3036 = vst.msk [vmem:[%s145 + $0x7e8] sm:$0xff] %vm2782, %v2779
      %3037 = vst.msk [vmem:[%s145 + $0x7f0] sm:$0xff] %vm2782, %v2780
      %3038 = vst.msk [vmem:[%s145 + $0x7f8] sm:$0xff] %vm2782, %v2781
      %s3039 = smul.u32 256, %s13
      %p3040 = scmp.lt.s32.totalorder %s3039, 1023
      %s3041 = scalar_select %p3040, %s3039, 1023
      %s3042 = smul.addr %s3041, 8
      %s3043 = scalar_lea.vmem %s2, %s3042
      // Predicated region
      $region29: #{generator_forward.19} parent=27 // pred_check
        %p3044 = pneg %p78
      $region30: #{generator_forward.19} parent=27 // pred_check_branch
        %3046 = sbr.rel (%p3044) target = $region32
      $region31: #{generator_forward.19} parent=27 // pred_region
        %s3047 = smul.u32 256, %s13
      $region32: #{generator_forward.19} parent=27 // pred_fallthru
        _
    $region28: #{generator_forward.19} parent=5 // pred_fallthru
      _
    %p3048 = scmp.le.s32.totalorder 2, %s8
    // Predicated region
    $region33: #{generator_forward.19} parent=5 // pred_check
      %p3049 = pneg %p3048
    $region34: #{generator_forward.19} parent=5 // pred_check_branch
      %3051 = sbr.rel (%p3049) target = $region36
    $region35: #{generator_forward.19} parent=5 // pred_region
      %s3052 = ssub.s32 %s8, 2
      // Predicated region
      $region37: #{generator_forward.19} parent=35 // pred_check
        %p3053 = pneg %p84
      $region38: #{generator_forward.19} parent=35 // pred_check_branch
        %3055 = sbr.rel (%p3053) target = $region40
      $region39: #{generator_forward.19} parent=35 // pred_region
        %s3056 = smul.u32 256, %s14
        %p3057 = scmp.lt.s32.totalorder %s3056, 1023
        %s3058 = scalar_select %p3057, %s3056, 1023
        %s3059 = smul.addr %s3058, 8
        %s3060 = scalar_lea.vmem %s2, %s3059
      $region40: #{generator_forward.19} parent=35 // pred_fallthru
        _
    $region36: #{generator_forward.19} parent=5 // pred_fallthru
      _
  $region6: #{generator_forward.19} parent=0 // loop_footer
    %s12 = sadd.s32 1, %s8
  $region7: #{generator_forward.19} parent=0 // loop_footer_branch
    %7 = sbr.rel target = $region3
  $region8: #{generator_forward.19} parent=0 // loop_exit
    _

</llo_original>
